<compile_context>
chip_gen: v5e
topology: v5e:2x2
jax: 0.10.0
libtpu: 0.0.40
codegen_flags: <defaults>
</compile_context>

<pallas_src>
import jax
import jax.numpy as jnp
from jax.experimental import pallas as pl
from jax.experimental.pallas import tpu as pltpu

_BN_EPS = 1e-5
_LOGIT_PAD = 128          # pad class dim 7 -> 128 so the logits store is lane-dense
_NEG_INF = -1e30


# ------------------------------ slab packing -------------------------------- #

def _pack_slab(entries, width, dtype, align=8):
    """Row-stack 2-D arrays into one (rows, width) slab.

    Returns (slab, offsets) with offsets[name] = (row_offset, n_rows, n_cols);
    each entry starts at a row offset aligned to `align` so the kernel can take
    cheap static ref slices.
    """
    offs, pieces, cur = {}, [], 0
    for name, arr in entries:
        arr = jnp.asarray(arr, jnp.float32)
        r, c = arr.shape
        pad_r = (-r) % align
        pieces.append(jnp.pad(arr, ((0, pad_r), (0, width - c))))
        offs[name] = (cur, r, c)
        cur += r + pad_r
    slab = jnp.concatenate(pieces, axis=0).astype(dtype)
    return slab, offs


# ------------------------------ fused kernel -------------------------------- #

def _make_kernel(t, offs_graph, offs_wide, offs_narrow, offs_vec, offs_late):
    f32, bf16 = jnp.float32, jnp.bfloat16

    def kernel(g_ref, x_ref, wide_ref, nar_ref, vec_ref, fw_ref, late_hbm,
               logits_ref, x12_ref, late_vmem, late_sem, gat_buf):

        def view(ref, offs, name):
            r0, nr, nc = offs[name]
            return ref[r0:r0 + nr, :nc]

        G = lambda k: view(g_ref, offs_graph, k)        # graph operators (f32)
        WW = lambda k: view(wide_ref, offs_wide, k)     # wide weights (bf16)
        NW = lambda k: view(nar_ref, offs_narrow, k)    # 128-col weights (bf16)
        V = lambda k: view(vec_ref, offs_vec, k)        # bias / BN vectors (f32)
        LW = lambda k: view(late_vmem, offs_late, k)    # prefetched late weights

        def mm(a, b):
            # bf16 MXU operands, f32 accumulation
            return jnp.dot(a.astype(bf16), b.astype(bf16),
                           preferred_element_type=f32)

        def relu(v):
            return jnp.maximum(v, 0.0)

        def bn(v, name):
            # training-mode BatchNorm1d (biased batch variance), f32 VPU epilogue
            mu = jnp.mean(v, axis=0, keepdims=True)
            var = jnp.mean((v - mu) ** 2, axis=0, keepdims=True)
            return (V(name + "_g") * (v - mu) * jax.lax.rsqrt(var + _BN_EPS)
                    + V(name + "_b"))

        # ---- overlap the late-use weight DMA with all branch compute ---------
        late_cp = pltpu.make_async_copy(late_hbm, late_vmem, late_sem)
        late_cp.start()

        a_hat = G("a_hat")                  # GCN sym-norm adjacency
        a_plus_i = G("a_plus_i")            # GIN sum aggregation (eps = 0)
        adj_mask = G("gat_mask") > 0.0      # GAT softmax mask (incl. self loops)
        sel = G("sel")                      # (2T, N) one-hot edge gather

        # ---- front end --------------------------------------------------------
        # TODO(synk): get_model(256, True) ("ppc") is undefined in the reference
        # source; stand-in = flatten + Linear(16*C -> 256) + ReLU.
        h0 = relu(mm(x_ref[...], WW("ppc_w")) + V("ppc_b"))            # (N, 256)

        # one wide matmul feeds every consumer of h0
        y0 = mm(h0, WW("w_h0"))                                        # (N, 512)
        y_gcn1 = y0[:, 0:128]               # h0 @ gcn1_w
        y_gin1 = y0[:, 128:256]             # h0 @ gin.0.w1
        gat_xl = y0[:, 256:384]             # h0 @ gat1.w   (8 heads x 16)
        gat_sc = y0[:, 384:400]             # [:, :8] src scores, [:, 8:] dst scores

        # ---- GCN branch --------------------------------------------------------
        g = mm(a_hat, y_gcn1) + V("gcn.gcn1_b")
        g = bn(relu(mm(g, NW("gcn.fc1_w")) + V("gcn.fc1_b")), "gcn.bn1")
        g = mm(a_hat, mm(g, NW("gcn.gcn2_w"))) + V("gcn.gcn2_b")
        g = bn(relu(mm(g, NW("gcn.fc2_w")) + V("gcn.fc2_b")), "gcn.bn2")

        # ---- GIN branch (layer-0 re-associated: (A+I)@(h0@W1)) -----------------
        ti = relu(mm(a_plus_i, y_gin1) + V("gin.0.b1"))
        ti = relu(mm(ti, NW("gin.0.w2")) + V("gin.0.b2"))
        ti = bn(ti, "gin.0.bn")
        ti = mm(a_plus_i, ti)
        ti = relu(mm(ti, NW("gin.1.w1")) + V("gin.1.b1"))
        ti = relu(mm(ti, NW("gin.1.w2")) + V("gin.1.b2"))
        ti = bn(ti, "gin.1.bn")

        # ---- GAT branch (attention scores folded into the projection matmul) --
        def attend(src_row, dst_col):
            e = dst_col + src_row                         # e[dst, src]
            e = jnp.where(e >= 0.0, e, 0.2 * e)           # LeakyReLU(0.2)
            e = jnp.where(adj_mask, e, _NEG_INF)          # single mask; exp() -> 0
            e = e - jnp.max(e, axis=1, keepdims=True)
            p = jnp.exp(e)
            return p * pl.reciprocal(jnp.sum(p, axis=1, keepdims=True), approx=True)

        src_rows = gat_sc[:, 0:8].T                       # one (N,8)->(8,N) transpose
        for hh in range(8):                               # heads=8, C=16
            p = attend(src_rows[hh:hh + 1, :], gat_sc[:, 8 + hh:9 + hh])
            lo = hh * 16
            gat_buf[:, lo:lo + 16] = mm(p, gat_xl[:, lo:lo + 16])  # lane-packed heads
        a1 = gat_buf[...] + V("gat.gat1.b")
        a1 = bn(relu(mm(a1, NW("gat.fc1_w")) + V("gat.fc1_b")), "gat.bn1")

        y2 = mm(a1, WW("w_gat2"))                         # heads=1, C=128
        p2 = attend(y2[:, 128:129].T, y2[:, 129:130])
        a2 = mm(p2, y2[:, 0:128]) + V("gat.gat2.b")
        a2 = bn(relu(mm(a2, NW("gat.fc2_w")) + V("gat.fc2_b")), "gat.bn2")

        # ---- branch heads use the prefetched late weights ----------------------
        late_cp.wait()
        gcn_out = relu(mm(g, LW("gcn.lin_w")) + V("gcn.lin_b"))        # (N, 512)
        gin_out = relu(mm(ti, LW("gin.lin_w")) + V("gin.lin_b"))       # (N, 512)
        gat_out = relu(mm(a2, LW("gat.lin_w")) + V("gat.lin_b"))       # (N, 512)

        # ---- weighted fusion + affine-free BN (F.batch_norm, training=True) ---
        s = fw_ref[0] * gcn_out + fw_ref[1] * gin_out + fw_ref[2] * gat_out
        mu = jnp.mean(s, axis=0, keepdims=True)
        var = jnp.mean((s - mu) ** 2, axis=0, keepdims=True)
        h = (s - mu) * jax.lax.rsqrt(var + _BN_EPS)

        # ---- head MLP ----------------------------------------------------------
        h = relu(mm(h, LW("lin1_w")) + V("lin1_b"))
        # TODO(synk): F.dropout(p=0.5, training=self.training) omitted (eval identity).
        h = mm(h, LW("lin2_w")) + V("lin2_b")                          # (N, 512)

        # ---- edge gather (one matmul for both endpoints), mul, classifier -----
        x12 = mm(sel, h)                                               # (2T, 512)
        x12_ref[...] = x12
        xm = x12[0:t, :] * x12[t:2 * t, :]                             # feature_fusion=None
        logits_ref[...] = mm(xm, NW("fc2_w_pad")) + V("fc2_b_pad")     # (T, 128) lane-dense

    return kernel


# ------------------------------- forward ------------------------------------ #

def graph_net_forward(params, x, edge_index, train_edge_id, class_num=7):
    f32, bf16 = jnp.float32, jnp.bfloat16
    n = int(x.shape[0])

    # ---- setup glue (tiny XLA prep, done once per call) -----------------------
    # x[:, :, :16].transpose(2, 1) -> (N, 16, C); stand-in ppc flattens it.
    x_flat = jnp.transpose(x[:, :, :16], (0, 2, 1)).reshape(n, -1).astype(f32)

    A = jnp.zeros((n, n), f32).at[edge_index[1], edge_index[0]].set(1.0)
    eye = jnp.eye(n, dtype=f32)
    a_self = jnp.minimum(A + eye, 1.0)
    d_inv_sqrt = jax.lax.rsqrt(jnp.sum(a_self, axis=1))
    a_hat = a_self * d_inv_sqrt[:, None] * d_inv_sqrt[None, :]   # GCN sym-norm
    a_plus_i = A + eye                                           # GIN sum-agg (eps=0)

    node_id = edge_index[:, train_edge_id]                       # (2, T)
    T = int(node_id.shape[1])
    rows = jnp.arange(2 * T)
    cols = jnp.concatenate([node_id[0], node_id[1]])
    sel = jnp.zeros((2 * T, n), f32).at[rows, cols].set(1.0)     # one-hot gather rows

    g_slab, offs_graph = _pack_slab(
        [("a_hat", a_hat), ("a_plus_i", a_plus_i), ("gat_mask", a_self),
         ("sel", sel)], width=n, dtype=f32, align=8)

    # ---- fold GAT attention vectors into the projections ----------------------
    g1w = params["gat.gat1.w"]
    s1, d1 = params["gat.gat1.att_src"][0], params["gat.gat1.att_dst"][0]
    H1, C1 = 8, 16
    v_src1 = jnp.stack([g1w[:, h * C1:(h + 1) * C1] @ s1[h * C1:(h + 1) * C1]
                        for h in range(H1)], axis=1)             # (256, 8)
    v_dst1 = jnp.stack([g1w[:, h * C1:(h + 1) * C1] @ d1[h * C1:(h + 1) * C1]
                        for h in range(H1)], axis=1)             # (256, 8)
    v_att1 = jnp.concatenate([v_src1, v_dst1], axis=1)           # (256, 16)

    g2w = params["gat.gat2.w"]
    s2, d2 = params["gat.gat2.att_src"][0], params["gat.gat2.att_dst"][0]
    v_att2 = jnp.stack([g2w @ s2, g2w @ d2], axis=1)             # (128, 2)

    # ---- fused / packed weight slabs (bf16) ------------------------------------
    w_h0 = jnp.concatenate([params["gcn.gcn1_w"], params["gin.0.w1"], g1w,
                            jnp.pad(v_att1, ((0, 0), (0, 112)))], axis=1)  # (256, 512)
    w_gat2 = jnp.concatenate([g2w, jnp.pad(v_att2, ((0, 0), (0, 126)))],
                             axis=1)                                        # (128, 256)

    wide_slab, offs_wide = _pack_slab(
        [("w_h0", w_h0), ("w_gat2", w_gat2), ("ppc_w", params["ppc_w"])],
        width=512, dtype=bf16, align=8)

    late_slab, offs_late = _pack_slab(
        [("gcn.lin_w", params["gcn.lin_w"]), ("gin.lin_w", params["gin.lin_w"]),
         ("gat.lin_w", params["gat.lin_w"]), ("lin1_w", params["lin1_w"]),
         ("lin2_w", params["lin2_w"])], width=512, dtype=bf16, align=8)

    fc2_w_pad = jnp.pad(params["fc2_w"], ((0, 0), (0, _LOGIT_PAD - class_num)))
    narrow_slab, offs_narrow = _pack_slab(
        [("gcn.gcn2_w", params["gcn.gcn2_w"]), ("gcn.fc1_w", params["gcn.fc1_w"]),
         ("gcn.fc2_w", params["gcn.fc2_w"]), ("gin.0.w2", params["gin.0.w2"]),
         ("gin.1.w1", params["gin.1.w1"]), ("gin.1.w2", params["gin.1.w2"]),
         ("gat.fc1_w", params["gat.fc1_w"]), ("gat.fc2_w", params["gat.fc2_w"]),
         ("fc2_w_pad", fc2_w_pad)], width=128, dtype=bf16, align=8)

    fc2_b_pad = jnp.pad(params["fc2_b"], ((0, 0), (0, _LOGIT_PAD - class_num)))
    vec_names = [
        "ppc_b",
        "gcn.gcn1_b", "gcn.gcn2_b", "gcn.fc1_b", "gcn.fc2_b",
        "gcn.bn1_g", "gcn.bn1_b", "gcn.bn2_g", "gcn.bn2_b", "gcn.lin_b",
        "gin.0.b1", "gin.0.b2", "gin.0.bn_g", "gin.0.bn_b",
        "gin.1.b1", "gin.1.b2", "gin.1.bn_g", "gin.1.bn_b", "gin.lin_b",
        "gat.gat1.b", "gat.gat2.b", "gat.fc1_b", "gat.fc2_b",
        "gat.bn1_g", "gat.bn1_b", "gat.bn2_g", "gat.bn2_b", "gat.lin_b",
        "lin1_b", "lin2_b",
    ]
    vec_slab, offs_vec = _pack_slab(
        [(k, params[k]) for k in vec_names] + [("fc2_b_pad", fc2_b_pad)],
        width=512, dtype=f32, align=1)

    hidden = int(params["lin2_w"].shape[1])
    kernel = _make_kernel(T, offs_graph, offs_wide, offs_narrow, offs_vec,
                          offs_late)

    in_specs = [
        pl.BlockSpec(memory_space=pltpu.MemorySpace.VMEM),   # graph operators
        pl.BlockSpec(memory_space=pltpu.MemorySpace.VMEM),   # x_flat
        pl.BlockSpec(memory_space=pltpu.MemorySpace.VMEM),   # wide weight slab
        pl.BlockSpec(memory_space=pltpu.MemorySpace.VMEM),   # narrow weight slab
        pl.BlockSpec(memory_space=pltpu.MemorySpace.VMEM),   # bias / BN vectors
        pl.BlockSpec(memory_space=pltpu.MemorySpace.SMEM),   # fusion weights (3,)
        pl.BlockSpec(memory_space=pl.ANY),                   # late weights (HBM)
    ]
    out_shape = (
        jax.ShapeDtypeStruct((T, _LOGIT_PAD), f32),          # padded logits
        jax.ShapeDtypeStruct((2 * T, hidden), f32),          # [x1; x2]
    )
    out_specs = (pl.BlockSpec(memory_space=pltpu.MemorySpace.VMEM),
                 pl.BlockSpec(memory_space=pltpu.MemorySpace.VMEM))

    scratch_shapes = [
        pltpu.VMEM(late_slab.shape, bf16),    # prefetch target for late weights
        pltpu.SemaphoreType.DMA,              # its completion semaphore
        pltpu.VMEM((n, 128), f32),            # lane-packed GAT head outputs
    ]

    logits_pad, x12 = pl.pallas_call(
        kernel,
        out_shape=out_shape,
        in_specs=in_specs,
        out_specs=out_specs,
        scratch_shapes=scratch_shapes,
        # real footprint ~3 MB; declare a tight-but-safe budget instead of 128 MB
        compiler_params=pltpu.CompilerParams(vmem_limit_bytes=16 * 1024 * 1024),
    )(g_slab, x_flat, wide_slab, narrow_slab, vec_slab,
      params["fusion_w"].astype(f32), late_slab)

    logits = logits_pad[:, :class_num]
    x1, x2 = x12[:T], x12[T:]
    return logits, x1, x2, node_id


# ------------------------------ parameters ---------------------------------- #

def init_params(key, in_c, seq_len=16):
    ks = iter(jax.random.split(key, 128))

    def dense(shape, scale=0.1):
        return scale * jax.random.normal(next(ks), shape, dtype=jnp.float32)

    def lin_p(i, o):
        return dense((i, o)), dense((1, o), 0.01)

    ones = lambda m: jnp.ones((1, m), jnp.float32)
    zeros = lambda m: jnp.zeros((1, m), jnp.float32)

    p = {}
    p["ppc_w"], p["ppc_b"] = lin_p(seq_len * in_c, 256)

    # GCNNet(256, 512, 128)
    p["gcn.gcn1_w"], p["gcn.gcn1_b"] = lin_p(256, 128)
    p["gcn.gcn2_w"], p["gcn.gcn2_b"] = lin_p(128, 128)
    p["gcn.fc1_w"], p["gcn.fc1_b"] = lin_p(128, 128)
    p["gcn.fc2_w"], p["gcn.fc2_b"] = lin_p(128, 128)
    p["gcn.bn1_g"], p["gcn.bn1_b"] = ones(128), zeros(128)
    p["gcn.bn2_g"], p["gcn.bn2_b"] = ones(128), zeros(128)
    p["gcn.lin_w"], p["gcn.lin_b"] = lin_p(128, 512)

    # GINNet(256, 512, 128, num_layers=2)
    in_dim = 256
    for li in range(2):
        p[f"gin.{li}.w1"], p[f"gin.{li}.b1"] = lin_p(in_dim, 128)
        p[f"gin.{li}.w2"], p[f"gin.{li}.b2"] = lin_p(128, 128)
        p[f"gin.{li}.bn_g"], p[f"gin.{li}.bn_b"] = ones(128), zeros(128)
        in_dim = 128
    p["gin.lin_w"], p["gin.lin_b"] = lin_p(128, 512)

    # GATNet(256, 512, 16): GAT1 heads=8 out=16 concat, GAT2 heads=1 out=128
    p["gat.gat1.w"] = dense((256, 8 * 16))
    p["gat.gat1.att_src"] = dense((1, 8 * 16))
    p["gat.gat1.att_dst"] = dense((1, 8 * 16))
    p["gat.gat1.b"] = dense((1, 8 * 16), 0.01)
    p["gat.gat2.w"] = dense((128, 128))
    p["gat.gat2.att_src"] = dense((1, 128))
    p["gat.gat2.att_dst"] = dense((1, 128))
    p["gat.gat2.b"] = dense((1, 128), 0.01)
    p["gat.fc1_w"], p["gat.fc1_b"] = lin_p(128, 128)
    p["gat.fc2_w"], p["gat.fc2_b"] = lin_p(128, 128)
    p["gat.bn1_g"], p["gat.bn1_b"] = ones(128), zeros(128)
    p["gat.bn2_g"], p["gat.bn2_b"] = ones(128), zeros(128)
    p["gat.lin_w"], p["gat.lin_b"] = lin_p(128, 512)

    # fusion + head
    p["fusion_w"] = jnp.ones((3,), jnp.float32)
    p["lin1_w"], p["lin1_b"] = lin_p(512, 512)
    p["lin2_w"], p["lin2_b"] = lin_p(512, 512)
    p["fc2_w"], p["fc2_b"] = lin_p(512, 7)
    return p


# --------------------------------- main -------------------------------------- #

if __name__ == "__main__":
    N, C_IN, L_IN = 16, 20, 16          # 16 graph nodes, per-node raw feature (20, 16)
    key = jax.random.PRNGKey(0)
    kx, kp = jax.random.split(key)
    x = jax.random.normal(kx, (N, C_IN, L_IN), dtype=jnp.float32)

    # symmetric ring graph: edge_index[0]=source, edge_index[1]=target
    src = jnp.arange(N, dtype=jnp.int32)
    dst = (src + 1) % N
    edge_index = jnp.concatenate(
        [jnp.stack([src, dst]), jnp.stack([dst, src])], axis=1)   # (2, 32)
    train_edge_id = jnp.array([0, 3, 7, 12], dtype=jnp.int32)

    params = init_params(kp, in_c=C_IN, seq_len=16)
    logits, x1, x2, node_id = graph_net_forward(params, x, edge_index, train_edge_id)
    jax.block_until_ready((logits, x1, x2))

    # node_embedding dict (host-side, mirrors the PyTorch python loop)
    node_embedding = {}
    nid = jax.device_get(node_id)
    for idx in range(nid.shape[1]):
        p0, p1 = int(nid[0, idx]), int(nid[1, idx])
        if p0 not in node_embedding:
            node_embedding[p0] = x1[idx]
        if p1 not in node_embedding:
            node_embedding[p1] = x2[idx]

    assert logits.shape == (int(train_edge_id.shape[0]), 7)
    assert all(v.shape == (512,) for v in node_embedding.values())
    assert bool(jnp.all(jnp.isfinite(logits)))
    print("KERNEL_OK")
</pallas_src>

<mosaic_0001>
module attributes {stable_mosaic.version = 11 : i64} {
  func.func @kernel(%arg0: memref<56x16xf32, #tpu.memory_space<vmem>>, %arg1: memref<16x320xf32, #tpu.memory_space<vmem>>, %arg2: memref<704x512xbf16, #tpu.memory_space<vmem>>, %arg3: memref<1536x128xbf16, #tpu.memory_space<vmem>>, %arg4: memref<31x512xf32, #tpu.memory_space<vmem>>, %arg5: memref<3xf32, #tpu.memory_space<smem>>, %arg6: memref<1408x512xbf16, #tpu.memory_space<any>>, %arg7: memref<4x128xf32, #tpu.memory_space<vmem>>, %arg8: memref<8x512xf32, #tpu.memory_space<vmem>>, %arg9: memref<1408x512xbf16, #tpu.memory_space<vmem>>, %arg10: memref<!tpu.dma_semaphore, #tpu.memory_space<semaphore_mem>>, %arg11: memref<16x128xf32, #tpu.memory_space<vmem>>) attributes {dimension_semantics = [], scalar_prefetch = 0 : i64, scratch_operands = 3 : i64, tpu.core_type = #tpu.core_type<tc>} {
    tpu.enqueue_dma source(%arg6 : memref<1408x512xbf16, #tpu.memory_space<any>>) target(%arg9 : memref<1408x512xbf16, #tpu.memory_space<vmem>>) target_semaphore(%arg10 : memref<!tpu.dma_semaphore, #tpu.memory_space<semaphore_mem>>)
    %c0 = arith.constant 0 : index
    %c0_0 = arith.constant 0 : index
    %0 = vector.load %arg0[%c0, %c0_0] : memref<56x16xf32, #tpu.memory_space<vmem>>, vector<16x16xf32>
    %c16 = arith.constant 16 : index
    %c0_1 = arith.constant 0 : index
    %1 = vector.load %arg0[%c16, %c0_1] : memref<56x16xf32, #tpu.memory_space<vmem>>, vector<16x16xf32>
    %c32 = arith.constant 32 : index
    %c0_2 = arith.constant 0 : index
    %2 = vector.load %arg0[%c32, %c0_2] : memref<56x16xf32, #tpu.memory_space<vmem>>, vector<16x16xf32>
    %cst = arith.constant 0.000000e+00 : f32
    %3 = vector.broadcast %cst : f32 to vector<16x16xf32>
    %4 = arith.cmpf ogt, %2, %3 : vector<16x16xf32>
    %c48 = arith.constant 48 : index
    %c0_3 = arith.constant 0 : index
    %5 = vector.load %arg0[%c48, %c0_3] : memref<56x16xf32, #tpu.memory_space<vmem>>, vector<8x16xf32>
    %c0_4 = arith.constant 0 : index
    %c0_5 = arith.constant 0 : index
    %6 = vector.load %arg1[%c0_4, %c0_5] : memref<16x320xf32, #tpu.memory_space<vmem>>, vector<16x320xf32>
    %c384 = arith.constant 384 : index
    %c0_6 = arith.constant 0 : index
    %7 = vector.load %arg2[%c384, %c0_6] : memref<704x512xbf16, #tpu.memory_space<vmem>>, vector<320x256xbf16>
    %8 = arith.truncf %6 : vector<16x320xf32> to vector<16x320xbf16>
    %cst_7 = arith.constant dense<0.000000e+00> : vector<16x256xf32>
    %9 = tpu.matmul %8, %7, %cst_7 {dimension_numbers = #tpu.dot_dimension_numbers<[1], [0], [0], [1], [0, 0, 1, 1], [], []>} : vector<16x320xbf16>, vector<320x256xbf16>, vector<16x256xf32> -> vector<16x256xf32>
    %c0_8 = arith.constant 0 : index
    %c0_9 = arith.constant 0 : index
    %10 = vector.load %arg4[%c0_8, %c0_9] : memref<31x512xf32, #tpu.memory_space<vmem>>, vector<1x256xf32>
    %11 = vector.broadcast %10 : vector<1x256xf32> to vector<16x256xf32>
    %12 = arith.addf %9, %11 : vector<16x256xf32>
    %cst_10 = arith.constant 0.000000e+00 : f32
    %13 = vector.broadcast %cst_10 : f32 to vector<16x256xf32>
    %14 = arith.maximumf %12, %13 : vector<16x256xf32>
    %c0_11 = arith.constant 0 : index
    %c0_12 = arith.constant 0 : index
    %15 = vector.load %arg2[%c0_11, %c0_12] : memref<704x512xbf16, #tpu.memory_space<vmem>>, vector<256x512xbf16>
    %16 = arith.truncf %14 : vector<16x256xf32> to vector<16x256xbf16>
    %cst_13 = arith.constant dense<0.000000e+00> : vector<16x512xf32>
    %17 = tpu.matmul %16, %15, %cst_13 {dimension_numbers = #tpu.dot_dimension_numbers<[1], [0], [0], [1], [0, 0, 1, 1], [], []>} : vector<16x256xbf16>, vector<256x512xbf16>, vector<16x512xf32> -> vector<16x512xf32>
    %18 = vector.extract_strided_slice %17 {offsets = [0, 0], sizes = [16, 128], strides = [1, 1]} : vector<16x512xf32> to vector<16x128xf32>
    %19 = vector.extract_strided_slice %17 {offsets = [0, 128], sizes = [16, 128], strides = [1, 1]} : vector<16x512xf32> to vector<16x128xf32>
    %20 = vector.extract_strided_slice %17 {offsets = [0, 256], sizes = [16, 128], strides = [1, 1]} : vector<16x512xf32> to vector<16x128xf32>
    %21 = vector.extract_strided_slice %17 {offsets = [0, 384], sizes = [16, 16], strides = [1, 1]} : vector<16x512xf32> to vector<16x16xf32>
    %22 = arith.truncf %0 : vector<16x16xf32> to vector<16x16xbf16>
    %23 = arith.truncf %18 : vector<16x128xf32> to vector<16x128xbf16>
    %cst_14 = arith.constant dense<0.000000e+00> : vector<16x128xf32>
    %24 = tpu.matmul %22, %23, %cst_14 {dimension_numbers = #tpu.dot_dimension_numbers<[1], [0], [0], [1], [0, 0, 1, 1], [], []>} : vector<16x16xbf16>, vector<16x128xbf16>, vector<16x128xf32> -> vector<16x128xf32>
    %c1 = arith.constant 1 : index
    %c0_15 = arith.constant 0 : index
    %25 = vector.load %arg4[%c1, %c0_15] : memref<31x512xf32, #tpu.memory_space<vmem>>, vector<1x128xf32>
    %26 = vector.broadcast %25 : vector<1x128xf32> to vector<16x128xf32>
    %27 = arith.addf %24, %26 : vector<16x128xf32>
    %c128 = arith.constant 128 : index
    %c0_16 = arith.constant 0 : index
    %28 = vector.load %arg3[%c128, %c0_16] : memref<1536x128xbf16, #tpu.memory_space<vmem>>, vector<128x128xbf16>
    %29 = arith.truncf %27 : vector<16x128xf32> to vector<16x128xbf16>
    %cst_17 = arith.constant dense<0.000000e+00> : vector<16x128xf32>
    %30 = tpu.matmul %29, %28, %cst_17 {dimension_numbers = #tpu.dot_dimension_numbers<[1], [0], [0], [1], [0, 0, 1, 1], [], []>} : vector<16x128xbf16>, vector<128x128xbf16>, vector<16x128xf32> -> vector<16x128xf32>
    %c3 = arith.constant 3 : index
    %c0_18 = arith.constant 0 : index
    %31 = vector.load %arg4[%c3, %c0_18] : memref<31x512xf32, #tpu.memory_space<vmem>>, vector<1x128xf32>
    %32 = vector.broadcast %31 : vector<1x128xf32> to vector<16x128xf32>
    %33 = arith.addf %30, %32 : vector<16x128xf32>
    %cst_19 = arith.constant 0.000000e+00 : f32
    %34 = vector.broadcast %cst_19 : f32 to vector<16x128xf32>
    %35 = arith.maximumf %33, %34 : vector<16x128xf32>
    %cst_20 = arith.constant dense<0.000000e+00> : vector<128xf32>
    %36 = vector.multi_reduction <add>, %35, %cst_20 [0] : vector<16x128xf32> to vector<128xf32>
    %37 = vector.shape_cast %36 : vector<128xf32> to vector<1x128xf32>
    %cst_21 = arith.constant 1.600000e+01 : f32
    %38 = vector.broadcast %cst_21 : f32 to vector<1x128xf32>
    %39 = arith.divf %37, %38 : vector<1x128xf32>
    %40 = vector.broadcast %39 : vector<1x128xf32> to vector<16x128xf32>
    %41 = arith.subf %35, %40 : vector<16x128xf32>
    %42 = arith.mulf %41, %41 : vector<16x128xf32>
    %cst_22 = arith.constant dense<0.000000e+00> : vector<128xf32>
    %43 = vector.multi_reduction <add>, %42, %cst_22 [0] : vector<16x128xf32> to vector<128xf32>
    %44 = vector.shape_cast %43 : vector<128xf32> to vector<1x128xf32>
    %cst_23 = arith.constant 1.600000e+01 : f32
    %45 = vector.broadcast %cst_23 : f32 to vector<1x128xf32>
    %46 = arith.divf %44, %45 : vector<1x128xf32>
    %c5 = arith.constant 5 : index
    %c0_24 = arith.constant 0 : index
    %47 = vector.load %arg4[%c5, %c0_24] : memref<31x512xf32, #tpu.memory_space<vmem>>, vector<1x128xf32>
    %48 = vector.broadcast %39 : vector<1x128xf32> to vector<16x128xf32>
    %49 = arith.subf %35, %48 : vector<16x128xf32>
    %50 = vector.broadcast %47 : vector<1x128xf32> to vector<16x128xf32>
    %51 = arith.mulf %50, %49 : vector<16x128xf32>
    %cst_25 = arith.constant 9.99999974E-6 : f32
    %52 = vector.broadcast %cst_25 : f32 to vector<1x128xf32>
    %53 = arith.addf %46, %52 : vector<1x128xf32>
    %54 = math.rsqrt %53 : vector<1x128xf32>
    %55 = vector.broadcast %54 : vector<1x128xf32> to vector<16x128xf32>
    %56 = arith.mulf %51, %55 : vector<16x128xf32>
    %c6 = arith.constant 6 : index
    %c0_26 = arith.constant 0 : index
    %57 = vector.load %arg4[%c6, %c0_26] : memref<31x512xf32, #tpu.memory_space<vmem>>, vector<1x128xf32>
    %58 = vector.broadcast %57 : vector<1x128xf32> to vector<16x128xf32>
    %59 = arith.addf %56, %58 : vector<16x128xf32>
    %c0_27 = arith.constant 0 : index
    %c0_28 = arith.constant 0 : index
    %60 = vector.load %arg3[%c0_27, %c0_28] : memref<1536x128xbf16, #tpu.memory_space<vmem>>, vector<128x128xbf16>
    %61 = arith.truncf %59 : vector<16x128xf32> to vector<16x128xbf16>
    %cst_29 = arith.constant dense<0.000000e+00> : vector<16x128xf32>
    %62 = tpu.matmul %61, %60, %cst_29 {dimension_numbers = #tpu.dot_dimension_numbers<[1], [0], [0], [1], [0, 0, 1, 1], [], []>} : vector<16x128xbf16>, vector<128x128xbf16>, vector<16x128xf32> -> vector<16x128xf32>
    %63 = arith.truncf %0 : vector<16x16xf32> to vector<16x16xbf16>
    %64 = arith.truncf %62 : vector<16x128xf32> to vector<16x128xbf16>
    %cst_30 = arith.constant dense<0.000000e+00> : vector<16x128xf32>
    %65 = tpu.matmul %63, %64, %cst_30 {dimension_numbers = #tpu.dot_dimension_numbers<[1], [0], [0], [1], [0, 0, 1, 1], [], []>} : vector<16x16xbf16>, vector<16x128xbf16>, vector<16x128xf32> -> vector<16x128xf32>
    %c2 = arith.constant 2 : index
    %c0_31 = arith.constant 0 : index
    %66 = vector.load %arg4[%c2, %c0_31] : memref<31x512xf32, #tpu.memory_space<vmem>>, vector<1x128xf32>
    %67 = vector.broadcast %66 : vector<1x128xf32> to vector<16x128xf32>
    %68 = arith.addf %65, %67 : vector<16x128xf32>
    %c256 = arith.constant 256 : index
    %c0_32 = arith.constant 0 : index
    %69 = vector.load %arg3[%c256, %c0_32] : memref<1536x128xbf16, #tpu.memory_space<vmem>>, vector<128x128xbf16>
    %70 = arith.truncf %68 : vector<16x128xf32> to vector<16x128xbf16>
    %cst_33 = arith.constant dense<0.000000e+00> : vector<16x128xf32>
    %71 = tpu.matmul %70, %69, %cst_33 {dimension_numbers = #tpu.dot_dimension_numbers<[1], [0], [0], [1], [0, 0, 1, 1], [], []>} : vector<16x128xbf16>, vector<128x128xbf16>, vector<16x128xf32> -> vector<16x128xf32>
    %c4 = arith.constant 4 : index
    %c0_34 = arith.constant 0 : index
    %72 = vector.load %arg4[%c4, %c0_34] : memref<31x512xf32, #tpu.memory_space<vmem>>, vector<1x128xf32>
    %73 = vector.broadcast %72 : vector<1x128xf32> to vector<16x128xf32>
    %74 = arith.addf %71, %73 : vector<16x128xf32>
    %cst_35 = arith.constant 0.000000e+00 : f32
    %75 = vector.broadcast %cst_35 : f32 to vector<16x128xf32>
    %76 = arith.maximumf %74, %75 : vector<16x128xf32>
    %cst_36 = arith.constant dense<0.000000e+00> : vector<128xf32>
    %77 = vector.multi_reduction <add>, %76, %cst_36 [0] : vector<16x128xf32> to vector<128xf32>
    %78 = vector.shape_cast %77 : vector<128xf32> to vector<1x128xf32>
    %cst_37 = arith.constant 1.600000e+01 : f32
    %79 = vector.broadcast %cst_37 : f32 to vector<1x128xf32>
    %80 = arith.divf %78, %79 : vector<1x128xf32>
    %81 = vector.broadcast %80 : vector<1x128xf32> to vector<16x128xf32>
    %82 = arith.subf %76, %81 : vector<16x128xf32>
    %83 = arith.mulf %82, %82 : vector<16x128xf32>
    %cst_38 = arith.constant dense<0.000000e+00> : vector<128xf32>
    %84 = vector.multi_reduction <add>, %83, %cst_38 [0] : vector<16x128xf32> to vector<128xf32>
    %85 = vector.shape_cast %84 : vector<128xf32> to vector<1x128xf32>
    %cst_39 = arith.constant 1.600000e+01 : f32
    %86 = vector.broadcast %cst_39 : f32 to vector<1x128xf32>
    %87 = arith.divf %85, %86 : vector<1x128xf32>
    %c7 = arith.constant 7 : index
    %c0_40 = arith.constant 0 : index
    %88 = vector.load %arg4[%c7, %c0_40] : memref<31x512xf32, #tpu.memory_space<vmem>>, vector<1x128xf32>
    %89 = vector.broadcast %80 : vector<1x128xf32> to vector<16x128xf32>
    %90 = arith.subf %76, %89 : vector<16x128xf32>
    %91 = vector.broadcast %88 : vector<1x128xf32> to vector<16x128xf32>
    %92 = arith.mulf %91, %90 : vector<16x128xf32>
    %cst_41 = arith.constant 9.99999974E-6 : f32
    %93 = vector.broadcast %cst_41 : f32 to vector<1x128xf32>
    %94 = arith.addf %87, %93 : vector<1x128xf32>
    %95 = math.rsqrt %94 : vector<1x128xf32>
    %96 = vector.broadcast %95 : vector<1x128xf32> to vector<16x128xf32>
    %97 = arith.mulf %92, %96 : vector<16x128xf32>
    %c8 = arith.constant 8 : index
    %c0_42 = arith.constant 0 : index
    %98 = vector.load %arg4[%c8, %c0_42] : memref<31x512xf32, #tpu.memory_space<vmem>>, vector<1x128xf32>
    %99 = vector.broadcast %98 : vector<1x128xf32> to vector<16x128xf32>
    %100 = arith.addf %97, %99 : vector<16x128xf32>
    %101 = arith.truncf %1 : vector<16x16xf32> to vector<16x16xbf16>
    %102 = arith.truncf %19 : vector<16x128xf32> to vector<16x128xbf16>
    %cst_43 = arith.constant dense<0.000000e+00> : vector<16x128xf32>
    %103 = tpu.matmul %101, %102, %cst_43 {dimension_numbers = #tpu.dot_dimension_numbers<[1], [0], [0], [1], [0, 0, 1, 1], [], []>} : vector<16x16xbf16>, vector<16x128xbf16>, vector<16x128xf32> -> vector<16x128xf32>
    %c10 = arith.constant 10 : index
    %c0_44 = arith.constant 0 : index
    %104 = vector.load %arg4[%c10, %c0_44] : memref<31x512xf32, #tpu.memory_space<vmem>>, vector<1x128xf32>
    %105 = vector.broadcast %104 : vector<1x128xf32> to vector<16x128xf32>
    %106 = arith.addf %103, %105 : vector<16x128xf32>
    %cst_45 = arith.constant 0.000000e+00 : f32
    %107 = vector.broadcast %cst_45 : f32 to vector<16x128xf32>
    %108 = arith.maximumf %106, %107 : vector<16x128xf32>
    %c384_46 = arith.constant 384 : index
    %c0_47 = arith.constant 0 : index
    %109 = vector.load %arg3[%c384_46, %c0_47] : memref<1536x128xbf16, #tpu.memory_space<vmem>>, vector<128x128xbf16>
    %110 = arith.truncf %108 : vector<16x128xf32> to vector<16x128xbf16>
    %cst_48 = arith.constant dense<0.000000e+00> : vector<16x128xf32>
    %111 = tpu.matmul %110, %109, %cst_48 {dimension_numbers = #tpu.dot_dimension_numbers<[1], [0], [0], [1], [0, 0, 1, 1], [], []>} : vector<16x128xbf16>, vector<128x128xbf16>, vector<16x128xf32> -> vector<16x128xf32>
    %c11 = arith.constant 11 : index
    %c0_49 = arith.constant 0 : index
    %112 = vector.load %arg4[%c11, %c0_49] : memref<31x512xf32, #tpu.memory_space<vmem>>, vector<1x128xf32>
    %113 = vector.broadcast %112 : vector<1x128xf32> to vector<16x128xf32>
    %114 = arith.addf %111, %113 : vector<16x128xf32>
    %cst_50 = arith.constant 0.000000e+00 : f32
    %115 = vector.broadcast %cst_50 : f32 to vector<16x128xf32>
    %116 = arith.maximumf %114, %115 : vector<16x128xf32>
    %cst_51 = arith.constant dense<0.000000e+00> : vector<128xf32>
    %117 = vector.multi_reduction <add>, %116, %cst_51 [0] : vector<16x128xf32> to vector<128xf32>
    %118 = vector.shape_cast %117 : vector<128xf32> to vector<1x128xf32>
    %cst_52 = arith.constant 1.600000e+01 : f32
    %119 = vector.broadcast %cst_52 : f32 to vector<1x128xf32>
    %120 = arith.divf %118, %119 : vector<1x128xf32>
    %121 = vector.broadcast %120 : vector<1x128xf32> to vector<16x128xf32>
    %122 = arith.subf %116, %121 : vector<16x128xf32>
    %123 = arith.mulf %122, %122 : vector<16x128xf32>
    %cst_53 = arith.constant dense<0.000000e+00> : vector<128xf32>
    %124 = vector.multi_reduction <add>, %123, %cst_53 [0] : vector<16x128xf32> to vector<128xf32>
    %125 = vector.shape_cast %124 : vector<128xf32> to vector<1x128xf32>
    %cst_54 = arith.constant 1.600000e+01 : f32
    %126 = vector.broadcast %cst_54 : f32 to vector<1x128xf32>
    %127 = arith.divf %125, %126 : vector<1x128xf32>
    %c12 = arith.constant 12 : index
    %c0_55 = arith.constant 0 : index
    %128 = vector.load %arg4[%c12, %c0_55] : memref<31x512xf32, #tpu.memory_space<vmem>>, vector<1x128xf32>
    %129 = vector.broadcast %120 : vector<1x128xf32> to vector<16x128xf32>
    %130 = arith.subf %116, %129 : vector<16x128xf32>
    %131 = vector.broadcast %128 : vector<1x128xf32> to vector<16x128xf32>
    %132 = arith.mulf %131, %130 : vector<16x128xf32>
    %cst_56 = arith.constant 9.99999974E-6 : f32
    %133 = vector.broadcast %cst_56 : f32 to vector<1x128xf32>
    %134 = arith.addf %127, %133 : vector<1x128xf32>
    %135 = math.rsqrt %134 : vector<1x128xf32>
    %136 = vector.broadcast %135 : vector<1x128xf32> to vector<16x128xf32>
    %137 = arith.mulf %132, %136 : vector<16x128xf32>
    %c13 = arith.constant 13 : index
    %c0_57 = arith.constant 0 : index
    %138 = vector.load %arg4[%c13, %c0_57] : memref<31x512xf32, #tpu.memory_space<vmem>>, vector<1x128xf32>
    %139 = vector.broadcast %138 : vector<1x128xf32> to vector<16x128xf32>
    %140 = arith.addf %137, %139 : vector<16x128xf32>
    %141 = arith.truncf %1 : vector<16x16xf32> to vector<16x16xbf16>
    %142 = arith.truncf %140 : vector<16x128xf32> to vector<16x128xbf16>
    %cst_58 = arith.constant dense<0.000000e+00> : vector<16x128xf32>
    %143 = tpu.matmul %141, %142, %cst_58 {dimension_numbers = #tpu.dot_dimension_numbers<[1], [0], [0], [1], [0, 0, 1, 1], [], []>} : vector<16x16xbf16>, vector<16x128xbf16>, vector<16x128xf32> -> vector<16x128xf32>
    %c512 = arith.constant 512 : index
    %c0_59 = arith.constant 0 : index
    %144 = vector.load %arg3[%c512, %c0_59] : memref<1536x128xbf16, #tpu.memory_space<vmem>>, vector<128x128xbf16>
    %145 = arith.truncf %143 : vector<16x128xf32> to vector<16x128xbf16>
    %cst_60 = arith.constant dense<0.000000e+00> : vector<16x128xf32>
    %146 = tpu.matmul %145, %144, %cst_60 {dimension_numbers = #tpu.dot_dimension_numbers<[1], [0], [0], [1], [0, 0, 1, 1], [], []>} : vector<16x128xbf16>, vector<128x128xbf16>, vector<16x128xf32> -> vector<16x128xf32>
    %c14 = arith.constant 14 : index
    %c0_61 = arith.constant 0 : index
    %147 = vector.load %arg4[%c14, %c0_61] : memref<31x512xf32, #tpu.memory_space<vmem>>, vector<1x128xf32>
    %148 = vector.broadcast %147 : vector<1x128xf32> to vector<16x128xf32>
    %149 = arith.addf %146, %148 : vector<16x128xf32>
    %cst_62 = arith.constant 0.000000e+00 : f32
    %150 = vector.broadcast %cst_62 : f32 to vector<16x128xf32>
    %151 = arith.maximumf %149, %150 : vector<16x128xf32>
    %c640 = arith.constant 640 : index
    %c0_63 = arith.constant 0 : index
    %152 = vector.load %arg3[%c640, %c0_63] : memref<1536x128xbf16, #tpu.memory_space<vmem>>, vector<128x128xbf16>
    %153 = arith.truncf %151 : vector<16x128xf32> to vector<16x128xbf16>
    %cst_64 = arith.constant dense<0.000000e+00> : vector<16x128xf32>
    %154 = tpu.matmul %153, %152, %cst_64 {dimension_numbers = #tpu.dot_dimension_numbers<[1], [0], [0], [1], [0, 0, 1, 1], [], []>} : vector<16x128xbf16>, vector<128x128xbf16>, vector<16x128xf32> -> vector<16x128xf32>
    %c15 = arith.constant 15 : index
    %c0_65 = arith.constant 0 : index
    %155 = vector.load %arg4[%c15, %c0_65] : memref<31x512xf32, #tpu.memory_space<vmem>>, vector<1x128xf32>
    %156 = vector.broadcast %155 : vector<1x128xf32> to vector<16x128xf32>
    %157 = arith.addf %154, %156 : vector<16x128xf32>
    %cst_66 = arith.constant 0.000000e+00 : f32
    %158 = vector.broadcast %cst_66 : f32 to vector<16x128xf32>
    %159 = arith.maximumf %157, %158 : vector<16x128xf32>
    %cst_67 = arith.constant dense<0.000000e+00> : vector<128xf32>
    %160 = vector.multi_reduction <add>, %159, %cst_67 [0] : vector<16x128xf32> to vector<128xf32>
    %161 = vector.shape_cast %160 : vector<128xf32> to vector<1x128xf32>
    %cst_68 = arith.constant 1.600000e+01 : f32
    %162 = vector.broadcast %cst_68 : f32 to vector<1x128xf32>
    %163 = arith.divf %161, %162 : vector<1x128xf32>
    %164 = vector.broadcast %163 : vector<1x128xf32> to vector<16x128xf32>
    %165 = arith.subf %159, %164 : vector<16x128xf32>
    %166 = arith.mulf %165, %165 : vector<16x128xf32>
    %cst_69 = arith.constant dense<0.000000e+00> : vector<128xf32>
    %167 = vector.multi_reduction <add>, %166, %cst_69 [0] : vector<16x128xf32> to vector<128xf32>
    %168 = vector.shape_cast %167 : vector<128xf32> to vector<1x128xf32>
    %cst_70 = arith.constant 1.600000e+01 : f32
    %169 = vector.broadcast %cst_70 : f32 to vector<1x128xf32>
    %170 = arith.divf %168, %169 : vector<1x128xf32>
    %c16_71 = arith.constant 16 : index
    %c0_72 = arith.constant 0 : index
    %171 = vector.load %arg4[%c16_71, %c0_72] : memref<31x512xf32, #tpu.memory_space<vmem>>, vector<1x128xf32>
    %172 = vector.broadcast %163 : vector<1x128xf32> to vector<16x128xf32>
    %173 = arith.subf %159, %172 : vector<16x128xf32>
    %174 = vector.broadcast %171 : vector<1x128xf32> to vector<16x128xf32>
    %175 = arith.mulf %174, %173 : vector<16x128xf32>
    %cst_73 = arith.constant 9.99999974E-6 : f32
    %176 = vector.broadcast %cst_73 : f32 to vector<1x128xf32>
    %177 = arith.addf %170, %176 : vector<1x128xf32>
    %178 = math.rsqrt %177 : vector<1x128xf32>
    %179 = vector.broadcast %178 : vector<1x128xf32> to vector<16x128xf32>
    %180 = arith.mulf %175, %179 : vector<16x128xf32>
    %c17 = arith.constant 17 : index
    %c0_74 = arith.constant 0 : index
    %181 = vector.load %arg4[%c17, %c0_74] : memref<31x512xf32, #tpu.memory_space<vmem>>, vector<1x128xf32>
    %182 = vector.broadcast %181 : vector<1x128xf32> to vector<16x128xf32>
    %183 = arith.addf %180, %182 : vector<16x128xf32>
    %184 = vector.extract_strided_slice %21 {offsets = [0, 0], sizes = [16, 8], strides = [1, 1]} : vector<16x16xf32> to vector<16x8xf32>
    %185 = tpu.transpose %184, [1, 0] : vector<16x8xf32> -> vector<8x16xf32>
    %186 = vector.extract_strided_slice %185 {offsets = [0, 0], sizes = [1, 16], strides = [1, 1]} : vector<8x16xf32> to vector<1x16xf32>
    %187 = vector.extract_strided_slice %21 {offsets = [0, 8], sizes = [16, 1], strides = [1, 1]} : vector<16x16xf32> to vector<16x1xf32>
    %188 = vector.broadcast %187 : vector<16x1xf32> to vector<16x16xf32>
    %189 = vector.broadcast %186 : vector<1x16xf32> to vector<16x16xf32>
    %190 = arith.addf %188, %189 : vector<16x16xf32>
    %cst_75 = arith.constant 0.000000e+00 : f32
    %191 = vector.broadcast %cst_75 : f32 to vector<16x16xf32>
    %192 = arith.cmpf oge, %190, %191 : vector<16x16xf32>
    %cst_76 = arith.constant 2.000000e-01 : f32
    %193 = vector.broadcast %cst_76 : f32 to vector<16x16xf32>
    %194 = arith.mulf %193, %190 : vector<16x16xf32>
    %195 = arith.select %192, %190, %194 : vector<16x16xi1>, vector<16x16xf32>
    %cst_77 = arith.constant -1.000000e+30 : f32
    %196 = vector.broadcast %cst_77 : f32 to vector<16x16xf32>
    %197 = arith.select %4, %195, %196 : vector<16x16xi1>, vector<16x16xf32>
    %cst_78 = arith.constant dense<0xFF800000> : vector<16xf32>
    %198 = vector.multi_reduction <maximumf>, %197, %cst_78 [1] : vector<16x16xf32> to vector<16xf32>
    %199 = vector.shape_cast %198 : vector<16xf32> to vector<16x1xf32>
    %200 = vector.broadcast %199 : vector<16x1xf32> to vector<16x16xf32>
    %201 = arith.subf %197, %200 : vector<16x16xf32>
    %202 = math.exp %201 : vector<16x16xf32>
    %cst_79 = arith.constant dense<0.000000e+00> : vector<16xf32>
    %203 = vector.multi_reduction <add>, %202, %cst_79 [1] : vector<16x16xf32> to vector<16xf32>
    %204 = vector.shape_cast %203 : vector<16xf32> to vector<16x1xf32>
    %205 = tpu.reciprocal %204 {approx = true} : vector<16x1xf32> -> vector<16x1xf32>
    %206 = vector.broadcast %205 : vector<16x1xf32> to vector<16x16xf32>
    %207 = arith.mulf %202, %206 : vector<16x16xf32>
    %208 = vector.extract_strided_slice %20 {offsets = [0, 0], sizes = [16, 16], strides = [1, 1]} : vector<16x128xf32> to vector<16x16xf32>
    %209 = arith.truncf %207 : vector<16x16xf32> to vector<16x16xbf16>
    %210 = arith.truncf %208 : vector<16x16xf32> to vector<16x16xbf16>
    %cst_80 = arith.constant dense<0.000000e+00> : vector<16x16xf32>
    %211 = tpu.matmul %209, %210, %cst_80 {dimension_numbers = #tpu.dot_dimension_numbers<[1], [0], [0], [1], [0, 0, 1, 1], [], []>} : vector<16x16xbf16>, vector<16x16xbf16>, vector<16x16xf32> -> vector<16x16xf32>
    %c0_81 = arith.constant 0 : index
    %c0_82 = arith.constant 0 : index
    %212 = vector.load %arg11[%c0_81, %c0_82] : memref<16x128xf32, #tpu.memory_space<vmem>>, vector<16x16xf32>
    tpu.vector_store %arg11[%c0_81, %c0_82], %211 {strides = array<i32>} : memref<16x128xf32, #tpu.memory_space<vmem>>, vector<16x16xf32>,
    %213 = vector.extract_strided_slice %185 {offsets = [1, 0], sizes = [1, 16], strides = [1, 1]} : vector<8x16xf32> to vector<1x16xf32>
    %214 = vector.extract_strided_slice %21 {offsets = [0, 9], sizes = [16, 1], strides = [1, 1]} : vector<16x16xf32> to vector<16x1xf32>
    %215 = vector.broadcast %214 : vector<16x1xf32> to vector<16x16xf32>
    %216 = vector.broadcast %213 : vector<1x16xf32> to vector<16x16xf32>
    %217 = arith.addf %215, %216 : vector<16x16xf32>
    %cst_83 = arith.constant 0.000000e+00 : f32
    %218 = vector.broadcast %cst_83 : f32 to vector<16x16xf32>
    %219 = arith.cmpf oge, %217, %218 : vector<16x16xf32>
    %cst_84 = arith.constant 2.000000e-01 : f32
    %220 = vector.broadcast %cst_84 : f32 to vector<16x16xf32>
    %221 = arith.mulf %220, %217 : vector<16x16xf32>
    %222 = arith.select %219, %217, %221 : vector<16x16xi1>, vector<16x16xf32>
    %cst_85 = arith.constant -1.000000e+30 : f32
    %223 = vector.broadcast %cst_85 : f32 to vector<16x16xf32>
    %224 = arith.select %4, %222, %223 : vector<16x16xi1>, vector<16x16xf32>
    %cst_86 = arith.constant dense<0xFF800000> : vector<16xf32>
    %225 = vector.multi_reduction <maximumf>, %224, %cst_86 [1] : vector<16x16xf32> to vector<16xf32>
    %226 = vector.shape_cast %225 : vector<16xf32> to vector<16x1xf32>
    %227 = vector.broadcast %226 : vector<16x1xf32> to vector<16x16xf32>
    %228 = arith.subf %224, %227 : vector<16x16xf32>
    %229 = math.exp %228 : vector<16x16xf32>
    %cst_87 = arith.constant dense<0.000000e+00> : vector<16xf32>
    %230 = vector.multi_reduction <add>, %229, %cst_87 [1] : vector<16x16xf32> to vector<16xf32>
    %231 = vector.shape_cast %230 : vector<16xf32> to vector<16x1xf32>
    %232 = tpu.reciprocal %231 {approx = true} : vector<16x1xf32> -> vector<16x1xf32>
    %233 = vector.broadcast %232 : vector<16x1xf32> to vector<16x16xf32>
    %234 = arith.mulf %229, %233 : vector<16x16xf32>
    %235 = vector.extract_strided_slice %20 {offsets = [0, 16], sizes = [16, 16], strides = [1, 1]} : vector<16x128xf32> to vector<16x16xf32>
    %236 = arith.truncf %234 : vector<16x16xf32> to vector<16x16xbf16>
    %237 = arith.truncf %235 : vector<16x16xf32> to vector<16x16xbf16>
    %cst_88 = arith.constant dense<0.000000e+00> : vector<16x16xf32>
    %238 = tpu.matmul %236, %237, %cst_88 {dimension_numbers = #tpu.dot_dimension_numbers<[1], [0], [0], [1], [0, 0, 1, 1], [], []>} : vector<16x16xbf16>, vector<16x16xbf16>, vector<16x16xf32> -> vector<16x16xf32>
    %c0_89 = arith.constant 0 : index
    %c16_90 = arith.constant 16 : index
    %239 = vector.load %arg11[%c0_89, %c16_90] : memref<16x128xf32, #tpu.memory_space<vmem>>, vector<16x16xf32>
    tpu.vector_store %arg11[%c0_89, %c16_90], %238 {strides = array<i32>} : memref<16x128xf32, #tpu.memory_space<vmem>>, vector<16x16xf32>,
    %240 = vector.extract_strided_slice %185 {offsets = [2, 0], sizes = [1, 16], strides = [1, 1]} : vector<8x16xf32> to vector<1x16xf32>
    %241 = vector.extract_strided_slice %21 {offsets = [0, 10], sizes = [16, 1], strides = [1, 1]} : vector<16x16xf32> to vector<16x1xf32>
    %242 = vector.broadcast %241 : vector<16x1xf32> to vector<16x16xf32>
    %243 = vector.broadcast %240 : vector<1x16xf32> to vector<16x16xf32>
    %244 = arith.addf %242, %243 : vector<16x16xf32>
    %cst_91 = arith.constant 0.000000e+00 : f32
    %245 = vector.broadcast %cst_91 : f32 to vector<16x16xf32>
    %246 = arith.cmpf oge, %244, %245 : vector<16x16xf32>
    %cst_92 = arith.constant 2.000000e-01 : f32
    %247 = vector.broadcast %cst_92 : f32 to vector<16x16xf32>
    %248 = arith.mulf %247, %244 : vector<16x16xf32>
    %249 = arith.select %246, %244, %248 : vector<16x16xi1>, vector<16x16xf32>
    %cst_93 = arith.constant -1.000000e+30 : f32
    %250 = vector.broadcast %cst_93 : f32 to vector<16x16xf32>
    %251 = arith.select %4, %249, %250 : vector<16x16xi1>, vector<16x16xf32>
    %cst_94 = arith.constant dense<0xFF800000> : vector<16xf32>
    %252 = vector.multi_reduction <maximumf>, %251, %cst_94 [1] : vector<16x16xf32> to vector<16xf32>
    %253 = vector.shape_cast %252 : vector<16xf32> to vector<16x1xf32>
    %254 = vector.broadcast %253 : vector<16x1xf32> to vector<16x16xf32>
    %255 = arith.subf %251, %254 : vector<16x16xf32>
    %256 = math.exp %255 : vector<16x16xf32>
    %cst_95 = arith.constant dense<0.000000e+00> : vector<16xf32>
    %257 = vector.multi_reduction <add>, %256, %cst_95 [1] : vector<16x16xf32> to vector<16xf32>
    %258 = vector.shape_cast %257 : vector<16xf32> to vector<16x1xf32>
    %259 = tpu.reciprocal %258 {approx = true} : vector<16x1xf32> -> vector<16x1xf32>
    %260 = vector.broadcast %259 : vector<16x1xf32> to vector<16x16xf32>
    %261 = arith.mulf %256, %260 : vector<16x16xf32>
    %262 = vector.extract_strided_slice %20 {offsets = [0, 32], sizes = [16, 16], strides = [1, 1]} : vector<16x128xf32> to vector<16x16xf32>
    %263 = arith.truncf %261 : vector<16x16xf32> to vector<16x16xbf16>
    %264 = arith.truncf %262 : vector<16x16xf32> to vector<16x16xbf16>
    %cst_96 = arith.constant dense<0.000000e+00> : vector<16x16xf32>
    %265 = tpu.matmul %263, %264, %cst_96 {dimension_numbers = #tpu.dot_dimension_numbers<[1], [0], [0], [1], [0, 0, 1, 1], [], []>} : vector<16x16xbf16>, vector<16x16xbf16>, vector<16x16xf32> -> vector<16x16xf32>
    %c0_97 = arith.constant 0 : index
    %c32_98 = arith.constant 32 : index
    %266 = vector.load %arg11[%c0_97, %c32_98] : memref<16x128xf32, #tpu.memory_space<vmem>>, vector<16x16xf32>
    tpu.vector_store %arg11[%c0_97, %c32_98], %265 {strides = array<i32>} : memref<16x128xf32, #tpu.memory_space<vmem>>, vector<16x16xf32>,
    %267 = vector.extract_strided_slice %185 {offsets = [3, 0], sizes = [1, 16], strides = [1, 1]} : vector<8x16xf32> to vector<1x16xf32>
    %268 = vector.extract_strided_slice %21 {offsets = [0, 11], sizes = [16, 1], strides = [1, 1]} : vector<16x16xf32> to vector<16x1xf32>
    %269 = vector.broadcast %268 : vector<16x1xf32> to vector<16x16xf32>
    %270 = vector.broadcast %267 : vector<1x16xf32> to vector<16x16xf32>
    %271 = arith.addf %269, %270 : vector<16x16xf32>
    %cst_99 = arith.constant 0.000000e+00 : f32
    %272 = vector.broadcast %cst_99 : f32 to vector<16x16xf32>
    %273 = arith.cmpf oge, %271, %272 : vector<16x16xf32>
    %cst_100 = arith.constant 2.000000e-01 : f32
    %274 = vector.broadcast %cst_100 : f32 to vector<16x16xf32>
    %275 = arith.mulf %274, %271 : vector<16x16xf32>
    %276 = arith.select %273, %271, %275 : vector<16x16xi1>, vector<16x16xf32>
    %cst_101 = arith.constant -1.000000e+30 : f32
    %277 = vector.broadcast %cst_101 : f32 to vector<16x16xf32>
    %278 = arith.select %4, %276, %277 : vector<16x16xi1>, vector<16x16xf32>
    %cst_102 = arith.constant dense<0xFF800000> : vector<16xf32>
    %279 = vector.multi_reduction <maximumf>, %278, %cst_102 [1] : vector<16x16xf32> to vector<16xf32>
    %280 = vector.shape_cast %279 : vector<16xf32> to vector<16x1xf32>
    %281 = vector.broadcast %280 : vector<16x1xf32> to vector<16x16xf32>
    %282 = arith.subf %278, %281 : vector<16x16xf32>
    %283 = math.exp %282 : vector<16x16xf32>
    %cst_103 = arith.constant dense<0.000000e+00> : vector<16xf32>
    %284 = vector.multi_reduction <add>, %283, %cst_103 [1] : vector<16x16xf32> to vector<16xf32>
    %285 = vector.shape_cast %284 : vector<16xf32> to vector<16x1xf32>
    %286 = tpu.reciprocal %285 {approx = true} : vector<16x1xf32> -> vector<16x1xf32>
    %287 = vector.broadcast %286 : vector<16x1xf32> to vector<16x16xf32>
    %288 = arith.mulf %283, %287 : vector<16x16xf32>
    %289 = vector.extract_strided_slice %20 {offsets = [0, 48], sizes = [16, 16], strides = [1, 1]} : vector<16x128xf32> to vector<16x16xf32>
    %290 = arith.truncf %288 : vector<16x16xf32> to vector<16x16xbf16>
    %291 = arith.truncf %289 : vector<16x16xf32> to vector<16x16xbf16>
    %cst_104 = arith.constant dense<0.000000e+00> : vector<16x16xf32>
    %292 = tpu.matmul %290, %291, %cst_104 {dimension_numbers = #tpu.dot_dimension_numbers<[1], [0], [0], [1], [0, 0, 1, 1], [], []>} : vector<16x16xbf16>, vector<16x16xbf16>, vector<16x16xf32> -> vector<16x16xf32>
    %c0_105 = arith.constant 0 : index
    %c48_106 = arith.constant 48 : index
    %293 = vector.load %arg11[%c0_105, %c48_106] : memref<16x128xf32, #tpu.memory_space<vmem>>, vector<16x16xf32>
    tpu.vector_store %arg11[%c0_105, %c48_106], %292 {strides = array<i32>} : memref<16x128xf32, #tpu.memory_space<vmem>>, vector<16x16xf32>,
    %294 = vector.extract_strided_slice %185 {offsets = [4, 0], sizes = [1, 16], strides = [1, 1]} : vector<8x16xf32> to vector<1x16xf32>
    %295 = vector.extract_strided_slice %21 {offsets = [0, 12], sizes = [16, 1], strides = [1, 1]} : vector<16x16xf32> to vector<16x1xf32>
    %296 = vector.broadcast %295 : vector<16x1xf32> to vector<16x16xf32>
    %297 = vector.broadcast %294 : vector<1x16xf32> to vector<16x16xf32>
    %298 = arith.addf %296, %297 : vector<16x16xf32>
    %cst_107 = arith.constant 0.000000e+00 : f32
    %299 = vector.broadcast %cst_107 : f32 to vector<16x16xf32>
    %300 = arith.cmpf oge, %298, %299 : vector<16x16xf32>
    %cst_108 = arith.constant 2.000000e-01 : f32
    %301 = vector.broadcast %cst_108 : f32 to vector<16x16xf32>
    %302 = arith.mulf %301, %298 : vector<16x16xf32>
    %303 = arith.select %300, %298, %302 : vector<16x16xi1>, vector<16x16xf32>
    %cst_109 = arith.constant -1.000000e+30 : f32
    %304 = vector.broadcast %cst_109 : f32 to vector<16x16xf32>
    %305 = arith.select %4, %303, %304 : vector<16x16xi1>, vector<16x16xf32>
    %cst_110 = arith.constant dense<0xFF800000> : vector<16xf32>
    %306 = vector.multi_reduction <maximumf>, %305, %cst_110 [1] : vector<16x16xf32> to vector<16xf32>
    %307 = vector.shape_cast %306 : vector<16xf32> to vector<16x1xf32>
    %308 = vector.broadcast %307 : vector<16x1xf32> to vector<16x16xf32>
    %309 = arith.subf %305, %308 : vector<16x16xf32>
    %310 = math.exp %309 : vector<16x16xf32>
    %cst_111 = arith.constant dense<0.000000e+00> : vector<16xf32>
    %311 = vector.multi_reduction <add>, %310, %cst_111 [1] : vector<16x16xf32> to vector<16xf32>
    %312 = vector.shape_cast %311 : vector<16xf32> to vector<16x1xf32>
    %313 = tpu.reciprocal %312 {approx = true} : vector<16x1xf32> -> vector<16x1xf32>
    %314 = vector.broadcast %313 : vector<16x1xf32> to vector<16x16xf32>
    %315 = arith.mulf %310, %314 : vector<16x16xf32>
    %316 = vector.extract_strided_slice %20 {offsets = [0, 64], sizes = [16, 16], strides = [1, 1]} : vector<16x128xf32> to vector<16x16xf32>
    %317 = arith.truncf %315 : vector<16x16xf32> to vector<16x16xbf16>
    %318 = arith.truncf %316 : vector<16x16xf32> to vector<16x16xbf16>
    %cst_112 = arith.constant dense<0.000000e+00> : vector<16x16xf32>
    %319 = tpu.matmul %317, %318, %cst_112 {dimension_numbers = #tpu.dot_dimension_numbers<[1], [0], [0], [1], [0, 0, 1, 1], [], []>} : vector<16x16xbf16>, vector<16x16xbf16>, vector<16x16xf32> -> vector<16x16xf32>
    %c0_113 = arith.constant 0 : index
    %c64 = arith.constant 64 : index
    %320 = vector.load %arg11[%c0_113, %c64] : memref<16x128xf32, #tpu.memory_space<vmem>>, vector<16x16xf32>
    tpu.vector_store %arg11[%c0_113, %c64], %319 {strides = array<i32>} : memref<16x128xf32, #tpu.memory_space<vmem>>, vector<16x16xf32>,
    %321 = vector.extract_strided_slice %185 {offsets = [5, 0], sizes = [1, 16], strides = [1, 1]} : vector<8x16xf32> to vector<1x16xf32>
    %322 = vector.extract_strided_slice %21 {offsets = [0, 13], sizes = [16, 1], strides = [1, 1]} : vector<16x16xf32> to vector<16x1xf32>
    %323 = vector.broadcast %322 : vector<16x1xf32> to vector<16x16xf32>
    %324 = vector.broadcast %321 : vector<1x16xf32> to vector<16x16xf32>
    %325 = arith.addf %323, %324 : vector<16x16xf32>
    %cst_114 = arith.constant 0.000000e+00 : f32
    %326 = vector.broadcast %cst_114 : f32 to vector<16x16xf32>
    %327 = arith.cmpf oge, %325, %326 : vector<16x16xf32>
    %cst_115 = arith.constant 2.000000e-01 : f32
    %328 = vector.broadcast %cst_115 : f32 to vector<16x16xf32>
    %329 = arith.mulf %328, %325 : vector<16x16xf32>
    %330 = arith.select %327, %325, %329 : vector<16x16xi1>, vector<16x16xf32>
    %cst_116 = arith.constant -1.000000e+30 : f32
    %331 = vector.broadcast %cst_116 : f32 to vector<16x16xf32>
    %332 = arith.select %4, %330, %331 : vector<16x16xi1>, vector<16x16xf32>
    %cst_117 = arith.constant dense<0xFF800000> : vector<16xf32>
    %333 = vector.multi_reduction <maximumf>, %332, %cst_117 [1] : vector<16x16xf32> to vector<16xf32>
    %334 = vector.shape_cast %333 : vector<16xf32> to vector<16x1xf32>
    %335 = vector.broadcast %334 : vector<16x1xf32> to vector<16x16xf32>
    %336 = arith.subf %332, %335 : vector<16x16xf32>
    %337 = math.exp %336 : vector<16x16xf32>
    %cst_118 = arith.constant dense<0.000000e+00> : vector<16xf32>
    %338 = vector.multi_reduction <add>, %337, %cst_118 [1] : vector<16x16xf32> to vector<16xf32>
    %339 = vector.shape_cast %338 : vector<16xf32> to vector<16x1xf32>
    %340 = tpu.reciprocal %339 {approx = true} : vector<16x1xf32> -> vector<16x1xf32>
    %341 = vector.broadcast %340 : vector<16x1xf32> to vector<16x16xf32>
    %342 = arith.mulf %337, %341 : vector<16x16xf32>
    %343 = vector.extract_strided_slice %20 {offsets = [0, 80], sizes = [16, 16], strides = [1, 1]} : vector<16x128xf32> to vector<16x16xf32>
    %344 = arith.truncf %342 : vector<16x16xf32> to vector<16x16xbf16>
    %345 = arith.truncf %343 : vector<16x16xf32> to vector<16x16xbf16>
    %cst_119 = arith.constant dense<0.000000e+00> : vector<16x16xf32>
    %346 = tpu.matmul %344, %345, %cst_119 {dimension_numbers = #tpu.dot_dimension_numbers<[1], [0], [0], [1], [0, 0, 1, 1], [], []>} : vector<16x16xbf16>, vector<16x16xbf16>, vector<16x16xf32> -> vector<16x16xf32>
    %c0_120 = arith.constant 0 : index
    %c80 = arith.constant 80 : index
    %347 = vector.load %arg11[%c0_120, %c80] : memref<16x128xf32, #tpu.memory_space<vmem>>, vector<16x16xf32>
    tpu.vector_store %arg11[%c0_120, %c80], %346 {strides = array<i32>} : memref<16x128xf32, #tpu.memory_space<vmem>>, vector<16x16xf32>,
    %348 = vector.extract_strided_slice %185 {offsets = [6, 0], sizes = [1, 16], strides = [1, 1]} : vector<8x16xf32> to vector<1x16xf32>
    %349 = vector.extract_strided_slice %21 {offsets = [0, 14], sizes = [16, 1], strides = [1, 1]} : vector<16x16xf32> to vector<16x1xf32>
    %350 = vector.broadcast %349 : vector<16x1xf32> to vector<16x16xf32>
    %351 = vector.broadcast %348 : vector<1x16xf32> to vector<16x16xf32>
    %352 = arith.addf %350, %351 : vector<16x16xf32>
    %cst_121 = arith.constant 0.000000e+00 : f32
    %353 = vector.broadcast %cst_121 : f32 to vector<16x16xf32>
    %354 = arith.cmpf oge, %352, %353 : vector<16x16xf32>
    %cst_122 = arith.constant 2.000000e-01 : f32
    %355 = vector.broadcast %cst_122 : f32 to vector<16x16xf32>
    %356 = arith.mulf %355, %352 : vector<16x16xf32>
    %357 = arith.select %354, %352, %356 : vector<16x16xi1>, vector<16x16xf32>
    %cst_123 = arith.constant -1.000000e+30 : f32
    %358 = vector.broadcast %cst_123 : f32 to vector<16x16xf32>
    %359 = arith.select %4, %357, %358 : vector<16x16xi1>, vector<16x16xf32>
    %cst_124 = arith.constant dense<0xFF800000> : vector<16xf32>
    %360 = vector.multi_reduction <maximumf>, %359, %cst_124 [1] : vector<16x16xf32> to vector<16xf32>
    %361 = vector.shape_cast %360 : vector<16xf32> to vector<16x1xf32>
    %362 = vector.broadcast %361 : vector<16x1xf32> to vector<16x16xf32>
    %363 = arith.subf %359, %362 : vector<16x16xf32>
    %364 = math.exp %363 : vector<16x16xf32>
    %cst_125 = arith.constant dense<0.000000e+00> : vector<16xf32>
    %365 = vector.multi_reduction <add>, %364, %cst_125 [1] : vector<16x16xf32> to vector<16xf32>
    %366 = vector.shape_cast %365 : vector<16xf32> to vector<16x1xf32>
    %367 = tpu.reciprocal %366 {approx = true} : vector<16x1xf32> -> vector<16x1xf32>
    %368 = vector.broadcast %367 : vector<16x1xf32> to vector<16x16xf32>
    %369 = arith.mulf %364, %368 : vector<16x16xf32>
    %370 = vector.extract_strided_slice %20 {offsets = [0, 96], sizes = [16, 16], strides = [1, 1]} : vector<16x128xf32> to vector<16x16xf32>
    %371 = arith.truncf %369 : vector<16x16xf32> to vector<16x16xbf16>
    %372 = arith.truncf %370 : vector<16x16xf32> to vector<16x16xbf16>
    %cst_126 = arith.constant dense<0.000000e+00> : vector<16x16xf32>
    %373 = tpu.matmul %371, %372, %cst_126 {dimension_numbers = #tpu.dot_dimension_numbers<[1], [0], [0], [1], [0, 0, 1, 1], [], []>} : vector<16x16xbf16>, vector<16x16xbf16>, vector<16x16xf32> -> vector<16x16xf32>
    %c0_127 = arith.constant 0 : index
    %c96 = arith.constant 96 : index
    %374 = vector.load %arg11[%c0_127, %c96] : memref<16x128xf32, #tpu.memory_space<vmem>>, vector<16x16xf32>
    tpu.vector_store %arg11[%c0_127, %c96], %373 {strides = array<i32>} : memref<16x128xf32, #tpu.memory_space<vmem>>, vector<16x16xf32>,
    %375 = vector.extract_strided_slice %185 {offsets = [7, 0], sizes = [1, 16], strides = [1, 1]} : vector<8x16xf32> to vector<1x16xf32>
    %376 = vector.extract_strided_slice %21 {offsets = [0, 15], sizes = [16, 1], strides = [1, 1]} : vector<16x16xf32> to vector<16x1xf32>
    %377 = vector.broadcast %376 : vector<16x1xf32> to vector<16x16xf32>
    %378 = vector.broadcast %375 : vector<1x16xf32> to vector<16x16xf32>
    %379 = arith.addf %377, %378 : vector<16x16xf32>
    %cst_128 = arith.constant 0.000000e+00 : f32
    %380 = vector.broadcast %cst_128 : f32 to vector<16x16xf32>
    %381 = arith.cmpf oge, %379, %380 : vector<16x16xf32>
    %cst_129 = arith.constant 2.000000e-01 : f32
    %382 = vector.broadcast %cst_129 : f32 to vector<16x16xf32>
    %383 = arith.mulf %382, %379 : vector<16x16xf32>
    %384 = arith.select %381, %379, %383 : vector<16x16xi1>, vector<16x16xf32>
    %cst_130 = arith.constant -1.000000e+30 : f32
    %385 = vector.broadcast %cst_130 : f32 to vector<16x16xf32>
    %386 = arith.select %4, %384, %385 : vector<16x16xi1>, vector<16x16xf32>
    %cst_131 = arith.constant dense<0xFF800000> : vector<16xf32>
    %387 = vector.multi_reduction <maximumf>, %386, %cst_131 [1] : vector<16x16xf32> to vector<16xf32>
    %388 = vector.shape_cast %387 : vector<16xf32> to vector<16x1xf32>
    %389 = vector.broadcast %388 : vector<16x1xf32> to vector<16x16xf32>
    %390 = arith.subf %386, %389 : vector<16x16xf32>
    %391 = math.exp %390 : vector<16x16xf32>
    %cst_132 = arith.constant dense<0.000000e+00> : vector<16xf32>
    %392 = vector.multi_reduction <add>, %391, %cst_132 [1] : vector<16x16xf32> to vector<16xf32>
    %393 = vector.shape_cast %392 : vector<16xf32> to vector<16x1xf32>
    %394 = tpu.reciprocal %393 {approx = true} : vector<16x1xf32> -> vector<16x1xf32>
    %395 = vector.broadcast %394 : vector<16x1xf32> to vector<16x16xf32>
    %396 = arith.mulf %391, %395 : vector<16x16xf32>
    %397 = vector.extract_strided_slice %20 {offsets = [0, 112], sizes = [16, 16], strides = [1, 1]} : vector<16x128xf32> to vector<16x16xf32>
    %398 = arith.truncf %396 : vector<16x16xf32> to vector<16x16xbf16>
    %399 = arith.truncf %397 : vector<16x16xf32> to vector<16x16xbf16>
    %cst_133 = arith.constant dense<0.000000e+00> : vector<16x16xf32>
    %400 = tpu.matmul %398, %399, %cst_133 {dimension_numbers = #tpu.dot_dimension_numbers<[1], [0], [0], [1], [0, 0, 1, 1], [], []>} : vector<16x16xbf16>, vector<16x16xbf16>, vector<16x16xf32> -> vector<16x16xf32>
    %c0_134 = arith.constant 0 : index
    %c112 = arith.constant 112 : index
    %401 = vector.load %arg11[%c0_134, %c112] : memref<16x128xf32, #tpu.memory_space<vmem>>, vector<16x16xf32>
    tpu.vector_store %arg11[%c0_134, %c112], %400 {strides = array<i32>} : memref<16x128xf32, #tpu.memory_space<vmem>>, vector<16x16xf32>,
    %c0_135 = arith.constant 0 : index
    %c0_136 = arith.constant 0 : index
    %402 = vector.load %arg11[%c0_135, %c0_136] : memref<16x128xf32, #tpu.memory_space<vmem>>, vector<16x128xf32>
    %c19 = arith.constant 19 : index
    %c0_137 = arith.constant 0 : index
    %403 = vector.load %arg4[%c19, %c0_137] : memref<31x512xf32, #tpu.memory_space<vmem>>, vector<1x128xf32>
    %404 = vector.broadcast %403 : vector<1x128xf32> to vector<16x128xf32>
    %405 = arith.addf %402, %404 : vector<16x128xf32>
    %c768 = arith.constant 768 : index
    %c0_138 = arith.constant 0 : index
    %406 = vector.load %arg3[%c768, %c0_138] : memref<1536x128xbf16, #tpu.memory_space<vmem>>, vector<128x128xbf16>
    %407 = arith.truncf %405 : vector<16x128xf32> to vector<16x128xbf16>
    %cst_139 = arith.constant dense<0.000000e+00> : vector<16x128xf32>
    %408 = tpu.matmul %407, %406, %cst_139 {dimension_numbers = #tpu.dot_dimension_numbers<[1], [0], [0], [1], [0, 0, 1, 1], [], []>} : vector<16x128xbf16>, vector<128x128xbf16>, vector<16x128xf32> -> vector<16x128xf32>
    %c21 = arith.constant 21 : index
    %c0_140 = arith.constant 0 : index
    %409 = vector.load %arg4[%c21, %c0_140] : memref<31x512xf32, #tpu.memory_space<vmem>>, vector<1x128xf32>
    %410 = vector.broadcast %409 : vector<1x128xf32> to vector<16x128xf32>
    %411 = arith.addf %408, %410 : vector<16x128xf32>
    %cst_141 = arith.constant 0.000000e+00 : f32
    %412 = vector.broadcast %cst_141 : f32 to vector<16x128xf32>
    %413 = arith.maximumf %411, %412 : vector<16x128xf32>
    %cst_142 = arith.constant dense<0.000000e+00> : vector<128xf32>
    %414 = vector.multi_reduction <add>, %413, %cst_142 [0] : vector<16x128xf32> to vector<128xf32>
    %415 = vector.shape_cast %414 : vector<128xf32> to vector<1x128xf32>
    %cst_143 = arith.constant 1.600000e+01 : f32
    %416 = vector.broadcast %cst_143 : f32 to vector<1x128xf32>
    %417 = arith.divf %415, %416 : vector<1x128xf32>
    %418 = vector.broadcast %417 : vector<1x128xf32> to vector<16x128xf32>
    %419 = arith.subf %413, %418 : vector<16x128xf32>
    %420 = arith.mulf %419, %419 : vector<16x128xf32>
    %cst_144 = arith.constant dense<0.000000e+00> : vector<128xf32>
    %421 = vector.multi_reduction <add>, %420, %cst_144 [0] : vector<16x128xf32> to vector<128xf32>
    %422 = vector.shape_cast %421 : vector<128xf32> to vector<1x128xf32>
    %cst_145 = arith.constant 1.600000e+01 : f32
    %423 = vector.broadcast %cst_145 : f32 to vector<1x128xf32>
    %424 = arith.divf %422, %423 : vector<1x128xf32>
    %c23 = arith.constant 23 : index
    %c0_146 = arith.constant 0 : index
    %425 = vector.load %arg4[%c23, %c0_146] : memref<31x512xf32, #tpu.memory_space<vmem>>, vector<1x128xf32>
    %426 = vector.broadcast %417 : vector<1x128xf32> to vector<16x128xf32>
    %427 = arith.subf %413, %426 : vector<16x128xf32>
    %428 = vector.broadcast %425 : vector<1x128xf32> to vector<16x128xf32>
    %429 = arith.mulf %428, %427 : vector<16x128xf32>
    %cst_147 = arith.constant 9.99999974E-6 : f32
    %430 = vector.broadcast %cst_147 : f32 to vector<1x128xf32>
    %431 = arith.addf %424, %430 : vector<1x128xf32>
    %432 = math.rsqrt %431 : vector<1x128xf32>
    %433 = vector.broadcast %432 : vector<1x128xf32> to vector<16x128xf32>
    %434 = arith.mulf %429, %433 : vector<16x128xf32>
    %c24 = arith.constant 24 : index
    %c0_148 = arith.constant 0 : index
    %435 = vector.load %arg4[%c24, %c0_148] : memref<31x512xf32, #tpu.memory_space<vmem>>, vector<1x128xf32>
    %436 = vector.broadcast %435 : vector<1x128xf32> to vector<16x128xf32>
    %437 = arith.addf %434, %436 : vector<16x128xf32>
    %c256_149 = arith.constant 256 : index
    %c0_150 = arith.constant 0 : index
    %438 = vector.load %arg2[%c256_149, %c0_150] : memref<704x512xbf16, #tpu.memory_space<vmem>>, vector<128x256xbf16>
    %439 = arith.truncf %437 : vector<16x128xf32> to vector<16x128xbf16>
    %cst_151 = arith.constant dense<0.000000e+00> : vector<16x256xf32>
    %440 = tpu.matmul %439, %438, %cst_151 {dimension_numbers = #tpu.dot_dimension_numbers<[1], [0], [0], [1], [0, 0, 1, 1], [], []>} : vector<16x128xbf16>, vector<128x256xbf16>, vector<16x256xf32> -> vector<16x256xf32>
    %441 = vector.extract_strided_slice %440 {offsets = [0, 128], sizes = [16, 1], strides = [1, 1]} : vector<16x256xf32> to vector<16x1xf32>
    %442 = tpu.transpose %441, [1, 0] : vector<16x1xf32> -> vector<1x16xf32>
    %443 = vector.extract_strided_slice %440 {offsets = [0, 129], sizes = [16, 1], strides = [1, 1]} : vector<16x256xf32> to vector<16x1xf32>
    %444 = vector.broadcast %443 : vector<16x1xf32> to vector<16x16xf32>
    %445 = vector.broadcast %442 : vector<1x16xf32> to vector<16x16xf32>
    %446 = arith.addf %444, %445 : vector<16x16xf32>
    %cst_152 = arith.constant 0.000000e+00 : f32
    %447 = vector.broadcast %cst_152 : f32 to vector<16x16xf32>
    %448 = arith.cmpf oge, %446, %447 : vector<16x16xf32>
    %cst_153 = arith.constant 2.000000e-01 : f32
    %449 = vector.broadcast %cst_153 : f32 to vector<16x16xf32>
    %450 = arith.mulf %449, %446 : vector<16x16xf32>
    %451 = arith.select %448, %446, %450 : vector<16x16xi1>, vector<16x16xf32>
    %cst_154 = arith.constant -1.000000e+30 : f32
    %452 = vector.broadcast %cst_154 : f32 to vector<16x16xf32>
    %453 = arith.select %4, %451, %452 : vector<16x16xi1>, vector<16x16xf32>
    %cst_155 = arith.constant dense<0xFF800000> : vector<16xf32>
    %454 = vector.multi_reduction <maximumf>, %453, %cst_155 [1] : vector<16x16xf32> to vector<16xf32>
    %455 = vector.shape_cast %454 : vector<16xf32> to vector<16x1xf32>
    %456 = vector.broadcast %455 : vector<16x1xf32> to vector<16x16xf32>
    %457 = arith.subf %453, %456 : vector<16x16xf32>
    %458 = math.exp %457 : vector<16x16xf32>
    %cst_156 = arith.constant dense<0.000000e+00> : vector<16xf32>
    %459 = vector.multi_reduction <add>, %458, %cst_156 [1] : vector<16x16xf32> to vector<16xf32>
    %460 = vector.shape_cast %459 : vector<16xf32> to vector<16x1xf32>
    %461 = tpu.reciprocal %460 {approx = true} : vector<16x1xf32> -> vector<16x1xf32>
    %462 = vector.broadcast %461 : vector<16x1xf32> to vector<16x16xf32>
    %463 = arith.mulf %458, %462 : vector<16x16xf32>
    %464 = vector.extract_strided_slice %440 {offsets = [0, 0], sizes = [16, 128], strides = [1, 1]} : vector<16x256xf32> to vector<16x128xf32>
    %465 = arith.truncf %463 : vector<16x16xf32> to vector<16x16xbf16>
    %466 = arith.truncf %464 : vector<16x128xf32> to vector<16x128xbf16>
    %cst_157 = arith.constant dense<0.000000e+00> : vector<16x128xf32>
    %467 = tpu.matmul %465, %466, %cst_157 {dimension_numbers = #tpu.dot_dimension_numbers<[1], [0], [0], [1], [0, 0, 1, 1], [], []>} : vector<16x16xbf16>, vector<16x128xbf16>, vector<16x128xf32> -> vector<16x128xf32>
    %c20 = arith.constant 20 : index
    %c0_158 = arith.constant 0 : index
    %468 = vector.load %arg4[%c20, %c0_158] : memref<31x512xf32, #tpu.memory_space<vmem>>, vector<1x128xf32>
    %469 = vector.broadcast %468 : vector<1x128xf32> to vector<16x128xf32>
    %470 = arith.addf %467, %469 : vector<16x128xf32>
    %c896 = arith.constant 896 : index
    %c0_159 = arith.constant 0 : index
    %471 = vector.load %arg3[%c896, %c0_159] : memref<1536x128xbf16, #tpu.memory_space<vmem>>, vector<128x128xbf16>
    %472 = arith.truncf %470 : vector<16x128xf32> to vector<16x128xbf16>
    %cst_160 = arith.constant dense<0.000000e+00> : vector<16x128xf32>
    %473 = tpu.matmul %472, %471, %cst_160 {dimension_numbers = #tpu.dot_dimension_numbers<[1], [0], [0], [1], [0, 0, 1, 1], [], []>} : vector<16x128xbf16>, vector<128x128xbf16>, vector<16x128xf32> -> vector<16x128xf32>
    %c22 = arith.constant 22 : index
    %c0_161 = arith.constant 0 : index
    %474 = vector.load %arg4[%c22, %c0_161] : memref<31x512xf32, #tpu.memory_space<vmem>>, vector<1x128xf32>
    %475 = vector.broadcast %474 : vector<1x128xf32> to vector<16x128xf32>
    %476 = arith.addf %473, %475 : vector<16x128xf32>
    %cst_162 = arith.constant 0.000000e+00 : f32
    %477 = vector.broadcast %cst_162 : f32 to vector<16x128xf32>
    %478 = arith.maximumf %476, %477 : vector<16x128xf32>
    %cst_163 = arith.constant dense<0.000000e+00> : vector<128xf32>
    %479 = vector.multi_reduction <add>, %478, %cst_163 [0] : vector<16x128xf32> to vector<128xf32>
    %480 = vector.shape_cast %479 : vector<128xf32> to vector<1x128xf32>
    %cst_164 = arith.constant 1.600000e+01 : f32
    %481 = vector.broadcast %cst_164 : f32 to vector<1x128xf32>
    %482 = arith.divf %480, %481 : vector<1x128xf32>
    %483 = vector.broadcast %482 : vector<1x128xf32> to vector<16x128xf32>
    %484 = arith.subf %478, %483 : vector<16x128xf32>
    %485 = arith.mulf %484, %484 : vector<16x128xf32>
    %cst_165 = arith.constant dense<0.000000e+00> : vector<128xf32>
    %486 = vector.multi_reduction <add>, %485, %cst_165 [0] : vector<16x128xf32> to vector<128xf32>
    %487 = vector.shape_cast %486 : vector<128xf32> to vector<1x128xf32>
    %cst_166 = arith.constant 1.600000e+01 : f32
    %488 = vector.broadcast %cst_166 : f32 to vector<1x128xf32>
    %489 = arith.divf %487, %488 : vector<1x128xf32>
    %c25 = arith.constant 25 : index
    %c0_167 = arith.constant 0 : index
    %490 = vector.load %arg4[%c25, %c0_167] : memref<31x512xf32, #tpu.memory_space<vmem>>, vector<1x128xf32>
    %491 = vector.broadcast %482 : vector<1x128xf32> to vector<16x128xf32>
    %492 = arith.subf %478, %491 : vector<16x128xf32>
    %493 = vector.broadcast %490 : vector<1x128xf32> to vector<16x128xf32>
    %494 = arith.mulf %493, %492 : vector<16x128xf32>
    %cst_168 = arith.constant 9.99999974E-6 : f32
    %495 = vector.broadcast %cst_168 : f32 to vector<1x128xf32>
    %496 = arith.addf %489, %495 : vector<1x128xf32>
    %497 = math.rsqrt %496 : vector<1x128xf32>
    %498 = vector.broadcast %497 : vector<1x128xf32> to vector<16x128xf32>
    %499 = arith.mulf %494, %498 : vector<16x128xf32>
    %c26 = arith.constant 26 : index
    %c0_169 = arith.constant 0 : index
    %500 = vector.load %arg4[%c26, %c0_169] : memref<31x512xf32, #tpu.memory_space<vmem>>, vector<1x128xf32>
    %501 = vector.broadcast %500 : vector<1x128xf32> to vector<16x128xf32>
    %502 = arith.addf %499, %501 : vector<16x128xf32>
    tpu.wait_dma2 semaphore(%arg10 : memref<!tpu.dma_semaphore, #tpu.memory_space<semaphore_mem>>) src(%arg6 : memref<1408x512xbf16, #tpu.memory_space<any>>) dst(%arg9 : memref<1408x512xbf16, #tpu.memory_space<vmem>>)
    %c0_170 = arith.constant 0 : index
    %c0_171 = arith.constant 0 : index
    %503 = vector.load %arg9[%c0_170, %c0_171] : memref<1408x512xbf16, #tpu.memory_space<vmem>>, vector<128x512xbf16>
    %504 = arith.truncf %100 : vector<16x128xf32> to vector<16x128xbf16>
    %cst_172 = arith.constant dense<0.000000e+00> : vector<16x512xf32>
    %505 = tpu.matmul %504, %503, %cst_172 {dimension_numbers = #tpu.dot_dimension_numbers<[1], [0], [0], [1], [0, 0, 1, 1], [], []>} : vector<16x128xbf16>, vector<128x512xbf16>, vector<16x512xf32> -> vector<16x512xf32>
    %c9 = arith.constant 9 : index
    %c0_173 = arith.constant 0 : index
    %506 = vector.load %arg4[%c9, %c0_173] : memref<31x512xf32, #tpu.memory_space<vmem>>, vector<1x512xf32>
    %507 = vector.broadcast %506 : vector<1x512xf32> to vector<16x512xf32>
    %508 = arith.addf %505, %507 : vector<16x512xf32>
    %cst_174 = arith.constant 0.000000e+00 : f32
    %509 = vector.broadcast %cst_174 : f32 to vector<16x512xf32>
    %510 = arith.maximumf %508, %509 : vector<16x512xf32>
    %c128_175 = arith.constant 128 : index
    %c0_176 = arith.constant 0 : index
    %511 = vector.load %arg9[%c128_175, %c0_176] : memref<1408x512xbf16, #tpu.memory_space<vmem>>, vector<128x512xbf16>
    %512 = arith.truncf %183 : vector<16x128xf32> to vector<16x128xbf16>
    %cst_177 = arith.constant dense<0.000000e+00> : vector<16x512xf32>
    %513 = tpu.matmul %512, %511, %cst_177 {dimension_numbers = #tpu.dot_dimension_numbers<[1], [0], [0], [1], [0, 0, 1, 1], [], []>} : vector<16x128xbf16>, vector<128x512xbf16>, vector<16x512xf32> -> vector<16x512xf32>
    %c18 = arith.constant 18 : index
    %c0_178 = arith.constant 0 : index
    %514 = vector.load %arg4[%c18, %c0_178] : memref<31x512xf32, #tpu.memory_space<vmem>>, vector<1x512xf32>
    %515 = vector.broadcast %514 : vector<1x512xf32> to vector<16x512xf32>
    %516 = arith.addf %513, %515 : vector<16x512xf32>
    %cst_179 = arith.constant 0.000000e+00 : f32
    %517 = vector.broadcast %cst_179 : f32 to vector<16x512xf32>
    %518 = arith.maximumf %516, %517 : vector<16x512xf32>
    %c256_180 = arith.constant 256 : index
    %c0_181 = arith.constant 0 : index
    %519 = vector.load %arg9[%c256_180, %c0_181] : memref<1408x512xbf16, #tpu.memory_space<vmem>>, vector<128x512xbf16>
    %520 = arith.truncf %502 : vector<16x128xf32> to vector<16x128xbf16>
    %cst_182 = arith.constant dense<0.000000e+00> : vector<16x512xf32>
    %521 = tpu.matmul %520, %519, %cst_182 {dimension_numbers = #tpu.dot_dimension_numbers<[1], [0], [0], [1], [0, 0, 1, 1], [], []>} : vector<16x128xbf16>, vector<128x512xbf16>, vector<16x512xf32> -> vector<16x512xf32>
    %c27 = arith.constant 27 : index
    %c0_183 = arith.constant 0 : index
    %522 = vector.load %arg4[%c27, %c0_183] : memref<31x512xf32, #tpu.memory_space<vmem>>, vector<1x512xf32>
    %523 = vector.broadcast %522 : vector<1x512xf32> to vector<16x512xf32>
    %524 = arith.addf %521, %523 : vector<16x512xf32>
    %cst_184 = arith.constant 0.000000e+00 : f32
    %525 = vector.broadcast %cst_184 : f32 to vector<16x512xf32>
    %526 = arith.maximumf %524, %525 : vector<16x512xf32>
    %c0_185 = arith.constant 0 : index
    %527 = memref.load %arg5[%c0_185] : memref<3xf32, #tpu.memory_space<smem>>
    %528 = vector.broadcast %527 : f32 to vector<16x512xf32>
    %529 = arith.mulf %528, %510 : vector<16x512xf32>
    %c1_186 = arith.constant 1 : index
    %530 = memref.load %arg5[%c1_186] : memref<3xf32, #tpu.memory_space<smem>>
    %531 = vector.broadcast %530 : f32 to vector<16x512xf32>
    %532 = arith.mulf %531, %518 : vector<16x512xf32>
    %533 = arith.addf %529, %532 : vector<16x512xf32>
    %c2_187 = arith.constant 2 : index
    %534 = memref.load %arg5[%c2_187] : memref<3xf32, #tpu.memory_space<smem>>
    %535 = vector.broadcast %534 : f32 to vector<16x512xf32>
    %536 = arith.mulf %535, %526 : vector<16x512xf32>
    %537 = arith.addf %533, %536 : vector<16x512xf32>
    %cst_188 = arith.constant dense<0.000000e+00> : vector<512xf32>
    %538 = vector.multi_reduction <add>, %537, %cst_188 [0] : vector<16x512xf32> to vector<512xf32>
    %539 = vector.shape_cast %538 : vector<512xf32> to vector<1x512xf32>
    %cst_189 = arith.constant 1.600000e+01 : f32
    %540 = vector.broadcast %cst_189 : f32 to vector<1x512xf32>
    %541 = arith.divf %539, %540 : vector<1x512xf32>
    %542 = vector.broadcast %541 : vector<1x512xf32> to vector<16x512xf32>
    %543 = arith.subf %537, %542 : vector<16x512xf32>
    %544 = arith.mulf %543, %543 : vector<16x512xf32>
    %cst_190 = arith.constant dense<0.000000e+00> : vector<512xf32>
    %545 = vector.multi_reduction <add>, %544, %cst_190 [0] : vector<16x512xf32> to vector<512xf32>
    %546 = vector.shape_cast %545 : vector<512xf32> to vector<1x512xf32>
    %cst_191 = arith.constant 1.600000e+01 : f32
    %547 = vector.broadcast %cst_191 : f32 to vector<1x512xf32>
    %548 = arith.divf %546, %547 : vector<1x512xf32>
    %549 = vector.broadcast %541 : vector<1x512xf32> to vector<16x512xf32>
    %550 = arith.subf %537, %549 : vector<16x512xf32>
    %cst_192 = arith.constant 9.99999974E-6 : f32
    %551 = vector.broadcast %cst_192 : f32 to vector<1x512xf32>
    %552 = arith.addf %548, %551 : vector<1x512xf32>
    %553 = math.rsqrt %552 : vector<1x512xf32>
    %554 = vector.broadcast %553 : vector<1x512xf32> to vector<16x512xf32>
    %555 = arith.mulf %550, %554 : vector<16x512xf32>
    %c384_193 = arith.constant 384 : index
    %c0_194 = arith.constant 0 : index
    %556 = vector.load %arg9[%c384_193, %c0_194] : memref<1408x512xbf16, #tpu.memory_space<vmem>>, vector<512x512xbf16>
    %557 = arith.truncf %555 : vector<16x512xf32> to vector<16x512xbf16>
    %cst_195 = arith.constant dense<0.000000e+00> : vector<16x512xf32>
    %558 = tpu.matmul %557, %556, %cst_195 {dimension_numbers = #tpu.dot_dimension_numbers<[1], [0], [0], [1], [0, 0, 1, 1], [], []>} : vector<16x512xbf16>, vector<512x512xbf16>, vector<16x512xf32> -> vector<16x512xf32>
    %c28 = arith.constant 28 : index
    %c0_196 = arith.constant 0 : index
    %559 = vector.load %arg4[%c28, %c0_196] : memref<31x512xf32, #tpu.memory_space<vmem>>, vector<1x512xf32>
    %560 = vector.broadcast %559 : vector<1x512xf32> to vector<16x512xf32>
    %561 = arith.addf %558, %560 : vector<16x512xf32>
    %cst_197 = arith.constant 0.000000e+00 : f32
    %562 = vector.broadcast %cst_197 : f32 to vector<16x512xf32>
    %563 = arith.maximumf %561, %562 : vector<16x512xf32>
    %c896_198 = arith.constant 896 : index
    %c0_199 = arith.constant 0 : index
    %564 = vector.load %arg9[%c896_198, %c0_199] : memref<1408x512xbf16, #tpu.memory_space<vmem>>, vector<512x512xbf16>
    %565 = arith.truncf %563 : vector<16x512xf32> to vector<16x512xbf16>
    %cst_200 = arith.constant dense<0.000000e+00> : vector<16x512xf32>
    %566 = tpu.matmul %565, %564, %cst_200 {dimension_numbers = #tpu.dot_dimension_numbers<[1], [0], [0], [1], [0, 0, 1, 1], [], []>} : vector<16x512xbf16>, vector<512x512xbf16>, vector<16x512xf32> -> vector<16x512xf32>
    %c29 = arith.constant 29 : index
    %c0_201 = arith.constant 0 : index
    %567 = vector.load %arg4[%c29, %c0_201] : memref<31x512xf32, #tpu.memory_space<vmem>>, vector<1x512xf32>
    %568 = vector.broadcast %567 : vector<1x512xf32> to vector<16x512xf32>
    %569 = arith.addf %566, %568 : vector<16x512xf32>
    %570 = arith.truncf %5 : vector<8x16xf32> to vector<8x16xbf16>
    %571 = arith.truncf %569 : vector<16x512xf32> to vector<16x512xbf16>
    %cst_202 = arith.constant dense<0.000000e+00> : vector<8x512xf32>
    %572 = tpu.matmul %570, %571, %cst_202 {dimension_numbers = #tpu.dot_dimension_numbers<[1], [0], [0], [1], [0, 0, 1, 1], [], []>} : vector<8x16xbf16>, vector<16x512xbf16>, vector<8x512xf32> -> vector<8x512xf32>
    %c0_203 = arith.constant 0 : index
    %c0_204 = arith.constant 0 : index
    %573 = vector.load %arg8[%c0_203, %c0_204] : memref<8x512xf32, #tpu.memory_space<vmem>>, vector<8x512xf32>
    tpu.vector_store %arg8[%c0_203, %c0_204], %572 {strides = array<i32>} : memref<8x512xf32, #tpu.memory_space<vmem>>, vector<8x512xf32>,
    %574 = vector.extract_strided_slice %572 {offsets = [0, 0], sizes = [4, 512], strides = [1, 1]} : vector<8x512xf32> to vector<4x512xf32>
    %575 = vector.extract_strided_slice %572 {offsets = [4, 0], sizes = [4, 512], strides = [1, 1]} : vector<8x512xf32> to vector<4x512xf32>
    %576 = arith.mulf %574, %575 : vector<4x512xf32>
    %c1024 = arith.constant 1024 : index
    %c0_205 = arith.constant 0 : index
    %577 = vector.load %arg3[%c1024, %c0_205] : memref<1536x128xbf16, #tpu.memory_space<vmem>>, vector<512x128xbf16>
    %578 = arith.truncf %576 : vector<4x512xf32> to vector<4x512xbf16>
    %cst_206 = arith.constant dense<0.000000e+00> : vector<4x128xf32>
    %579 = tpu.matmul %578, %577, %cst_206 {dimension_numbers = #tpu.dot_dimension_numbers<[1], [0], [0], [1], [0, 0, 1, 1], [], []>} : vector<4x512xbf16>, vector<512x128xbf16>, vector<4x128xf32> -> vector<4x128xf32>
    %c30 = arith.constant 30 : index
    %c0_207 = arith.constant 0 : index
    %580 = vector.load %arg4[%c30, %c0_207] : memref<31x512xf32, #tpu.memory_space<vmem>>, vector<1x128xf32>
    %581 = vector.broadcast %580 : vector<1x128xf32> to vector<4x128xf32>
    %582 = arith.addf %579, %581 : vector<4x128xf32>
    %c0_208 = arith.constant 0 : index
    %c0_209 = arith.constant 0 : index
    %583 = vector.load %arg7[%c0_208, %c0_209] : memref<4x128xf32, #tpu.memory_space<vmem>>, vector<4x128xf32>
    tpu.vector_store %arg7[%c0_208, %c0_209], %582 {strides = array<i32>} : memref<4x128xf32, #tpu.memory_space<vmem>>, vector<4x128xf32>,
    return
  }
}

</mosaic_0001>

<llo_original>
// kernel: tpu_custom_call.1
$region0: #{tpu_custom_call.1}
  #allocation0 [shape = 'u32[]', space=smem, size = 0x4, offset = 0x4, fixed_abs, tag = 'smem constant byte address 0x4 - core index']
  #allocation1 [shape = 'u32[72,128]{1,0:T(1,128)}', space=vmem, size = 0x9000, scoped, tag = 'internal scratch']
  #allocation2 [shape = 'bf16[1408,512]{1,0:T(8,128)(2,1)}', space=vmem, size = 0x160000, scoped, tag = 'scratch operand']
  #allocation3 [shape = 's32[1]{0}', space=sflag, size = 0x4, scoped, tag = 'scratch operand']
  #allocation4 [shape = 'f32[16,128]{1,0:T(8,128)}', space=vmem, size = 0x2000, scoped, tag = 'scratch operand']
  #allocation18 [shape = 's32[]', space=sflag, size = 0x4, offset = 0, fixed_abs, tag = 'sflag constant byte address 0x0 - dummy sync flag']
  #allocation19 [shape = 's32[]', space=sflag, size = 0x4, offset = 0, fixed_abs, tag = 'sflag constant byte address 0x0 - dummy sync flag']
  #allocation20 [shape = 'u32[]', space=smem, size = 0x4, offset = 0x44, fixed_abs, tag = 'smem constant byte address 0x44 - assertion arg 0']
  #allocation21 [shape = 'u32[]', space=smem, size = 0x4, offset = 0x48, fixed_abs, tag = 'smem constant byte address 0x48 - assertion arg 1']
  %s0 = inlined_call_operand.vmem [shape: f32[56,16], index: 0, kind: input, shape index: {}]
  %s1 = inlined_call_operand.hbm [shape: f32[16,320], index: 1, kind: input, shape index: {}]
  %s2 = inlined_call_operand.hbm [shape: bf16[704,512], index: 2, kind: input, shape index: {}]
  %s3 = inlined_call_operand.hbm [shape: bf16[1536,128], index: 3, kind: input, shape index: {}]
  %s4 = inlined_call_operand.hbm [shape: f32[31,512], index: 4, kind: input, shape index: {}]
  %s5 = inlined_call_operand.hbm [shape: f32[3], index: 5, kind: input, shape index: {}]
  %s6 = inlined_call_operand.hbm [shape: bf16[1408,512], index: 6, kind: input, shape index: {}]
  %s7 = inlined_call_operand.hbm [shape: f32[4,128], index: 7, kind: output, shape index: {0}]
  %s8 = inlined_call_operand.hbm [shape: f32[8,512], index: 8, kind: output, shape index: {1}]
  %9 = xla_tuple %s7, %s8
  %s10 = sld [smem:[#allocation0]]
  $region66: #{tpu_custom_call.1} parent=0
    _
  %s12 = ssub.s32 1, %s10
  %s13 = scalar_select 0, %s12, %s10
  $region1: #{tpu_custom_call.1} parent=0
    #allocation5 [shape = 'u8[24576]{0}', space=vmem, size = 0x6000, scoped, tag = 'input window, operand 1, single buffered']
    #allocation6 [shape = 's32[1]{0}', space=sflag, size = 0x4, scoped, tag = 'scoped memory for tpu_custom_call.1']
    #allocation7 [shape = 's32[1]{0}', space=sflag, size = 0x4, scoped, tag = 'scoped memory for tpu_custom_call.1']
    #allocation8 [shape = 's32[1]{0}', space=sflag, size = 0x4, scoped, tag = 'scoped memory for tpu_custom_call.1']
    #allocation9 [shape = 'u8[720896]{0}', space=vmem, size = 0xb0000, scoped, tag = 'input window, operand 2, single buffered']
    #allocation10 [shape = 's32[1]{0}', space=sflag, size = 0x4, scoped, tag = 'scoped memory for tpu_custom_call.1']
    #allocation11 [shape = 'u8[393216]{0}', space=vmem, size = 0x60000, scoped, tag = 'input window, operand 3, single buffered']
    #allocation12 [shape = 'u8[65536]{0}', space=vmem, size = 0x10000, scoped, tag = 'input window, operand 4, single buffered']
    #allocation13 [shape = 's32[1]{0}', space=sflag, size = 0x4, scoped, tag = 'scoped memory for tpu_custom_call.1']
    #allocation14 [shape = 'u8[512]{0}', space=smem, size = 0x200, scoped, tag = 'input window, operand 5, single buffered']
    #allocation15 [shape = 'u8[2048]{0}', space=vmem, size = 0x800, scoped, tag = 'output window, operand 0, single buffered']
    #allocation16 [shape = 'u8[16384]{0}', space=vmem, size = 0x4000, scoped, tag = 'output window, operand 1, single buffered']
    #allocation17 [shape = 's32[1]{0}', space=sflag, size = 0x4, scoped, tag = 'scoped memory for tpu_custom_call.1']
    %14 = vsyncpa [#allocation6], 0
    %15 = vsyncpa [#allocation10], 0
    %16 = vsyncpa [#allocation13], 0
    %17 = vsyncpa [#allocation8], 0
    %18 = vsyncpa [#allocation7], 0
    %19 = vsyncpa [#allocation17], 0
    // Predicated region
    $region2: #{tpu_custom_call.1} parent=1 // pred_check
      _
    $region3: #{tpu_custom_call.1} parent=1 // pred_check_branch
      %21 = sbr.rel (0) target = $region5
    $region4: #{tpu_custom_call.1} parent=1 // pred_region
      _
    $region5: #{tpu_custom_call.1} parent=1 // pred_fallthru
      _
    // Predicated region
    $region6: #{tpu_custom_call.1} parent=1 // pred_check
      _
    $region7: #{tpu_custom_call.1} parent=1 // pred_check_branch
      %23 = sbr.rel (0) target = $region9
    $region8: #{tpu_custom_call.1} parent=1 // pred_region
      %25 = vsyncadd [#allocation6], 0
      %s26 = sshll.u32 %s1, 4
      %s27 = int_to_ptr.hbm [resolvable:$true] %s26
      %s28 = sshll.u32 [#allocation5], 4
      %s29 = int_to_ptr.vmem [resolvable:$true] %s28
      %34 = dma.hbm_to_vmem [thread:$0]  %s27, 768, %s29, [#allocation6], 384, 384, 24
    $region9: #{tpu_custom_call.1} parent=1 // pred_fallthru
      _
    // Predicated region
    $region10: #{tpu_custom_call.1} parent=1 // pred_check
      _
    $region11: #{tpu_custom_call.1} parent=1 // pred_check_branch
      %36 = sbr.rel (0) target = $region13
    $region12: #{tpu_custom_call.1} parent=1 // pred_region
      %38 = vsyncadd [#allocation10], 0
      %s39 = sshll.u32 %s2, 4
      %s40 = int_to_ptr.hbm [resolvable:$true] %s39
      %s41 = sshll.u32 [#allocation9], 4
      %s42 = int_to_ptr.vmem [resolvable:$true] %s41
      %47 = dma.hbm_to_vmem [thread:$0]  %s40, 22528, %s42, [#allocation10], 256, 256, 16
    $region13: #{tpu_custom_call.1} parent=1 // pred_fallthru
      _
    // Predicated region
    $region14: #{tpu_custom_call.1} parent=1 // pred_check
      _
    $region15: #{tpu_custom_call.1} parent=1 // pred_check_branch
      %49 = sbr.rel (0) target = $region17
    $region16: #{tpu_custom_call.1} parent=1 // pred_region
      %51 = vsyncadd [#allocation10], 0
      %s52 = sshll.u32 %s3, 4
      %s53 = int_to_ptr.hbm [resolvable:$true] %s52
      %s54 = sshll.u32 [#allocation11], 4
      %s55 = int_to_ptr.vmem [resolvable:$true] %s54
      %60 = dma.hbm_to_vmem [thread:$0]  %s53, 12288, %s55, [#allocation10], 64, 64, 4
    $region17: #{tpu_custom_call.1} parent=1 // pred_fallthru
      _
    // Predicated region
    $region18: #{tpu_custom_call.1} parent=1 // pred_check
      _
    $region19: #{tpu_custom_call.1} parent=1 // pred_check_branch
      %62 = sbr.rel (0) target = $region21
    $region20: #{tpu_custom_call.1} parent=1 // pred_region
      %64 = vsyncadd [#allocation13], 0
      %s65 = sshll.u32 %s4, 4
      %s66 = int_to_ptr.hbm [resolvable:$true] %s65
      %s67 = sshll.u32 [#allocation12], 4
      %s68 = int_to_ptr.vmem [resolvable:$true] %s67
      %73 = dma.hbm_to_vmem [thread:$0]  %s66, 2048, %s68, [#allocation13], 512, 512, 32
    $region21: #{tpu_custom_call.1} parent=1 // pred_fallthru
      _
    // Predicated region
    $region22: #{tpu_custom_call.1} parent=1 // pred_check
      _
    $region23: #{tpu_custom_call.1} parent=1 // pred_check_branch
      %75 = sbr.rel (0) target = $region25
    $region24: #{tpu_custom_call.1} parent=1 // pred_region
      %77 = vsyncadd [#allocation8], 0
      %s79 = sshll.u32 %s5, 4
      %s80 = int_to_ptr.hbm [resolvable:$true] %s79
      %82 = dma.hbm_to_smem %s80, 16, [#allocation14], [#allocation8]
    $region25: #{tpu_custom_call.1} parent=1 // pred_fallthru
      _
    // Predicated region
    $region26: #{tpu_custom_call.1} parent=1 // pred_check
      _
    $region27: #{tpu_custom_call.1} parent=1 // pred_check_branch
      %84 = sbr.rel (0) target = $region29
    $region28: #{tpu_custom_call.1} parent=1 // pred_region
      %86 = dma.done [#allocation6], 768
    $region29: #{tpu_custom_call.1} parent=1 // pred_fallthru
      _
    // Predicated region
    $region30: #{tpu_custom_call.1} parent=1 // pred_check
      _
    $region31: #{tpu_custom_call.1} parent=1 // pred_check_branch
      %88 = sbr.rel (0) target = $region33
    $region32: #{tpu_custom_call.1} parent=1 // pred_region
      %90 = dma.done [#allocation10], 22528
    $region33: #{tpu_custom_call.1} parent=1 // pred_fallthru
      _
    // Predicated region
    $region34: #{tpu_custom_call.1} parent=1 // pred_check
      _
    $region35: #{tpu_custom_call.1} parent=1 // pred_check_branch
      %92 = sbr.rel (0) target = $region37
    $region36: #{tpu_custom_call.1} parent=1 // pred_region
      %94 = dma.done [#allocation10], 12288
    $region37: #{tpu_custom_call.1} parent=1 // pred_fallthru
      _
    // Predicated region
    $region38: #{tpu_custom_call.1} parent=1 // pred_check
      _
    $region39: #{tpu_custom_call.1} parent=1 // pred_check_branch
      %96 = sbr.rel (0) target = $region41
    $region40: #{tpu_custom_call.1} parent=1 // pred_region
      %98 = dma.done [#allocation13], 2048
    $region41: #{tpu_custom_call.1} parent=1 // pred_fallthru
      _
    // Predicated region
    $region42: #{tpu_custom_call.1} parent=1 // pred_check
      _
    $region43: #{tpu_custom_call.1} parent=1 // pred_check_branch
      %100 = sbr.rel (0) target = $region45
    $region44: #{tpu_custom_call.1} parent=1 // pred_region
      %102 = dma.done [#allocation8], 16
    $region45: #{tpu_custom_call.1} parent=1 // pred_fallthru
      _
    %103 = sfence
    // Predicated region
    $region46: #{tpu_custom_call.1} parent=1 // pred_check
      _
    $region47: #{tpu_custom_call.1} parent=1 // pred_check_branch
      %106 = sbr.rel target = $region49
    $region48: #{tpu_custom_call.1} parent=1 // pred_region
      %107 = sst [smem:[#allocation20]] [#allocation19]
      %108 = sst [smem:[#allocation21]] [#allocation18]
    $region49: #{tpu_custom_call.1} parent=1 // pred_fallthru
      _
    %110 = shalt.err (0)
    %s112 = sshll.u32 %s6, 4
    %s113 = int_to_ptr.hbm [resolvable:$true] %s112
    %s114 = sshll.u32 [#allocation2], 4
    %s115 = int_to_ptr.vmem [resolvable:$true] %s114
    %117 = dma.hbm_to_vmem [thread:$0]  %s113, 45056, %s115, [#allocation3]
    %v118 = vld [vmem:[%s0] sm:$0xff]
    %v119 = vld [vmem:[%s0 + $0x8] sm:$0xff]
    %v120 = vld [vmem:[%s0 + $0x10] sm:$0xff]
    %v121 = vld [vmem:[%s0 + $0x18] sm:$0xff]
    %v122 = vld [vmem:[%s0 + $0x20] sm:$0xff]
    %v123 = vld [vmem:[%s0 + $0x28] sm:$0xff]
    %vm124 = vcmp.gt.f32.partialorder %v122, 0.0
    %vm125 = vcmp.gt.f32.partialorder %v123, 0.0
    %v126 = vld [vmem:[%s0 + $0x30] sm:$0xff]
    %v127 = vld [vmem:[#allocation5] sm:$0xff]
    %v128 = vld [vmem:[#allocation5 + $0x8] sm:$0xff]
    %v129 = vld [vmem:[#allocation5 + $0x10] sm:$0xff]
    %v130 = vld [vmem:[#allocation5 + $0x18] sm:$0xff]
    %v131 = vld [vmem:[#allocation5 + $0x20] sm:$0xff]
    %v132 = vld [vmem:[#allocation5 + $0x28] sm:$0xff]
    %v133 = vld [vmem:[#allocation9 + $0x300] sm:$0xff]
    %v134 = vld [vmem:[#allocation9 + $0x310] sm:$0xff]
    %v135 = vld [vmem:[#allocation9 + $0x320] sm:$0xff]
    %v136 = vld [vmem:[#allocation9 + $0x330] sm:$0xff]
    %v137 = vld [vmem:[#allocation9 + $0x340] sm:$0xff]
    %v138 = vld [vmem:[#allocation9 + $0x350] sm:$0xff]
    %v139 = vld [vmem:[#allocation9 + $0x360] sm:$0xff]
    %v140 = vld [vmem:[#allocation9 + $0x370] sm:$0xff]
    %v141 = vld [vmem:[#allocation9 + $0x380] sm:$0xff]
    %v142 = vld [vmem:[#allocation9 + $0x390] sm:$0xff]
    %v143 = vld [vmem:[#allocation9 + $0x3a0] sm:$0xff]
    %v144 = vld [vmem:[#allocation9 + $0x3b0] sm:$0xff]
    %v145 = vld [vmem:[#allocation9 + $0x3c0] sm:$0xff]
    %v146 = vld [vmem:[#allocation9 + $0x3d0] sm:$0xff]
    %v147 = vld [vmem:[#allocation9 + $0x3e0] sm:$0xff]
    %v148 = vld [vmem:[#allocation9 + $0x3f0] sm:$0xff]
    %v149 = vld [vmem:[#allocation9 + $0x400] sm:$0xff]
    %v150 = vld [vmem:[#allocation9 + $0x410] sm:$0xff]
    %v151 = vld [vmem:[#allocation9 + $0x420] sm:$0xff]
    %v152 = vld [vmem:[#allocation9 + $0x430] sm:$0xff]
    %v153 = vld [vmem:[#allocation9 + $0x440] sm:$0xff]
    %v154 = vld [vmem:[#allocation9 + $0x450] sm:$0xff]
    %v155 = vld [vmem:[#allocation9 + $0x460] sm:$0xff]
    %v156 = vld [vmem:[#allocation9 + $0x470] sm:$0xff]
    %v157 = vld [vmem:[#allocation9 + $0x480] sm:$0xff]
    %v158 = vld [vmem:[#allocation9 + $0x490] sm:$0xff]
    %v159 = vld [vmem:[#allocation9 + $0x4a0] sm:$0xff]
    %v160 = vld [vmem:[#allocation9 + $0x4b0] sm:$0xff]
    %v161 = vld [vmem:[#allocation9 + $0x4c0] sm:$0xff]
    %v162 = vld [vmem:[#allocation9 + $0x4d0] sm:$0xff]
    %v163 = vld [vmem:[#allocation9 + $0x4e0] sm:$0xff]
    %v164 = vld [vmem:[#allocation9 + $0x4f0] sm:$0xff]
    %v165 = vld [vmem:[#allocation9 + $0x500] sm:$0xff]
    %v166 = vld [vmem:[#allocation9 + $0x510] sm:$0xff]
    %v167 = vld [vmem:[#allocation9 + $0x520] sm:$0xff]
    %v168 = vld [vmem:[#allocation9 + $0x530] sm:$0xff]
    %v169 = vld [vmem:[#allocation9 + $0x540] sm:$0xff]
    %v170 = vld [vmem:[#allocation9 + $0x550] sm:$0xff]
    %v171 = vld [vmem:[#allocation9 + $0x560] sm:$0xff]
    %v172 = vld [vmem:[#allocation9 + $0x570] sm:$0xff]
    %v173 = vpack.c.bf16 %v130, %v127
    %v174 = vpack.c.bf16 %v131, %v128
    %v175 = vpack.c.bf16 %v132, %v129
    %v176 = vld [vmem:[#allocation12] ss:$8 sm:$0x3]
    %v178 = vperm.slane %v176, 0
    %v179 = vperm.slane %v176, 1
    %v222 = vunpack.c.l.b16 %v133
    %v223 = vunpack.c.h.b16 %v133
    %v224 = vunpack.c.l.b16 %v134
    %v225 = vunpack.c.h.b16 %v134
    %v226 = vunpack.c.l.b16 %v135
    %v227 = vunpack.c.h.b16 %v135
    %v228 = vunpack.c.l.b16 %v136
    %v229 = vunpack.c.h.b16 %v136
    %v230 = vunpack.c.l.b16 %v137
    %v231 = vunpack.c.h.b16 %v137
    %v232 = vunpack.c.l.b16 %v138
    %v233 = vunpack.c.h.b16 %v138
    %v234 = vunpack.c.l.b16 %v139
    %v235 = vunpack.c.h.b16 %v139
    %v236 = vunpack.c.l.b16 %v140
    %v237 = vunpack.c.h.b16 %v140
    %v238 = vunpack.c.l.b16 %v141
    %v239 = vunpack.c.h.b16 %v141
    %v240 = vunpack.c.l.b16 %v142
    %v241 = vunpack.c.h.b16 %v142
    %v242 = vunpack.c.l.b16 %v143
    %v243 = vunpack.c.h.b16 %v143
    %v244 = vunpack.c.l.b16 %v144
    %v245 = vunpack.c.h.b16 %v144
    %v246 = vunpack.c.l.b16 %v145
    %v247 = vunpack.c.h.b16 %v145
    %v248 = vunpack.c.l.b16 %v146
    %v249 = vunpack.c.h.b16 %v146
    %v250 = vunpack.c.l.b16 %v147
    %v251 = vunpack.c.h.b16 %v147
    %v252 = vunpack.c.l.b16 %v148
    %v253 = vunpack.c.h.b16 %v148
    %v254 = vunpack.c.l.b16 %v149
    %v255 = vunpack.c.h.b16 %v149
    %v256 = vunpack.c.l.b16 %v150
    %v257 = vunpack.c.h.b16 %v150
    %v258 = vunpack.c.l.b16 %v151
    %v259 = vunpack.c.h.b16 %v151
    %v260 = vunpack.c.l.b16 %v152
    %v261 = vunpack.c.h.b16 %v152
    %v262 = vunpack.c.l.b16 %v153
    %v263 = vunpack.c.h.b16 %v153
    %v264 = vunpack.c.l.b16 %v154
    %v265 = vunpack.c.h.b16 %v154
    %v266 = vunpack.c.l.b16 %v155
    %v267 = vunpack.c.h.b16 %v155
    %v268 = vunpack.c.l.b16 %v156
    %v269 = vunpack.c.h.b16 %v156
    %v270 = vunpack.c.l.b16 %v157
    %v271 = vunpack.c.h.b16 %v157
    %v272 = vunpack.c.l.b16 %v158
    %v273 = vunpack.c.h.b16 %v158
    %v274 = vunpack.c.l.b16 %v159
    %v275 = vunpack.c.h.b16 %v159
    %v276 = vunpack.c.l.b16 %v160
    %v277 = vunpack.c.h.b16 %v160
    %v278 = vunpack.c.l.b16 %v161
    %v279 = vunpack.c.h.b16 %v161
    %v280 = vunpack.c.l.b16 %v162
    %v281 = vunpack.c.h.b16 %v162
    %v282 = vunpack.c.l.b16 %v163
    %v283 = vunpack.c.h.b16 %v163
    %v284 = vunpack.c.l.b16 %v164
    %v285 = vunpack.c.h.b16 %v164
    %v286 = vunpack.c.l.b16 %v165
    %v287 = vunpack.c.h.b16 %v165
    %v288 = vunpack.c.l.b16 %v166
    %v289 = vunpack.c.h.b16 %v166
    %v290 = vunpack.c.l.b16 %v167
    %v291 = vunpack.c.h.b16 %v167
    %v292 = vunpack.c.l.b16 %v168
    %v293 = vunpack.c.h.b16 %v168
    %v294 = vunpack.c.l.b16 %v169
    %v295 = vunpack.c.h.b16 %v169
    %v296 = vunpack.c.l.b16 %v170
    %v297 = vunpack.c.h.b16 %v170
    %v298 = vunpack.c.l.b16 %v171
    %v299 = vunpack.c.h.b16 %v171
    %v300 = vunpack.c.l.b16 %v172
    %v301 = vunpack.c.h.b16 %v172
    %v302 = vpack.c.b16 %v224, %v222
    %v303 = vpack.c.b16 %v225, %v223
    %v304 = vpack.c.b16 %v228, %v226
    %v305 = vpack.c.b16 %v229, %v227
    %v306 = vpack.c.b16 %v232, %v230
    %v307 = vpack.c.b16 %v233, %v231
    %v308 = vpack.c.b16 %v236, %v234
    %v309 = vpack.c.b16 %v237, %v235
    %v310 = vpack.c.b16 %v240, %v238
    %v311 = vpack.c.b16 %v241, %v239
    %v312 = vpack.c.b16 %v244, %v242
    %v313 = vpack.c.b16 %v245, %v243
    %v314 = vpack.c.b16 %v248, %v246
    %v315 = vpack.c.b16 %v249, %v247
    %v316 = vpack.c.b16 %v252, %v250
    %v317 = vpack.c.b16 %v253, %v251
    %v318 = vpack.c.b16 %v256, %v254
    %v319 = vpack.c.b16 %v257, %v255
    %v320 = vpack.c.b16 %v260, %v258
    %v321 = vpack.c.b16 %v261, %v259
    %v322 = vpack.c.b16 %v264, %v262
    %v323 = vpack.c.b16 %v265, %v263
    %v324 = vpack.c.b16 %v268, %v266
    %v325 = vpack.c.b16 %v269, %v267
    %v326 = vpack.c.b16 %v272, %v270
    %v327 = vpack.c.b16 %v273, %v271
    %v328 = vpack.c.b16 %v276, %v274
    %v329 = vpack.c.b16 %v277, %v275
    %v330 = vpack.c.b16 %v280, %v278
    %v331 = vpack.c.b16 %v281, %v279
    %v332 = vpack.c.b16 %v284, %v282
    %v333 = vpack.c.b16 %v285, %v283
    %v334 = vpack.c.b16 %v288, %v286
    %v335 = vpack.c.b16 %v289, %v287
    %v336 = vpack.c.b16 %v292, %v290
    %v337 = vpack.c.b16 %v293, %v291
    %v338 = vpack.c.b16 %v296, %v294
    %v339 = vpack.c.b16 %v297, %v295
    %v340 = vpack.c.b16 %v300, %v298
    %v341 = vpack.c.b16 %v301, %v299
    %vm382 = vcmask 523264
    %v384 = vsel %vm382, %v175, 0
    %386 = vmatpush.bf16.msra.mxu0 %v316
    %387 = vmatpush.bf16.msra.mxu0 %v314
    %388 = vmatpush.bf16.msra.mxu0 %v312
    %389 = vmatpush.bf16.msra.mxu0 %v310
    %390 = vmatpush.bf16.msra.mxu0 %v308
    %391 = vmatpush.bf16.msra.mxu0 %v306
    %392 = vmatpush.bf16.msra.mxu0 %v304
    %393 = vmatpush.bf16.msra.mxu0 %v302
    %394 = vmatmul.bf16.gmra.mxu0 %v173
    %v395 = vpop.f32.mrf.mxu0
    %v396 = vadd.f32 %v178, %v395
    %v397 = vpop.f32.mrf.mxu0
    %v398 = vadd.f32 %v178, %v397
    %399 = vdwg.mxu0
    %400 = vmatpush.bf16.msra.mxu0 %v332
    %401 = vmatpush.bf16.msra.mxu0 %v330
    %402 = vmatpush.bf16.msra.mxu0 %v328
    %403 = vmatpush.bf16.msra.mxu0 %v326
    %404 = vmatpush.bf16.msra.mxu0 %v324
    %405 = vmatpush.bf16.msra.mxu0 %v322
    %406 = vmatpush.bf16.msra.mxu0 %v320
    %407 = vmatpush.bf16.msra.mxu0 %v318
    %408 = vmatmul.bf16.gmra.mxu0 %v174
    %v409 = vpop.f32.mrf.mxu0
    %v410 = vadd.f32 %v396, %v409
    %v411 = vpop.f32.mrf.mxu0
    %v412 = vadd.f32 %v398, %v411
    %413 = vdwg.mxu0
    %414 = vmatpush.bf16.msra.mxu0 0
    %415 = vmatpush.bf16.msra.mxu0 0
    %416 = vmatpush.bf16.msra.mxu0 0
    %417 = vmatpush.bf16.msra.mxu0 0
    %418 = vmatpush.bf16.msra.mxu0 %v340
    %419 = vmatpush.bf16.msra.mxu0 %v338
    %420 = vmatpush.bf16.msra.mxu0 %v336
    %421 = vmatpush.bf16.msra.mxu0 %v334
    %422 = vmatmul.bf16.gmra.mxu0 %v384
    %v423 = vpop.f32.mrf.mxu0
    %v424 = vadd.f32 %v410, %v423
    %v425 = vpop.f32.mrf.mxu0
    %v426 = vadd.f32 %v412, %v425
    %427 = vdwg.mxu0
    %428 = vmatpush.bf16.msra.mxu0 %v317
    %429 = vmatpush.bf16.msra.mxu0 %v315
    %430 = vmatpush.bf16.msra.mxu0 %v313
    %431 = vmatpush.bf16.msra.mxu0 %v311
    %432 = vmatpush.bf16.msra.mxu0 %v309
    %433 = vmatpush.bf16.msra.mxu0 %v307
    %434 = vmatpush.bf16.msra.mxu0 %v305
    %435 = vmatpush.bf16.msra.mxu0 %v303
    %436 = vmatmul.bf16.gmra.mxu0 %v173
    %v437 = vpop.f32.mrf.mxu0
    %v438 = vadd.f32 %v179, %v437
    %v439 = vpop.f32.mrf.mxu0
    %v440 = vadd.f32 %v179, %v439
    %441 = vdwg.mxu0
    %442 = vmatpush.bf16.msra.mxu0 %v333
    %443 = vmatpush.bf16.msra.mxu0 %v331
    %444 = vmatpush.bf16.msra.mxu0 %v329
    %445 = vmatpush.bf16.msra.mxu0 %v327
    %446 = vmatpush.bf16.msra.mxu0 %v325
    %447 = vmatpush.bf16.msra.mxu0 %v323
    %448 = vmatpush.bf16.msra.mxu0 %v321
    %449 = vmatpush.bf16.msra.mxu0 %v319
    %450 = vmatmul.bf16.gmra.mxu0 %v174
    %v451 = vpop.f32.mrf.mxu0
    %v452 = vadd.f32 %v438, %v451
    %v453 = vpop.f32.mrf.mxu0
    %v454 = vadd.f32 %v440, %v453
    %455 = vdwg.mxu0
    %456 = vmatpush.bf16.msra.mxu0 0
    %457 = vmatpush.bf16.msra.mxu0 0
    %458 = vmatpush.bf16.msra.mxu0 0
    %459 = vmatpush.bf16.msra.mxu0 0
    %460 = vmatpush.bf16.msra.mxu0 %v341
    %461 = vmatpush.bf16.msra.mxu0 %v339
    %462 = vmatpush.bf16.msra.mxu0 %v337
    %463 = vmatpush.bf16.msra.mxu0 %v335
    %464 = vmatmul.bf16.gmra.mxu0 %v384
    %v465 = vpop.f32.mrf.mxu0
    %v466 = vadd.f32 %v452, %v465
    %v467 = vpop.f32.mrf.mxu0
    %v468 = vadd.f32 %v454, %v467
    %469 = vdwg.mxu0
    %v470 = vmax.f32 %v424, 0.0
    %v471 = vmax.f32 %v466, 0.0
    %v472 = vmax.f32 %v426, 0.0
    %v473 = vmax.f32 %v468, 0.0
    %v474 = vld [vmem:[#allocation9] sm:$0xff]
    %v475 = vld [vmem:[#allocation9 + $0x8] sm:$0xff]
    %v476 = vld [vmem:[#allocation9 + $0x10] sm:$0xff]
    %v477 = vld [vmem:[#allocation9 + $0x18] sm:$0xff]
    %v478 = vld [vmem:[#allocation9 + $0x20] sm:$0xff]
    %v479 = vld [vmem:[#allocation9 + $0x28] sm:$0xff]
    %v480 = vld [vmem:[#allocation9 + $0x30] sm:$0xff]
    %v481 = vld [vmem:[#allocation9 + $0x38] sm:$0xff]
    %v482 = vld [vmem:[#allocation9 + $0x40] sm:$0xff]
    %v483 = vld [vmem:[#allocation9 + $0x48] sm:$0xff]
    %v484 = vld [vmem:[#allocation9 + $0x50] sm:$0xff]
    %v485 = vld [vmem:[#allocation9 + $0x58] sm:$0xff]
    %v486 = vld [vmem:[#allocation9 + $0x60] sm:$0xff]
    %v487 = vld [vmem:[#allocation9 + $0x68] sm:$0xff]
    %v488 = vld [vmem:[#allocation9 + $0x70] sm:$0xff]
    %v489 = vld [vmem:[#allocation9 + $0x78] sm:$0xff]
    %v490 = vld [vmem:[#allocation9 + $0x80] sm:$0xff]
    %v491 = vld [vmem:[#allocation9 + $0x88] sm:$0xff]
    %v492 = vld [vmem:[#allocation9 + $0x90] sm:$0xff]
    %v493 = vld [vmem:[#allocation9 + $0x98] sm:$0xff]
    %v494 = vld [vmem:[#allocation9 + $0xa0] sm:$0xff]
    %v495 = vld [vmem:[#allocation9 + $0xa8] sm:$0xff]
    %v496 = vld [vmem:[#allocation9 + $0xb0] sm:$0xff]
    %v497 = vld [vmem:[#allocation9 + $0xb8] sm:$0xff]
    %v498 = vld [vmem:[#allocation9 + $0xc0] sm:$0xff]
    %v499 = vld [vmem:[#allocation9 + $0xc8] sm:$0xff]
    %v500 = vld [vmem:[#allocation9 + $0xd0] sm:$0xff]
    %v501 = vld [vmem:[#allocation9 + $0xd8] sm:$0xff]
    %v502 = vld [vmem:[#allocation9 + $0xe0] sm:$0xff]
    %v503 = vld [vmem:[#allocation9 + $0xe8] sm:$0xff]
    %v504 = vld [vmem:[#allocation9 + $0xf0] sm:$0xff]
    %v505 = vld [vmem:[#allocation9 + $0xf8] sm:$0xff]
    %v506 = vld [vmem:[#allocation9 + $0x100] sm:$0xff]
    %v507 = vld [vmem:[#allocation9 + $0x108] sm:$0xff]
    %v508 = vld [vmem:[#allocation9 + $0x110] sm:$0xff]
    %v509 = vld [vmem:[#allocation9 + $0x118] sm:$0xff]
    %v510 = vld [vmem:[#allocation9 + $0x120] sm:$0xff]
    %v511 = vld [vmem:[#allocation9 + $0x128] sm:$0xff]
    %v512 = vld [vmem:[#allocation9 + $0x130] sm:$0xff]
    %v513 = vld [vmem:[#allocation9 + $0x138] sm:$0xff]
    %v514 = vld [vmem:[#allocation9 + $0x140] sm:$0xff]
    %v515 = vld [vmem:[#allocation9 + $0x148] sm:$0xff]
    %v516 = vld [vmem:[#allocation9 + $0x150] sm:$0xff]
    %v517 = vld [vmem:[#allocation9 + $0x158] sm:$0xff]
    %v518 = vld [vmem:[#allocation9 + $0x160] sm:$0xff]
    %v519 = vld [vmem:[#allocation9 + $0x168] sm:$0xff]
    %v520 = vld [vmem:[#allocation9 + $0x170] sm:$0xff]
    %v521 = vld [vmem:[#allocation9 + $0x178] sm:$0xff]
    %v522 = vld [vmem:[#allocation9 + $0x180] sm:$0xff]
    %v523 = vld [vmem:[#allocation9 + $0x188] sm:$0xff]
    %v524 = vld [vmem:[#allocation9 + $0x190] sm:$0xff]
    %v525 = vld [vmem:[#allocation9 + $0x198] sm:$0xff]
    %v526 = vld [vmem:[#allocation9 + $0x1a0] sm:$0xff]
    %v527 = vld [vmem:[#allocation9 + $0x1a8] sm:$0xff]
    %v528 = vld [vmem:[#allocation9 + $0x1b0] sm:$0xff]
    %v529 = vld [vmem:[#allocation9 + $0x1b8] sm:$0xff]
    %v530 = vld [vmem:[#allocation9 + $0x1c0] sm:$0xff]
    %v531 = vld [vmem:[#allocation9 + $0x1c8] sm:$0xff]
    %v532 = vld [vmem:[#allocation9 + $0x1d0] sm:$0xff]
    %v533 = vld [vmem:[#allocation9 + $0x1d8] sm:$0xff]
    %v534 = vld [vmem:[#allocation9 + $0x1e0] sm:$0xff]
    %v535 = vld [vmem:[#allocation9 + $0x1e8] sm:$0xff]
    %v536 = vld [vmem:[#allocation9 + $0x1f0] sm:$0xff]
    %v537 = vld [vmem:[#allocation9 + $0x1f8] sm:$0xff]
    %v538 = vpack.c.bf16 %v472, %v470
    %v539 = vpack.c.bf16 %v473, %v471
    %v604 = vunpack.c.l.b16 %v474
    %v605 = vunpack.c.h.b16 %v474
    %v606 = vunpack.c.l.b16 %v475
    %v607 = vunpack.c.h.b16 %v475
    %v608 = vunpack.c.l.b16 %v476
    %v609 = vunpack.c.h.b16 %v476
    %v610 = vunpack.c.l.b16 %v477
    %v611 = vunpack.c.h.b16 %v477
    %v612 = vunpack.c.l.b16 %v478
    %v613 = vunpack.c.h.b16 %v478
    %v614 = vunpack.c.l.b16 %v479
    %v615 = vunpack.c.h.b16 %v479
    %v616 = vunpack.c.l.b16 %v480
    %v617 = vunpack.c.h.b16 %v480
    %v618 = vunpack.c.l.b16 %v481
    %v619 = vunpack.c.h.b16 %v481
    %v620 = vunpack.c.l.b16 %v482
    %v621 = vunpack.c.h.b16 %v482
    %v622 = vunpack.c.l.b16 %v483
    %v623 = vunpack.c.h.b16 %v483
    %v624 = vunpack.c.l.b16 %v484
    %v625 = vunpack.c.h.b16 %v484
    %v626 = vunpack.c.l.b16 %v485
    %v627 = vunpack.c.h.b16 %v485
    %v628 = vunpack.c.l.b16 %v486
    %v629 = vunpack.c.h.b16 %v486
    %v630 = vunpack.c.l.b16 %v487
    %v631 = vunpack.c.h.b16 %v487
    %v632 = vunpack.c.l.b16 %v488
    %v633 = vunpack.c.h.b16 %v488
    %v634 = vunpack.c.l.b16 %v489
    %v635 = vunpack.c.h.b16 %v489
    %v636 = vunpack.c.l.b16 %v490
    %v637 = vunpack.c.h.b16 %v490
    %v638 = vunpack.c.l.b16 %v491
    %v639 = vunpack.c.h.b16 %v491
    %v640 = vunpack.c.l.b16 %v492
    %v641 = vunpack.c.h.b16 %v492
    %v642 = vunpack.c.l.b16 %v493
    %v643 = vunpack.c.h.b16 %v493
    %v644 = vunpack.c.l.b16 %v494
    %v645 = vunpack.c.h.b16 %v494
    %v646 = vunpack.c.l.b16 %v495
    %v647 = vunpack.c.h.b16 %v495
    %v648 = vunpack.c.l.b16 %v496
    %v649 = vunpack.c.h.b16 %v496
    %v650 = vunpack.c.l.b16 %v497
    %v651 = vunpack.c.h.b16 %v497
    %v652 = vunpack.c.l.b16 %v498
    %v653 = vunpack.c.h.b16 %v498
    %v654 = vunpack.c.l.b16 %v499
    %v655 = vunpack.c.h.b16 %v499
    %v656 = vunpack.c.l.b16 %v500
    %v657 = vunpack.c.h.b16 %v500
    %v658 = vunpack.c.l.b16 %v501
    %v659 = vunpack.c.h.b16 %v501
    %v660 = vunpack.c.l.b16 %v502
    %v661 = vunpack.c.h.b16 %v502
    %v662 = vunpack.c.l.b16 %v503
    %v663 = vunpack.c.h.b16 %v503
    %v664 = vunpack.c.l.b16 %v504
    %v665 = vunpack.c.h.b16 %v504
    %v666 = vunpack.c.l.b16 %v505
    %v667 = vunpack.c.h.b16 %v505
    %v668 = vunpack.c.l.b16 %v506
    %v669 = vunpack.c.h.b16 %v506
    %v670 = vunpack.c.l.b16 %v507
    %v671 = vunpack.c.h.b16 %v507
    %v672 = vunpack.c.l.b16 %v508
    %v673 = vunpack.c.h.b16 %v508
    %v674 = vunpack.c.l.b16 %v509
    %v675 = vunpack.c.h.b16 %v509
    %v676 = vunpack.c.l.b16 %v510
    %v677 = vunpack.c.h.b16 %v510
    %v678 = vunpack.c.l.b16 %v511
    %v679 = vunpack.c.h.b16 %v511
    %v680 = vunpack.c.l.b16 %v512
    %v681 = vunpack.c.h.b16 %v512
    %v682 = vunpack.c.l.b16 %v513
    %v683 = vunpack.c.h.b16 %v513
    %v684 = vunpack.c.l.b16 %v514
    %v685 = vunpack.c.h.b16 %v514
    %v686 = vunpack.c.l.b16 %v515
    %v687 = vunpack.c.h.b16 %v515
    %v688 = vunpack.c.l.b16 %v516
    %v689 = vunpack.c.h.b16 %v516
    %v690 = vunpack.c.l.b16 %v517
    %v691 = vunpack.c.h.b16 %v517
    %v692 = vunpack.c.l.b16 %v518
    %v693 = vunpack.c.h.b16 %v518
    %v694 = vunpack.c.l.b16 %v519
    %v695 = vunpack.c.h.b16 %v519
    %v696 = vunpack.c.l.b16 %v520
    %v697 = vunpack.c.h.b16 %v520
    %v698 = vunpack.c.l.b16 %v521
    %v699 = vunpack.c.h.b16 %v521
    %v700 = vunpack.c.l.b16 %v522
    %v701 = vunpack.c.h.b16 %v522
    %v702 = vunpack.c.l.b16 %v523
    %v703 = vunpack.c.h.b16 %v523
    %v704 = vunpack.c.l.b16 %v524
    %v705 = vunpack.c.h.b16 %v524
    %v706 = vunpack.c.l.b16 %v525
    %v707 = vunpack.c.h.b16 %v525
    %v708 = vunpack.c.l.b16 %v526
    %v709 = vunpack.c.h.b16 %v526
    %v710 = vunpack.c.l.b16 %v527
    %v711 = vunpack.c.h.b16 %v527
    %v712 = vunpack.c.l.b16 %v528
    %v713 = vunpack.c.h.b16 %v528
    %v714 = vunpack.c.l.b16 %v529
    %v715 = vunpack.c.h.b16 %v529
    %v716 = vunpack.c.l.b16 %v530
    %v717 = vunpack.c.h.b16 %v530
    %v718 = vunpack.c.l.b16 %v531
    %v719 = vunpack.c.h.b16 %v531
    %v720 = vunpack.c.l.b16 %v532
    %v721 = vunpack.c.h.b16 %v532
    %v722 = vunpack.c.l.b16 %v533
    %v723 = vunpack.c.h.b16 %v533
    %v724 = vunpack.c.l.b16 %v534
    %v725 = vunpack.c.h.b16 %v534
    %v726 = vunpack.c.l.b16 %v535
    %v727 = vunpack.c.h.b16 %v535
    %v728 = vunpack.c.l.b16 %v536
    %v729 = vunpack.c.h.b16 %v536
    %v730 = vunpack.c.l.b16 %v537
    %v731 = vunpack.c.h.b16 %v537
    %v732 = vpack.c.b16 %v608, %v604
    %v733 = vpack.c.b16 %v609, %v605
    %v734 = vpack.c.b16 %v610, %v606
    %v735 = vpack.c.b16 %v611, %v607
    %v736 = vpack.c.b16 %v616, %v612
    %v737 = vpack.c.b16 %v617, %v613
    %v738 = vpack.c.b16 %v618, %v614
    %v739 = vpack.c.b16 %v619, %v615
    %v740 = vpack.c.b16 %v624, %v620
    %v741 = vpack.c.b16 %v625, %v621
    %v742 = vpack.c.b16 %v626, %v622
    %v743 = vpack.c.b16 %v627, %v623
    %v744 = vpack.c.b16 %v632, %v628
    %v745 = vpack.c.b16 %v633, %v629
    %v746 = vpack.c.b16 %v634, %v630
    %v747 = vpack.c.b16 %v635, %v631
    %v748 = vpack.c.b16 %v640, %v636
    %v749 = vpack.c.b16 %v641, %v637
    %v750 = vpack.c.b16 %v642, %v638
    %v751 = vpack.c.b16 %v643, %v639
    %v752 = vpack.c.b16 %v648, %v644
    %v753 = vpack.c.b16 %v649, %v645
    %v754 = vpack.c.b16 %v650, %v646
    %v755 = vpack.c.b16 %v651, %v647
    %v756 = vpack.c.b16 %v656, %v652
    %v757 = vpack.c.b16 %v657, %v653
    %v758 = vpack.c.b16 %v658, %v654
    %v759 = vpack.c.b16 %v659, %v655
    %v760 = vpack.c.b16 %v664, %v660
    %v761 = vpack.c.b16 %v665, %v661
    %v762 = vpack.c.b16 %v666, %v662
    %v763 = vpack.c.b16 %v667, %v663
    %v764 = vpack.c.b16 %v672, %v668
    %v765 = vpack.c.b16 %v673, %v669
    %v766 = vpack.c.b16 %v674, %v670
    %v767 = vpack.c.b16 %v675, %v671
    %v768 = vpack.c.b16 %v680, %v676
    %v769 = vpack.c.b16 %v681, %v677
    %v770 = vpack.c.b16 %v682, %v678
    %v771 = vpack.c.b16 %v683, %v679
    %v772 = vpack.c.b16 %v688, %v684
    %v773 = vpack.c.b16 %v689, %v685
    %v774 = vpack.c.b16 %v690, %v686
    %v775 = vpack.c.b16 %v691, %v687
    %v776 = vpack.c.b16 %v696, %v692
    %v777 = vpack.c.b16 %v697, %v693
    %v778 = vpack.c.b16 %v698, %v694
    %v779 = vpack.c.b16 %v699, %v695
    %v780 = vpack.c.b16 %v704, %v700
    %v781 = vpack.c.b16 %v705, %v701
    %v782 = vpack.c.b16 %v706, %v702
    %v783 = vpack.c.b16 %v707, %v703
    %v784 = vpack.c.b16 %v712, %v708
    %v785 = vpack.c.b16 %v713, %v709
    %v786 = vpack.c.b16 %v714, %v710
    %v787 = vpack.c.b16 %v715, %v711
    %v788 = vpack.c.b16 %v720, %v716
    %v789 = vpack.c.b16 %v721, %v717
    %v790 = vpack.c.b16 %v722, %v718
    %v791 = vpack.c.b16 %v723, %v719
    %v792 = vpack.c.b16 %v728, %v724
    %v793 = vpack.c.b16 %v729, %v725
    %v794 = vpack.c.b16 %v730, %v726
    %v795 = vpack.c.b16 %v731, %v727
    %860 = vmatpush.bf16.msra.mxu0 %v760
    %861 = vmatpush.bf16.msra.mxu0 %v756
    %862 = vmatpush.bf16.msra.mxu0 %v752
    %863 = vmatpush.bf16.msra.mxu0 %v748
    %864 = vmatpush.bf16.msra.mxu0 %v744
    %865 = vmatpush.bf16.msra.mxu0 %v740
    %866 = vmatpush.bf16.msra.mxu0 %v736
    %867 = vmatpush.bf16.msra.mxu0 %v732
    %868 = vmatmul.bf16.gmra.mxu0 %v538
    %v869 = vpop.f32.mrf.mxu0
    %v870 = vadd.f32 0.0, %v869
    %v871 = vpop.f32.mrf.mxu0
    %v872 = vadd.f32 0.0, %v871
    %873 = vdwg.mxu0
    %874 = vmatpush.bf16.msra.mxu0 %v792
    %875 = vmatpush.bf16.msra.mxu0 %v788
    %876 = vmatpush.bf16.msra.mxu0 %v784
    %877 = vmatpush.bf16.msra.mxu0 %v780
    %878 = vmatpush.bf16.msra.mxu0 %v776
    %879 = vmatpush.bf16.msra.mxu0 %v772
    %880 = vmatpush.bf16.msra.mxu0 %v768
    %881 = vmatpush.bf16.msra.mxu0 %v764
    %882 = vmatmul.bf16.gmra.mxu0 %v539
    %v883 = vpop.f32.mrf.mxu0
    %v884 = vadd.f32 %v870, %v883
    %v885 = vpop.f32.mrf.mxu0
    %v886 = vadd.f32 %v872, %v885
    %887 = vdwg.mxu0
    %888 = vmatpush.bf16.msra.mxu0 %v761
    %889 = vmatpush.bf16.msra.mxu0 %v757
    %890 = vmatpush.bf16.msra.mxu0 %v753
    %891 = vmatpush.bf16.msra.mxu0 %v749
    %892 = vmatpush.bf16.msra.mxu0 %v745
    %893 = vmatpush.bf16.msra.mxu0 %v741
    %894 = vmatpush.bf16.msra.mxu0 %v737
    %895 = vmatpush.bf16.msra.mxu0 %v733
    %896 = vmatmul.bf16.gmra.mxu0 %v538
    %v897 = vpop.f32.mrf.mxu0
    %v898 = vadd.f32 0.0, %v897
    %v899 = vpop.f32.mrf.mxu0
    %v900 = vadd.f32 0.0, %v899
    %901 = vdwg.mxu0
    %902 = vmatpush.bf16.msra.mxu0 %v793
    %903 = vmatpush.bf16.msra.mxu0 %v789
    %904 = vmatpush.bf16.msra.mxu0 %v785
    %905 = vmatpush.bf16.msra.mxu0 %v781
    %906 = vmatpush.bf16.msra.mxu0 %v777
    %907 = vmatpush.bf16.msra.mxu0 %v773
    %908 = vmatpush.bf16.msra.mxu0 %v769
    %909 = vmatpush.bf16.msra.mxu0 %v765
    %910 = vmatmul.bf16.gmra.mxu0 %v539
    %v911 = vpop.f32.mrf.mxu0
    %v912 = vadd.f32 %v898, %v911
    %v913 = vpop.f32.mrf.mxu0
    %v914 = vadd.f32 %v900, %v913
    %915 = vdwg.mxu0
    %916 = vmatpush.bf16.msra.mxu0 %v762
    %917 = vmatpush.bf16.msra.mxu0 %v758
    %918 = vmatpush.bf16.msra.mxu0 %v754
    %919 = vmatpush.bf16.msra.mxu0 %v750
    %920 = vmatpush.bf16.msra.mxu0 %v746
    %921 = vmatpush.bf16.msra.mxu0 %v742
    %922 = vmatpush.bf16.msra.mxu0 %v738
    %923 = vmatpush.bf16.msra.mxu0 %v734
    %924 = vmatmul.bf16.gmra.mxu0 %v538
    %v925 = vpop.f32.mrf.mxu0
    %v926 = vadd.f32 0.0, %v925
    %v927 = vpop.f32.mrf.mxu0
    %v928 = vadd.f32 0.0, %v927
    %929 = vdwg.mxu0
    %930 = vmatpush.bf16.msra.mxu0 %v794
    %931 = vmatpush.bf16.msra.mxu0 %v790
    %932 = vmatpush.bf16.msra.mxu0 %v786
    %933 = vmatpush.bf16.msra.mxu0 %v782
    %934 = vmatpush.bf16.msra.mxu0 %v778
    %935 = vmatpush.bf16.msra.mxu0 %v774
    %936 = vmatpush.bf16.msra.mxu0 %v770
    %937 = vmatpush.bf16.msra.mxu0 %v766
    %938 = vmatmul.bf16.gmra.mxu0 %v539
    %v939 = vpop.f32.mrf.mxu0
    %v940 = vadd.f32 %v926, %v939
    %v941 = vpop.f32.mrf.mxu0
    %v942 = vadd.f32 %v928, %v941
    %943 = vdwg.mxu0
    %944 = vmatpush.bf16.msra.mxu0 %v763
    %945 = vmatpush.bf16.msra.mxu0 %v759
    %946 = vmatpush.bf16.msra.mxu0 %v755
    %947 = vmatpush.bf16.msra.mxu0 %v751
    %948 = vmatpush.bf16.msra.mxu0 %v747
    %949 = vmatpush.bf16.msra.mxu0 %v743
    %950 = vmatpush.bf16.msra.mxu0 %v739
    %951 = vmatpush.bf16.msra.mxu0 %v735
    %952 = vmatmul.bf16.gmra.mxu0 %v538
    %v953 = vpop.f32.mrf.mxu0
    %v954 = vadd.f32 0.0, %v953
    %v955 = vpop.f32.mrf.mxu0
    %v956 = vadd.f32 0.0, %v955
    %957 = vdwg.mxu0
    %958 = vmatpush.bf16.msra.mxu0 %v795
    %959 = vmatpush.bf16.msra.mxu0 %v791
    %960 = vmatpush.bf16.msra.mxu0 %v787
    %961 = vmatpush.bf16.msra.mxu0 %v783
    %962 = vmatpush.bf16.msra.mxu0 %v779
    %963 = vmatpush.bf16.msra.mxu0 %v775
    %964 = vmatpush.bf16.msra.mxu0 %v771
    %965 = vmatpush.bf16.msra.mxu0 %v767
    %966 = vmatmul.bf16.gmra.mxu0 %v539
    %v967 = vpop.f32.mrf.mxu0
    %v968 = vadd.f32 %v954, %v967
    %v969 = vpop.f32.mrf.mxu0
    %v970 = vadd.f32 %v956, %v969
    %971 = vdwg.mxu0
    %v972 = vpack.c.bf16 %v119, %v118
    %v973 = vpack.c.bf16 %v886, %v884
    %v974 = vld [vmem:[#allocation12 + $0x1] ss:$0 sm:$0xff]
    %vm975 = vcmask 130048
    %v977 = vsel %vm975, %v972, 0
    %979 = vmatpush.bf16.msra.mxu0 0
    %980 = vmatpush.bf16.msra.mxu0 0
    %981 = vmatpush.bf16.msra.mxu0 0
    %982 = vmatpush.bf16.msra.mxu0 0
    %983 = vmatpush.bf16.msra.mxu0 0
    %984 = vmatpush.bf16.msra.mxu0 0
    %985 = vmatpush.bf16.msra.mxu0 0
    %986 = vmatpush.bf16.msra.mxu0 %v973
    %987 = vmatmul.bf16.gmra.mxu0 %v977
    %v988 = vpop.f32.mrf.mxu0
    %v989 = vadd.f32 %v974, %v988
    %v990 = vpop.f32.mrf.mxu0
    %v991 = vadd.f32 %v974, %v990
    %992 = vdwg.mxu0
    %v993 = vld [vmem:[#allocation11 + $0x40] sm:$0xf]
    %v994 = vld [vmem:[#allocation11 + $0x44] sm:$0xf]
    %v995 = vld [vmem:[#allocation11 + $0x48] sm:$0xf]
    %v996 = vld [vmem:[#allocation11 + $0x4c] sm:$0xf]
    %v997 = vld [vmem:[#allocation11 + $0x50] sm:$0xf]
    %v998 = vld [vmem:[#allocation11 + $0x54] sm:$0xf]
    %v999 = vld [vmem:[#allocation11 + $0x58] sm:$0xf]
    %v1000 = vld [vmem:[#allocation11 + $0x5c] sm:$0xf]
    %v1001 = vld [vmem:[#allocation11 + $0x60] sm:$0xf]
    %v1002 = vld [vmem:[#allocation11 + $0x64] sm:$0xf]
    %v1003 = vld [vmem:[#allocation11 + $0x68] sm:$0xf]
    %v1004 = vld [vmem:[#allocation11 + $0x6c] sm:$0xf]
    %v1005 = vld [vmem:[#allocation11 + $0x70] sm:$0xf]
    %v1006 = vld [vmem:[#allocation11 + $0x74] sm:$0xf]
    %v1007 = vld [vmem:[#allocation11 + $0x78] sm:$0xf]
    %v1008 = vld [vmem:[#allocation11 + $0x7c] sm:$0xf]
    %v1009 = vpack.c.bf16 %v991, %v989
    %v1010 = vld [vmem:[#allocation12 + $0x3] ss:$0 sm:$0xff]
    %v1027 = vunpack.c.l.b16 %v993
    %v1028 = vunpack.c.l.b16 %v994
    %v1029 = vunpack.c.l.b16 %v995
    %v1030 = vunpack.c.l.b16 %v996
    %v1031 = vunpack.c.l.b16 %v997
    %v1032 = vunpack.c.l.b16 %v998
    %v1033 = vunpack.c.l.b16 %v999
    %v1034 = vunpack.c.l.b16 %v1000
    %v1035 = vunpack.c.l.b16 %v1001
    %v1036 = vunpack.c.l.b16 %v1002
    %v1037 = vunpack.c.l.b16 %v1003
    %v1038 = vunpack.c.l.b16 %v1004
    %v1039 = vunpack.c.l.b16 %v1005
    %v1040 = vunpack.c.l.b16 %v1006
    %v1041 = vunpack.c.l.b16 %v1007
    %v1042 = vunpack.c.l.b16 %v1008
    %v1043 = vpack.c.b16 %v1028, %v1027
    %v1044 = vpack.c.b16 %v1030, %v1029
    %v1045 = vpack.c.b16 %v1032, %v1031
    %v1046 = vpack.c.b16 %v1034, %v1033
    %v1047 = vpack.c.b16 %v1036, %v1035
    %v1048 = vpack.c.b16 %v1038, %v1037
    %v1049 = vpack.c.b16 %v1040, %v1039
    %v1050 = vpack.c.b16 %v1042, %v1041
    %1059 = vmatpush.bf16.msra.mxu0 %v1050
    %1060 = vmatpush.bf16.msra.mxu0 %v1049
    %1061 = vmatpush.bf16.msra.mxu0 %v1048
    %1062 = vmatpush.bf16.msra.mxu0 %v1047
    %1063 = vmatpush.bf16.msra.mxu0 %v1046
    %1064 = vmatpush.bf16.msra.mxu0 %v1045
    %1065 = vmatpush.bf16.msra.mxu0 %v1044
    %1066 = vmatpush.bf16.msra.mxu0 %v1043
    %1067 = vmatmul.bf16.gmra.mxu0 %v1009
    %v1068 = vpop.f32.mrf.mxu0
    %v1069 = vadd.f32 %v1010, %v1068
    %v1070 = vpop.f32.mrf.mxu0
    %v1071 = vadd.f32 %v1010, %v1070
    %1072 = vdwg.mxu0
    %v1073 = vmax.f32 %v1069, 0.0
    %v1074 = vmax.f32 %v1071, 0.0
    %v1075 = vadd.f32 %v1073, %v1074
    %v1076 = vrot.slane %v1075, 4
    %v1077 = vadd.f32 %v1075, %v1076
    %v1078 = vrot.slane %v1077, 2
    %v1079 = vadd.f32 %v1077, %v1078
    %v1080 = vrot.slane %v1079, 1
    %v1081 = vadd.f32 %v1079, %v1080
    %v1082 = vrcp.pop 16.0
    %v1083 = vmul.f32 16.0, %v1082
    %v1084 = vsub.f32 1.0, %v1083
    %v1085 = vmul.f32 %v1082, %v1084
    %v1086 = vadd.f32 %v1082, %v1085
    %vm1087 = vweird.f32 %v1082
    %v1088 = vsel %vm1087, %v1082, %v1086
    %v1089 = vmul.f32 %v1081, %v1088
    %v1090 = vsub.f32 %v1073, %v1089
    %v1091 = vsub.f32 %v1074, %v1089
    %v1092 = vmul.f32 %v1090, %v1090
    %v1093 = vmul.f32 %v1091, %v1091
    %v1094 = vadd.f32 %v1092, %v1093
    %v1095 = vrot.slane %v1094, 4
    %v1096 = vadd.f32 %v1094, %v1095
    %v1097 = vrot.slane %v1096, 2
    %v1098 = vadd.f32 %v1096, %v1097
    %v1099 = vrot.slane %v1098, 1
    %v1100 = vadd.f32 %v1098, %v1099
    %v1101 = vmul.f32 %v1100, %v1088
    %v1102 = vld [vmem:[#allocation12 + $0x5] ss:$0 sm:$0xff]
    %v1103 = vmul.f32 %v1102, %v1090
    %v1104 = vmul.f32 %v1102, %v1091
    %v1105 = vadd.f32 %v1101, 1e-05
    %v1106 = vrsqrt.pop %v1105
    %v1107 = vmul.f32 %v1106, %v1105
    %v1108 = vmul.f32 %v1107, %v1106
    %v1109 = vmul.f32 0.5, %v1108
    %v1110 = vsub.f32 1.5, %v1109
    %v1111 = vmul.f32 %v1106, %v1110
    %vm1112 = vweird.f32 %v1105
    %vm1113 = vweird.f32 %v1106
    %vm1114 = vmor %vm1112, %vm1113
    %v1115 = vsel %vm1114, %v1106, %v1111
    %v1116 = vmul.f32 %v1103, %v1115
    %v1117 = vmul.f32 %v1104, %v1115
    %v1118 = vld [vmem:[#allocation12 + $0x6] ss:$0 sm:$0xff]
    %v1119 = vadd.f32 %v1116, %v1118
    %v1120 = vadd.f32 %v1117, %v1118
    %v1121 = vld [vmem:[#allocation11] sm:$0xf]
    %v1122 = vld [vmem:[#allocation11 + $0x4] sm:$0xf]
    %v1123 = vld [vmem:[#allocation11 + $0x8] sm:$0xf]
    %v1124 = vld [vmem:[#allocation11 + $0xc] sm:$0xf]
    %v1125 = vld [vmem:[#allocation11 + $0x10] sm:$0xf]
    %v1126 = vld [vmem:[#allocation11 + $0x14] sm:$0xf]
    %v1127 = vld [vmem:[#allocation11 + $0x18] sm:$0xf]
    %v1128 = vld [vmem:[#allocation11 + $0x1c] sm:$0xf]
    %v1129 = vld [vmem:[#allocation11 + $0x20] sm:$0xf]
    %v1130 = vld [vmem:[#allocation11 + $0x24] sm:$0xf]
    %v1131 = vld [vmem:[#allocation11 + $0x28] sm:$0xf]
    %v1132 = vld [vmem:[#allocation11 + $0x2c] sm:$0xf]
    %v1133 = vld [vmem:[#allocation11 + $0x30] sm:$0xf]
    %v1134 = vld [vmem:[#allocation11 + $0x34] sm:$0xf]
    %v1135 = vld [vmem:[#allocation11 + $0x38] sm:$0xf]
    %v1136 = vld [vmem:[#allocation11 + $0x3c] sm:$0xf]
    %v1137 = vpack.c.bf16 %v1120, %v1119
    %v1154 = vunpack.c.l.b16 %v1121
    %v1155 = vunpack.c.l.b16 %v1122
    %v1156 = vunpack.c.l.b16 %v1123
    %v1157 = vunpack.c.l.b16 %v1124
    %v1158 = vunpack.c.l.b16 %v1125
    %v1159 = vunpack.c.l.b16 %v1126
    %v1160 = vunpack.c.l.b16 %v1127
    %v1161 = vunpack.c.l.b16 %v1128
    %v1162 = vunpack.c.l.b16 %v1129
    %v1163 = vunpack.c.l.b16 %v1130
    %v1164 = vunpack.c.l.b16 %v1131
    %v1165 = vunpack.c.l.b16 %v1132
    %v1166 = vunpack.c.l.b16 %v1133
    %v1167 = vunpack.c.l.b16 %v1134
    %v1168 = vunpack.c.l.b16 %v1135
    %v1169 = vunpack.c.l.b16 %v1136
    %v1170 = vpack.c.b16 %v1155, %v1154
    %v1171 = vpack.c.b16 %v1157, %v1156
    %v1172 = vpack.c.b16 %v1159, %v1158
    %v1173 = vpack.c.b16 %v1161, %v1160
    %v1174 = vpack.c.b16 %v1163, %v1162
    %v1175 = vpack.c.b16 %v1165, %v1164
    %v1176 = vpack.c.b16 %v1167, %v1166
    %v1177 = vpack.c.b16 %v1169, %v1168
    %1186 = vmatpush.bf16.msra.mxu0 %v1177
    %1187 = vmatpush.bf16.msra.mxu0 %v1176
    %1188 = vmatpush.bf16.msra.mxu0 %v1175
    %1189 = vmatpush.bf16.msra.mxu0 %v1174
    %1190 = vmatpush.bf16.msra.mxu0 %v1173
    %1191 = vmatpush.bf16.msra.mxu0 %v1172
    %1192 = vmatpush.bf16.msra.mxu0 %v1171
    %1193 = vmatpush.bf16.msra.mxu0 %v1170
    %1194 = vmatmul.bf16.gmra.mxu0 %v1137
    %v1195 = vpop.f32.mrf.mxu0
    %v1196 = vadd.f32 0.0, %v1195
    %v1197 = vpop.f32.mrf.mxu0
    %v1198 = vadd.f32 0.0, %v1197
    %1199 = vdwg.mxu0
    %v1200 = vpack.c.bf16 %v1198, %v1196
    %v1201 = vld [vmem:[#allocation12 + $0x2] ss:$0 sm:$0xff]
    %1202 = vmatpush.bf16.msra.mxu0 0
    %1203 = vmatpush.bf16.msra.mxu0 0
    %1204 = vmatpush.bf16.msra.mxu0 0
    %1205 = vmatpush.bf16.msra.mxu0 0
    %1206 = vmatpush.bf16.msra.mxu0 0
    %1207 = vmatpush.bf16.msra.mxu0 0
    %1208 = vmatpush.bf16.msra.mxu0 0
    %1209 = vmatpush.bf16.msra.mxu0 %v1200
    %1210 = vmatmul.bf16.gmra.mxu0 %v977
    %v1211 = vpop.f32.mrf.mxu0
    %v1212 = vadd.f32 %v1201, %v1211
    %v1213 = vpop.f32.mrf.mxu0
    %v1214 = vadd.f32 %v1201, %v1213
    %1215 = vdwg.mxu0
    %v1216 = vld [vmem:[#allocation11 + $0x80] sm:$0xf]
    %v1217 = vld [vmem:[#allocation11 + $0x84] sm:$0xf]
    %v1218 = vld [vmem:[#allocation11 + $0x88] sm:$0xf]
    %v1219 = vld [vmem:[#allocation11 + $0x8c] sm:$0xf]
    %v1220 = vld [vmem:[#allocation11 + $0x90] sm:$0xf]
    %v1221 = vld [vmem:[#allocation11 + $0x94] sm:$0xf]
    %v1222 = vld [vmem:[#allocation11 + $0x98] sm:$0xf]
    %v1223 = vld [vmem:[#allocation11 + $0x9c] sm:$0xf]
    %v1224 = vld [vmem:[#allocation11 + $0xa0] sm:$0xf]
    %v1225 = vld [vmem:[#allocation11 + $0xa4] sm:$0xf]
    %v1226 = vld [vmem:[#allocation11 + $0xa8] sm:$0xf]
    %v1227 = vld [vmem:[#allocation11 + $0xac] sm:$0xf]
    %v1228 = vld [vmem:[#allocation11 + $0xb0] sm:$0xf]
    %v1229 = vld [vmem:[#allocation11 + $0xb4] sm:$0xf]
    %v1230 = vld [vmem:[#allocation11 + $0xb8] sm:$0xf]
    %v1231 = vld [vmem:[#allocation11 + $0xbc] sm:$0xf]
    %v1232 = vpack.c.bf16 %v1214, %v1212
    %v1233 = vld [vmem:[#allocation12 + $0x4] ss:$0 sm:$0xff]
    %v1250 = vunpack.c.l.b16 %v1216
    %v1251 = vunpack.c.l.b16 %v1217
    %v1252 = vunpack.c.l.b16 %v1218
    %v1253 = vunpack.c.l.b16 %v1219
    %v1254 = vunpack.c.l.b16 %v1220
    %v1255 = vunpack.c.l.b16 %v1221
    %v1256 = vunpack.c.l.b16 %v1222
    %v1257 = vunpack.c.l.b16 %v1223
    %v1258 = vunpack.c.l.b16 %v1224
    %v1259 = vunpack.c.l.b16 %v1225
    %v1260 = vunpack.c.l.b16 %v1226
    %v1261 = vunpack.c.l.b16 %v1227
    %v1262 = vunpack.c.l.b16 %v1228
    %v1263 = vunpack.c.l.b16 %v1229
    %v1264 = vunpack.c.l.b16 %v1230
    %v1265 = vunpack.c.l.b16 %v1231
    %v1266 = vpack.c.b16 %v1251, %v1250
    %v1267 = vpack.c.b16 %v1253, %v1252
    %v1268 = vpack.c.b16 %v1255, %v1254
    %v1269 = vpack.c.b16 %v1257, %v1256
    %v1270 = vpack.c.b16 %v1259, %v1258
    %v1271 = vpack.c.b16 %v1261, %v1260
    %v1272 = vpack.c.b16 %v1263, %v1262
    %v1273 = vpack.c.b16 %v1265, %v1264
    %1282 = vmatpush.bf16.msra.mxu0 %v1273
    %1283 = vmatpush.bf16.msra.mxu0 %v1272
    %1284 = vmatpush.bf16.msra.mxu0 %v1271
    %1285 = vmatpush.bf16.msra.mxu0 %v1270
    %1286 = vmatpush.bf16.msra.mxu0 %v1269
    %1287 = vmatpush.bf16.msra.mxu0 %v1268
    %1288 = vmatpush.bf16.msra.mxu0 %v1267
    %1289 = vmatpush.bf16.msra.mxu0 %v1266
    %1290 = vmatmul.bf16.gmra.mxu0 %v1232
    %v1291 = vpop.f32.mrf.mxu0
    %v1292 = vadd.f32 %v1233, %v1291
    %v1293 = vpop.f32.mrf.mxu0
    %v1294 = vadd.f32 %v1233, %v1293
    %1295 = vdwg.mxu0
    %v1296 = vmax.f32 %v1292, 0.0
    %v1297 = vmax.f32 %v1294, 0.0
    %v1298 = vadd.f32 %v1296, %v1297
    %v1299 = vrot.slane %v1298, 4
    %v1300 = vadd.f32 %v1298, %v1299
    %v1301 = vrot.slane %v1300, 2
    %v1302 = vadd.f32 %v1300, %v1301
    %v1303 = vrot.slane %v1302, 1
    %v1304 = vadd.f32 %v1302, %v1303
    %v1305 = vmul.f32 %v1304, %v1088
    %v1306 = vsub.f32 %v1296, %v1305
    %v1307 = vsub.f32 %v1297, %v1305
    %v1308 = vmul.f32 %v1306, %v1306
    %v1309 = vmul.f32 %v1307, %v1307
    %v1310 = vadd.f32 %v1308, %v1309
    %v1311 = vrot.slane %v1310, 4
    %v1312 = vadd.f32 %v1310, %v1311
    %v1313 = vrot.slane %v1312, 2
    %v1314 = vadd.f32 %v1312, %v1313
    %v1315 = vrot.slane %v1314, 1
    %v1316 = vadd.f32 %v1314, %v1315
    %v1317 = vmul.f32 %v1316, %v1088
    %v1318 = vld [vmem:[#allocation12 + $0x7] ss:$0 sm:$0xff]
    %v1319 = vmul.f32 %v1318, %v1306
    %v1320 = vmul.f32 %v1318, %v1307
    %v1321 = vadd.f32 %v1317, 1e-05
    %v1322 = vrsqrt.pop %v1321
    %v1323 = vmul.f32 %v1322, %v1321
    %v1324 = vmul.f32 %v1323, %v1322
    %v1325 = vmul.f32 0.5, %v1324
    %v1326 = vsub.f32 1.5, %v1325
    %v1327 = vmul.f32 %v1322, %v1326
    %vm1328 = vweird.f32 %v1321
    %vm1329 = vweird.f32 %v1322
    %vm1330 = vmor %vm1328, %vm1329
    %v1331 = vsel %vm1330, %v1322, %v1327
    %v1332 = vmul.f32 %v1319, %v1331
    %v1333 = vmul.f32 %v1320, %v1331
    %v1334 = vld [vmem:[#allocation12 + $0x20] ss:$0 sm:$0xff]
    %v1335 = vadd.f32 %v1332, %v1334
    %v1336 = vadd.f32 %v1333, %v1334
    %v1337 = vpack.c.bf16 %v121, %v120
    %v1338 = vpack.c.bf16 %v914, %v912
    %v1339 = vld [vmem:[#allocation12 + $0x22] ss:$0 sm:$0xff]
    %v1341 = vsel %vm975, %v1337, 0
    %1343 = vmatpush.bf16.msra.mxu0 0
    %1344 = vmatpush.bf16.msra.mxu0 0
    %1345 = vmatpush.bf16.msra.mxu0 0
    %1346 = vmatpush.bf16.msra.mxu0 0
    %1347 = vmatpush.bf16.msra.mxu0 0
    %1348 = vmatpush.bf16.msra.mxu0 0
    %1349 = vmatpush.bf16.msra.mxu0 0
    %1350 = vmatpush.bf16.msra.mxu0 %v1338
    %1351 = vmatmul.bf16.gmra.mxu0 %v1341
    %v1352 = vpop.f32.mrf.mxu0
    %v1353 = vadd.f32 %v1339, %v1352
    %v1354 = vpop.f32.mrf.mxu0
    %v1355 = vadd.f32 %v1339, %v1354
    %1356 = vdwg.mxu0
    %v1357 = vmax.f32 %v1353, 0.0
    %v1358 = vmax.f32 %v1355, 0.0
    %v1359 = vld [vmem:[#allocation11 + $0xc0] sm:$0xf]
    %v1360 = vld [vmem:[#allocation11 + $0xc4] sm:$0xf]
    %v1361 = vld [vmem:[#allocation11 + $0xc8] sm:$0xf]
    %v1362 = vld [vmem:[#allocation11 + $0xcc] sm:$0xf]
    %v1363 = vld [vmem:[#allocation11 + $0xd0] sm:$0xf]
    %v1364 = vld [vmem:[#allocation11 + $0xd4] sm:$0xf]
    %v1365 = vld [vmem:[#allocation11 + $0xd8] sm:$0xf]
    %v1366 = vld [vmem:[#allocation11 + $0xdc] sm:$0xf]
    %v1367 = vld [vmem:[#allocation11 + $0xe0] sm:$0xf]
    %v1368 = vld [vmem:[#allocation11 + $0xe4] sm:$0xf]
    %v1369 = vld [vmem:[#allocation11 + $0xe8] sm:$0xf]
    %v1370 = vld [vmem:[#allocation11 + $0xec] sm:$0xf]
    %v1371 = vld [vmem:[#allocation11 + $0xf0] sm:$0xf]
    %v1372 = vld [vmem:[#allocation11 + $0xf4] sm:$0xf]
    %v1373 = vld [vmem:[#allocation11 + $0xf8] sm:$0xf]
    %v1374 = vld [vmem:[#allocation11 + $0xfc] sm:$0xf]
    %v1375 = vpack.c.bf16 %v1358, %v1357
    %v1376 = vld [vmem:[#allocation12 + $0x23] ss:$0 sm:$0xff]
    %v1393 = vunpack.c.l.b16 %v1359
    %v1394 = vunpack.c.l.b16 %v1360
    %v1395 = vunpack.c.l.b16 %v1361
    %v1396 = vunpack.c.l.b16 %v1362
    %v1397 = vunpack.c.l.b16 %v1363
    %v1398 = vunpack.c.l.b16 %v1364
    %v1399 = vunpack.c.l.b16 %v1365
    %v1400 = vunpack.c.l.b16 %v1366
    %v1401 = vunpack.c.l.b16 %v1367
    %v1402 = vunpack.c.l.b16 %v1368
    %v1403 = vunpack.c.l.b16 %v1369
    %v1404 = vunpack.c.l.b16 %v1370
    %v1405 = vunpack.c.l.b16 %v1371
    %v1406 = vunpack.c.l.b16 %v1372
    %v1407 = vunpack.c.l.b16 %v1373
    %v1408 = vunpack.c.l.b16 %v1374
    %v1409 = vpack.c.b16 %v1394, %v1393
    %v1410 = vpack.c.b16 %v1396, %v1395
    %v1411 = vpack.c.b16 %v1398, %v1397
    %v1412 = vpack.c.b16 %v1400, %v1399
    %v1413 = vpack.c.b16 %v1402, %v1401
    %v1414 = vpack.c.b16 %v1404, %v1403
    %v1415 = vpack.c.b16 %v1406, %v1405
    %v1416 = vpack.c.b16 %v1408, %v1407
    %1425 = vmatpush.bf16.msra.mxu0 %v1416
    %1426 = vmatpush.bf16.msra.mxu0 %v1415
    %1427 = vmatpush.bf16.msra.mxu0 %v1414
    %1428 = vmatpush.bf16.msra.mxu0 %v1413
    %1429 = vmatpush.bf16.msra.mxu0 %v1412
    %1430 = vmatpush.bf16.msra.mxu0 %v1411
    %1431 = vmatpush.bf16.msra.mxu0 %v1410
    %1432 = vmatpush.bf16.msra.mxu0 %v1409
    %1433 = vmatmul.bf16.gmra.mxu0 %v1375
    %v1434 = vpop.f32.mrf.mxu0
    %v1435 = vadd.f32 %v1376, %v1434
    %v1436 = vpop.f32.mrf.mxu0
    %v1437 = vadd.f32 %v1376, %v1436
    %1438 = vdwg.mxu0
    %v1439 = vmax.f32 %v1435, 0.0
    %v1440 = vmax.f32 %v1437, 0.0
    %v1441 = vadd.f32 %v1439, %v1440
    %v1442 = vrot.slane %v1441, 4
    %v1443 = vadd.f32 %v1441, %v1442
    %v1444 = vrot.slane %v1443, 2
    %v1445 = vadd.f32 %v1443, %v1444
    %v1446 = vrot.slane %v1445, 1
    %v1447 = vadd.f32 %v1445, %v1446
    %v1448 = vmul.f32 %v1447, %v1088
    %v1449 = vsub.f32 %v1439, %v1448
    %v1450 = vsub.f32 %v1440, %v1448
    %v1451 = vmul.f32 %v1449, %v1449
    %v1452 = vmul.f32 %v1450, %v1450
    %v1453 = vadd.f32 %v1451, %v1452
    %v1454 = vrot.slane %v1453, 4
    %v1455 = vadd.f32 %v1453, %v1454
    %v1456 = vrot.slane %v1455, 2
    %v1457 = vadd.f32 %v1455, %v1456
    %v1458 = vrot.slane %v1457, 1
    %v1459 = vadd.f32 %v1457, %v1458
    %v1460 = vmul.f32 %v1459, %v1088
    %v1461 = vld [vmem:[#allocation12 + $0x24] ss:$0 sm:$0xff]
    %v1462 = vmul.f32 %v1461, %v1449
    %v1463 = vmul.f32 %v1461, %v1450
    %v1464 = vadd.f32 %v1460, 1e-05
    %v1465 = vrsqrt.pop %v1464
    %v1466 = vmul.f32 %v1465, %v1464
    %v1467 = vmul.f32 %v1466, %v1465
    %v1468 = vmul.f32 0.5, %v1467
    %v1469 = vsub.f32 1.5, %v1468
    %v1470 = vmul.f32 %v1465, %v1469
    %vm1471 = vweird.f32 %v1464
    %vm1472 = vweird.f32 %v1465
    %vm1473 = vmor %vm1471, %vm1472
    %v1474 = vsel %vm1473, %v1465, %v1470
    %v1475 = vmul.f32 %v1462, %v1474
    %v1476 = vmul.f32 %v1463, %v1474
    %v1477 = vld [vmem:[#allocation12 + $0x25] ss:$0 sm:$0xff]
    %v1478 = vadd.f32 %v1475, %v1477
    %v1479 = vadd.f32 %v1476, %v1477
    %v1480 = vpack.c.bf16 %v1479, %v1478
    %1481 = vmatpush.bf16.msra.mxu0 0
    %1482 = vmatpush.bf16.msra.mxu0 0
    %1483 = vmatpush.bf16.msra.mxu0 0
    %1484 = vmatpush.bf16.msra.mxu0 0
    %1485 = vmatpush.bf16.msra.mxu0 0
    %1486 = vmatpush.bf16.msra.mxu0 0
    %1487 = vmatpush.bf16.msra.mxu0 0
    %1488 = vmatpush.bf16.msra.mxu0 %v1480
    %1489 = vmatmul.bf16.gmra.mxu0 %v1341
    %v1490 = vpop.f32.mrf.mxu0
    %v1491 = vadd.f32 0.0, %v1490
    %v1492 = vpop.f32.mrf.mxu0
    %v1493 = vadd.f32 0.0, %v1492
    %1494 = vdwg.mxu0
    %v1495 = vld [vmem:[#allocation11 + $0x100] sm:$0xf]
    %v1496 = vld [vmem:[#allocation11 + $0x104] sm:$0xf]
    %v1497 = vld [vmem:[#allocation11 + $0x108] sm:$0xf]
    %v1498 = vld [vmem:[#allocation11 + $0x10c] sm:$0xf]
    %v1499 = vld [vmem:[#allocation11 + $0x110] sm:$0xf]
    %v1500 = vld [vmem:[#allocation11 + $0x114] sm:$0xf]
    %v1501 = vld [vmem:[#allocation11 + $0x118] sm:$0xf]
    %v1502 = vld [vmem:[#allocation11 + $0x11c] sm:$0xf]
    %v1503 = vld [vmem:[#allocation11 + $0x120] sm:$0xf]
    %v1504 = vld [vmem:[#allocation11 + $0x124] sm:$0xf]
    %v1505 = vld [vmem:[#allocation11 + $0x128] sm:$0xf]
    %v1506 = vld [vmem:[#allocation11 + $0x12c] sm:$0xf]
    %v1507 = vld [vmem:[#allocation11 + $0x130] sm:$0xf]
    %v1508 = vld [vmem:[#allocation11 + $0x134] sm:$0xf]
    %v1509 = vld [vmem:[#allocation11 + $0x138] sm:$0xf]
    %v1510 = vld [vmem:[#allocation11 + $0x13c] sm:$0xf]
    %v1511 = vpack.c.bf16 %v1493, %v1491
    %v1512 = vld [vmem:[#allocation12 + $0x26] ss:$0 sm:$0xff]
    %v1529 = vunpack.c.l.b16 %v1495
    %v1530 = vunpack.c.l.b16 %v1496
    %v1531 = vunpack.c.l.b16 %v1497
    %v1532 = vunpack.c.l.b16 %v1498
    %v1533 = vunpack.c.l.b16 %v1499
    %v1534 = vunpack.c.l.b16 %v1500
    %v1535 = vunpack.c.l.b16 %v1501
    %v1536 = vunpack.c.l.b16 %v1502
    %v1537 = vunpack.c.l.b16 %v1503
    %v1538 = vunpack.c.l.b16 %v1504
    %v1539 = vunpack.c.l.b16 %v1505
    %v1540 = vunpack.c.l.b16 %v1506
    %v1541 = vunpack.c.l.b16 %v1507
    %v1542 = vunpack.c.l.b16 %v1508
    %v1543 = vunpack.c.l.b16 %v1509
    %v1544 = vunpack.c.l.b16 %v1510
    %v1545 = vpack.c.b16 %v1530, %v1529
    %v1546 = vpack.c.b16 %v1532, %v1531
    %v1547 = vpack.c.b16 %v1534, %v1533
    %v1548 = vpack.c.b16 %v1536, %v1535
    %v1549 = vpack.c.b16 %v1538, %v1537
    %v1550 = vpack.c.b16 %v1540, %v1539
    %v1551 = vpack.c.b16 %v1542, %v1541
    %v1552 = vpack.c.b16 %v1544, %v1543
    %1561 = vmatpush.bf16.msra.mxu0 %v1552
    %1562 = vmatpush.bf16.msra.mxu0 %v1551
    %1563 = vmatpush.bf16.msra.mxu0 %v1550
    %1564 = vmatpush.bf16.msra.mxu0 %v1549
    %1565 = vmatpush.bf16.msra.mxu0 %v1548
    %1566 = vmatpush.bf16.msra.mxu0 %v1547
    %1567 = vmatpush.bf16.msra.mxu0 %v1546
    %1568 = vmatpush.bf16.msra.mxu0 %v1545
    %1569 = vmatmul.bf16.gmra.mxu0 %v1511
    %v1570 = vpop.f32.mrf.mxu0
    %v1571 = vadd.f32 %v1512, %v1570
    %v1572 = vpop.f32.mrf.mxu0
    %v1573 = vadd.f32 %v1512, %v1572
    %1574 = vdwg.mxu0
    %v1575 = vmax.f32 %v1571, 0.0
    %v1576 = vmax.f32 %v1573, 0.0
    %v1577 = vld [vmem:[#allocation11 + $0x140] sm:$0xf]
    %v1578 = vld [vmem:[#allocation11 + $0x144] sm:$0xf]
    %v1579 = vld [vmem:[#allocation11 + $0x148] sm:$0xf]
    %v1580 = vld [vmem:[#allocation11 + $0x14c] sm:$0xf]
    %v1581 = vld [vmem:[#allocation11 + $0x150] sm:$0xf]
    %v1582 = vld [vmem:[#allocation11 + $0x154] sm:$0xf]
    %v1583 = vld [vmem:[#allocation11 + $0x158] sm:$0xf]
    %v1584 = vld [vmem:[#allocation11 + $0x15c] sm:$0xf]
    %v1585 = vld [vmem:[#allocation11 + $0x160] sm:$0xf]
    %v1586 = vld [vmem:[#allocation11 + $0x164] sm:$0xf]
    %v1587 = vld [vmem:[#allocation11 + $0x168] sm:$0xf]
    %v1588 = vld [vmem:[#allocation11 + $0x16c] sm:$0xf]
    %v1589 = vld [vmem:[#allocation11 + $0x170] sm:$0xf]
    %v1590 = vld [vmem:[#allocation11 + $0x174] sm:$0xf]
    %v1591 = vld [vmem:[#allocation11 + $0x178] sm:$0xf]
    %v1592 = vld [vmem:[#allocation11 + $0x17c] sm:$0xf]
    %v1593 = vpack.c.bf16 %v1576, %v1575
    %v1594 = vld [vmem:[#allocation12 + $0x27] ss:$0 sm:$0xff]
    %v1611 = vunpack.c.l.b16 %v1577
    %v1612 = vunpack.c.l.b16 %v1578
    %v1613 = vunpack.c.l.b16 %v1579
    %v1614 = vunpack.c.l.b16 %v1580
    %v1615 = vunpack.c.l.b16 %v1581
    %v1616 = vunpack.c.l.b16 %v1582
    %v1617 = vunpack.c.l.b16 %v1583
    %v1618 = vunpack.c.l.b16 %v1584
    %v1619 = vunpack.c.l.b16 %v1585
    %v1620 = vunpack.c.l.b16 %v1586
    %v1621 = vunpack.c.l.b16 %v1587
    %v1622 = vunpack.c.l.b16 %v1588
    %v1623 = vunpack.c.l.b16 %v1589
    %v1624 = vunpack.c.l.b16 %v1590
    %v1625 = vunpack.c.l.b16 %v1591
    %v1626 = vunpack.c.l.b16 %v1592
    %v1627 = vpack.c.b16 %v1612, %v1611
    %v1628 = vpack.c.b16 %v1614, %v1613
    %v1629 = vpack.c.b16 %v1616, %v1615
    %v1630 = vpack.c.b16 %v1618, %v1617
    %v1631 = vpack.c.b16 %v1620, %v1619
    %v1632 = vpack.c.b16 %v1622, %v1621
    %v1633 = vpack.c.b16 %v1624, %v1623
    %v1634 = vpack.c.b16 %v1626, %v1625
    %1643 = vmatpush.bf16.msra.mxu0 %v1634
    %1644 = vmatpush.bf16.msra.mxu0 %v1633
    %1645 = vmatpush.bf16.msra.mxu0 %v1632
    %1646 = vmatpush.bf16.msra.mxu0 %v1631
    %1647 = vmatpush.bf16.msra.mxu0 %v1630
    %1648 = vmatpush.bf16.msra.mxu0 %v1629
    %1649 = vmatpush.bf16.msra.mxu0 %v1628
    %1650 = vmatpush.bf16.msra.mxu0 %v1627
    %1651 = vmatmul.bf16.gmra.mxu0 %v1593
    %v1652 = vpop.f32.mrf.mxu0
    %v1653 = vadd.f32 %v1594, %v1652
    %v1654 = vpop.f32.mrf.mxu0
    %v1655 = vadd.f32 %v1594, %v1654
    %1656 = vdwg.mxu0
    %v1657 = vmax.f32 %v1653, 0.0
    %v1658 = vmax.f32 %v1655, 0.0
    %v1659 = vadd.f32 %v1657, %v1658
    %v1660 = vrot.slane %v1659, 4
    %v1661 = vadd.f32 %v1659, %v1660
    %v1662 = vrot.slane %v1661, 2
    %v1663 = vadd.f32 %v1661, %v1662
    %v1664 = vrot.slane %v1663, 1
    %v1665 = vadd.f32 %v1663, %v1664
    %v1666 = vmul.f32 %v1665, %v1088
    %v1667 = vsub.f32 %v1657, %v1666
    %v1668 = vsub.f32 %v1658, %v1666
    %v1669 = vmul.f32 %v1667, %v1667
    %v1670 = vmul.f32 %v1668, %v1668
    %v1671 = vadd.f32 %v1669, %v1670
    %v1672 = vrot.slane %v1671, 4
    %v1673 = vadd.f32 %v1671, %v1672
    %v1674 = vrot.slane %v1673, 2
    %v1675 = vadd.f32 %v1673, %v1674
    %v1676 = vrot.slane %v1675, 1
    %v1677 = vadd.f32 %v1675, %v1676
    %v1678 = vmul.f32 %v1677, %v1088
    %v1679 = vld [vmem:[#allocation12 + $0x40] ss:$0 sm:$0xff]
    %v1680 = vmul.f32 %v1679, %v1667
    %v1681 = vmul.f32 %v1679, %v1668
    %v1682 = vadd.f32 %v1678, 1e-05
    %v1683 = vrsqrt.pop %v1682
    %v1684 = vmul.f32 %v1683, %v1682
    %v1685 = vmul.f32 %v1684, %v1683
    %v1686 = vmul.f32 0.5, %v1685
    %v1687 = vsub.f32 1.5, %v1686
    %v1688 = vmul.f32 %v1683, %v1687
    %vm1689 = vweird.f32 %v1682
    %vm1690 = vweird.f32 %v1683
    %vm1691 = vmor %vm1689, %vm1690
    %v1692 = vsel %vm1691, %v1683, %v1688
    %v1693 = vmul.f32 %v1680, %v1692
    %v1694 = vmul.f32 %v1681, %v1692
    %v1695 = vld [vmem:[#allocation12 + $0x41] ss:$0 sm:$0xff]
    %v1696 = vadd.f32 %v1693, %v1695
    %v1697 = vadd.f32 %v1694, %v1695
    %1698 = vxpose.xlu0.b32.start [1/16] %v968, 128
    %1699 = vxpose.xlu0.b32.cont [2/16] %v970, 128
    %1700 = vxpose.xlu0.b32.cont [3/16] 0.0, 128
    %1701 = vxpose.xlu0.b32.cont [4/16] 0.0, 128
    %1702 = vxpose.xlu0.b32.cont [5/16] 0.0, 128
    %1703 = vxpose.xlu0.b32.cont [6/16] 0.0, 128
    %1704 = vxpose.xlu0.b32.cont [7/16] 0.0, 128
    %1705 = vxpose.xlu0.b32.cont [8/16] 0.0, 128
    %1706 = vxpose.xlu0.b32.cont [9/16] 0.0, 128
    %1707 = vxpose.xlu0.b32.cont [10/16] 0.0, 128
    %1708 = vxpose.xlu0.b32.cont [11/16] 0.0, 128
    %1709 = vxpose.xlu0.b32.cont [12/16] 0.0, 128
    %1710 = vxpose.xlu0.b32.cont [13/16] 0.0, 128
    %1711 = vxpose.xlu0.b32.cont [14/16] 0.0, 128
    %1712 = vxpose.xlu0.b32.cont [15/16] 0.0, 128
    %1713 = vxpose.xlu0.b32.end [16/16] 0.0, 128
    %v1714 = vpop.trf.xlu0
    %v1715 = vpop.trf.xlu0
    %v1716 = vpop.trf.xlu0
    %v1717 = vpop.trf.xlu0
    %v1718 = vpop.trf.xlu0
    %v1719 = vpop.trf.xlu0
    %v1720 = vpop.trf.xlu0
    %v1721 = vpop.trf.xlu0
    %v1722 = vpop.trf.xlu0
    %v1723 = vpop.trf.xlu0
    %v1724 = vpop.trf.xlu0
    %v1725 = vpop.trf.xlu0
    %v1726 = vpop.trf.xlu0
    %v1727 = vpop.trf.xlu0
    %v1728 = vpop.trf.xlu0
    %v1729 = vpop.trf.xlu0
    %1731 = vset.pattern.permute.xlu0 8
    %1732 = vperm.xlu0 %1731, %v968
    %v1733 = vpop.permute.xlu0 %1732
    %1736 = vset.pattern.permute.xlu0 8
    %1737 = vperm.xlu0 %1736, %v970
    %v1738 = vpop.permute.xlu0 %1737
    %v1740 = vperm.slane %v1714, 0
    %v1741 = vadd.f32 %v1733, %v1740
    %v1742 = vadd.f32 %v1738, %v1740
    %vm1743 = vcmp.ge.f32.partialorder %v1741, 0.0
    %vm1744 = vcmp.ge.f32.partialorder %v1742, 0.0
    %v1745 = vmul.f32 %v1741, 0.2
    %v1746 = vmul.f32 %v1742, 0.2
    %v1747 = vsel %vm1743, %v1741, %v1745
    %v1748 = vsel %vm1744, %v1742, %v1746
    %v1749 = vsel %vm124, %v1747, -1e+30
    %v1750 = vsel %vm125, %v1748, -1e+30
    %v1751 = vsel %vm975, %v1749, -inf
    %1752 = vmax.xlane.f32.xlu0 %v1751
    %v1753 = vpop.xlane.xlu0 %1752
    %v1754 = vsel %vm975, %v1750, -inf
    %1755 = vmax.xlane.f32.xlu0 %v1754
    %v1756 = vpop.xlane.xlu0 %1755
    %v1757 = vsub.f32 %v1749, %v1753
    %v1758 = vsub.f32 %v1750, %v1756
    %v1759 = vmul.f32 %v1757, 1.442695
    %v1760 = vpow.pop %v1759
    %v1761 = vmul.f32 %v1758, 1.442695
    %v1762 = vpow.pop %v1761
    %v1763 = vsel %vm975, %v1760, 0.0
    %1764 = vadd.xlane.f32.xlu0 %v1763
    %v1765 = vpop.xlane.xlu0 %1764
    %v1766 = vsel %vm975, %v1762, 0.0
    %1767 = vadd.xlane.f32.xlu0 %v1766
    %v1768 = vpop.xlane.xlu0 %1767
    %v1769 = vrcp.pop %v1765
    %v1770 = vrcp.pop %v1768
    %v1771 = vmul.f32 %v1760, %v1769
    %v1772 = vmul.f32 %v1762, %v1770
    %v1773 = vpack.c.bf16 %v1772, %v1771
    %v1774 = vpack.c.bf16 %v942, %v940
    %v1776 = vsel %vm975, %v1773, 0
    %1778 = vmatpush.bf16.msra.mxu0 0
    %1779 = vmatpush.bf16.msra.mxu0 0
    %1780 = vmatpush.bf16.msra.mxu0 0
    %1781 = vmatpush.bf16.msra.mxu0 0
    %1782 = vmatpush.bf16.msra.mxu0 0
    %1783 = vmatpush.bf16.msra.mxu0 0
    %1784 = vmatpush.bf16.msra.mxu0 0
    %1785 = vmatpush.bf16.msra.mxu0 %v1774
    %1786 = vmatmul.bf16.gmra.mxu0 %v1776
    %v1787 = vpop.f32.mrf.mxu0
    %v1788 = vadd.f32 0.0, %v1787
    %v1789 = vpop.f32.mrf.mxu0
    %v1790 = vadd.f32 0.0, %v1789
    %1791 = vdwg.mxu0
    %1792 = vst.msk [vmem:[#allocation4] sm:$0xff] %vm975, %v1788
    %1793 = vst.msk [vmem:[#allocation4 + $0x8] sm:$0xff] %vm975, %v1790
    %1794 = vset.pattern.permute.xlu0 9
    %1795 = vperm.xlu0 %1794, %v968
    %v1796 = vpop.permute.xlu0 %1795
    %1798 = vset.pattern.permute.xlu0 9
    %1799 = vperm.xlu0 %1798, %v970
    %v1800 = vpop.permute.xlu0 %1799
    %v1802 = vperm.slane %v1714, 1
    %v1803 = vadd.f32 %v1796, %v1802
    %v1804 = vadd.f32 %v1800, %v1802
    %vm1805 = vcmp.ge.f32.partialorder %v1803, 0.0
    %vm1806 = vcmp.ge.f32.partialorder %v1804, 0.0
    %v1807 = vmul.f32 %v1803, 0.2
    %v1808 = vmul.f32 %v1804, 0.2
    %v1809 = vsel %vm1805, %v1803, %v1807
    %v1810 = vsel %vm1806, %v1804, %v1808
    %v1811 = vsel %vm124, %v1809, -1e+30
    %v1812 = vsel %vm125, %v1810, -1e+30
    %v1813 = vsel %vm975, %v1811, -inf
    %1814 = vmax.xlane.f32.xlu0 %v1813
    %v1815 = vpop.xlane.xlu0 %1814
    %v1816 = vsel %vm975, %v1812, -inf
    %1817 = vmax.xlane.f32.xlu0 %v1816
    %v1818 = vpop.xlane.xlu0 %1817
    %v1819 = vsub.f32 %v1811, %v1815
    %v1820 = vsub.f32 %v1812, %v1818
    %v1821 = vmul.f32 %v1819, 1.442695
    %v1822 = vpow.pop %v1821
    %v1823 = vmul.f32 %v1820, 1.442695
    %v1824 = vpow.pop %v1823
    %v1825 = vsel %vm975, %v1822, 0.0
    %1826 = vadd.xlane.f32.xlu0 %v1825
    %v1827 = vpop.xlane.xlu0 %1826
    %v1828 = vsel %vm975, %v1824, 0.0
    %1829 = vadd.xlane.f32.xlu0 %v1828
    %v1830 = vpop.xlane.xlu0 %1829
    %v1831 = vrcp.pop %v1827
    %v1832 = vrcp.pop %v1830
    %v1833 = vmul.f32 %v1822, %v1831
    %v1834 = vmul.f32 %v1824, %v1832
    %v1835 = vpack.c.bf16 %v1834, %v1833
    %1837 = vrot.lane.b32.xlu0 %v1774, 112
    %v1838 = vpop.permute.xlu0 %1837
    %v1841 = vsel %vm975, %v1835, 0
    %1843 = vmatpush.bf16.msra.mxu0 0
    %1844 = vmatpush.bf16.msra.mxu0 0
    %1845 = vmatpush.bf16.msra.mxu0 0
    %1846 = vmatpush.bf16.msra.mxu0 0
    %1847 = vmatpush.bf16.msra.mxu0 0
    %1848 = vmatpush.bf16.msra.mxu0 0
    %1849 = vmatpush.bf16.msra.mxu0 0
    %1850 = vmatpush.bf16.msra.mxu0 %v1838
    %1851 = vmatmul.bf16.gmra.mxu0 %v1841
    %v1852 = vpop.f32.mrf.mxu0
    %v1853 = vadd.f32 0.0, %v1852
    %v1854 = vpop.f32.mrf.mxu0
    %v1855 = vadd.f32 0.0, %v1854
    %1856 = vdwg.mxu0
    %1859 = vrot.lane.b32.xlu0 %v1853, 16
    %v1860 = vpop.permute.xlu0 %1859
    %1861 = vrot.lane.b32.xlu0 %v1855, 16
    %v1862 = vpop.permute.xlu0 %1861
    %vm1865 = vcmask 261248
    %1866 = vst.msk [vmem:[#allocation4] sm:$0xff] %vm1865, %v1860
    %1867 = vst.msk [vmem:[#allocation4 + $0x8] sm:$0xff] %vm1865, %v1862
    %1868 = vset.pattern.permute.xlu0 10
    %1869 = vperm.xlu0 %1868, %v968
    %v1870 = vpop.permute.xlu0 %1869
    %1872 = vset.pattern.permute.xlu0 10
    %1873 = vperm.xlu0 %1872, %v970
    %v1874 = vpop.permute.xlu0 %1873
    %v1876 = vperm.slane %v1714, 2
    %v1877 = vadd.f32 %v1870, %v1876
    %v1878 = vadd.f32 %v1874, %v1876
    %vm1879 = vcmp.ge.f32.partialorder %v1877, 0.0
    %vm1880 = vcmp.ge.f32.partialorder %v1878, 0.0
    %v1881 = vmul.f32 %v1877, 0.2
    %v1882 = vmul.f32 %v1878, 0.2
    %v1883 = vsel %vm1879, %v1877, %v1881
    %v1884 = vsel %vm1880, %v1878, %v1882
    %v1885 = vsel %vm124, %v1883, -1e+30
    %v1886 = vsel %vm125, %v1884, -1e+30
    %v1887 = vsel %vm975, %v1885, -inf
    %1888 = vmax.xlane.f32.xlu0 %v1887
    %v1889 = vpop.xlane.xlu0 %1888
    %v1890 = vsel %vm975, %v1886, -inf
    %1891 = vmax.xlane.f32.xlu0 %v1890
    %v1892 = vpop.xlane.xlu0 %1891
    %v1893 = vsub.f32 %v1885, %v1889
    %v1894 = vsub.f32 %v1886, %v1892
    %v1895 = vmul.f32 %v1893, 1.442695
    %v1896 = vpow.pop %v1895
    %v1897 = vmul.f32 %v1894, 1.442695
    %v1898 = vpow.pop %v1897
    %v1899 = vsel %vm975, %v1896, 0.0
    %1900 = vadd.xlane.f32.xlu0 %v1899
    %v1901 = vpop.xlane.xlu0 %1900
    %v1902 = vsel %vm975, %v1898, 0.0
    %1903 = vadd.xlane.f32.xlu0 %v1902
    %v1904 = vpop.xlane.xlu0 %1903
    %v1905 = vrcp.pop %v1901
    %v1906 = vrcp.pop %v1904
    %v1907 = vmul.f32 %v1896, %v1905
    %v1908 = vmul.f32 %v1898, %v1906
    %v1909 = vpack.c.bf16 %v1908, %v1907
    %1910 = vrot.lane.b32.xlu0 %v1774, 96
    %v1911 = vpop.permute.xlu0 %1910
    %v1914 = vsel %vm975, %v1909, 0
    %1916 = vmatpush.bf16.msra.mxu0 0
    %1917 = vmatpush.bf16.msra.mxu0 0
    %1918 = vmatpush.bf16.msra.mxu0 0
    %1919 = vmatpush.bf16.msra.mxu0 0
    %1920 = vmatpush.bf16.msra.mxu0 0
    %1921 = vmatpush.bf16.msra.mxu0 0
    %1922 = vmatpush.bf16.msra.mxu0 0
    %1923 = vmatpush.bf16.msra.mxu0 %v1911
    %1924 = vmatmul.bf16.gmra.mxu0 %v1914
    %v1925 = vpop.f32.mrf.mxu0
    %v1926 = vadd.f32 0.0, %v1925
    %v1927 = vpop.f32.mrf.mxu0
    %v1928 = vadd.f32 0.0, %v1927
    %1929 = vdwg.mxu0
    %1932 = vrot.lane.b32.xlu0 %v1926, 32
    %v1933 = vpop.permute.xlu0 %1932
    %1934 = vrot.lane.b32.xlu0 %v1928, 32
    %v1935 = vpop.permute.xlu0 %1934
    %vm1938 = vcmask 392448
    %1939 = vst.msk [vmem:[#allocation4] sm:$0xff] %vm1938, %v1933
    %1940 = vst.msk [vmem:[#allocation4 + $0x8] sm:$0xff] %vm1938, %v1935
    %1941 = vset.pattern.permute.xlu0 11
    %1942 = vperm.xlu0 %1941, %v968
    %v1943 = vpop.permute.xlu0 %1942
    %1945 = vset.pattern.permute.xlu0 11
    %1946 = vperm.xlu0 %1945, %v970
    %v1947 = vpop.permute.xlu0 %1946
    %v1949 = vperm.slane %v1714, 3
    %v1950 = vadd.f32 %v1943, %v1949
    %v1951 = vadd.f32 %v1947, %v1949
    %vm1952 = vcmp.ge.f32.partialorder %v1950, 0.0
    %vm1953 = vcmp.ge.f32.partialorder %v1951, 0.0
    %v1954 = vmul.f32 %v1950, 0.2
    %v1955 = vmul.f32 %v1951, 0.2
    %v1956 = vsel %vm1952, %v1950, %v1954
    %v1957 = vsel %vm1953, %v1951, %v1955
    %v1958 = vsel %vm124, %v1956, -1e+30
    %v1959 = vsel %vm125, %v1957, -1e+30
    %v1960 = vsel %vm975, %v1958, -inf
    %1961 = vmax.xlane.f32.xlu0 %v1960
    %v1962 = vpop.xlane.xlu0 %1961
    %v1963 = vsel %vm975, %v1959, -inf
    %1964 = vmax.xlane.f32.xlu0 %v1963
    %v1965 = vpop.xlane.xlu0 %1964
    %v1966 = vsub.f32 %v1958, %v1962
    %v1967 = vsub.f32 %v1959, %v1965
    %v1968 = vmul.f32 %v1966, 1.442695
    %v1969 = vpow.pop %v1968
    %v1970 = vmul.f32 %v1967, 1.442695
    %v1971 = vpow.pop %v1970
    %v1972 = vsel %vm975, %v1969, 0.0
    %1973 = vadd.xlane.f32.xlu0 %v1972
    %v1974 = vpop.xlane.xlu0 %1973
    %v1975 = vsel %vm975, %v1971, 0.0
    %1976 = vadd.xlane.f32.xlu0 %v1975
    %v1977 = vpop.xlane.xlu0 %1976
    %v1978 = vrcp.pop %v1974
    %v1979 = vrcp.pop %v1977
    %v1980 = vmul.f32 %v1969, %v1978
    %v1981 = vmul.f32 %v1971, %v1979
    %v1982 = vpack.c.bf16 %v1981, %v1980
    %1983 = vrot.lane.b32.xlu0 %v1774, 80
    %v1984 = vpop.permute.xlu0 %1983
    %v1987 = vsel %vm975, %v1982, 0
    %1989 = vmatpush.bf16.msra.mxu0 0
    %1990 = vmatpush.bf16.msra.mxu0 0
    %1991 = vmatpush.bf16.msra.mxu0 0
    %1992 = vmatpush.bf16.msra.mxu0 0
    %1993 = vmatpush.bf16.msra.mxu0 0
    %1994 = vmatpush.bf16.msra.mxu0 0
    %1995 = vmatpush.bf16.msra.mxu0 0
    %1996 = vmatpush.bf16.msra.mxu0 %v1984
    %1997 = vmatmul.bf16.gmra.mxu0 %v1987
    %v1998 = vpop.f32.mrf.mxu0
    %v1999 = vadd.f32 0.0, %v1998
    %v2000 = vpop.f32.mrf.mxu0
    %v2001 = vadd.f32 0.0, %v2000
    %2002 = vdwg.mxu0
    %2005 = vrot.lane.b32.xlu0 %v1999, 48
    %v2006 = vpop.permute.xlu0 %2005
    %2007 = vrot.lane.b32.xlu0 %v2001, 48
    %v2008 = vpop.permute.xlu0 %2007
    %vm2011 = vcmask 523648
    %2012 = vst.msk [vmem:[#allocation4] sm:$0xff] %vm2011, %v2006
    %2013 = vst.msk [vmem:[#allocation4 + $0x8] sm:$0xff] %vm2011, %v2008
    %2014 = vset.pattern.permute.xlu0 12
    %2015 = vperm.xlu0 %2014, %v968
    %v2016 = vpop.permute.xlu0 %2015
    %2018 = vset.pattern.permute.xlu0 12
    %2019 = vperm.xlu0 %2018, %v970
    %v2020 = vpop.permute.xlu0 %2019
    %v2022 = vperm.slane %v1714, 4
    %v2023 = vadd.f32 %v2016, %v2022
    %v2024 = vadd.f32 %v2020, %v2022
    %vm2025 = vcmp.ge.f32.partialorder %v2023, 0.0
    %vm2026 = vcmp.ge.f32.partialorder %v2024, 0.0
    %v2027 = vmul.f32 %v2023, 0.2
    %v2028 = vmul.f32 %v2024, 0.2
    %v2029 = vsel %vm2025, %v2023, %v2027
    %v2030 = vsel %vm2026, %v2024, %v2028
    %v2031 = vsel %vm124, %v2029, -1e+30
    %v2032 = vsel %vm125, %v2030, -1e+30
    %v2033 = vsel %vm975, %v2031, -inf
    %2034 = vmax.xlane.f32.xlu0 %v2033
    %v2035 = vpop.xlane.xlu0 %2034
    %v2036 = vsel %vm975, %v2032, -inf
    %2037 = vmax.xlane.f32.xlu0 %v2036
    %v2038 = vpop.xlane.xlu0 %2037
    %v2039 = vsub.f32 %v2031, %v2035
    %v2040 = vsub.f32 %v2032, %v2038
    %v2041 = vmul.f32 %v2039, 1.442695
    %v2042 = vpow.pop %v2041
    %v2043 = vmul.f32 %v2040, 1.442695
    %v2044 = vpow.pop %v2043
    %v2045 = vsel %vm975, %v2042, 0.0
    %2046 = vadd.xlane.f32.xlu0 %v2045
    %v2047 = vpop.xlane.xlu0 %2046
    %v2048 = vsel %vm975, %v2044, 0.0
    %2049 = vadd.xlane.f32.xlu0 %v2048
    %v2050 = vpop.xlane.xlu0 %2049
    %v2051 = vrcp.pop %v2047
    %v2052 = vrcp.pop %v2050
    %v2053 = vmul.f32 %v2042, %v2051
    %v2054 = vmul.f32 %v2044, %v2052
    %v2055 = vpack.c.bf16 %v2054, %v2053
    %2056 = vrot.lane.b32.xlu0 %v1774, 64
    %v2057 = vpop.permute.xlu0 %2056
    %v2060 = vsel %vm975, %v2055, 0
    %2062 = vmatpush.bf16.msra.mxu0 0
    %2063 = vmatpush.bf16.msra.mxu0 0
    %2064 = vmatpush.bf16.msra.mxu0 0
    %2065 = vmatpush.bf16.msra.mxu0 0
    %2066 = vmatpush.bf16.msra.mxu0 0
    %2067 = vmatpush.bf16.msra.mxu0 0
    %2068 = vmatpush.bf16.msra.mxu0 0
    %2069 = vmatpush.bf16.msra.mxu0 %v2057
    %2070 = vmatmul.bf16.gmra.mxu0 %v2060
    %v2071 = vpop.f32.mrf.mxu0
    %v2072 = vadd.f32 0.0, %v2071
    %v2073 = vpop.f32.mrf.mxu0
    %v2074 = vadd.f32 0.0, %v2073
    %2075 = vdwg.mxu0
    %2078 = vrot.lane.b32.xlu0 %v2072, 64
    %v2079 = vpop.permute.xlu0 %2078
    %2080 = vrot.lane.b32.xlu0 %v2074, 64
    %v2081 = vpop.permute.xlu0 %2080
    %vm2084 = vcmask 654848
    %2085 = vst.msk [vmem:[#allocation4] sm:$0xff] %vm2084, %v2079
    %2086 = vst.msk [vmem:[#allocation4 + $0x8] sm:$0xff] %vm2084, %v2081
    %2087 = vset.pattern.permute.xlu0 13
    %2088 = vperm.xlu0 %2087, %v968
    %v2089 = vpop.permute.xlu0 %2088
    %2091 = vset.pattern.permute.xlu0 13
    %2092 = vperm.xlu0 %2091, %v970
    %v2093 = vpop.permute.xlu0 %2092
    %v2095 = vperm.slane %v1714, 5
    %v2096 = vadd.f32 %v2089, %v2095
    %v2097 = vadd.f32 %v2093, %v2095
    %vm2098 = vcmp.ge.f32.partialorder %v2096, 0.0
    %vm2099 = vcmp.ge.f32.partialorder %v2097, 0.0
    %v2100 = vmul.f32 %v2096, 0.2
    %v2101 = vmul.f32 %v2097, 0.2
    %v2102 = vsel %vm2098, %v2096, %v2100
    %v2103 = vsel %vm2099, %v2097, %v2101
    %v2104 = vsel %vm124, %v2102, -1e+30
    %v2105 = vsel %vm125, %v2103, -1e+30
    %v2106 = vsel %vm975, %v2104, -inf
    %2107 = vmax.xlane.f32.xlu0 %v2106
    %v2108 = vpop.xlane.xlu0 %2107
    %v2109 = vsel %vm975, %v2105, -inf
    %2110 = vmax.xlane.f32.xlu0 %v2109
    %v2111 = vpop.xlane.xlu0 %2110
    %v2112 = vsub.f32 %v2104, %v2108
    %v2113 = vsub.f32 %v2105, %v2111
    %v2114 = vmul.f32 %v2112, 1.442695
    %v2115 = vpow.pop %v2114
    %v2116 = vmul.f32 %v2113, 1.442695
    %v2117 = vpow.pop %v2116
    %v2118 = vsel %vm975, %v2115, 0.0
    %2119 = vadd.xlane.f32.xlu0 %v2118
    %v2120 = vpop.xlane.xlu0 %2119
    %v2121 = vsel %vm975, %v2117, 0.0
    %2122 = vadd.xlane.f32.xlu0 %v2121
    %v2123 = vpop.xlane.xlu0 %2122
    %v2124 = vrcp.pop %v2120
    %v2125 = vrcp.pop %v2123
    %v2126 = vmul.f32 %v2115, %v2124
    %v2127 = vmul.f32 %v2117, %v2125
    %v2128 = vpack.c.bf16 %v2127, %v2126
    %2129 = vrot.lane.b32.xlu0 %v1774, 48
    %v2130 = vpop.permute.xlu0 %2129
    %v2133 = vsel %vm975, %v2128, 0
    %2135 = vmatpush.bf16.msra.mxu0 0
    %2136 = vmatpush.bf16.msra.mxu0 0
    %2137 = vmatpush.bf16.msra.mxu0 0
    %2138 = vmatpush.bf16.msra.mxu0 0
    %2139 = vmatpush.bf16.msra.mxu0 0
    %2140 = vmatpush.bf16.msra.mxu0 0
    %2141 = vmatpush.bf16.msra.mxu0 0
    %2142 = vmatpush.bf16.msra.mxu0 %v2130
    %2143 = vmatmul.bf16.gmra.mxu0 %v2133
    %v2144 = vpop.f32.mrf.mxu0
    %v2145 = vadd.f32 0.0, %v2144
    %v2146 = vpop.f32.mrf.mxu0
    %v2147 = vadd.f32 0.0, %v2146
    %2148 = vdwg.mxu0
    %2151 = vrot.lane.b32.xlu0 %v2145, 80
    %v2152 = vpop.permute.xlu0 %2151
    %2153 = vrot.lane.b32.xlu0 %v2147, 80
    %v2154 = vpop.permute.xlu0 %2153
    %vm2157 = vcmask 786048
    %2158 = vst.msk [vmem:[#allocation4] sm:$0xff] %vm2157, %v2152
    %2159 = vst.msk [vmem:[#allocation4 + $0x8] sm:$0xff] %vm2157, %v2154
    %2160 = vset.pattern.permute.xlu0 14
    %2161 = vperm.xlu0 %2160, %v968
    %v2162 = vpop.permute.xlu0 %2161
    %2164 = vset.pattern.permute.xlu0 14
    %2165 = vperm.xlu0 %2164, %v970
    %v2166 = vpop.permute.xlu0 %2165
    %v2168 = vperm.slane %v1714, 6
    %v2169 = vadd.f32 %v2162, %v2168
    %v2170 = vadd.f32 %v2166, %v2168
    %vm2171 = vcmp.ge.f32.partialorder %v2169, 0.0
    %vm2172 = vcmp.ge.f32.partialorder %v2170, 0.0
    %v2173 = vmul.f32 %v2169, 0.2
    %v2174 = vmul.f32 %v2170, 0.2
    %v2175 = vsel %vm2171, %v2169, %v2173
    %v2176 = vsel %vm2172, %v2170, %v2174
    %v2177 = vsel %vm124, %v2175, -1e+30
    %v2178 = vsel %vm125, %v2176, -1e+30
    %v2179 = vsel %vm975, %v2177, -inf
    %2180 = vmax.xlane.f32.xlu0 %v2179
    %v2181 = vpop.xlane.xlu0 %2180
    %v2182 = vsel %vm975, %v2178, -inf
    %2183 = vmax.xlane.f32.xlu0 %v2182
    %v2184 = vpop.xlane.xlu0 %2183
    %v2185 = vsub.f32 %v2177, %v2181
    %v2186 = vsub.f32 %v2178, %v2184
    %v2187 = vmul.f32 %v2185, 1.442695
    %v2188 = vpow.pop %v2187
    %v2189 = vmul.f32 %v2186, 1.442695
    %v2190 = vpow.pop %v2189
    %v2191 = vsel %vm975, %v2188, 0.0
    %2192 = vadd.xlane.f32.xlu0 %v2191
    %v2193 = vpop.xlane.xlu0 %2192
    %v2194 = vsel %vm975, %v2190, 0.0
    %2195 = vadd.xlane.f32.xlu0 %v2194
    %v2196 = vpop.xlane.xlu0 %2195
    %v2197 = vrcp.pop %v2193
    %v2198 = vrcp.pop %v2196
    %v2199 = vmul.f32 %v2188, %v2197
    %v2200 = vmul.f32 %v2190, %v2198
    %v2201 = vpack.c.bf16 %v2200, %v2199
    %2202 = vrot.lane.b32.xlu0 %v1774, 32
    %v2203 = vpop.permute.xlu0 %2202
    %v2206 = vsel %vm975, %v2201, 0
    %2208 = vmatpush.bf16.msra.mxu0 0
    %2209 = vmatpush.bf16.msra.mxu0 0
    %2210 = vmatpush.bf16.msra.mxu0 0
    %2211 = vmatpush.bf16.msra.mxu0 0
    %2212 = vmatpush.bf16.msra.mxu0 0
    %2213 = vmatpush.bf16.msra.mxu0 0
    %2214 = vmatpush.bf16.msra.mxu0 0
    %2215 = vmatpush.bf16.msra.mxu0 %v2203
    %2216 = vmatmul.bf16.gmra.mxu0 %v2206
    %v2217 = vpop.f32.mrf.mxu0
    %v2218 = vadd.f32 0.0, %v2217
    %v2219 = vpop.f32.mrf.mxu0
    %v2220 = vadd.f32 0.0, %v2219
    %2221 = vdwg.mxu0
    %2224 = vrot.lane.b32.xlu0 %v2218, 96
    %v2225 = vpop.permute.xlu0 %2224
    %2226 = vrot.lane.b32.xlu0 %v2220, 96
    %v2227 = vpop.permute.xlu0 %2226
    %vm2230 = vcmask 917248
    %2231 = vst.msk [vmem:[#allocation4] sm:$0xff] %vm2230, %v2225
    %2232 = vst.msk [vmem:[#allocation4 + $0x8] sm:$0xff] %vm2230, %v2227
    %2233 = vset.pattern.permute.xlu0 15
    %2234 = vperm.xlu0 %2233, %v968
    %v2235 = vpop.permute.xlu0 %2234
    %2237 = vset.pattern.permute.xlu0 15
    %2238 = vperm.xlu0 %2237, %v970
    %v2239 = vpop.permute.xlu0 %2238
    %v2241 = vperm.slane %v1714, 7
    %v2242 = vadd.f32 %v2235, %v2241
    %v2243 = vadd.f32 %v2239, %v2241
    %vm2244 = vcmp.ge.f32.partialorder %v2242, 0.0
    %vm2245 = vcmp.ge.f32.partialorder %v2243, 0.0
    %v2246 = vmul.f32 %v2242, 0.2
    %v2247 = vmul.f32 %v2243, 0.2
    %v2248 = vsel %vm2244, %v2242, %v2246
    %v2249 = vsel %vm2245, %v2243, %v2247
    %v2250 = vsel %vm124, %v2248, -1e+30
    %v2251 = vsel %vm125, %v2249, -1e+30
    %v2252 = vsel %vm975, %v2250, -inf
    %2253 = vmax.xlane.f32.xlu0 %v2252
    %v2254 = vpop.xlane.xlu0 %2253
    %v2255 = vsel %vm975, %v2251, -inf
    %2256 = vmax.xlane.f32.xlu0 %v2255
    %v2257 = vpop.xlane.xlu0 %2256
    %v2258 = vsub.f32 %v2250, %v2254
    %v2259 = vsub.f32 %v2251, %v2257
    %v2260 = vmul.f32 %v2258, 1.442695
    %v2261 = vpow.pop %v2260
    %v2262 = vmul.f32 %v2259, 1.442695
    %v2263 = vpow.pop %v2262
    %v2264 = vsel %vm975, %v2261, 0.0
    %2265 = vadd.xlane.f32.xlu0 %v2264
    %v2266 = vpop.xlane.xlu0 %2265
    %v2267 = vsel %vm975, %v2263, 0.0
    %2268 = vadd.xlane.f32.xlu0 %v2267
    %v2269 = vpop.xlane.xlu0 %2268
    %v2270 = vrcp.pop %v2266
    %v2271 = vrcp.pop %v2269
    %v2272 = vmul.f32 %v2261, %v2270
    %v2273 = vmul.f32 %v2263, %v2271
    %v2274 = vpack.c.bf16 %v2273, %v2272
    %2275 = vrot.lane.b32.xlu0 %v1774, 16
    %v2276 = vpop.permute.xlu0 %2275
    %v2279 = vsel %vm975, %v2274, 0
    %2281 = vmatpush.bf16.msra.mxu0 0
    %2282 = vmatpush.bf16.msra.mxu0 0
    %2283 = vmatpush.bf16.msra.mxu0 0
    %2284 = vmatpush.bf16.msra.mxu0 0
    %2285 = vmatpush.bf16.msra.mxu0 0
    %2286 = vmatpush.bf16.msra.mxu0 0
    %2287 = vmatpush.bf16.msra.mxu0 0
    %2288 = vmatpush.bf16.msra.mxu0 %v2276
    %2289 = vmatmul.bf16.gmra.mxu0 %v2279
    %v2290 = vpop.f32.mrf.mxu0
    %v2291 = vadd.f32 0.0, %v2290
    %v2292 = vpop.f32.mrf.mxu0
    %v2293 = vadd.f32 0.0, %v2292
    %2294 = vdwg.mxu0
    %2297 = vrot.lane.b32.xlu0 %v2291, 112
    %v2298 = vpop.permute.xlu0 %2297
    %2299 = vrot.lane.b32.xlu0 %v2293, 112
    %v2300 = vpop.permute.xlu0 %2299
    %vm2303 = vcmask 1048448
    %2304 = vst.msk [vmem:[#allocation4] sm:$0xff] %vm2303, %v2298
    %2305 = vst.msk [vmem:[#allocation4 + $0x8] sm:$0xff] %vm2303, %v2300
    %v2306 = vld [vmem:[#allocation4] sm:$0xff]
    %v2307 = vld [vmem:[#allocation4 + $0x8] sm:$0xff]
    %v2308 = vld [vmem:[#allocation12 + $0x43] ss:$0 sm:$0xff]
    %v2309 = vadd.f32 %v2306, %v2308
    %v2310 = vadd.f32 %v2307, %v2308
    %v2311 = vld [vmem:[#allocation11 + $0x180] sm:$0xf]
    %v2312 = vld [vmem:[#allocation11 + $0x184] sm:$0xf]
    %v2313 = vld [vmem:[#allocation11 + $0x188] sm:$0xf]
    %v2314 = vld [vmem:[#allocation11 + $0x18c] sm:$0xf]
    %v2315 = vld [vmem:[#allocation11 + $0x190] sm:$0xf]
    %v2316 = vld [vmem:[#allocation11 + $0x194] sm:$0xf]
    %v2317 = vld [vmem:[#allocation11 + $0x198] sm:$0xf]
    %v2318 = vld [vmem:[#allocation11 + $0x19c] sm:$0xf]
    %v2319 = vld [vmem:[#allocation11 + $0x1a0] sm:$0xf]
    %v2320 = vld [vmem:[#allocation11 + $0x1a4] sm:$0xf]
    %v2321 = vld [vmem:[#allocation11 + $0x1a8] sm:$0xf]
    %v2322 = vld [vmem:[#allocation11 + $0x1ac] sm:$0xf]
    %v2323 = vld [vmem:[#allocation11 + $0x1b0] sm:$0xf]
    %v2324 = vld [vmem:[#allocation11 + $0x1b4] sm:$0xf]
    %v2325 = vld [vmem:[#allocation11 + $0x1b8] sm:$0xf]
    %v2326 = vld [vmem:[#allocation11 + $0x1bc] sm:$0xf]
    %v2327 = vpack.c.bf16 %v2310, %v2309
    %v2328 = vld [vmem:[#allocation12 + $0x45] ss:$0 sm:$0xff]
    %v2345 = vunpack.c.l.b16 %v2311
    %v2346 = vunpack.c.l.b16 %v2312
    %v2347 = vunpack.c.l.b16 %v2313
    %v2348 = vunpack.c.l.b16 %v2314
    %v2349 = vunpack.c.l.b16 %v2315
    %v2350 = vunpack.c.l.b16 %v2316
    %v2351 = vunpack.c.l.b16 %v2317
    %v2352 = vunpack.c.l.b16 %v2318
    %v2353 = vunpack.c.l.b16 %v2319
    %v2354 = vunpack.c.l.b16 %v2320
    %v2355 = vunpack.c.l.b16 %v2321
    %v2356 = vunpack.c.l.b16 %v2322
    %v2357 = vunpack.c.l.b16 %v2323
    %v2358 = vunpack.c.l.b16 %v2324
    %v2359 = vunpack.c.l.b16 %v2325
    %v2360 = vunpack.c.l.b16 %v2326
    %v2361 = vpack.c.b16 %v2346, %v2345
    %v2362 = vpack.c.b16 %v2348, %v2347
    %v2363 = vpack.c.b16 %v2350, %v2349
    %v2364 = vpack.c.b16 %v2352, %v2351
    %v2365 = vpack.c.b16 %v2354, %v2353
    %v2366 = vpack.c.b16 %v2356, %v2355
    %v2367 = vpack.c.b16 %v2358, %v2357
    %v2368 = vpack.c.b16 %v2360, %v2359
    %2377 = vmatpush.bf16.msra.mxu0 %v2368
    %2378 = vmatpush.bf16.msra.mxu0 %v2367
    %2379 = vmatpush.bf16.msra.mxu0 %v2366
    %2380 = vmatpush.bf16.msra.mxu0 %v2365
    %2381 = vmatpush.bf16.msra.mxu0 %v2364
    %2382 = vmatpush.bf16.msra.mxu0 %v2363
    %2383 = vmatpush.bf16.msra.mxu0 %v2362
    %2384 = vmatpush.bf16.msra.mxu0 %v2361
    %2385 = vmatmul.bf16.gmra.mxu0 %v2327
    %v2386 = vpop.f32.mrf.mxu0
    %v2387 = vadd.f32 %v2328, %v2386
    %v2388 = vpop.f32.mrf.mxu0
    %v2389 = vadd.f32 %v2328, %v2388
    %2390 = vdwg.mxu0
    %v2391 = vmax.f32 %v2387, 0.0
    %v2392 = vmax.f32 %v2389, 0.0
    %v2393 = vadd.f32 %v2391, %v2392
    %v2394 = vrot.slane %v2393, 4
    %v2395 = vadd.f32 %v2393, %v2394
    %v2396 = vrot.slane %v2395, 2
    %v2397 = vadd.f32 %v2395, %v2396
    %v2398 = vrot.slane %v2397, 1
    %v2399 = vadd.f32 %v2397, %v2398
    %v2400 = vmul.f32 %v2399, %v1088
    %v2401 = vsub.f32 %v2391, %v2400
    %v2402 = vsub.f32 %v2392, %v2400
    %v2403 = vmul.f32 %v2401, %v2401
    %v2404 = vmul.f32 %v2402, %v2402
    %v2405 = vadd.f32 %v2403, %v2404
    %v2406 = vrot.slane %v2405, 4
    %v2407 = vadd.f32 %v2405, %v2406
    %v2408 = vrot.slane %v2407, 2
    %v2409 = vadd.f32 %v2407, %v2408
    %v2410 = vrot.slane %v2409, 1
    %v2411 = vadd.f32 %v2409, %v2410
    %v2412 = vmul.f32 %v2411, %v1088
    %v2413 = vld [vmem:[#allocation12 + $0x47] ss:$0 sm:$0xff]
    %v2414 = vmul.f32 %v2413, %v2401
    %v2415 = vmul.f32 %v2413, %v2402
    %v2416 = vadd.f32 %v2412, 1e-05
    %v2417 = vrsqrt.pop %v2416
    %v2418 = vmul.f32 %v2417, %v2416
    %v2419 = vmul.f32 %v2418, %v2417
    %v2420 = vmul.f32 0.5, %v2419
    %v2421 = vsub.f32 1.5, %v2420
    %v2422 = vmul.f32 %v2417, %v2421
    %vm2423 = vweird.f32 %v2416
    %vm2424 = vweird.f32 %v2417
    %vm2425 = vmor %vm2423, %vm2424
    %v2426 = vsel %vm2425, %v2417, %v2422
    %v2427 = vmul.f32 %v2414, %v2426
    %v2428 = vmul.f32 %v2415, %v2426
    %v2429 = vld [vmem:[#allocation12 + $0x60] ss:$0 sm:$0xff]
    %v2430 = vadd.f32 %v2427, %v2429
    %v2431 = vadd.f32 %v2428, %v2429
    %v2432 = vld [vmem:[#allocation9 + $0x200] sm:$0xff]
    %v2433 = vld [vmem:[#allocation9 + $0x210] sm:$0xff]
    %v2434 = vld [vmem:[#allocation9 + $0x220] sm:$0xff]
    %v2435 = vld [vmem:[#allocation9 + $0x230] sm:$0xff]
    %v2436 = vld [vmem:[#allocation9 + $0x240] sm:$0xff]
    %v2437 = vld [vmem:[#allocation9 + $0x250] sm:$0xff]
    %v2438 = vld [vmem:[#allocation9 + $0x260] sm:$0xff]
    %v2439 = vld [vmem:[#allocation9 + $0x270] sm:$0xff]
    %v2440 = vld [vmem:[#allocation9 + $0x280] sm:$0xff]
    %v2441 = vld [vmem:[#allocation9 + $0x290] sm:$0xff]
    %v2442 = vld [vmem:[#allocation9 + $0x2a0] sm:$0xff]
    %v2443 = vld [vmem:[#allocation9 + $0x2b0] sm:$0xff]
    %v2444 = vld [vmem:[#allocation9 + $0x2c0] sm:$0xff]
    %v2445 = vld [vmem:[#allocation9 + $0x2d0] sm:$0xff]
    %v2446 = vld [vmem:[#allocation9 + $0x2e0] sm:$0xff]
    %v2447 = vld [vmem:[#allocation9 + $0x2f0] sm:$0xff]
    %v2448 = vpack.c.bf16 %v2431, %v2430
    %v2465 = vunpack.c.l.b16 %v2432
    %v2466 = vunpack.c.h.b16 %v2432
    %v2467 = vunpack.c.l.b16 %v2433
    %v2468 = vunpack.c.h.b16 %v2433
    %v2469 = vunpack.c.l.b16 %v2434
    %v2470 = vunpack.c.h.b16 %v2434
    %v2471 = vunpack.c.l.b16 %v2435
    %v2472 = vunpack.c.h.b16 %v2435
    %v2473 = vunpack.c.l.b16 %v2436
    %v2474 = vunpack.c.h.b16 %v2436
    %v2475 = vunpack.c.l.b16 %v2437
    %v2476 = vunpack.c.h.b16 %v2437
    %v2477 = vunpack.c.l.b16 %v2438
    %v2478 = vunpack.c.h.b16 %v2438
    %v2479 = vunpack.c.l.b16 %v2439
    %v2480 = vunpack.c.h.b16 %v2439
    %v2481 = vunpack.c.l.b16 %v2440
    %v2482 = vunpack.c.h.b16 %v2440
    %v2483 = vunpack.c.l.b16 %v2441
    %v2484 = vunpack.c.h.b16 %v2441
    %v2485 = vunpack.c.l.b16 %v2442
    %v2486 = vunpack.c.h.b16 %v2442
    %v2487 = vunpack.c.l.b16 %v2443
    %v2488 = vunpack.c.h.b16 %v2443
    %v2489 = vunpack.c.l.b16 %v2444
    %v2490 = vunpack.c.h.b16 %v2444
    %v2491 = vunpack.c.l.b16 %v2445
    %v2492 = vunpack.c.h.b16 %v2445
    %v2493 = vunpack.c.l.b16 %v2446
    %v2494 = vunpack.c.h.b16 %v2446
    %v2495 = vunpack.c.l.b16 %v2447
    %v2496 = vunpack.c.h.b16 %v2447
    %v2497 = vpack.c.b16 %v2467, %v2465
    %v2498 = vpack.c.b16 %v2468, %v2466
    %v2499 = vpack.c.b16 %v2471, %v2469
    %v2500 = vpack.c.b16 %v2472, %v2470
    %v2501 = vpack.c.b16 %v2475, %v2473
    %v2502 = vpack.c.b16 %v2476, %v2474
    %v2503 = vpack.c.b16 %v2479, %v2477
    %v2504 = vpack.c.b16 %v2480, %v2478
    %v2505 = vpack.c.b16 %v2483, %v2481
    %v2506 = vpack.c.b16 %v2484, %v2482
    %v2507 = vpack.c.b16 %v2487, %v2485
    %v2508 = vpack.c.b16 %v2488, %v2486
    %v2509 = vpack.c.b16 %v2491, %v2489
    %v2510 = vpack.c.b16 %v2492, %v2490
    %v2511 = vpack.c.b16 %v2495, %v2493
    %v2512 = vpack.c.b16 %v2496, %v2494
    %2529 = vmatpush.bf16.msra.mxu0 %v2511
    %2530 = vmatpush.bf16.msra.mxu0 %v2509
    %2531 = vmatpush.bf16.msra.mxu0 %v2507
    %2532 = vmatpush.bf16.msra.mxu0 %v2505
    %2533 = vmatpush.bf16.msra.mxu0 %v2503
    %2534 = vmatpush.bf16.msra.mxu0 %v2501
    %2535 = vmatpush.bf16.msra.mxu0 %v2499
    %2536 = vmatpush.bf16.msra.mxu0 %v2497
    %2537 = vmatmul.bf16.gmra.mxu0 %v2448
    %v2538 = vpop.f32.mrf.mxu0
    %v2539 = vadd.f32 0.0, %v2538
    %v2540 = vpop.f32.mrf.mxu0
    %v2541 = vadd.f32 0.0, %v2540
    %2542 = vdwg.mxu0
    %2543 = vmatpush.bf16.msra.mxu0 %v2512
    %2544 = vmatpush.bf16.msra.mxu0 %v2510
    %2545 = vmatpush.bf16.msra.mxu0 %v2508
    %2546 = vmatpush.bf16.msra.mxu0 %v2506
    %2547 = vmatpush.bf16.msra.mxu0 %v2504
    %2548 = vmatpush.bf16.msra.mxu0 %v2502
    %2549 = vmatpush.bf16.msra.mxu0 %v2500
    %2550 = vmatpush.bf16.msra.mxu0 %v2498
    %2551 = vmatmul.bf16.gmra.mxu0 %v2448
    %v2552 = vpop.f32.mrf.mxu0
    %v2553 = vadd.f32 0.0, %v2552
    %v2554 = vpop.f32.mrf.mxu0
    %v2555 = vadd.f32 0.0, %v2554
    %2556 = vdwg.mxu0
    %2557 = vxpose.xlu0.b32.start [1/16] %v2553, 128
    %2558 = vxpose.xlu0.b32.cont [2/16] %v2555, 128
    %2559 = vxpose.xlu0.b32.cont [3/16] 0.0, 128
    %2560 = vxpose.xlu0.b32.cont [4/16] 0.0, 128
    %2561 = vxpose.xlu0.b32.cont [5/16] 0.0, 128
    %2562 = vxpose.xlu0.b32.cont [6/16] 0.0, 128
    %2563 = vxpose.xlu0.b32.cont [7/16] 0.0, 128
    %2564 = vxpose.xlu0.b32.cont [8/16] 0.0, 128
    %2565 = vxpose.xlu0.b32.cont [9/16] 0.0, 128
    %2566 = vxpose.xlu0.b32.cont [10/16] 0.0, 128
    %2567 = vxpose.xlu0.b32.cont [11/16] 0.0, 128
    %2568 = vxpose.xlu0.b32.cont [12/16] 0.0, 128
    %2569 = vxpose.xlu0.b32.cont [13/16] 0.0, 128
    %2570 = vxpose.xlu0.b32.cont [14/16] 0.0, 128
    %2571 = vxpose.xlu0.b32.cont [15/16] 0.0, 128
    %2572 = vxpose.xlu0.b32.end [16/16] 0.0, 128
    %v2573 = vpop.trf.xlu0
    %v2574 = vpop.trf.xlu0
    %v2575 = vpop.trf.xlu0
    %v2576 = vpop.trf.xlu0
    %v2577 = vpop.trf.xlu0
    %v2578 = vpop.trf.xlu0
    %v2579 = vpop.trf.xlu0
    %v2580 = vpop.trf.xlu0
    %v2581 = vpop.trf.xlu0
    %v2582 = vpop.trf.xlu0
    %v2583 = vpop.trf.xlu0
    %v2584 = vpop.trf.xlu0
    %v2585 = vpop.trf.xlu0
    %v2586 = vpop.trf.xlu0
    %v2587 = vpop.trf.xlu0
    %v2588 = vpop.trf.xlu0
    %2590 = vset.pattern.permute.xlu0 1
    %2591 = vperm.xlu0 %2590, %v2553
    %v2592 = vpop.permute.xlu0 %2591
    %2595 = vset.pattern.permute.xlu0 1
    %2596 = vperm.xlu0 %2595, %v2555
    %v2597 = vpop.permute.xlu0 %2596
    %v2599 = vperm.slane %v2573, 0
    %v2600 = vadd.f32 %v2592, %v2599
    %v2601 = vadd.f32 %v2597, %v2599
    %vm2602 = vcmp.ge.f32.partialorder %v2600, 0.0
    %vm2603 = vcmp.ge.f32.partialorder %v2601, 0.0
    %v2604 = vmul.f32 %v2600, 0.2
    %v2605 = vmul.f32 %v2601, 0.2
    %v2606 = vsel %vm2602, %v2600, %v2604
    %v2607 = vsel %vm2603, %v2601, %v2605
    %v2608 = vsel %vm124, %v2606, -1e+30
    %v2609 = vsel %vm125, %v2607, -1e+30
    %v2610 = vsel %vm975, %v2608, -inf
    %2611 = vmax.xlane.f32.xlu0 %v2610
    %v2612 = vpop.xlane.xlu0 %2611
    %v2613 = vsel %vm975, %v2609, -inf
    %2614 = vmax.xlane.f32.xlu0 %v2613
    %v2615 = vpop.xlane.xlu0 %2614
    %v2616 = vsub.f32 %v2608, %v2612
    %v2617 = vsub.f32 %v2609, %v2615
    %v2618 = vmul.f32 %v2616, 1.442695
    %v2619 = vpow.pop %v2618
    %v2620 = vmul.f32 %v2617, 1.442695
    %v2621 = vpow.pop %v2620
    %v2622 = vsel %vm975, %v2619, 0.0
    %2623 = vadd.xlane.f32.xlu0 %v2622
    %v2624 = vpop.xlane.xlu0 %2623
    %v2625 = vsel %vm975, %v2621, 0.0
    %2626 = vadd.xlane.f32.xlu0 %v2625
    %v2627 = vpop.xlane.xlu0 %2626
    %v2628 = vrcp.pop %v2624
    %v2629 = vrcp.pop %v2627
    %v2630 = vmul.f32 %v2619, %v2628
    %v2631 = vmul.f32 %v2621, %v2629
    %v2632 = vpack.c.bf16 %v2631, %v2630
    %v2633 = vpack.c.bf16 %v2541, %v2539
    %v2634 = vld [vmem:[#allocation12 + $0x44] ss:$0 sm:$0xff]
    %v2636 = vsel %vm975, %v2632, 0
    %2638 = vmatpush.bf16.msra.mxu0 0
    %2639 = vmatpush.bf16.msra.mxu0 0
    %2640 = vmatpush.bf16.msra.mxu0 0
    %2641 = vmatpush.bf16.msra.mxu0 0
    %2642 = vmatpush.bf16.msra.mxu0 0
    %2643 = vmatpush.bf16.msra.mxu0 0
    %2644 = vmatpush.bf16.msra.mxu0 0
    %2645 = vmatpush.bf16.msra.mxu0 %v2633
    %2646 = vmatmul.bf16.gmra.mxu0 %v2636
    %v2647 = vpop.f32.mrf.mxu0
    %v2648 = vadd.f32 %v2634, %v2647
    %v2649 = vpop.f32.mrf.mxu0
    %v2650 = vadd.f32 %v2634, %v2649
    %2651 = vdwg.mxu0
    %v2652 = vld [vmem:[#allocation11 + $0x1c0] sm:$0xf]
    %v2653 = vld [vmem:[#allocation11 + $0x1c4] sm:$0xf]
    %v2654 = vld [vmem:[#allocation11 + $0x1c8] sm:$0xf]
    %v2655 = vld [vmem:[#allocation11 + $0x1cc] sm:$0xf]
    %v2656 = vld [vmem:[#allocation11 + $0x1d0] sm:$0xf]
    %v2657 = vld [vmem:[#allocation11 + $0x1d4] sm:$0xf]
    %v2658 = vld [vmem:[#allocation11 + $0x1d8] sm:$0xf]
    %v2659 = vld [vmem:[#allocation11 + $0x1dc] sm:$0xf]
    %v2660 = vld [vmem:[#allocation11 + $0x1e0] sm:$0xf]
    %v2661 = vld [vmem:[#allocation11 + $0x1e4] sm:$0xf]
    %v2662 = vld [vmem:[#allocation11 + $0x1e8] sm:$0xf]
    %v2663 = vld [vmem:[#allocation11 + $0x1ec] sm:$0xf]
    %v2664 = vld [vmem:[#allocation11 + $0x1f0] sm:$0xf]
    %v2665 = vld [vmem:[#allocation11 + $0x1f4] sm:$0xf]
    %v2666 = vld [vmem:[#allocation11 + $0x1f8] sm:$0xf]
    %v2667 = vld [vmem:[#allocation11 + $0x1fc] sm:$0xf]
    %v2668 = vpack.c.bf16 %v2650, %v2648
    %v2669 = vld [vmem:[#allocation12 + $0x46] ss:$0 sm:$0xff]
    %v2686 = vunpack.c.l.b16 %v2652
    %v2687 = vunpack.c.l.b16 %v2653
    %v2688 = vunpack.c.l.b16 %v2654
    %v2689 = vunpack.c.l.b16 %v2655
    %v2690 = vunpack.c.l.b16 %v2656
    %v2691 = vunpack.c.l.b16 %v2657
    %v2692 = vunpack.c.l.b16 %v2658
    %v2693 = vunpack.c.l.b16 %v2659
    %v2694 = vunpack.c.l.b16 %v2660
    %v2695 = vunpack.c.l.b16 %v2661
    %v2696 = vunpack.c.l.b16 %v2662
    %v2697 = vunpack.c.l.b16 %v2663
    %v2698 = vunpack.c.l.b16 %v2664
    %v2699 = vunpack.c.l.b16 %v2665
    %v2700 = vunpack.c.l.b16 %v2666
    %v2701 = vunpack.c.l.b16 %v2667
    %v2702 = vpack.c.b16 %v2687, %v2686
    %v2703 = vpack.c.b16 %v2689, %v2688
    %v2704 = vpack.c.b16 %v2691, %v2690
    %v2705 = vpack.c.b16 %v2693, %v2692
    %v2706 = vpack.c.b16 %v2695, %v2694
    %v2707 = vpack.c.b16 %v2697, %v2696
    %v2708 = vpack.c.b16 %v2699, %v2698
    %v2709 = vpack.c.b16 %v2701, %v2700
    %2718 = vmatpush.bf16.msra.mxu0 %v2709
    %2719 = vmatpush.bf16.msra.mxu0 %v2708
    %2720 = vmatpush.bf16.msra.mxu0 %v2707
    %2721 = vmatpush.bf16.msra.mxu0 %v2706
    %2722 = vmatpush.bf16.msra.mxu0 %v2705
    %2723 = vmatpush.bf16.msra.mxu0 %v2704
    %2724 = vmatpush.bf16.msra.mxu0 %v2703
    %2725 = vmatpush.bf16.msra.mxu0 %v2702
    %2726 = vmatmul.bf16.gmra.mxu0 %v2668
    %v2727 = vpop.f32.mrf.mxu0
    %v2728 = vadd.f32 %v2669, %v2727
    %v2729 = vpop.f32.mrf.mxu0
    %v2730 = vadd.f32 %v2669, %v2729
    %2731 = vdwg.mxu0
    %v2732 = vmax.f32 %v2728, 0.0
    %v2733 = vmax.f32 %v2730, 0.0
    %v2734 = vadd.f32 %v2732, %v2733
    %v2735 = vrot.slane %v2734, 4
    %v2736 = vadd.f32 %v2734, %v2735
    %v2737 = vrot.slane %v2736, 2
    %v2738 = vadd.f32 %v2736, %v2737
    %v2739 = vrot.slane %v2738, 1
    %v2740 = vadd.f32 %v2738, %v2739
    %v2741 = vmul.f32 %v2740, %v1088
    %v2742 = vsub.f32 %v2732, %v2741
    %v2743 = vsub.f32 %v2733, %v2741
    %v2744 = vmul.f32 %v2742, %v2742
    %v2745 = vmul.f32 %v2743, %v2743
    %v2746 = vadd.f32 %v2744, %v2745
    %v2747 = vrot.slane %v2746, 4
    %v2748 = vadd.f32 %v2746, %v2747
    %v2749 = vrot.slane %v2748, 2
    %v2750 = vadd.f32 %v2748, %v2749
    %v2751 = vrot.slane %v2750, 1
    %v2752 = vadd.f32 %v2750, %v2751
    %v2753 = vmul.f32 %v2752, %v1088
    %v2754 = vld [vmem:[#allocation12 + $0x61] ss:$0 sm:$0xff]
    %v2755 = vmul.f32 %v2754, %v2742
    %v2756 = vmul.f32 %v2754, %v2743
    %v2757 = vadd.f32 %v2753, 1e-05
    %v2758 = vrsqrt.pop %v2757
    %v2759 = vmul.f32 %v2758, %v2757
    %v2760 = vmul.f32 %v2759, %v2758
    %v2761 = vmul.f32 0.5, %v2760
    %v2762 = vsub.f32 1.5, %v2761
    %v2763 = vmul.f32 %v2758, %v2762
    %vm2764 = vweird.f32 %v2757
    %vm2765 = vweird.f32 %v2758
    %vm2766 = vmor %vm2764, %vm2765
    %v2767 = vsel %vm2766, %v2758, %v2763
    %v2768 = vmul.f32 %v2755, %v2767
    %v2769 = vmul.f32 %v2756, %v2767
    %v2770 = vld [vmem:[#allocation12 + $0x62] ss:$0 sm:$0xff]
    %v2771 = vadd.f32 %v2768, %v2770
    %v2772 = vadd.f32 %v2769, %v2770
    %s2773 = smul.u32 4, 176
    %s2774 = smul.u32 %s2773, 4
    %s2775 = sshll.u32 %s2774, 4
    %2776 = dma.done [#allocation3], %s2775
    %v2777 = vld [vmem:[#allocation2] sm:$0xff]
    %v2778 = vld [vmem:[#allocation2 + $0x8] sm:$0xff]
    %v2779 = vld [vmem:[#allocation2 + $0x10] sm:$0xff]
    %v2780 = vld [vmem:[#allocation2 + $0x18] sm:$0xff]
    %v2781 = vld [vmem:[#allocation2 + $0x20] sm:$0xff]
    %v2782 = vld [vmem:[#allocation2 + $0x28] sm:$0xff]
    %v2783 = vld [vmem:[#allocation2 + $0x30] sm:$0xff]
    %v2784 = vld [vmem:[#allocation2 + $0x38] sm:$0xff]
    %v2785 = vld [vmem:[#allocation2 + $0x40] sm:$0xff]
    %v2786 = vld [vmem:[#allocation2 + $0x48] sm:$0xff]
    %v2787 = vld [vmem:[#allocation2 + $0x50] sm:$0xff]
    %v2788 = vld [vmem:[#allocation2 + $0x58] sm:$0xff]
    %v2789 = vld [vmem:[#allocation2 + $0x60] sm:$0xff]
    %v2790 = vld [vmem:[#allocation2 + $0x68] sm:$0xff]
    %v2791 = vld [vmem:[#allocation2 + $0x70] sm:$0xff]
    %v2792 = vld [vmem:[#allocation2 + $0x78] sm:$0xff]
    %v2793 = vld [vmem:[#allocation2 + $0x80] sm:$0xff]
    %v2794 = vld [vmem:[#allocation2 + $0x88] sm:$0xff]
    %v2795 = vld [vmem:[#allocation2 + $0x90] sm:$0xff]
    %v2796 = vld [vmem:[#allocation2 + $0x98] sm:$0xff]
    %v2797 = vld [vmem:[#allocation2 + $0xa0] sm:$0xff]
    %v2798 = vld [vmem:[#allocation2 + $0xa8] sm:$0xff]
    %v2799 = vld [vmem:[#allocation2 + $0xb0] sm:$0xff]
    %v2800 = vld [vmem:[#allocation2 + $0xb8] sm:$0xff]
    %v2801 = vld [vmem:[#allocation2 + $0xc0] sm:$0xff]
    %v2802 = vld [vmem:[#allocation2 + $0xc8] sm:$0xff]
    %v2803 = vld [vmem:[#allocation2 + $0xd0] sm:$0xff]
    %v2804 = vld [vmem:[#allocation2 + $0xd8] sm:$0xff]
    %v2805 = vld [vmem:[#allocation2 + $0xe0] sm:$0xff]
    %v2806 = vld [vmem:[#allocation2 + $0xe8] sm:$0xff]
    %v2807 = vld [vmem:[#allocation2 + $0xf0] sm:$0xff]
    %v2808 = vld [vmem:[#allocation2 + $0xf8] sm:$0xff]
    %v2809 = vpack.c.bf16 %v1336, %v1335
    %s2810 = scalar_lea.vmem [#allocation12], 33
    %v2811 = vld [vmem:[%s2810] ss:$8 sm:$0xf]
    %v2813 = vperm.slane %v2811, 0
    %v2814 = vperm.slane %v2811, 1
    %v2815 = vperm.slane %v2811, 2
    %v2816 = vperm.slane %v2811, 3
    %v2853 = vunpack.c.l.b16 %v2777
    %v2854 = vunpack.c.h.b16 %v2777
    %v2855 = vunpack.c.l.b16 %v2778
    %v2856 = vunpack.c.h.b16 %v2778
    %v2857 = vunpack.c.l.b16 %v2779
    %v2858 = vunpack.c.h.b16 %v2779
    %v2859 = vunpack.c.l.b16 %v2780
    %v2860 = vunpack.c.h.b16 %v2780
    %v2861 = vunpack.c.l.b16 %v2781
    %v2862 = vunpack.c.h.b16 %v2781
    %v2863 = vunpack.c.l.b16 %v2782
    %v2864 = vunpack.c.h.b16 %v2782
    %v2865 = vunpack.c.l.b16 %v2783
    %v2866 = vunpack.c.h.b16 %v2783
    %v2867 = vunpack.c.l.b16 %v2784
    %v2868 = vunpack.c.h.b16 %v2784
    %v2869 = vunpack.c.l.b16 %v2785
    %v2870 = vunpack.c.h.b16 %v2785
    %v2871 = vunpack.c.l.b16 %v2786
    %v2872 = vunpack.c.h.b16 %v2786
    %v2873 = vunpack.c.l.b16 %v2787
    %v2874 = vunpack.c.h.b16 %v2787
    %v2875 = vunpack.c.l.b16 %v2788
    %v2876 = vunpack.c.h.b16 %v2788
    %v2877 = vunpack.c.l.b16 %v2789
    %v2878 = vunpack.c.h.b16 %v2789
    %v2879 = vunpack.c.l.b16 %v2790
    %v2880 = vunpack.c.h.b16 %v2790
    %v2881 = vunpack.c.l.b16 %v2791
    %v2882 = vunpack.c.h.b16 %v2791
    %v2883 = vunpack.c.l.b16 %v2792
    %v2884 = vunpack.c.h.b16 %v2792
    %v2885 = vunpack.c.l.b16 %v2793
    %v2886 = vunpack.c.h.b16 %v2793
    %v2887 = vunpack.c.l.b16 %v2794
    %v2888 = vunpack.c.h.b16 %v2794
    %v2889 = vunpack.c.l.b16 %v2795
    %v2890 = vunpack.c.h.b16 %v2795
    %v2891 = vunpack.c.l.b16 %v2796
    %v2892 = vunpack.c.h.b16 %v2796
    %v2893 = vunpack.c.l.b16 %v2797
    %v2894 = vunpack.c.h.b16 %v2797
    %v2895 = vunpack.c.l.b16 %v2798
    %v2896 = vunpack.c.h.b16 %v2798
    %v2897 = vunpack.c.l.b16 %v2799
    %v2898 = vunpack.c.h.b16 %v2799
    %v2899 = vunpack.c.l.b16 %v2800
    %v2900 = vunpack.c.h.b16 %v2800
    %v2901 = vunpack.c.l.b16 %v2801
    %v2902 = vunpack.c.h.b16 %v2801
    %v2903 = vunpack.c.l.b16 %v2802
    %v2904 = vunpack.c.h.b16 %v2802
    %v2905 = vunpack.c.l.b16 %v2803
    %v2906 = vunpack.c.h.b16 %v2803
    %v2907 = vunpack.c.l.b16 %v2804
    %v2908 = vunpack.c.h.b16 %v2804
    %v2909 = vunpack.c.l.b16 %v2805
    %v2910 = vunpack.c.h.b16 %v2805
    %v2911 = vunpack.c.l.b16 %v2806
    %v2912 = vunpack.c.h.b16 %v2806
    %v2913 = vunpack.c.l.b16 %v2807
    %v2914 = vunpack.c.h.b16 %v2807
    %v2915 = vunpack.c.l.b16 %v2808
    %v2916 = vunpack.c.h.b16 %v2808
    %v2917 = vpack.c.b16 %v2857, %v2853
    %v2918 = vpack.c.b16 %v2858, %v2854
    %v2919 = vpack.c.b16 %v2859, %v2855
    %v2920 = vpack.c.b16 %v2860, %v2856
    %v2921 = vpack.c.b16 %v2865, %v2861
    %v2922 = vpack.c.b16 %v2866, %v2862
    %v2923 = vpack.c.b16 %v2867, %v2863
    %v2924 = vpack.c.b16 %v2868, %v2864
    %v2925 = vpack.c.b16 %v2873, %v2869
    %v2926 = vpack.c.b16 %v2874, %v2870
    %v2927 = vpack.c.b16 %v2875, %v2871
    %v2928 = vpack.c.b16 %v2876, %v2872
    %v2929 = vpack.c.b16 %v2881, %v2877
    %v2930 = vpack.c.b16 %v2882, %v2878
    %v2931 = vpack.c.b16 %v2883, %v2879
    %v2932 = vpack.c.b16 %v2884, %v2880
    %v2933 = vpack.c.b16 %v2889, %v2885
    %v2934 = vpack.c.b16 %v2890, %v2886
    %v2935 = vpack.c.b16 %v2891, %v2887
    %v2936 = vpack.c.b16 %v2892, %v2888
    %v2937 = vpack.c.b16 %v2897, %v2893
    %v2938 = vpack.c.b16 %v2898, %v2894
    %v2939 = vpack.c.b16 %v2899, %v2895
    %v2940 = vpack.c.b16 %v2900, %v2896
    %v2941 = vpack.c.b16 %v2905, %v2901
    %v2942 = vpack.c.b16 %v2906, %v2902
    %v2943 = vpack.c.b16 %v2907, %v2903
    %v2944 = vpack.c.b16 %v2908, %v2904
    %v2945 = vpack.c.b16 %v2913, %v2909
    %v2946 = vpack.c.b16 %v2914, %v2910
    %v2947 = vpack.c.b16 %v2915, %v2911
    %v2948 = vpack.c.b16 %v2916, %v2912
    %2981 = vmatpush.bf16.msra.mxu0 %v2945
    %2982 = vmatpush.bf16.msra.mxu0 %v2941
    %2983 = vmatpush.bf16.msra.mxu0 %v2937
    %2984 = vmatpush.bf16.msra.mxu0 %v2933
    %2985 = vmatpush.bf16.msra.mxu0 %v2929
    %2986 = vmatpush.bf16.msra.mxu0 %v2925
    %2987 = vmatpush.bf16.msra.mxu0 %v2921
    %2988 = vmatpush.bf16.msra.mxu0 %v2917
    %2989 = vmatmul.bf16.gmra.mxu0 %v2809
    %v2990 = vpop.f32.mrf.mxu0
    %v2991 = vadd.f32 %v2813, %v2990
    %v2992 = vpop.f32.mrf.mxu0
    %v2993 = vadd.f32 %v2813, %v2992
    %2994 = vdwg.mxu0
    %2995 = vmatpush.bf16.msra.mxu0 %v2946
    %2996 = vmatpush.bf16.msra.mxu0 %v2942
    %2997 = vmatpush.bf16.msra.mxu0 %v2938
    %2998 = vmatpush.bf16.msra.mxu0 %v2934
    %2999 = vmatpush.bf16.msra.mxu0 %v2930
    %3000 = vmatpush.bf16.msra.mxu0 %v2926
    %3001 = vmatpush.bf16.msra.mxu0 %v2922
    %3002 = vmatpush.bf16.msra.mxu0 %v2918
    %3003 = vmatmul.bf16.gmra.mxu0 %v2809
    %v3004 = vpop.f32.mrf.mxu0
    %v3005 = vadd.f32 %v2814, %v3004
    %v3006 = vpop.f32.mrf.mxu0
    %v3007 = vadd.f32 %v2814, %v3006
    %3008 = vdwg.mxu0
    %3009 = vmatpush.bf16.msra.mxu0 %v2947
    %3010 = vmatpush.bf16.msra.mxu0 %v2943
    %3011 = vmatpush.bf16.msra.mxu0 %v2939
    %3012 = vmatpush.bf16.msra.mxu0 %v2935
    %3013 = vmatpush.bf16.msra.mxu0 %v2931
    %3014 = vmatpush.bf16.msra.mxu0 %v2927
    %3015 = vmatpush.bf16.msra.mxu0 %v2923
    %3016 = vmatpush.bf16.msra.mxu0 %v2919
    %3017 = vmatmul.bf16.gmra.mxu0 %v2809
    %v3018 = vpop.f32.mrf.mxu0
    %v3019 = vadd.f32 %v2815, %v3018
    %v3020 = vpop.f32.mrf.mxu0
    %v3021 = vadd.f32 %v2815, %v3020
    %3022 = vdwg.mxu0
    %3023 = vmatpush.bf16.msra.mxu0 %v2948
    %3024 = vmatpush.bf16.msra.mxu0 %v2944
    %3025 = vmatpush.bf16.msra.mxu0 %v2940
    %3026 = vmatpush.bf16.msra.mxu0 %v2936
    %3027 = vmatpush.bf16.msra.mxu0 %v2932
    %3028 = vmatpush.bf16.msra.mxu0 %v2928
    %3029 = vmatpush.bf16.msra.mxu0 %v2924
    %3030 = vmatpush.bf16.msra.mxu0 %v2920
    %3031 = vmatmul.bf16.gmra.mxu0 %v2809
    %v3032 = vpop.f32.mrf.mxu0
    %v3033 = vadd.f32 %v2816, %v3032
    %v3034 = vpop.f32.mrf.mxu0
    %v3035 = vadd.f32 %v2816, %v3034
    %3036 = vdwg.mxu0
    %v3037 = vmax.f32 %v2991, 0.0
    %v3038 = vmax.f32 %v3005, 0.0
    %v3039 = vmax.f32 %v3019, 0.0
    %v3040 = vmax.f32 %v3033, 0.0
    %v3041 = vmax.f32 %v2993, 0.0
    %v3042 = vmax.f32 %v3007, 0.0
    %v3043 = vmax.f32 %v3021, 0.0
    %v3044 = vmax.f32 %v3035, 0.0
    %v3045 = vld [vmem:[#allocation2 + $0x100] sm:$0xff]
    %v3046 = vld [vmem:[#allocation2 + $0x108] sm:$0xff]
    %v3047 = vld [vmem:[#allocation2 + $0x110] sm:$0xff]
    %v3048 = vld [vmem:[#allocation2 + $0x118] sm:$0xff]
    %v3049 = vld [vmem:[#allocation2 + $0x120] sm:$0xff]
    %v3050 = vld [vmem:[#allocation2 + $0x128] sm:$0xff]
    %v3051 = vld [vmem:[#allocation2 + $0x130] sm:$0xff]
    %v3052 = vld [vmem:[#allocation2 + $0x138] sm:$0xff]
    %v3053 = vld [vmem:[#allocation2 + $0x140] sm:$0xff]
    %v3054 = vld [vmem:[#allocation2 + $0x148] sm:$0xff]
    %v3055 = vld [vmem:[#allocation2 + $0x150] sm:$0xff]
    %v3056 = vld [vmem:[#allocation2 + $0x158] sm:$0xff]
    %v3057 = vld [vmem:[#allocation2 + $0x160] sm:$0xff]
    %v3058 = vld [vmem:[#allocation2 + $0x168] sm:$0xff]
    %v3059 = vld [vmem:[#allocation2 + $0x170] sm:$0xff]
    %v3060 = vld [vmem:[#allocation2 + $0x178] sm:$0xff]
    %v3061 = vld [vmem:[#allocation2 + $0x180] sm:$0xff]
    %v3062 = vld [vmem:[#allocation2 + $0x188] sm:$0xff]
    %v3063 = vld [vmem:[#allocation2 + $0x190] sm:$0xff]
    %v3064 = vld [vmem:[#allocation2 + $0x198] sm:$0xff]
    %v3065 = vld [vmem:[#allocation2 + $0x1a0] sm:$0xff]
    %v3066 = vld [vmem:[#allocation2 + $0x1a8] sm:$0xff]
    %v3067 = vld [vmem:[#allocation2 + $0x1b0] sm:$0xff]
    %v3068 = vld [vmem:[#allocation2 + $0x1b8] sm:$0xff]
    %v3069 = vld [vmem:[#allocation2 + $0x1c0] sm:$0xff]
    %v3070 = vld [vmem:[#allocation2 + $0x1c8] sm:$0xff]
    %v3071 = vld [vmem:[#allocation2 + $0x1d0] sm:$0xff]
    %v3072 = vld [vmem:[#allocation2 + $0x1d8] sm:$0xff]
    %v3073 = vld [vmem:[#allocation2 + $0x1e0] sm:$0xff]
    %v3074 = vld [vmem:[#allocation2 + $0x1e8] sm:$0xff]
    %v3075 = vld [vmem:[#allocation2 + $0x1f0] sm:$0xff]
    %v3076 = vld [vmem:[#allocation2 + $0x1f8] sm:$0xff]
    %v3077 = vpack.c.bf16 %v1697, %v1696
    %s3078 = scalar_lea.vmem [#allocation12], 66
    %v3079 = vld [vmem:[%s3078] ss:$8 sm:$0xf]
    %v3081 = vperm.slane %v3079, 0
    %v3082 = vperm.slane %v3079, 1
    %v3083 = vperm.slane %v3079, 2
    %v3084 = vperm.slane %v3079, 3
    %v3121 = vunpack.c.l.b16 %v3045
    %v3122 = vunpack.c.h.b16 %v3045
    %v3123 = vunpack.c.l.b16 %v3046
    %v3124 = vunpack.c.h.b16 %v3046
    %v3125 = vunpack.c.l.b16 %v3047
    %v3126 = vunpack.c.h.b16 %v3047
    %v3127 = vunpack.c.l.b16 %v3048
    %v3128 = vunpack.c.h.b16 %v3048
    %v3129 = vunpack.c.l.b16 %v3049
    %v3130 = vunpack.c.h.b16 %v3049
    %v3131 = vunpack.c.l.b16 %v3050
    %v3132 = vunpack.c.h.b16 %v3050
    %v3133 = vunpack.c.l.b16 %v3051
    %v3134 = vunpack.c.h.b16 %v3051
    %v3135 = vunpack.c.l.b16 %v3052
    %v3136 = vunpack.c.h.b16 %v3052
    %v3137 = vunpack.c.l.b16 %v3053
    %v3138 = vunpack.c.h.b16 %v3053
    %v3139 = vunpack.c.l.b16 %v3054
    %v3140 = vunpack.c.h.b16 %v3054
    %v3141 = vunpack.c.l.b16 %v3055
    %v3142 = vunpack.c.h.b16 %v3055
    %v3143 = vunpack.c.l.b16 %v3056
    %v3144 = vunpack.c.h.b16 %v3056
    %v3145 = vunpack.c.l.b16 %v3057
    %v3146 = vunpack.c.h.b16 %v3057
    %v3147 = vunpack.c.l.b16 %v3058
    %v3148 = vunpack.c.h.b16 %v3058
    %v3149 = vunpack.c.l.b16 %v3059
    %v3150 = vunpack.c.h.b16 %v3059
    %v3151 = vunpack.c.l.b16 %v3060
    %v3152 = vunpack.c.h.b16 %v3060
    %v3153 = vunpack.c.l.b16 %v3061
    %v3154 = vunpack.c.h.b16 %v3061
    %v3155 = vunpack.c.l.b16 %v3062
    %v3156 = vunpack.c.h.b16 %v3062
    %v3157 = vunpack.c.l.b16 %v3063
    %v3158 = vunpack.c.h.b16 %v3063
    %v3159 = vunpack.c.l.b16 %v3064
    %v3160 = vunpack.c.h.b16 %v3064
    %v3161 = vunpack.c.l.b16 %v3065
    %v3162 = vunpack.c.h.b16 %v3065
    %v3163 = vunpack.c.l.b16 %v3066
    %v3164 = vunpack.c.h.b16 %v3066
    %v3165 = vunpack.c.l.b16 %v3067
    %v3166 = vunpack.c.h.b16 %v3067
    %v3167 = vunpack.c.l.b16 %v3068
    %v3168 = vunpack.c.h.b16 %v3068
    %v3169 = vunpack.c.l.b16 %v3069
    %v3170 = vunpack.c.h.b16 %v3069
    %v3171 = vunpack.c.l.b16 %v3070
    %v3172 = vunpack.c.h.b16 %v3070
    %v3173 = vunpack.c.l.b16 %v3071
    %v3174 = vunpack.c.h.b16 %v3071
    %v3175 = vunpack.c.l.b16 %v3072
    %v3176 = vunpack.c.h.b16 %v3072
    %v3177 = vunpack.c.l.b16 %v3073
    %v3178 = vunpack.c.h.b16 %v3073
    %v3179 = vunpack.c.l.b16 %v3074
    %v3180 = vunpack.c.h.b16 %v3074
    %v3181 = vunpack.c.l.b16 %v3075
    %v3182 = vunpack.c.h.b16 %v3075
    %v3183 = vunpack.c.l.b16 %v3076
    %v3184 = vunpack.c.h.b16 %v3076
    %v3185 = vpack.c.b16 %v3125, %v3121
    %v3186 = vpack.c.b16 %v3126, %v3122
    %v3187 = vpack.c.b16 %v3127, %v3123
    %v3188 = vpack.c.b16 %v3128, %v3124
    %v3189 = vpack.c.b16 %v3133, %v3129
    %v3190 = vpack.c.b16 %v3134, %v3130
    %v3191 = vpack.c.b16 %v3135, %v3131
    %v3192 = vpack.c.b16 %v3136, %v3132
    %v3193 = vpack.c.b16 %v3141, %v3137
    %v3194 = vpack.c.b16 %v3142, %v3138
    %v3195 = vpack.c.b16 %v3143, %v3139
    %v3196 = vpack.c.b16 %v3144, %v3140
    %v3197 = vpack.c.b16 %v3149, %v3145
    %v3198 = vpack.c.b16 %v3150, %v3146
    %v3199 = vpack.c.b16 %v3151, %v3147
    %v3200 = vpack.c.b16 %v3152, %v3148
    %v3201 = vpack.c.b16 %v3157, %v3153
    %v3202 = vpack.c.b16 %v3158, %v3154
    %v3203 = vpack.c.b16 %v3159, %v3155
    %v3204 = vpack.c.b16 %v3160, %v3156
    %v3205 = vpack.c.b16 %v3165, %v3161
    %v3206 = vpack.c.b16 %v3166, %v3162
    %v3207 = vpack.c.b16 %v3167, %v3163
    %v3208 = vpack.c.b16 %v3168, %v3164
    %v3209 = vpack.c.b16 %v3173, %v3169
    %v3210 = vpack.c.b16 %v3174, %v3170
    %v3211 = vpack.c.b16 %v3175, %v3171
    %v3212 = vpack.c.b16 %v3176, %v3172
    %v3213 = vpack.c.b16 %v3181, %v3177
    %v3214 = vpack.c.b16 %v3182, %v3178
    %v3215 = vpack.c.b16 %v3183, %v3179
    %v3216 = vpack.c.b16 %v3184, %v3180
    %3249 = vmatpush.bf16.msra.mxu0 %v3213
    %3250 = vmatpush.bf16.msra.mxu0 %v3209
    %3251 = vmatpush.bf16.msra.mxu0 %v3205
    %3252 = vmatpush.bf16.msra.mxu0 %v3201
    %3253 = vmatpush.bf16.msra.mxu0 %v3197
    %3254 = vmatpush.bf16.msra.mxu0 %v3193
    %3255 = vmatpush.bf16.msra.mxu0 %v3189
    %3256 = vmatpush.bf16.msra.mxu0 %v3185
    %3257 = vmatmul.bf16.gmra.mxu0 %v3077
    %v3258 = vpop.f32.mrf.mxu0
    %v3259 = vadd.f32 %v3081, %v3258
    %v3260 = vpop.f32.mrf.mxu0
    %v3261 = vadd.f32 %v3081, %v3260
    %3262 = vdwg.mxu0
    %3263 = vmatpush.bf16.msra.mxu0 %v3214
    %3264 = vmatpush.bf16.msra.mxu0 %v3210
    %3265 = vmatpush.bf16.msra.mxu0 %v3206
    %3266 = vmatpush.bf16.msra.mxu0 %v3202
    %3267 = vmatpush.bf16.msra.mxu0 %v3198
    %3268 = vmatpush.bf16.msra.mxu0 %v3194
    %3269 = vmatpush.bf16.msra.mxu0 %v3190
    %3270 = vmatpush.bf16.msra.mxu0 %v3186
    %3271 = vmatmul.bf16.gmra.mxu0 %v3077
    %v3272 = vpop.f32.mrf.mxu0
    %v3273 = vadd.f32 %v3082, %v3272
    %v3274 = vpop.f32.mrf.mxu0
    %v3275 = vadd.f32 %v3082, %v3274
    %3276 = vdwg.mxu0
    %3277 = vmatpush.bf16.msra.mxu0 %v3215
    %3278 = vmatpush.bf16.msra.mxu0 %v3211
    %3279 = vmatpush.bf16.msra.mxu0 %v3207
    %3280 = vmatpush.bf16.msra.mxu0 %v3203
    %3281 = vmatpush.bf16.msra.mxu0 %v3199
    %3282 = vmatpush.bf16.msra.mxu0 %v3195
    %3283 = vmatpush.bf16.msra.mxu0 %v3191
    %3284 = vmatpush.bf16.msra.mxu0 %v3187
    %3285 = vmatmul.bf16.gmra.mxu0 %v3077
    %v3286 = vpop.f32.mrf.mxu0
    %v3287 = vadd.f32 %v3083, %v3286
    %v3288 = vpop.f32.mrf.mxu0
    %v3289 = vadd.f32 %v3083, %v3288
    %3290 = vdwg.mxu0
    %3291 = vmatpush.bf16.msra.mxu0 %v3216
    %3292 = vmatpush.bf16.msra.mxu0 %v3212
    %3293 = vmatpush.bf16.msra.mxu0 %v3208
    %3294 = vmatpush.bf16.msra.mxu0 %v3204
    %3295 = vmatpush.bf16.msra.mxu0 %v3200
    %3296 = vmatpush.bf16.msra.mxu0 %v3196
    %3297 = vmatpush.bf16.msra.mxu0 %v3192
    %3298 = vmatpush.bf16.msra.mxu0 %v3188
    %3299 = vmatmul.bf16.gmra.mxu0 %v3077
    %v3300 = vpop.f32.mrf.mxu0
    %v3301 = vadd.f32 %v3084, %v3300
    %v3302 = vpop.f32.mrf.mxu0
    %v3303 = vadd.f32 %v3084, %v3302
    %3304 = vdwg.mxu0
    %v3305 = vmax.f32 %v3259, 0.0
    %v3306 = vmax.f32 %v3273, 0.0
    %v3307 = vmax.f32 %v3287, 0.0
    %v3308 = vmax.f32 %v3301, 0.0
    %v3309 = vmax.f32 %v3261, 0.0
    %v3310 = vmax.f32 %v3275, 0.0
    %v3311 = vmax.f32 %v3289, 0.0
    %v3312 = vmax.f32 %v3303, 0.0
    %v3313 = vld [vmem:[#allocation2 + $0x200] sm:$0xff]
    %v3314 = vld [vmem:[#allocation2 + $0x208] sm:$0xff]
    %v3315 = vld [vmem:[#allocation2 + $0x210] sm:$0xff]
    %v3316 = vld [vmem:[#allocation2 + $0x218] sm:$0xff]
    %v3317 = vld [vmem:[#allocation2 + $0x220] sm:$0xff]
    %v3318 = vld [vmem:[#allocation2 + $0x228] sm:$0xff]
    %v3319 = vld [vmem:[#allocation2 + $0x230] sm:$0xff]
    %v3320 = vld [vmem:[#allocation2 + $0x238] sm:$0xff]
    %v3321 = vld [vmem:[#allocation2 + $0x240] sm:$0xff]
    %v3322 = vld [vmem:[#allocation2 + $0x248] sm:$0xff]
    %v3323 = vld [vmem:[#allocation2 + $0x250] sm:$0xff]
    %v3324 = vld [vmem:[#allocation2 + $0x258] sm:$0xff]
    %v3325 = vld [vmem:[#allocation2 + $0x260] sm:$0xff]
    %v3326 = vld [vmem:[#allocation2 + $0x268] sm:$0xff]
    %v3327 = vld [vmem:[#allocation2 + $0x270] sm:$0xff]
    %v3328 = vld [vmem:[#allocation2 + $0x278] sm:$0xff]
    %v3329 = vld [vmem:[#allocation2 + $0x280] sm:$0xff]
    %v3330 = vld [vmem:[#allocation2 + $0x288] sm:$0xff]
    %v3331 = vld [vmem:[#allocation2 + $0x290] sm:$0xff]
    %v3332 = vld [vmem:[#allocation2 + $0x298] sm:$0xff]
    %v3333 = vld [vmem:[#allocation2 + $0x2a0] sm:$0xff]
    %v3334 = vld [vmem:[#allocation2 + $0x2a8] sm:$0xff]
    %v3335 = vld [vmem:[#allocation2 + $0x2b0] sm:$0xff]
    %v3336 = vld [vmem:[#allocation2 + $0x2b8] sm:$0xff]
    %v3337 = vld [vmem:[#allocation2 + $0x2c0] sm:$0xff]
    %v3338 = vld [vmem:[#allocation2 + $0x2c8] sm:$0xff]
    %v3339 = vld [vmem:[#allocation2 + $0x2d0] sm:$0xff]
    %v3340 = vld [vmem:[#allocation2 + $0x2d8] sm:$0xff]
    %v3341 = vld [vmem:[#allocation2 + $0x2e0] sm:$0xff]
    %v3342 = vld [vmem:[#allocation2 + $0x2e8] sm:$0xff]
    %v3343 = vld [vmem:[#allocation2 + $0x2f0] sm:$0xff]
    %v3344 = vld [vmem:[#allocation2 + $0x2f8] sm:$0xff]
    %v3345 = vpack.c.bf16 %v2772, %v2771
    %s3346 = scalar_lea.vmem [#allocation12], 99
    %v3347 = vld [vmem:[%s3346] ss:$8 sm:$0xf]
    %v3349 = vperm.slane %v3347, 0
    %v3350 = vperm.slane %v3347, 1
    %v3351 = vperm.slane %v3347, 2
    %v3352 = vperm.slane %v3347, 3
    %v3389 = vunpack.c.l.b16 %v3313
    %v3390 = vunpack.c.h.b16 %v3313
    %v3391 = vunpack.c.l.b16 %v3314
    %v3392 = vunpack.c.h.b16 %v3314
    %v3393 = vunpack.c.l.b16 %v3315
    %v3394 = vunpack.c.h.b16 %v3315
    %v3395 = vunpack.c.l.b16 %v3316
    %v3396 = vunpack.c.h.b16 %v3316
    %v3397 = vunpack.c.l.b16 %v3317
    %v3398 = vunpack.c.h.b16 %v3317
    %v3399 = vunpack.c.l.b16 %v3318
    %v3400 = vunpack.c.h.b16 %v3318
    %v3401 = vunpack.c.l.b16 %v3319
    %v3402 = vunpack.c.h.b16 %v3319
    %v3403 = vunpack.c.l.b16 %v3320
    %v3404 = vunpack.c.h.b16 %v3320
    %v3405 = vunpack.c.l.b16 %v3321
    %v3406 = vunpack.c.h.b16 %v3321
    %v3407 = vunpack.c.l.b16 %v3322
    %v3408 = vunpack.c.h.b16 %v3322
    %v3409 = vunpack.c.l.b16 %v3323
    %v3410 = vunpack.c.h.b16 %v3323
    %v3411 = vunpack.c.l.b16 %v3324
    %v3412 = vunpack.c.h.b16 %v3324
    %v3413 = vunpack.c.l.b16 %v3325
    %v3414 = vunpack.c.h.b16 %v3325
    %v3415 = vunpack.c.l.b16 %v3326
    %v3416 = vunpack.c.h.b16 %v3326
    %v3417 = vunpack.c.l.b16 %v3327
    %v3418 = vunpack.c.h.b16 %v3327
    %v3419 = vunpack.c.l.b16 %v3328
    %v3420 = vunpack.c.h.b16 %v3328
    %v3421 = vunpack.c.l.b16 %v3329
    %v3422 = vunpack.c.h.b16 %v3329
    %v3423 = vunpack.c.l.b16 %v3330
    %v3424 = vunpack.c.h.b16 %v3330
    %v3425 = vunpack.c.l.b16 %v3331
    %v3426 = vunpack.c.h.b16 %v3331
    %v3427 = vunpack.c.l.b16 %v3332
    %v3428 = vunpack.c.h.b16 %v3332
    %v3429 = vunpack.c.l.b16 %v3333
    %v3430 = vunpack.c.h.b16 %v3333
    %v3431 = vunpack.c.l.b16 %v3334
    %v3432 = vunpack.c.h.b16 %v3334
    %v3433 = vunpack.c.l.b16 %v3335
    %v3434 = vunpack.c.h.b16 %v3335
    %v3435 = vunpack.c.l.b16 %v3336
    %v3436 = vunpack.c.h.b16 %v3336
    %v3437 = vunpack.c.l.b16 %v3337
    %v3438 = vunpack.c.h.b16 %v3337
    %v3439 = vunpack.c.l.b16 %v3338
    %v3440 = vunpack.c.h.b16 %v3338
    %v3441 = vunpack.c.l.b16 %v3339
    %v3442 = vunpack.c.h.b16 %v3339
    %v3443 = vunpack.c.l.b16 %v3340
    %v3444 = vunpack.c.h.b16 %v3340
    %v3445 = vunpack.c.l.b16 %v3341
    %v3446 = vunpack.c.h.b16 %v3341
    %v3447 = vunpack.c.l.b16 %v3342
    %v3448 = vunpack.c.h.b16 %v3342
    %v3449 = vunpack.c.l.b16 %v3343
    %v3450 = vunpack.c.h.b16 %v3343
    %v3451 = vunpack.c.l.b16 %v3344
    %v3452 = vunpack.c.h.b16 %v3344
    %v3453 = vpack.c.b16 %v3393, %v3389
    %v3454 = vpack.c.b16 %v3394, %v3390
    %v3455 = vpack.c.b16 %v3395, %v3391
    %v3456 = vpack.c.b16 %v3396, %v3392
    %v3457 = vpack.c.b16 %v3401, %v3397
    %v3458 = vpack.c.b16 %v3402, %v3398
    %v3459 = vpack.c.b16 %v3403, %v3399
    %v3460 = vpack.c.b16 %v3404, %v3400
    %v3461 = vpack.c.b16 %v3409, %v3405
    %v3462 = vpack.c.b16 %v3410, %v3406
    %v3463 = vpack.c.b16 %v3411, %v3407
    %v3464 = vpack.c.b16 %v3412, %v3408
    %v3465 = vpack.c.b16 %v3417, %v3413
    %v3466 = vpack.c.b16 %v3418, %v3414
    %v3467 = vpack.c.b16 %v3419, %v3415
    %v3468 = vpack.c.b16 %v3420, %v3416
    %v3469 = vpack.c.b16 %v3425, %v3421
    %v3470 = vpack.c.b16 %v3426, %v3422
    %v3471 = vpack.c.b16 %v3427, %v3423
    %v3472 = vpack.c.b16 %v3428, %v3424
    %v3473 = vpack.c.b16 %v3433, %v3429
    %v3474 = vpack.c.b16 %v3434, %v3430
    %v3475 = vpack.c.b16 %v3435, %v3431
    %v3476 = vpack.c.b16 %v3436, %v3432
    %v3477 = vpack.c.b16 %v3441, %v3437
    %v3478 = vpack.c.b16 %v3442, %v3438
    %v3479 = vpack.c.b16 %v3443, %v3439
    %v3480 = vpack.c.b16 %v3444, %v3440
    %v3481 = vpack.c.b16 %v3449, %v3445
    %v3482 = vpack.c.b16 %v3450, %v3446
    %v3483 = vpack.c.b16 %v3451, %v3447
    %v3484 = vpack.c.b16 %v3452, %v3448
    %3517 = vmatpush.bf16.msra.mxu0 %v3481
    %3518 = vmatpush.bf16.msra.mxu0 %v3477
    %3519 = vmatpush.bf16.msra.mxu0 %v3473
    %3520 = vmatpush.bf16.msra.mxu0 %v3469
    %3521 = vmatpush.bf16.msra.mxu0 %v3465
    %3522 = vmatpush.bf16.msra.mxu0 %v3461
    %3523 = vmatpush.bf16.msra.mxu0 %v3457
    %3524 = vmatpush.bf16.msra.mxu0 %v3453
    %3525 = vmatmul.bf16.gmra.mxu0 %v3345
    %v3526 = vpop.f32.mrf.mxu0
    %v3527 = vadd.f32 %v3349, %v3526
    %v3528 = vpop.f32.mrf.mxu0
    %v3529 = vadd.f32 %v3349, %v3528
    %3530 = vdwg.mxu0
    %3531 = vmatpush.bf16.msra.mxu0 %v3482
    %3532 = vmatpush.bf16.msra.mxu0 %v3478
    %3533 = vmatpush.bf16.msra.mxu0 %v3474
    %3534 = vmatpush.bf16.msra.mxu0 %v3470
    %3535 = vmatpush.bf16.msra.mxu0 %v3466
    %3536 = vmatpush.bf16.msra.mxu0 %v3462
    %3537 = vmatpush.bf16.msra.mxu0 %v3458
    %3538 = vmatpush.bf16.msra.mxu0 %v3454
    %3539 = vmatmul.bf16.gmra.mxu0 %v3345
    %v3540 = vpop.f32.mrf.mxu0
    %v3541 = vadd.f32 %v3350, %v3540
    %v3542 = vpop.f32.mrf.mxu0
    %v3543 = vadd.f32 %v3350, %v3542
    %3544 = vdwg.mxu0
    %3545 = vmatpush.bf16.msra.mxu0 %v3483
    %3546 = vmatpush.bf16.msra.mxu0 %v3479
    %3547 = vmatpush.bf16.msra.mxu0 %v3475
    %3548 = vmatpush.bf16.msra.mxu0 %v3471
    %3549 = vmatpush.bf16.msra.mxu0 %v3467
    %3550 = vmatpush.bf16.msra.mxu0 %v3463
    %3551 = vmatpush.bf16.msra.mxu0 %v3459
    %3552 = vmatpush.bf16.msra.mxu0 %v3455
    %3553 = vmatmul.bf16.gmra.mxu0 %v3345
    %v3554 = vpop.f32.mrf.mxu0
    %v3555 = vadd.f32 %v3351, %v3554
    %v3556 = vpop.f32.mrf.mxu0
    %v3557 = vadd.f32 %v3351, %v3556
    %3558 = vdwg.mxu0
    %3559 = vmatpush.bf16.msra.mxu0 %v3484
    %3560 = vmatpush.bf16.msra.mxu0 %v3480
    %3561 = vmatpush.bf16.msra.mxu0 %v3476
    %3562 = vmatpush.bf16.msra.mxu0 %v3472
    %3563 = vmatpush.bf16.msra.mxu0 %v3468
    %3564 = vmatpush.bf16.msra.mxu0 %v3464
    %3565 = vmatpush.bf16.msra.mxu0 %v3460
    %3566 = vmatpush.bf16.msra.mxu0 %v3456
    %3567 = vmatmul.bf16.gmra.mxu0 %v3345
    %v3568 = vpop.f32.mrf.mxu0
    %v3569 = vadd.f32 %v3352, %v3568
    %v3570 = vpop.f32.mrf.mxu0
    %v3571 = vadd.f32 %v3352, %v3570
    %3572 = vdwg.mxu0
    %v3573 = vmax.f32 %v3527, 0.0
    %v3574 = vmax.f32 %v3541, 0.0
    %v3575 = vmax.f32 %v3555, 0.0
    %v3576 = vmax.f32 %v3569, 0.0
    %v3577 = vmax.f32 %v3529, 0.0
    %v3578 = vmax.f32 %v3543, 0.0
    %v3579 = vmax.f32 %v3557, 0.0
    %v3580 = vmax.f32 %v3571, 0.0
    %s3581 = sld [smem:[#allocation14]]
    %v3582 = vstv %s3581
    %v3583 = vmul.f32 %v3582, %v3037
    %v3584 = vmul.f32 %v3582, %v3038
    %v3585 = vmul.f32 %v3582, %v3039
    %v3586 = vmul.f32 %v3582, %v3040
    %v3587 = vmul.f32 %v3582, %v3041
    %v3588 = vmul.f32 %v3582, %v3042
    %v3589 = vmul.f32 %v3582, %v3043
    %v3590 = vmul.f32 %v3582, %v3044
    %s3591 = sld [smem:[#allocation14 + $0x1]]
    %v3592 = vstv %s3591
    %v3593 = vmul.f32 %v3592, %v3305
    %v3594 = vmul.f32 %v3592, %v3306
    %v3595 = vmul.f32 %v3592, %v3307
    %v3596 = vmul.f32 %v3592, %v3308
    %v3597 = vmul.f32 %v3592, %v3309
    %v3598 = vmul.f32 %v3592, %v3310
    %v3599 = vmul.f32 %v3592, %v3311
    %v3600 = vmul.f32 %v3592, %v3312
    %v3601 = vadd.f32 %v3583, %v3593
    %v3602 = vadd.f32 %v3584, %v3594
    %v3603 = vadd.f32 %v3585, %v3595
    %v3604 = vadd.f32 %v3586, %v3596
    %v3605 = vadd.f32 %v3587, %v3597
    %v3606 = vadd.f32 %v3588, %v3598
    %v3607 = vadd.f32 %v3589, %v3599
    %v3608 = vadd.f32 %v3590, %v3600
    %s3609 = sld [smem:[#allocation14 + $0x2]]
    %v3610 = vstv %s3609
    %v3611 = vmul.f32 %v3610, %v3573
    %v3612 = vmul.f32 %v3610, %v3574
    %v3613 = vmul.f32 %v3610, %v3575
    %v3614 = vmul.f32 %v3610, %v3576
    %v3615 = vmul.f32 %v3610, %v3577
    %v3616 = vmul.f32 %v3610, %v3578
    %v3617 = vmul.f32 %v3610, %v3579
    %v3618 = vmul.f32 %v3610, %v3580
    %v3619 = vadd.f32 %v3601, %v3611
    %v3620 = vadd.f32 %v3602, %v3612
    %v3621 = vadd.f32 %v3603, %v3613
    %v3622 = vadd.f32 %v3604, %v3614
    %v3623 = vadd.f32 %v3605, %v3615
    %v3624 = vadd.f32 %v3606, %v3616
    %v3625 = vadd.f32 %v3607, %v3617
    %v3626 = vadd.f32 %v3608, %v3618
    %v3627 = vadd.f32 %v3619, %v3623
    %v3628 = vrot.slane %v3627, 4
    %v3629 = vadd.f32 %v3627, %v3628
    %v3630 = vrot.slane %v3629, 2
    %v3631 = vadd.f32 %v3629, %v3630
    %v3632 = vrot.slane %v3631, 1
    %v3633 = vadd.f32 %v3631, %v3632
    %v3634 = vadd.f32 %v3620, %v3624
    %v3635 = vrot.slane %v3634, 4
    %v3636 = vadd.f32 %v3634, %v3635
    %v3637 = vrot.slane %v3636, 2
    %v3638 = vadd.f32 %v3636, %v3637
    %v3639 = vrot.slane %v3638, 1
    %v3640 = vadd.f32 %v3638, %v3639
    %v3641 = vadd.f32 %v3621, %v3625
    %v3642 = vrot.slane %v3641, 4
    %v3643 = vadd.f32 %v3641, %v3642
    %v3644 = vrot.slane %v3643, 2
    %v3645 = vadd.f32 %v3643, %v3644
    %v3646 = vrot.slane %v3645, 1
    %v3647 = vadd.f32 %v3645, %v3646
    %v3648 = vadd.f32 %v3622, %v3626
    %v3649 = vrot.slane %v3648, 4
    %v3650 = vadd.f32 %v3648, %v3649
    %v3651 = vrot.slane %v3650, 2
    %v3652 = vadd.f32 %v3650, %v3651
    %v3653 = vrot.slane %v3652, 1
    %v3654 = vadd.f32 %v3652, %v3653
    %v3655 = vmul.f32 %v3633, %v1088
    %v3656 = vmul.f32 %v3640, %v1088
    %v3657 = vmul.f32 %v3647, %v1088
    %v3658 = vmul.f32 %v3654, %v1088
    %v3659 = vsub.f32 %v3619, %v3655
    %v3660 = vsub.f32 %v3620, %v3656
    %v3661 = vsub.f32 %v3621, %v3657
    %v3662 = vsub.f32 %v3622, %v3658
    %v3663 = vsub.f32 %v3623, %v3655
    %v3664 = vsub.f32 %v3624, %v3656
    %v3665 = vsub.f32 %v3625, %v3657
    %v3666 = vsub.f32 %v3626, %v3658
    %v3667 = vmul.f32 %v3659, %v3659
    %v3668 = vmul.f32 %v3660, %v3660
    %v3669 = vmul.f32 %v3661, %v3661
    %v3670 = vmul.f32 %v3662, %v3662
    %v3671 = vmul.f32 %v3663, %v3663
    %v3672 = vmul.f32 %v3664, %v3664
    %v3673 = vmul.f32 %v3665, %v3665
    %v3674 = vmul.f32 %v3666, %v3666
    %v3675 = vadd.f32 %v3667, %v3671
    %v3676 = vrot.slane %v3675, 4
    %v3677 = vadd.f32 %v3675, %v3676
    %v3678 = vrot.slane %v3677, 2
    %v3679 = vadd.f32 %v3677, %v3678
    %v3680 = vrot.slane %v3679, 1
    %v3681 = vadd.f32 %v3679, %v3680
    %v3682 = vadd.f32 %v3668, %v3672
    %v3683 = vrot.slane %v3682, 4
    %v3684 = vadd.f32 %v3682, %v3683
    %v3685 = vrot.slane %v3684, 2
    %v3686 = vadd.f32 %v3684, %v3685
    %v3687 = vrot.slane %v3686, 1
    %v3688 = vadd.f32 %v3686, %v3687
    %v3689 = vadd.f32 %v3669, %v3673
    %v3690 = vrot.slane %v3689, 4
    %v3691 = vadd.f32 %v3689, %v3690
    %v3692 = vrot.slane %v3691, 2
    %v3693 = vadd.f32 %v3691, %v3692
    %v3694 = vrot.slane %v3693, 1
    %v3695 = vadd.f32 %v3693, %v3694
    %v3696 = vadd.f32 %v3670, %v3674
    %v3697 = vrot.slane %v3696, 4
    %v3698 = vadd.f32 %v3696, %v3697
    %v3699 = vrot.slane %v3698, 2
    %v3700 = vadd.f32 %v3698, %v3699
    %v3701 = vrot.slane %v3700, 1
    %v3702 = vadd.f32 %v3700, %v3701
    %v3703 = vmul.f32 %v3681, %v1088
    %v3704 = vmul.f32 %v3688, %v1088
    %v3705 = vmul.f32 %v3695, %v1088
    %v3706 = vmul.f32 %v3702, %v1088
    %v3707 = vadd.f32 %v3703, 1e-05
    %v3708 = vadd.f32 %v3704, 1e-05
    %v3709 = vadd.f32 %v3705, 1e-05
    %v3710 = vadd.f32 %v3706, 1e-05
    %v3711 = vrsqrt.pop %v3707
    %v3712 = vmul.f32 %v3711, %v3707
    %v3713 = vmul.f32 %v3712, %v3711
    %v3714 = vmul.f32 0.5, %v3713
    %v3715 = vsub.f32 1.5, %v3714
    %v3716 = vmul.f32 %v3711, %v3715
    %vm3717 = vweird.f32 %v3707
    %vm3718 = vweird.f32 %v3711
    %vm3719 = vmor %vm3717, %vm3718
    %v3720 = vsel %vm3719, %v3711, %v3716
    %v3721 = vrsqrt.pop %v3708
    %v3722 = vmul.f32 %v3721, %v3708
    %v3723 = vmul.f32 %v3722, %v3721
    %v3724 = vmul.f32 0.5, %v3723
    %v3725 = vsub.f32 1.5, %v3724
    %v3726 = vmul.f32 %v3721, %v3725
    %vm3727 = vweird.f32 %v3708
    %vm3728 = vweird.f32 %v3721
    %vm3729 = vmor %vm3727, %vm3728
    %v3730 = vsel %vm3729, %v3721, %v3726
    %v3731 = vrsqrt.pop %v3709
    %v3732 = vmul.f32 %v3731, %v3709
    %v3733 = vmul.f32 %v3732, %v3731
    %v3734 = vmul.f32 0.5, %v3733
    %v3735 = vsub.f32 1.5, %v3734
    %v3736 = vmul.f32 %v3731, %v3735
    %vm3737 = vweird.f32 %v3709
    %vm3738 = vweird.f32 %v3731
    %vm3739 = vmor %vm3737, %vm3738
    %v3740 = vsel %vm3739, %v3731, %v3736
    %v3741 = vrsqrt.pop %v3710
    %v3742 = vmul.f32 %v3741, %v3710
    %v3743 = vmul.f32 %v3742, %v3741
    %v3744 = vmul.f32 0.5, %v3743
    %v3745 = vsub.f32 1.5, %v3744
    %v3746 = vmul.f32 %v3741, %v3745
    %vm3747 = vweird.f32 %v3710
    %vm3748 = vweird.f32 %v3741
    %vm3749 = vmor %vm3747, %vm3748
    %v3750 = vsel %vm3749, %v3741, %v3746
    %v3751 = vmul.f32 %v3659, %v3720
    %v3752 = vmul.f32 %v3660, %v3730
    %v3753 = vmul.f32 %v3661, %v3740
    %v3754 = vmul.f32 %v3662, %v3750
    %v3755 = vmul.f32 %v3663, %v3720
    %v3756 = vmul.f32 %v3664, %v3730
    %v3757 = vmul.f32 %v3665, %v3740
    %v3758 = vmul.f32 %v3666, %v3750
    %v3759 = vld [vmem:[#allocation2 + $0x300] sm:$0xff]
    %v3760 = vld [vmem:[#allocation2 + $0x308] sm:$0xff]
    %v3761 = vld [vmem:[#allocation2 + $0x310] sm:$0xff]
    %v3762 = vld [vmem:[#allocation2 + $0x318] sm:$0xff]
    %v3763 = vld [vmem:[#allocation2 + $0x320] sm:$0xff]
    %v3764 = vld [vmem:[#allocation2 + $0x328] sm:$0xff]
    %v3765 = vld [vmem:[#allocation2 + $0x330] sm:$0xff]
    %v3766 = vld [vmem:[#allocation2 + $0x338] sm:$0xff]
    %v3767 = vld [vmem:[#allocation2 + $0x340] sm:$0xff]
    %v3768 = vld [vmem:[#allocation2 + $0x348] sm:$0xff]
    %v3769 = vld [vmem:[#allocation2 + $0x350] sm:$0xff]
    %v3770 = vld [vmem:[#allocation2 + $0x358] sm:$0xff]
    %v3771 = vld [vmem:[#allocation2 + $0x360] sm:$0xff]
    %v3772 = vld [vmem:[#allocation2 + $0x368] sm:$0xff]
    %v3773 = vld [vmem:[#allocation2 + $0x370] sm:$0xff]
    %v3774 = vld [vmem:[#allocation2 + $0x378] sm:$0xff]
    %v3775 = vld [vmem:[#allocation2 + $0x380] sm:$0xff]
    %v3776 = vld [vmem:[#allocation2 + $0x388] sm:$0xff]
    %v3777 = vld [vmem:[#allocation2 + $0x390] sm:$0xff]
    %v3778 = vld [vmem:[#allocation2 + $0x398] sm:$0xff]
    %v3779 = vld [vmem:[#allocation2 + $0x3a0] sm:$0xff]
    %v3780 = vld [vmem:[#allocation2 + $0x3a8] sm:$0xff]
    %v3781 = vld [vmem:[#allocation2 + $0x3b0] sm:$0xff]
    %v3782 = vld [vmem:[#allocation2 + $0x3b8] sm:$0xff]
    %v3783 = vld [vmem:[#allocation2 + $0x3c0] sm:$0xff]
    %v3784 = vld [vmem:[#allocation2 + $0x3c8] sm:$0xff]
    %v3785 = vld [vmem:[#allocation2 + $0x3d0] sm:$0xff]
    %v3786 = vld [vmem:[#allocation2 + $0x3d8] sm:$0xff]
    %v3787 = vld [vmem:[#allocation2 + $0x3e0] sm:$0xff]
    %v3788 = vld [vmem:[#allocation2 + $0x3e8] sm:$0xff]
    %v3789 = vld [vmem:[#allocation2 + $0x3f0] sm:$0xff]
    %v3790 = vld [vmem:[#allocation2 + $0x3f8] sm:$0xff]
    %v3791 = vld [vmem:[#allocation2 + $0x400] sm:$0xff]
    %v3792 = vld [vmem:[#allocation2 + $0x408] sm:$0xff]
    %v3793 = vld [vmem:[#allocation2 + $0x410] sm:$0xff]
    %v3794 = vld [vmem:[#allocation2 + $0x418] sm:$0xff]
    %v3795 = vld [vmem:[#allocation2 + $0x420] sm:$0xff]
    %v3796 = vld [vmem:[#allocation2 + $0x428] sm:$0xff]
    %v3797 = vld [vmem:[#allocation2 + $0x430] sm:$0xff]
    %v3798 = vld [vmem:[#allocation2 + $0x438] sm:$0xff]
    %v3799 = vld [vmem:[#allocation2 + $0x440] sm:$0xff]
    %v3800 = vld [vmem:[#allocation2 + $0x448] sm:$0xff]
    %v3801 = vld [vmem:[#allocation2 + $0x450] sm:$0xff]
    %v3802 = vld [vmem:[#allocation2 + $0x458] sm:$0xff]
    %v3803 = vld [vmem:[#allocation2 + $0x460] sm:$0xff]
    %v3804 = vld [vmem:[#allocation2 + $0x468] sm:$0xff]
    %v3805 = vld [vmem:[#allocation2 + $0x470] sm:$0xff]
    %v3806 = vld [vmem:[#allocation2 + $0x478] sm:$0xff]
    %v3807 = vld [vmem:[#allocation2 + $0x480] sm:$0xff]
    %v3808 = vld [vmem:[#allocation2 + $0x488] sm:$0xff]
    %v3809 = vld [vmem:[#allocation2 + $0x490] sm:$0xff]
    %v3810 = vld [vmem:[#allocation2 + $0x498] sm:$0xff]
    %v3811 = vld [vmem:[#allocation2 + $0x4a0] sm:$0xff]
    %v3812 = vld [vmem:[#allocation2 + $0x4a8] sm:$0xff]
    %v3813 = vld [vmem:[#allocation2 + $0x4b0] sm:$0xff]
    %v3814 = vld [vmem:[#allocation2 + $0x4b8] sm:$0xff]
    %v3815 = vld [vmem:[#allocation2 + $0x4c0] sm:$0xff]
    %v3816 = vld [vmem:[#allocation2 + $0x4c8] sm:$0xff]
    %v3817 = vld [vmem:[#allocation2 + $0x4d0] sm:$0xff]
    %v3818 = vld [vmem:[#allocation2 + $0x4d8] sm:$0xff]
    %v3819 = vld [vmem:[#allocation2 + $0x4e0] sm:$0xff]
    %v3820 = vld [vmem:[#allocation2 + $0x4e8] sm:$0xff]
    %v3821 = vld [vmem:[#allocation2 + $0x4f0] sm:$0xff]
    %v3822 = vld [vmem:[#allocation2 + $0x4f8] sm:$0xff]
    %v3823 = vld [vmem:[#allocation2 + $0x500] sm:$0xff]
    %v3824 = vld [vmem:[#allocation2 + $0x508] sm:$0xff]
    %v3825 = vld [vmem:[#allocation2 + $0x510] sm:$0xff]
    %v3826 = vld [vmem:[#allocation2 + $0x518] sm:$0xff]
    %v3827 = vld [vmem:[#allocation2 + $0x520] sm:$0xff]
    %v3828 = vld [vmem:[#allocation2 + $0x528] sm:$0xff]
    %v3829 = vld [vmem:[#allocation2 + $0x530] sm:$0xff]
    %v3830 = vld [vmem:[#allocation2 + $0x538] sm:$0xff]
    %v3831 = vld [vmem:[#allocation2 + $0x540] sm:$0xff]
    %v3832 = vld [vmem:[#allocation2 + $0x548] sm:$0xff]
    %v3833 = vld [vmem:[#allocation2 + $0x550] sm:$0xff]
    %v3834 = vld [vmem:[#allocation2 + $0x558] sm:$0xff]
    %v3835 = vld [vmem:[#allocation2 + $0x560] sm:$0xff]
    %v3836 = vld [vmem:[#allocation2 + $0x568] sm:$0xff]
    %v3837 = vld [vmem:[#allocation2 + $0x570] sm:$0xff]
    %v3838 = vld [vmem:[#allocation2 + $0x578] sm:$0xff]
    %v3839 = vld [vmem:[#allocation2 + $0x580] sm:$0xff]
    %v3840 = vld [vmem:[#allocation2 + $0x588] sm:$0xff]
    %v3841 = vld [vmem:[#allocation2 + $0x590] sm:$0xff]
    %v3842 = vld [vmem:[#allocation2 + $0x598] sm:$0xff]
    %v3843 = vld [vmem:[#allocation2 + $0x5a0] sm:$0xff]
    %v3844 = vld [vmem:[#allocation2 + $0x5a8] sm:$0xff]
    %v3845 = vld [vmem:[#allocation2 + $0x5b0] sm:$0xff]
    %v3846 = vld [vmem:[#allocation2 + $0x5b8] sm:$0xff]
    %v3847 = vld [vmem:[#allocation2 + $0x5c0] sm:$0xff]
    %v3848 = vld [vmem:[#allocation2 + $0x5c8] sm:$0xff]
    %v3849 = vld [vmem:[#allocation2 + $0x5d0] sm:$0xff]
    %v3850 = vld [vmem:[#allocation2 + $0x5d8] sm:$0xff]
    %v3851 = vld [vmem:[#allocation2 + $0x5e0] sm:$0xff]
    %v3852 = vld [vmem:[#allocation2 + $0x5e8] sm:$0xff]
    %v3853 = vld [vmem:[#allocation2 + $0x5f0] sm:$0xff]
    %v3854 = vld [vmem:[#allocation2 + $0x5f8] sm:$0xff]
    %v3855 = vld [vmem:[#allocation2 + $0x600] sm:$0xff]
    %v3856 = vld [vmem:[#allocation2 + $0x608] sm:$0xff]
    %v3857 = vld [vmem:[#allocation2 + $0x610] sm:$0xff]
    %v3858 = vld [vmem:[#allocation2 + $0x618] sm:$0xff]
    %v3859 = vld [vmem:[#allocation2 + $0x620] sm:$0xff]
    %v3860 = vld [vmem:[#allocation2 + $0x628] sm:$0xff]
    %v3861 = vld [vmem:[#allocation2 + $0x630] sm:$0xff]
    %v3862 = vld [vmem:[#allocation2 + $0x638] sm:$0xff]
    %v3863 = vld [vmem:[#allocation2 + $0x640] sm:$0xff]
    %v3864 = vld [vmem:[#allocation2 + $0x648] sm:$0xff]
    %v3865 = vld [vmem:[#allocation2 + $0x650] sm:$0xff]
    %v3866 = vld [vmem:[#allocation2 + $0x658] sm:$0xff]
    %v3867 = vld [vmem:[#allocation2 + $0x660] sm:$0xff]
    %v3868 = vld [vmem:[#allocation2 + $0x668] sm:$0xff]
    %v3869 = vld [vmem:[#allocation2 + $0x670] sm:$0xff]
    %v3870 = vld [vmem:[#allocation2 + $0x678] sm:$0xff]
    %v3871 = vld [vmem:[#allocation2 + $0x680] sm:$0xff]
    %v3872 = vld [vmem:[#allocation2 + $0x688] sm:$0xff]
    %v3873 = vld [vmem:[#allocation2 + $0x690] sm:$0xff]
    %v3874 = vld [vmem:[#allocation2 + $0x698] sm:$0xff]
    %v3875 = vld [vmem:[#allocation2 + $0x6a0] sm:$0xff]
    %v3876 = vld [vmem:[#allocation2 + $0x6a8] sm:$0xff]
    %v3877 = vld [vmem:[#allocation2 + $0x6b0] sm:$0xff]
    %v3878 = vld [vmem:[#allocation2 + $0x6b8] sm:$0xff]
    %v3879 = vld [vmem:[#allocation2 + $0x6c0] sm:$0xff]
    %v3880 = vld [vmem:[#allocation2 + $0x6c8] sm:$0xff]
    %v3881 = vld [vmem:[#allocation2 + $0x6d0] sm:$0xff]
    %v3882 = vld [vmem:[#allocation2 + $0x6d8] sm:$0xff]
    %v3883 = vld [vmem:[#allocation2 + $0x6e0] sm:$0xff]
    %v3884 = vld [vmem:[#allocation2 + $0x6e8] sm:$0xff]
    %v3885 = vld [vmem:[#allocation2 + $0x6f0] sm:$0xff]
    %v3886 = vld [vmem:[#allocation2 + $0x6f8] sm:$0xff]
    %v3887 = vpack.c.bf16 %v3755, %v3751
    %v3888 = vpack.c.bf16 %v3756, %v3752
    %v3889 = vpack.c.bf16 %v3757, %v3753
    %v3890 = vpack.c.bf16 %v3758, %v3754
    %s3891 = scalar_lea.vmem [#allocation12], 100
    %v3892 = vld [vmem:[%s3891] ss:$8 sm:$0xf]
    %v3894 = vperm.slane %v3892, 0
    %v3895 = vperm.slane %v3892, 1
    %v3896 = vperm.slane %v3892, 2
    %v3897 = vperm.slane %v3892, 3
    %v4030 = vunpack.c.l.b16 %v3759
    %v4031 = vunpack.c.h.b16 %v3759
    %v4032 = vunpack.c.l.b16 %v3760
    %v4033 = vunpack.c.h.b16 %v3760
    %v4034 = vunpack.c.l.b16 %v3761
    %v4035 = vunpack.c.h.b16 %v3761
    %v4036 = vunpack.c.l.b16 %v3762
    %v4037 = vunpack.c.h.b16 %v3762
    %v4038 = vunpack.c.l.b16 %v3763
    %v4039 = vunpack.c.h.b16 %v3763
    %v4040 = vunpack.c.l.b16 %v3764
    %v4041 = vunpack.c.h.b16 %v3764
    %v4042 = vunpack.c.l.b16 %v3765
    %v4043 = vunpack.c.h.b16 %v3765
    %v4044 = vunpack.c.l.b16 %v3766
    %v4045 = vunpack.c.h.b16 %v3766
    %v4046 = vunpack.c.l.b16 %v3767
    %v4047 = vunpack.c.h.b16 %v3767
    %v4048 = vunpack.c.l.b16 %v3768
    %v4049 = vunpack.c.h.b16 %v3768
    %v4050 = vunpack.c.l.b16 %v3769
    %v4051 = vunpack.c.h.b16 %v3769
    %v4052 = vunpack.c.l.b16 %v3770
    %v4053 = vunpack.c.h.b16 %v3770
    %v4054 = vunpack.c.l.b16 %v3771
    %v4055 = vunpack.c.h.b16 %v3771
    %v4056 = vunpack.c.l.b16 %v3772
    %v4057 = vunpack.c.h.b16 %v3772
    %v4058 = vunpack.c.l.b16 %v3773
    %v4059 = vunpack.c.h.b16 %v3773
    %v4060 = vunpack.c.l.b16 %v3774
    %v4061 = vunpack.c.h.b16 %v3774
    %v4062 = vunpack.c.l.b16 %v3775
    %v4063 = vunpack.c.h.b16 %v3775
    %v4064 = vunpack.c.l.b16 %v3776
    %v4065 = vunpack.c.h.b16 %v3776
    %v4066 = vunpack.c.l.b16 %v3777
    %v4067 = vunpack.c.h.b16 %v3777
    %v4068 = vunpack.c.l.b16 %v3778
    %v4069 = vunpack.c.h.b16 %v3778
    %v4070 = vunpack.c.l.b16 %v3779
    %v4071 = vunpack.c.h.b16 %v3779
    %v4072 = vunpack.c.l.b16 %v3780
    %v4073 = vunpack.c.h.b16 %v3780
    %v4074 = vunpack.c.l.b16 %v3781
    %v4075 = vunpack.c.h.b16 %v3781
    %v4076 = vunpack.c.l.b16 %v3782
    %v4077 = vunpack.c.h.b16 %v3782
    %v4078 = vunpack.c.l.b16 %v3783
    %v4079 = vunpack.c.h.b16 %v3783
    %v4080 = vunpack.c.l.b16 %v3784
    %v4081 = vunpack.c.h.b16 %v3784
    %v4082 = vunpack.c.l.b16 %v3785
    %v4083 = vunpack.c.h.b16 %v3785
    %v4084 = vunpack.c.l.b16 %v3786
    %v4085 = vunpack.c.h.b16 %v3786
    %v4086 = vunpack.c.l.b16 %v3787
    %v4087 = vunpack.c.h.b16 %v3787
    %v4088 = vunpack.c.l.b16 %v3788
    %v4089 = vunpack.c.h.b16 %v3788
    %v4090 = vunpack.c.l.b16 %v3789
    %v4091 = vunpack.c.h.b16 %v3789
    %v4092 = vunpack.c.l.b16 %v3790
    %v4093 = vunpack.c.h.b16 %v3790
    %v4094 = vunpack.c.l.b16 %v3791
    %v4095 = vunpack.c.h.b16 %v3791
    %v4096 = vunpack.c.l.b16 %v3792
    %v4097 = vunpack.c.h.b16 %v3792
    %v4098 = vunpack.c.l.b16 %v3793
    %v4099 = vunpack.c.h.b16 %v3793
    %v4100 = vunpack.c.l.b16 %v3794
    %v4101 = vunpack.c.h.b16 %v3794
    %v4102 = vunpack.c.l.b16 %v3795
    %v4103 = vunpack.c.h.b16 %v3795
    %v4104 = vunpack.c.l.b16 %v3796
    %v4105 = vunpack.c.h.b16 %v3796
    %v4106 = vunpack.c.l.b16 %v3797
    %v4107 = vunpack.c.h.b16 %v3797
    %v4108 = vunpack.c.l.b16 %v3798
    %v4109 = vunpack.c.h.b16 %v3798
    %v4110 = vunpack.c.l.b16 %v3799
    %v4111 = vunpack.c.h.b16 %v3799
    %v4112 = vunpack.c.l.b16 %v3800
    %v4113 = vunpack.c.h.b16 %v3800
    %v4114 = vunpack.c.l.b16 %v3801
    %v4115 = vunpack.c.h.b16 %v3801
    %v4116 = vunpack.c.l.b16 %v3802
    %v4117 = vunpack.c.h.b16 %v3802
    %v4118 = vunpack.c.l.b16 %v3803
    %v4119 = vunpack.c.h.b16 %v3803
    %v4120 = vunpack.c.l.b16 %v3804
    %v4121 = vunpack.c.h.b16 %v3804
    %v4122 = vunpack.c.l.b16 %v3805
    %v4123 = vunpack.c.h.b16 %v3805
    %v4124 = vunpack.c.l.b16 %v3806
    %v4125 = vunpack.c.h.b16 %v3806
    %v4126 = vunpack.c.l.b16 %v3807
    %v4127 = vunpack.c.h.b16 %v3807
    %v4128 = vunpack.c.l.b16 %v3808
    %v4129 = vunpack.c.h.b16 %v3808
    %v4130 = vunpack.c.l.b16 %v3809
    %v4131 = vunpack.c.h.b16 %v3809
    %v4132 = vunpack.c.l.b16 %v3810
    %v4133 = vunpack.c.h.b16 %v3810
    %v4134 = vunpack.c.l.b16 %v3811
    %v4135 = vunpack.c.h.b16 %v3811
    %v4136 = vunpack.c.l.b16 %v3812
    %v4137 = vunpack.c.h.b16 %v3812
    %v4138 = vunpack.c.l.b16 %v3813
    %v4139 = vunpack.c.h.b16 %v3813
    %v4140 = vunpack.c.l.b16 %v3814
    %v4141 = vunpack.c.h.b16 %v3814
    %v4142 = vunpack.c.l.b16 %v3815
    %v4143 = vunpack.c.h.b16 %v3815
    %v4144 = vunpack.c.l.b16 %v3816
    %v4145 = vunpack.c.h.b16 %v3816
    %v4146 = vunpack.c.l.b16 %v3817
    %v4147 = vunpack.c.h.b16 %v3817
    %v4148 = vunpack.c.l.b16 %v3818
    %v4149 = vunpack.c.h.b16 %v3818
    %v4150 = vunpack.c.l.b16 %v3819
    %v4151 = vunpack.c.h.b16 %v3819
    %v4152 = vunpack.c.l.b16 %v3820
    %v4153 = vunpack.c.h.b16 %v3820
    %v4154 = vunpack.c.l.b16 %v3821
    %v4155 = vunpack.c.h.b16 %v3821
    %v4156 = vunpack.c.l.b16 %v3822
    %v4157 = vunpack.c.h.b16 %v3822
    %v4158 = vunpack.c.l.b16 %v3823
    %v4159 = vunpack.c.h.b16 %v3823
    %v4160 = vunpack.c.l.b16 %v3824
    %v4161 = vunpack.c.h.b16 %v3824
    %v4162 = vunpack.c.l.b16 %v3825
    %v4163 = vunpack.c.h.b16 %v3825
    %v4164 = vunpack.c.l.b16 %v3826
    %v4165 = vunpack.c.h.b16 %v3826
    %v4166 = vunpack.c.l.b16 %v3827
    %v4167 = vunpack.c.h.b16 %v3827
    %v4168 = vunpack.c.l.b16 %v3828
    %v4169 = vunpack.c.h.b16 %v3828
    %v4170 = vunpack.c.l.b16 %v3829
    %v4171 = vunpack.c.h.b16 %v3829
    %v4172 = vunpack.c.l.b16 %v3830
    %v4173 = vunpack.c.h.b16 %v3830
    %v4174 = vunpack.c.l.b16 %v3831
    %v4175 = vunpack.c.h.b16 %v3831
    %v4176 = vunpack.c.l.b16 %v3832
    %v4177 = vunpack.c.h.b16 %v3832
    %v4178 = vunpack.c.l.b16 %v3833
    %v4179 = vunpack.c.h.b16 %v3833
    %v4180 = vunpack.c.l.b16 %v3834
    %v4181 = vunpack.c.h.b16 %v3834
    %v4182 = vunpack.c.l.b16 %v3835
    %v4183 = vunpack.c.h.b16 %v3835
    %v4184 = vunpack.c.l.b16 %v3836
    %v4185 = vunpack.c.h.b16 %v3836
    %v4186 = vunpack.c.l.b16 %v3837
    %v4187 = vunpack.c.h.b16 %v3837
    %v4188 = vunpack.c.l.b16 %v3838
    %v4189 = vunpack.c.h.b16 %v3838
    %v4190 = vunpack.c.l.b16 %v3839
    %v4191 = vunpack.c.h.b16 %v3839
    %v4192 = vunpack.c.l.b16 %v3840
    %v4193 = vunpack.c.h.b16 %v3840
    %v4194 = vunpack.c.l.b16 %v3841
    %v4195 = vunpack.c.h.b16 %v3841
    %v4196 = vunpack.c.l.b16 %v3842
    %v4197 = vunpack.c.h.b16 %v3842
    %v4198 = vunpack.c.l.b16 %v3843
    %v4199 = vunpack.c.h.b16 %v3843
    %v4200 = vunpack.c.l.b16 %v3844
    %v4201 = vunpack.c.h.b16 %v3844
    %v4202 = vunpack.c.l.b16 %v3845
    %v4203 = vunpack.c.h.b16 %v3845
    %v4204 = vunpack.c.l.b16 %v3846
    %v4205 = vunpack.c.h.b16 %v3846
    %v4206 = vunpack.c.l.b16 %v3847
    %v4207 = vunpack.c.h.b16 %v3847
    %v4208 = vunpack.c.l.b16 %v3848
    %v4209 = vunpack.c.h.b16 %v3848
    %v4210 = vunpack.c.l.b16 %v3849
    %v4211 = vunpack.c.h.b16 %v3849
    %v4212 = vunpack.c.l.b16 %v3850
    %v4213 = vunpack.c.h.b16 %v3850
    %v4214 = vunpack.c.l.b16 %v3851
    %v4215 = vunpack.c.h.b16 %v3851
    %v4216 = vunpack.c.l.b16 %v3852
    %v4217 = vunpack.c.h.b16 %v3852
    %v4218 = vunpack.c.l.b16 %v3853
    %v4219 = vunpack.c.h.b16 %v3853
    %v4220 = vunpack.c.l.b16 %v3854
    %v4221 = vunpack.c.h.b16 %v3854
    %v4222 = vunpack.c.l.b16 %v3855
    %v4223 = vunpack.c.h.b16 %v3855
    %v4224 = vunpack.c.l.b16 %v3856
    %v4225 = vunpack.c.h.b16 %v3856
    %v4226 = vunpack.c.l.b16 %v3857
    %v4227 = vunpack.c.h.b16 %v3857
    %v4228 = vunpack.c.l.b16 %v3858
    %v4229 = vunpack.c.h.b16 %v3858
    %v4230 = vunpack.c.l.b16 %v3859
    %v4231 = vunpack.c.h.b16 %v3859
    %v4232 = vunpack.c.l.b16 %v3860
    %v4233 = vunpack.c.h.b16 %v3860
    %v4234 = vunpack.c.l.b16 %v3861
    %v4235 = vunpack.c.h.b16 %v3861
    %v4236 = vunpack.c.l.b16 %v3862
    %v4237 = vunpack.c.h.b16 %v3862
    %v4238 = vunpack.c.l.b16 %v3863
    %v4239 = vunpack.c.h.b16 %v3863
    %v4240 = vunpack.c.l.b16 %v3864
    %v4241 = vunpack.c.h.b16 %v3864
    %v4242 = vunpack.c.l.b16 %v3865
    %v4243 = vunpack.c.h.b16 %v3865
    %v4244 = vunpack.c.l.b16 %v3866
    %v4245 = vunpack.c.h.b16 %v3866
    %v4246 = vunpack.c.l.b16 %v3867
    %v4247 = vunpack.c.h.b16 %v3867
    %v4248 = vunpack.c.l.b16 %v3868
    %v4249 = vunpack.c.h.b16 %v3868
    %v4250 = vunpack.c.l.b16 %v3869
    %v4251 = vunpack.c.h.b16 %v3869
    %v4252 = vunpack.c.l.b16 %v3870
    %v4253 = vunpack.c.h.b16 %v3870
    %v4254 = vunpack.c.l.b16 %v3871
    %v4255 = vunpack.c.h.b16 %v3871
    %v4256 = vunpack.c.l.b16 %v3872
    %v4257 = vunpack.c.h.b16 %v3872
    %v4258 = vunpack.c.l.b16 %v3873
    %v4259 = vunpack.c.h.b16 %v3873
    %v4260 = vunpack.c.l.b16 %v3874
    %v4261 = vunpack.c.h.b16 %v3874
    %v4262 = vunpack.c.l.b16 %v3875
    %v4263 = vunpack.c.h.b16 %v3875
    %v4264 = vunpack.c.l.b16 %v3876
    %v4265 = vunpack.c.h.b16 %v3876
    %v4266 = vunpack.c.l.b16 %v3877
    %v4267 = vunpack.c.h.b16 %v3877
    %v4268 = vunpack.c.l.b16 %v3878
    %v4269 = vunpack.c.h.b16 %v3878
    %v4270 = vunpack.c.l.b16 %v3879
    %v4271 = vunpack.c.h.b16 %v3879
    %v4272 = vunpack.c.l.b16 %v3880
    %v4273 = vunpack.c.h.b16 %v3880
    %v4274 = vunpack.c.l.b16 %v3881
    %v4275 = vunpack.c.h.b16 %v3881
    %v4276 = vunpack.c.l.b16 %v3882
    %v4277 = vunpack.c.h.b16 %v3882
    %v4278 = vunpack.c.l.b16 %v3883
    %v4279 = vunpack.c.h.b16 %v3883
    %v4280 = vunpack.c.l.b16 %v3884
    %v4281 = vunpack.c.h.b16 %v3884
    %v4282 = vunpack.c.l.b16 %v3885
    %v4283 = vunpack.c.h.b16 %v3885
    %v4284 = vunpack.c.l.b16 %v3886
    %v4285 = vunpack.c.h.b16 %v3886
    %v4286 = vpack.c.b16 %v4034, %v4030
    %v4287 = vpack.c.b16 %v4035, %v4031
    %v4288 = vpack.c.b16 %v4036, %v4032
    %v4289 = vpack.c.b16 %v4037, %v4033
    %v4290 = vpack.c.b16 %v4042, %v4038
    %v4291 = vpack.c.b16 %v4043, %v4039
    %v4292 = vpack.c.b16 %v4044, %v4040
    %v4293 = vpack.c.b16 %v4045, %v4041
    %v4294 = vpack.c.b16 %v4050, %v4046
    %v4295 = vpack.c.b16 %v4051, %v4047
    %v4296 = vpack.c.b16 %v4052, %v4048
    %v4297 = vpack.c.b16 %v4053, %v4049
    %v4298 = vpack.c.b16 %v4058, %v4054
    %v4299 = vpack.c.b16 %v4059, %v4055
    %v4300 = vpack.c.b16 %v4060, %v4056
    %v4301 = vpack.c.b16 %v4061, %v4057
    %v4302 = vpack.c.b16 %v4066, %v4062
    %v4303 = vpack.c.b16 %v4067, %v4063
    %v4304 = vpack.c.b16 %v4068, %v4064
    %v4305 = vpack.c.b16 %v4069, %v4065
    %v4306 = vpack.c.b16 %v4074, %v4070
    %v4307 = vpack.c.b16 %v4075, %v4071
    %v4308 = vpack.c.b16 %v4076, %v4072
    %v4309 = vpack.c.b16 %v4077, %v4073
    %v4310 = vpack.c.b16 %v4082, %v4078
    %v4311 = vpack.c.b16 %v4083, %v4079
    %v4312 = vpack.c.b16 %v4084, %v4080
    %v4313 = vpack.c.b16 %v4085, %v4081
    %v4314 = vpack.c.b16 %v4090, %v4086
    %v4315 = vpack.c.b16 %v4091, %v4087
    %v4316 = vpack.c.b16 %v4092, %v4088
    %v4317 = vpack.c.b16 %v4093, %v4089
    %v4318 = vpack.c.b16 %v4098, %v4094
    %v4319 = vpack.c.b16 %v4099, %v4095
    %v4320 = vpack.c.b16 %v4100, %v4096
    %v4321 = vpack.c.b16 %v4101, %v4097
    %v4322 = vpack.c.b16 %v4106, %v4102
    %v4323 = vpack.c.b16 %v4107, %v4103
    %v4324 = vpack.c.b16 %v4108, %v4104
    %v4325 = vpack.c.b16 %v4109, %v4105
    %v4326 = vpack.c.b16 %v4114, %v4110
    %v4327 = vpack.c.b16 %v4115, %v4111
    %v4328 = vpack.c.b16 %v4116, %v4112
    %v4329 = vpack.c.b16 %v4117, %v4113
    %v4330 = vpack.c.b16 %v4122, %v4118
    %v4331 = vpack.c.b16 %v4123, %v4119
    %v4332 = vpack.c.b16 %v4124, %v4120
    %v4333 = vpack.c.b16 %v4125, %v4121
    %v4334 = vpack.c.b16 %v4130, %v4126
    %v4335 = vpack.c.b16 %v4131, %v4127
    %v4336 = vpack.c.b16 %v4132, %v4128
    %v4337 = vpack.c.b16 %v4133, %v4129
    %v4338 = vpack.c.b16 %v4138, %v4134
    %v4339 = vpack.c.b16 %v4139, %v4135
    %v4340 = vpack.c.b16 %v4140, %v4136
    %v4341 = vpack.c.b16 %v4141, %v4137
    %v4342 = vpack.c.b16 %v4146, %v4142
    %v4343 = vpack.c.b16 %v4147, %v4143
    %v4344 = vpack.c.b16 %v4148, %v4144
    %v4345 = vpack.c.b16 %v4149, %v4145
    %v4346 = vpack.c.b16 %v4154, %v4150
    %v4347 = vpack.c.b16 %v4155, %v4151
    %v4348 = vpack.c.b16 %v4156, %v4152
    %v4349 = vpack.c.b16 %v4157, %v4153
    %v4350 = vpack.c.b16 %v4162, %v4158
    %v4351 = vpack.c.b16 %v4163, %v4159
    %v4352 = vpack.c.b16 %v4164, %v4160
    %v4353 = vpack.c.b16 %v4165, %v4161
    %v4354 = vpack.c.b16 %v4170, %v4166
    %v4355 = vpack.c.b16 %v4171, %v4167
    %v4356 = vpack.c.b16 %v4172, %v4168
    %v4357 = vpack.c.b16 %v4173, %v4169
    %v4358 = vpack.c.b16 %v4178, %v4174
    %v4359 = vpack.c.b16 %v4179, %v4175
    %v4360 = vpack.c.b16 %v4180, %v4176
    %v4361 = vpack.c.b16 %v4181, %v4177
    %v4362 = vpack.c.b16 %v4186, %v4182
    %v4363 = vpack.c.b16 %v4187, %v4183
    %v4364 = vpack.c.b16 %v4188, %v4184
    %v4365 = vpack.c.b16 %v4189, %v4185
    %v4366 = vpack.c.b16 %v4194, %v4190
    %v4367 = vpack.c.b16 %v4195, %v4191
    %v4368 = vpack.c.b16 %v4196, %v4192
    %v4369 = vpack.c.b16 %v4197, %v4193
    %v4370 = vpack.c.b16 %v4202, %v4198
    %v4371 = vpack.c.b16 %v4203, %v4199
    %v4372 = vpack.c.b16 %v4204, %v4200
    %v4373 = vpack.c.b16 %v4205, %v4201
    %v4374 = vpack.c.b16 %v4210, %v4206
    %v4375 = vpack.c.b16 %v4211, %v4207
    %v4376 = vpack.c.b16 %v4212, %v4208
    %v4377 = vpack.c.b16 %v4213, %v4209
    %v4378 = vpack.c.b16 %v4218, %v4214
    %v4379 = vpack.c.b16 %v4219, %v4215
    %v4380 = vpack.c.b16 %v4220, %v4216
    %v4381 = vpack.c.b16 %v4221, %v4217
    %v4382 = vpack.c.b16 %v4226, %v4222
    %v4383 = vpack.c.b16 %v4227, %v4223
    %v4384 = vpack.c.b16 %v4228, %v4224
    %v4385 = vpack.c.b16 %v4229, %v4225
    %v4386 = vpack.c.b16 %v4234, %v4230
    %v4387 = vpack.c.b16 %v4235, %v4231
    %v4388 = vpack.c.b16 %v4236, %v4232
    %v4389 = vpack.c.b16 %v4237, %v4233
    %v4390 = vpack.c.b16 %v4242, %v4238
    %v4391 = vpack.c.b16 %v4243, %v4239
    %v4392 = vpack.c.b16 %v4244, %v4240
    %v4393 = vpack.c.b16 %v4245, %v4241
    %v4394 = vpack.c.b16 %v4250, %v4246
    %v4395 = vpack.c.b16 %v4251, %v4247
    %v4396 = vpack.c.b16 %v4252, %v4248
    %v4397 = vpack.c.b16 %v4253, %v4249
    %v4398 = vpack.c.b16 %v4258, %v4254
    %v4399 = vpack.c.b16 %v4259, %v4255
    %v4400 = vpack.c.b16 %v4260, %v4256
    %v4401 = vpack.c.b16 %v4261, %v4257
    %v4402 = vpack.c.b16 %v4266, %v4262
    %v4403 = vpack.c.b16 %v4267, %v4263
    %v4404 = vpack.c.b16 %v4268, %v4264
    %v4405 = vpack.c.b16 %v4269, %v4265
    %v4406 = vpack.c.b16 %v4274, %v4270
    %v4407 = vpack.c.b16 %v4275, %v4271
    %v4408 = vpack.c.b16 %v4276, %v4272
    %v4409 = vpack.c.b16 %v4277, %v4273
    %v4410 = vpack.c.b16 %v4282, %v4278
    %v4411 = vpack.c.b16 %v4283, %v4279
    %v4412 = vpack.c.b16 %v4284, %v4280
    %v4413 = vpack.c.b16 %v4285, %v4281
    %4542 = vmatpush.bf16.msra.mxu0 %v4314
    %4543 = vmatpush.bf16.msra.mxu0 %v4310
    %4544 = vmatpush.bf16.msra.mxu0 %v4306
    %4545 = vmatpush.bf16.msra.mxu0 %v4302
    %4546 = vmatpush.bf16.msra.mxu0 %v4298
    %4547 = vmatpush.bf16.msra.mxu0 %v4294
    %4548 = vmatpush.bf16.msra.mxu0 %v4290
    %4549 = vmatpush.bf16.msra.mxu0 %v4286
    %4550 = vmatmul.bf16.gmra.mxu0 %v3887
    %v4551 = vpop.f32.mrf.mxu0
    %v4552 = vadd.f32 %v3894, %v4551
    %v4553 = vpop.f32.mrf.mxu0
    %v4554 = vadd.f32 %v3894, %v4553
    %4555 = vdwg.mxu0
    %4556 = vmatpush.bf16.msra.mxu0 %v4346
    %4557 = vmatpush.bf16.msra.mxu0 %v4342
    %4558 = vmatpush.bf16.msra.mxu0 %v4338
    %4559 = vmatpush.bf16.msra.mxu0 %v4334
    %4560 = vmatpush.bf16.msra.mxu0 %v4330
    %4561 = vmatpush.bf16.msra.mxu0 %v4326
    %4562 = vmatpush.bf16.msra.mxu0 %v4322
    %4563 = vmatpush.bf16.msra.mxu0 %v4318
    %4564 = vmatmul.bf16.gmra.mxu0 %v3888
    %v4565 = vpop.f32.mrf.mxu0
    %v4566 = vadd.f32 %v4552, %v4565
    %v4567 = vpop.f32.mrf.mxu0
    %v4568 = vadd.f32 %v4554, %v4567
    %4569 = vdwg.mxu0
    %4570 = vmatpush.bf16.msra.mxu0 %v4378
    %4571 = vmatpush.bf16.msra.mxu0 %v4374
    %4572 = vmatpush.bf16.msra.mxu0 %v4370
    %4573 = vmatpush.bf16.msra.mxu0 %v4366
    %4574 = vmatpush.bf16.msra.mxu0 %v4362
    %4575 = vmatpush.bf16.msra.mxu0 %v4358
    %4576 = vmatpush.bf16.msra.mxu0 %v4354
    %4577 = vmatpush.bf16.msra.mxu0 %v4350
    %4578 = vmatmul.bf16.gmra.mxu0 %v3889
    %v4579 = vpop.f32.mrf.mxu0
    %v4580 = vadd.f32 %v4566, %v4579
    %v4581 = vpop.f32.mrf.mxu0
    %v4582 = vadd.f32 %v4568, %v4581
    %4583 = vdwg.mxu0
    %4584 = vmatpush.bf16.msra.mxu0 %v4410
    %4585 = vmatpush.bf16.msra.mxu0 %v4406
    %4586 = vmatpush.bf16.msra.mxu0 %v4402
    %4587 = vmatpush.bf16.msra.mxu0 %v4398
    %4588 = vmatpush.bf16.msra.mxu0 %v4394
    %4589 = vmatpush.bf16.msra.mxu0 %v4390
    %4590 = vmatpush.bf16.msra.mxu0 %v4386
    %4591 = vmatpush.bf16.msra.mxu0 %v4382
    %4592 = vmatmul.bf16.gmra.mxu0 %v3890
    %v4593 = vpop.f32.mrf.mxu0
    %v4594 = vadd.f32 %v4580, %v4593
    %v4595 = vpop.f32.mrf.mxu0
    %v4596 = vadd.f32 %v4582, %v4595
    %4597 = vdwg.mxu0
    %4598 = vmatpush.bf16.msra.mxu0 %v4315
    %4599 = vmatpush.bf16.msra.mxu0 %v4311
    %4600 = vmatpush.bf16.msra.mxu0 %v4307
    %4601 = vmatpush.bf16.msra.mxu0 %v4303
    %4602 = vmatpush.bf16.msra.mxu0 %v4299
    %4603 = vmatpush.bf16.msra.mxu0 %v4295
    %4604 = vmatpush.bf16.msra.mxu0 %v4291
    %4605 = vmatpush.bf16.msra.mxu0 %v4287
    %4606 = vmatmul.bf16.gmra.mxu0 %v3887
    %v4607 = vpop.f32.mrf.mxu0
    %v4608 = vadd.f32 %v3895, %v4607
    %v4609 = vpop.f32.mrf.mxu0
    %v4610 = vadd.f32 %v3895, %v4609
    %4611 = vdwg.mxu0
    %4612 = vmatpush.bf16.msra.mxu0 %v4347
    %4613 = vmatpush.bf16.msra.mxu0 %v4343
    %4614 = vmatpush.bf16.msra.mxu0 %v4339
    %4615 = vmatpush.bf16.msra.mxu0 %v4335
    %4616 = vmatpush.bf16.msra.mxu0 %v4331
    %4617 = vmatpush.bf16.msra.mxu0 %v4327
    %4618 = vmatpush.bf16.msra.mxu0 %v4323
    %4619 = vmatpush.bf16.msra.mxu0 %v4319
    %4620 = vmatmul.bf16.gmra.mxu0 %v3888
    %v4621 = vpop.f32.mrf.mxu0
    %v4622 = vadd.f32 %v4608, %v4621
    %v4623 = vpop.f32.mrf.mxu0
    %v4624 = vadd.f32 %v4610, %v4623
    %4625 = vdwg.mxu0
    %4626 = vmatpush.bf16.msra.mxu0 %v4379
    %4627 = vmatpush.bf16.msra.mxu0 %v4375
    %4628 = vmatpush.bf16.msra.mxu0 %v4371
    %4629 = vmatpush.bf16.msra.mxu0 %v4367
    %4630 = vmatpush.bf16.msra.mxu0 %v4363
    %4631 = vmatpush.bf16.msra.mxu0 %v4359
    %4632 = vmatpush.bf16.msra.mxu0 %v4355
    %4633 = vmatpush.bf16.msra.mxu0 %v4351
    %4634 = vmatmul.bf16.gmra.mxu0 %v3889
    %v4635 = vpop.f32.mrf.mxu0
    %v4636 = vadd.f32 %v4622, %v4635
    %v4637 = vpop.f32.mrf.mxu0
    %v4638 = vadd.f32 %v4624, %v4637
    %4639 = vdwg.mxu0
    %4640 = vmatpush.bf16.msra.mxu0 %v4411
    %4641 = vmatpush.bf16.msra.mxu0 %v4407
    %4642 = vmatpush.bf16.msra.mxu0 %v4403
    %4643 = vmatpush.bf16.msra.mxu0 %v4399
    %4644 = vmatpush.bf16.msra.mxu0 %v4395
    %4645 = vmatpush.bf16.msra.mxu0 %v4391
    %4646 = vmatpush.bf16.msra.mxu0 %v4387
    %4647 = vmatpush.bf16.msra.mxu0 %v4383
    %4648 = vmatmul.bf16.gmra.mxu0 %v3890
    %v4649 = vpop.f32.mrf.mxu0
    %v4650 = vadd.f32 %v4636, %v4649
    %v4651 = vpop.f32.mrf.mxu0
    %v4652 = vadd.f32 %v4638, %v4651
    %4653 = vdwg.mxu0
    %4654 = vmatpush.bf16.msra.mxu0 %v4316
    %4655 = vmatpush.bf16.msra.mxu0 %v4312
    %4656 = vmatpush.bf16.msra.mxu0 %v4308
    %4657 = vmatpush.bf16.msra.mxu0 %v4304
    %4658 = vmatpush.bf16.msra.mxu0 %v4300
    %4659 = vmatpush.bf16.msra.mxu0 %v4296
    %4660 = vmatpush.bf16.msra.mxu0 %v4292
    %4661 = vmatpush.bf16.msra.mxu0 %v4288
    %4662 = vmatmul.bf16.gmra.mxu0 %v3887
    %v4663 = vpop.f32.mrf.mxu0
    %v4664 = vadd.f32 %v3896, %v4663
    %v4665 = vpop.f32.mrf.mxu0
    %v4666 = vadd.f32 %v3896, %v4665
    %4667 = vdwg.mxu0
    %4668 = vmatpush.bf16.msra.mxu0 %v4348
    %4669 = vmatpush.bf16.msra.mxu0 %v4344
    %4670 = vmatpush.bf16.msra.mxu0 %v4340
    %4671 = vmatpush.bf16.msra.mxu0 %v4336
    %4672 = vmatpush.bf16.msra.mxu0 %v4332
    %4673 = vmatpush.bf16.msra.mxu0 %v4328
    %4674 = vmatpush.bf16.msra.mxu0 %v4324
    %4675 = vmatpush.bf16.msra.mxu0 %v4320
    %4676 = vmatmul.bf16.gmra.mxu0 %v3888
    %v4677 = vpop.f32.mrf.mxu0
    %v4678 = vadd.f32 %v4664, %v4677
    %v4679 = vpop.f32.mrf.mxu0
    %v4680 = vadd.f32 %v4666, %v4679
    %4681 = vdwg.mxu0
    %4682 = vmatpush.bf16.msra.mxu0 %v4380
    %4683 = vmatpush.bf16.msra.mxu0 %v4376
    %4684 = vmatpush.bf16.msra.mxu0 %v4372
    %4685 = vmatpush.bf16.msra.mxu0 %v4368
    %4686 = vmatpush.bf16.msra.mxu0 %v4364
    %4687 = vmatpush.bf16.msra.mxu0 %v4360
    %4688 = vmatpush.bf16.msra.mxu0 %v4356
    %4689 = vmatpush.bf16.msra.mxu0 %v4352
    %4690 = vmatmul.bf16.gmra.mxu0 %v3889
    %v4691 = vpop.f32.mrf.mxu0
    %v4692 = vadd.f32 %v4678, %v4691
    %v4693 = vpop.f32.mrf.mxu0
    %v4694 = vadd.f32 %v4680, %v4693
    %4695 = vdwg.mxu0
    %4696 = vmatpush.bf16.msra.mxu0 %v4412
    %4697 = vmatpush.bf16.msra.mxu0 %v4408
    %4698 = vmatpush.bf16.msra.mxu0 %v4404
    %4699 = vmatpush.bf16.msra.mxu0 %v4400
    %4700 = vmatpush.bf16.msra.mxu0 %v4396
    %4701 = vmatpush.bf16.msra.mxu0 %v4392
    %4702 = vmatpush.bf16.msra.mxu0 %v4388
    %4703 = vmatpush.bf16.msra.mxu0 %v4384
    %4704 = vmatmul.bf16.gmra.mxu0 %v3890
    %v4705 = vpop.f32.mrf.mxu0
    %v4706 = vadd.f32 %v4692, %v4705
    %v4707 = vpop.f32.mrf.mxu0
    %v4708 = vadd.f32 %v4694, %v4707
    %4709 = vdwg.mxu0
    %4710 = vmatpush.bf16.msra.mxu0 %v4317
    %4711 = vmatpush.bf16.msra.mxu0 %v4313
    %4712 = vmatpush.bf16.msra.mxu0 %v4309
    %4713 = vmatpush.bf16.msra.mxu0 %v4305
    %4714 = vmatpush.bf16.msra.mxu0 %v4301
    %4715 = vmatpush.bf16.msra.mxu0 %v4297
    %4716 = vmatpush.bf16.msra.mxu0 %v4293
    %4717 = vmatpush.bf16.msra.mxu0 %v4289
    %4718 = vmatmul.bf16.gmra.mxu0 %v3887
    %v4719 = vpop.f32.mrf.mxu0
    %v4720 = vadd.f32 %v3897, %v4719
    %v4721 = vpop.f32.mrf.mxu0
    %v4722 = vadd.f32 %v3897, %v4721
    %4723 = vdwg.mxu0
    %4724 = vmatpush.bf16.msra.mxu0 %v4349
    %4725 = vmatpush.bf16.msra.mxu0 %v4345
    %4726 = vmatpush.bf16.msra.mxu0 %v4341
    %4727 = vmatpush.bf16.msra.mxu0 %v4337
    %4728 = vmatpush.bf16.msra.mxu0 %v4333
    %4729 = vmatpush.bf16.msra.mxu0 %v4329
    %4730 = vmatpush.bf16.msra.mxu0 %v4325
    %4731 = vmatpush.bf16.msra.mxu0 %v4321
    %4732 = vmatmul.bf16.gmra.mxu0 %v3888
    %v4733 = vpop.f32.mrf.mxu0
    %v4734 = vadd.f32 %v4720, %v4733
    %v4735 = vpop.f32.mrf.mxu0
    %v4736 = vadd.f32 %v4722, %v4735
    %4737 = vdwg.mxu0
    %4738 = vmatpush.bf16.msra.mxu0 %v4381
    %4739 = vmatpush.bf16.msra.mxu0 %v4377
    %4740 = vmatpush.bf16.msra.mxu0 %v4373
    %4741 = vmatpush.bf16.msra.mxu0 %v4369
    %4742 = vmatpush.bf16.msra.mxu0 %v4365
    %4743 = vmatpush.bf16.msra.mxu0 %v4361
    %4744 = vmatpush.bf16.msra.mxu0 %v4357
    %4745 = vmatpush.bf16.msra.mxu0 %v4353
    %4746 = vmatmul.bf16.gmra.mxu0 %v3889
    %v4747 = vpop.f32.mrf.mxu0
    %v4748 = vadd.f32 %v4734, %v4747
    %v4749 = vpop.f32.mrf.mxu0
    %v4750 = vadd.f32 %v4736, %v4749
    %4751 = vdwg.mxu0
    %4752 = vmatpush.bf16.msra.mxu0 %v4413
    %4753 = vmatpush.bf16.msra.mxu0 %v4409
    %4754 = vmatpush.bf16.msra.mxu0 %v4405
    %4755 = vmatpush.bf16.msra.mxu0 %v4401
    %4756 = vmatpush.bf16.msra.mxu0 %v4397
    %4757 = vmatpush.bf16.msra.mxu0 %v4393
    %4758 = vmatpush.bf16.msra.mxu0 %v4389
    %4759 = vmatpush.bf16.msra.mxu0 %v4385
    %4760 = vmatmul.bf16.gmra.mxu0 %v3890
    %v4761 = vpop.f32.mrf.mxu0
    %v4762 = vadd.f32 %v4748, %v4761
    %v4763 = vpop.f32.mrf.mxu0
    %v4764 = vadd.f32 %v4750, %v4763
    %4765 = vdwg.mxu0
    %v4766 = vmax.f32 %v4594, 0.0
    %v4767 = vmax.f32 %v4650, 0.0
    %v4768 = vmax.f32 %v4706, 0.0
    %v4769 = vmax.f32 %v4762, 0.0
    %v4770 = vmax.f32 %v4596, 0.0
    %v4771 = vmax.f32 %v4652, 0.0
    %v4772 = vmax.f32 %v4708, 0.0
    %v4773 = vmax.f32 %v4764, 0.0
    %v4774 = vld [vmem:[#allocation2 + $0x700] sm:$0xff]
    %v4775 = vld [vmem:[#allocation2 + $0x708] sm:$0xff]
    %v4776 = vld [vmem:[#allocation2 + $0x710] sm:$0xff]
    %v4777 = vld [vmem:[#allocation2 + $0x718] sm:$0xff]
    %v4778 = vld [vmem:[#allocation2 + $0x720] sm:$0xff]
    %v4779 = vld [vmem:[#allocation2 + $0x728] sm:$0xff]
    %v4780 = vld [vmem:[#allocation2 + $0x730] sm:$0xff]
    %v4781 = vld [vmem:[#allocation2 + $0x738] sm:$0xff]
    %v4782 = vld [vmem:[#allocation2 + $0x740] sm:$0xff]
    %v4783 = vld [vmem:[#allocation2 + $0x748] sm:$0xff]
    %v4784 = vld [vmem:[#allocation2 + $0x750] sm:$0xff]
    %v4785 = vld [vmem:[#allocation2 + $0x758] sm:$0xff]
    %v4786 = vld [vmem:[#allocation2 + $0x760] sm:$0xff]
    %v4787 = vld [vmem:[#allocation2 + $0x768] sm:$0xff]
    %v4788 = vld [vmem:[#allocation2 + $0x770] sm:$0xff]
    %v4789 = vld [vmem:[#allocation2 + $0x778] sm:$0xff]
    %v4790 = vld [vmem:[#allocation2 + $0x780] sm:$0xff]
    %v4791 = vld [vmem:[#allocation2 + $0x788] sm:$0xff]
    %v4792 = vld [vmem:[#allocation2 + $0x790] sm:$0xff]
    %v4793 = vld [vmem:[#allocation2 + $0x798] sm:$0xff]
    %v4794 = vld [vmem:[#allocation2 + $0x7a0] sm:$0xff]
    %v4795 = vld [vmem:[#allocation2 + $0x7a8] sm:$0xff]
    %v4796 = vld [vmem:[#allocation2 + $0x7b0] sm:$0xff]
    %v4797 = vld [vmem:[#allocation2 + $0x7b8] sm:$0xff]
    %v4798 = vld [vmem:[#allocation2 + $0x7c0] sm:$0xff]
    %v4799 = vld [vmem:[#allocation2 + $0x7c8] sm:$0xff]
    %v4800 = vld [vmem:[#allocation2 + $0x7d0] sm:$0xff]
    %v4801 = vld [vmem:[#allocation2 + $0x7d8] sm:$0xff]
    %v4802 = vld [vmem:[#allocation2 + $0x7e0] sm:$0xff]
    %v4803 = vld [vmem:[#allocation2 + $0x7e8] sm:$0xff]
    %v4804 = vld [vmem:[#allocation2 + $0x7f0] sm:$0xff]
    %v4805 = vld [vmem:[#allocation2 + $0x7f8] sm:$0xff]
    %v4806 = vld [vmem:[#allocation2 + $0x800] sm:$0xff]
    %v4807 = vld [vmem:[#allocation2 + $0x808] sm:$0xff]
    %v4808 = vld [vmem:[#allocation2 + $0x810] sm:$0xff]
    %v4809 = vld [vmem:[#allocation2 + $0x818] sm:$0xff]
    %v4810 = vld [vmem:[#allocation2 + $0x820] sm:$0xff]
    %v4811 = vld [vmem:[#allocation2 + $0x828] sm:$0xff]
    %v4812 = vld [vmem:[#allocation2 + $0x830] sm:$0xff]
    %v4813 = vld [vmem:[#allocation2 + $0x838] sm:$0xff]
    %v4814 = vld [vmem:[#allocation2 + $0x840] sm:$0xff]
    %v4815 = vld [vmem:[#allocation2 + $0x848] sm:$0xff]
    %v4816 = vld [vmem:[#allocation2 + $0x850] sm:$0xff]
    %v4817 = vld [vmem:[#allocation2 + $0x858] sm:$0xff]
    %v4818 = vld [vmem:[#allocation2 + $0x860] sm:$0xff]
    %v4819 = vld [vmem:[#allocation2 + $0x868] sm:$0xff]
    %v4820 = vld [vmem:[#allocation2 + $0x870] sm:$0xff]
    %v4821 = vld [vmem:[#allocation2 + $0x878] sm:$0xff]
    %v4822 = vld [vmem:[#allocation2 + $0x880] sm:$0xff]
    %v4823 = vld [vmem:[#allocation2 + $0x888] sm:$0xff]
    %v4824 = vld [vmem:[#allocation2 + $0x890] sm:$0xff]
    %v4825 = vld [vmem:[#allocation2 + $0x898] sm:$0xff]
    %v4826 = vld [vmem:[#allocation2 + $0x8a0] sm:$0xff]
    %v4827 = vld [vmem:[#allocation2 + $0x8a8] sm:$0xff]
    %v4828 = vld [vmem:[#allocation2 + $0x8b0] sm:$0xff]
    %v4829 = vld [vmem:[#allocation2 + $0x8b8] sm:$0xff]
    %v4830 = vld [vmem:[#allocation2 + $0x8c0] sm:$0xff]
    %v4831 = vld [vmem:[#allocation2 + $0x8c8] sm:$0xff]
    %v4832 = vld [vmem:[#allocation2 + $0x8d0] sm:$0xff]
    %v4833 = vld [vmem:[#allocation2 + $0x8d8] sm:$0xff]
    %v4834 = vld [vmem:[#allocation2 + $0x8e0] sm:$0xff]
    %v4835 = vld [vmem:[#allocation2 + $0x8e8] sm:$0xff]
    %v4836 = vld [vmem:[#allocation2 + $0x8f0] sm:$0xff]
    %v4837 = vld [vmem:[#allocation2 + $0x8f8] sm:$0xff]
    %v4838 = vld [vmem:[#allocation2 + $0x900] sm:$0xff]
    %v4839 = vld [vmem:[#allocation2 + $0x908] sm:$0xff]
    %v4840 = vld [vmem:[#allocation2 + $0x910] sm:$0xff]
    %v4841 = vld [vmem:[#allocation2 + $0x918] sm:$0xff]
    %v4842 = vld [vmem:[#allocation2 + $0x920] sm:$0xff]
    %v4843 = vld [vmem:[#allocation2 + $0x928] sm:$0xff]
    %v4844 = vld [vmem:[#allocation2 + $0x930] sm:$0xff]
    %v4845 = vld [vmem:[#allocation2 + $0x938] sm:$0xff]
    %v4846 = vld [vmem:[#allocation2 + $0x940] sm:$0xff]
    %v4847 = vld [vmem:[#allocation2 + $0x948] sm:$0xff]
    %v4848 = vld [vmem:[#allocation2 + $0x950] sm:$0xff]
    %v4849 = vld [vmem:[#allocation2 + $0x958] sm:$0xff]
    %v4850 = vld [vmem:[#allocation2 + $0x960] sm:$0xff]
    %v4851 = vld [vmem:[#allocation2 + $0x968] sm:$0xff]
    %v4852 = vld [vmem:[#allocation2 + $0x970] sm:$0xff]
    %v4853 = vld [vmem:[#allocation2 + $0x978] sm:$0xff]
    %v4854 = vld [vmem:[#allocation2 + $0x980] sm:$0xff]
    %v4855 = vld [vmem:[#allocation2 + $0x988] sm:$0xff]
    %v4856 = vld [vmem:[#allocation2 + $0x990] sm:$0xff]
    %v4857 = vld [vmem:[#allocation2 + $0x998] sm:$0xff]
    %v4858 = vld [vmem:[#allocation2 + $0x9a0] sm:$0xff]
    %v4859 = vld [vmem:[#allocation2 + $0x9a8] sm:$0xff]
    %v4860 = vld [vmem:[#allocation2 + $0x9b0] sm:$0xff]
    %v4861 = vld [vmem:[#allocation2 + $0x9b8] sm:$0xff]
    %v4862 = vld [vmem:[#allocation2 + $0x9c0] sm:$0xff]
    %v4863 = vld [vmem:[#allocation2 + $0x9c8] sm:$0xff]
    %v4864 = vld [vmem:[#allocation2 + $0x9d0] sm:$0xff]
    %v4865 = vld [vmem:[#allocation2 + $0x9d8] sm:$0xff]
    %v4866 = vld [vmem:[#allocation2 + $0x9e0] sm:$0xff]
    %v4867 = vld [vmem:[#allocation2 + $0x9e8] sm:$0xff]
    %v4868 = vld [vmem:[#allocation2 + $0x9f0] sm:$0xff]
    %v4869 = vld [vmem:[#allocation2 + $0x9f8] sm:$0xff]
    %v4870 = vld [vmem:[#allocation2 + $0xa00] sm:$0xff]
    %v4871 = vld [vmem:[#allocation2 + $0xa08] sm:$0xff]
    %v4872 = vld [vmem:[#allocation2 + $0xa10] sm:$0xff]
    %v4873 = vld [vmem:[#allocation2 + $0xa18] sm:$0xff]
    %v4874 = vld [vmem:[#allocation2 + $0xa20] sm:$0xff]
    %v4875 = vld [vmem:[#allocation2 + $0xa28] sm:$0xff]
    %v4876 = vld [vmem:[#allocation2 + $0xa30] sm:$0xff]
    %v4877 = vld [vmem:[#allocation2 + $0xa38] sm:$0xff]
    %v4878 = vld [vmem:[#allocation2 + $0xa40] sm:$0xff]
    %v4879 = vld [vmem:[#allocation2 + $0xa48] sm:$0xff]
    %v4880 = vld [vmem:[#allocation2 + $0xa50] sm:$0xff]
    %v4881 = vld [vmem:[#allocation2 + $0xa58] sm:$0xff]
    %v4882 = vld [vmem:[#allocation2 + $0xa60] sm:$0xff]
    %v4883 = vld [vmem:[#allocation2 + $0xa68] sm:$0xff]
    %v4884 = vld [vmem:[#allocation2 + $0xa70] sm:$0xff]
    %v4885 = vld [vmem:[#allocation2 + $0xa78] sm:$0xff]
    %v4886 = vld [vmem:[#allocation2 + $0xa80] sm:$0xff]
    %v4887 = vld [vmem:[#allocation2 + $0xa88] sm:$0xff]
    %v4888 = vld [vmem:[#allocation2 + $0xa90] sm:$0xff]
    %v4889 = vld [vmem:[#allocation2 + $0xa98] sm:$0xff]
    %v4890 = vld [vmem:[#allocation2 + $0xaa0] sm:$0xff]
    %v4891 = vld [vmem:[#allocation2 + $0xaa8] sm:$0xff]
    %v4892 = vld [vmem:[#allocation2 + $0xab0] sm:$0xff]
    %v4893 = vld [vmem:[#allocation2 + $0xab8] sm:$0xff]
    %v4894 = vld [vmem:[#allocation2 + $0xac0] sm:$0xff]
    %v4895 = vld [vmem:[#allocation2 + $0xac8] sm:$0xff]
    %v4896 = vld [vmem:[#allocation2 + $0xad0] sm:$0xff]
    %v4897 = vld [vmem:[#allocation2 + $0xad8] sm:$0xff]
    %v4898 = vld [vmem:[#allocation2 + $0xae0] sm:$0xff]
    %v4899 = vld [vmem:[#allocation2 + $0xae8] sm:$0xff]
    %v4900 = vld [vmem:[#allocation2 + $0xaf0] sm:$0xff]
    %v4901 = vld [vmem:[#allocation2 + $0xaf8] sm:$0xff]
    %v4902 = vpack.c.bf16 %v4770, %v4766
    %v4903 = vpack.c.bf16 %v4771, %v4767
    %v4904 = vpack.c.bf16 %v4772, %v4768
    %v4905 = vpack.c.bf16 %v4773, %v4769
    %s4906 = scalar_lea.vmem [#allocation12], 101
    %v4907 = vld [vmem:[%s4906] ss:$8 sm:$0xf]
    %v4909 = vperm.slane %v4907, 0
    %v4910 = vperm.slane %v4907, 1
    %v4911 = vperm.slane %v4907, 2
    %v4912 = vperm.slane %v4907, 3
    %v5045 = vunpack.c.l.b16 %v4774
    %v5046 = vunpack.c.h.b16 %v4774
    %v5047 = vunpack.c.l.b16 %v4775
    %v5048 = vunpack.c.h.b16 %v4775
    %v5049 = vunpack.c.l.b16 %v4776
    %v5050 = vunpack.c.h.b16 %v4776
    %v5051 = vunpack.c.l.b16 %v4777
    %v5052 = vunpack.c.h.b16 %v4777
    %v5053 = vunpack.c.l.b16 %v4778
    %v5054 = vunpack.c.h.b16 %v4778
    %v5055 = vunpack.c.l.b16 %v4779
    %v5056 = vunpack.c.h.b16 %v4779
    %v5057 = vunpack.c.l.b16 %v4780
    %v5058 = vunpack.c.h.b16 %v4780
    %v5059 = vunpack.c.l.b16 %v4781
    %v5060 = vunpack.c.h.b16 %v4781
    %v5061 = vunpack.c.l.b16 %v4782
    %v5062 = vunpack.c.h.b16 %v4782
    %v5063 = vunpack.c.l.b16 %v4783
    %v5064 = vunpack.c.h.b16 %v4783
    %v5065 = vunpack.c.l.b16 %v4784
    %v5066 = vunpack.c.h.b16 %v4784
    %v5067 = vunpack.c.l.b16 %v4785
    %v5068 = vunpack.c.h.b16 %v4785
    %v5069 = vunpack.c.l.b16 %v4786
    %v5070 = vunpack.c.h.b16 %v4786
    %v5071 = vunpack.c.l.b16 %v4787
    %v5072 = vunpack.c.h.b16 %v4787
    %v5073 = vunpack.c.l.b16 %v4788
    %v5074 = vunpack.c.h.b16 %v4788
    %v5075 = vunpack.c.l.b16 %v4789
    %v5076 = vunpack.c.h.b16 %v4789
    %v5077 = vunpack.c.l.b16 %v4790
    %v5078 = vunpack.c.h.b16 %v4790
    %v5079 = vunpack.c.l.b16 %v4791
    %v5080 = vunpack.c.h.b16 %v4791
    %v5081 = vunpack.c.l.b16 %v4792
    %v5082 = vunpack.c.h.b16 %v4792
    %v5083 = vunpack.c.l.b16 %v4793
    %v5084 = vunpack.c.h.b16 %v4793
    %v5085 = vunpack.c.l.b16 %v4794
    %v5086 = vunpack.c.h.b16 %v4794
    %v5087 = vunpack.c.l.b16 %v4795
    %v5088 = vunpack.c.h.b16 %v4795
    %v5089 = vunpack.c.l.b16 %v4796
    %v5090 = vunpack.c.h.b16 %v4796
    %v5091 = vunpack.c.l.b16 %v4797
    %v5092 = vunpack.c.h.b16 %v4797
    %v5093 = vunpack.c.l.b16 %v4798
    %v5094 = vunpack.c.h.b16 %v4798
    %v5095 = vunpack.c.l.b16 %v4799
    %v5096 = vunpack.c.h.b16 %v4799
    %v5097 = vunpack.c.l.b16 %v4800
    %v5098 = vunpack.c.h.b16 %v4800
    %v5099 = vunpack.c.l.b16 %v4801
    %v5100 = vunpack.c.h.b16 %v4801
    %v5101 = vunpack.c.l.b16 %v4802
    %v5102 = vunpack.c.h.b16 %v4802
    %v5103 = vunpack.c.l.b16 %v4803
    %v5104 = vunpack.c.h.b16 %v4803
    %v5105 = vunpack.c.l.b16 %v4804
    %v5106 = vunpack.c.h.b16 %v4804
    %v5107 = vunpack.c.l.b16 %v4805
    %v5108 = vunpack.c.h.b16 %v4805
    %v5109 = vunpack.c.l.b16 %v4806
    %v5110 = vunpack.c.h.b16 %v4806
    %v5111 = vunpack.c.l.b16 %v4807
    %v5112 = vunpack.c.h.b16 %v4807
    %v5113 = vunpack.c.l.b16 %v4808
    %v5114 = vunpack.c.h.b16 %v4808
    %v5115 = vunpack.c.l.b16 %v4809
    %v5116 = vunpack.c.h.b16 %v4809
    %v5117 = vunpack.c.l.b16 %v4810
    %v5118 = vunpack.c.h.b16 %v4810
    %v5119 = vunpack.c.l.b16 %v4811
    %v5120 = vunpack.c.h.b16 %v4811
    %v5121 = vunpack.c.l.b16 %v4812
    %v5122 = vunpack.c.h.b16 %v4812
    %v5123 = vunpack.c.l.b16 %v4813
    %v5124 = vunpack.c.h.b16 %v4813
    %v5125 = vunpack.c.l.b16 %v4814
    %v5126 = vunpack.c.h.b16 %v4814
    %v5127 = vunpack.c.l.b16 %v4815
    %v5128 = vunpack.c.h.b16 %v4815
    %v5129 = vunpack.c.l.b16 %v4816
    %v5130 = vunpack.c.h.b16 %v4816
    %v5131 = vunpack.c.l.b16 %v4817
    %v5132 = vunpack.c.h.b16 %v4817
    %v5133 = vunpack.c.l.b16 %v4818
    %v5134 = vunpack.c.h.b16 %v4818
    %v5135 = vunpack.c.l.b16 %v4819
    %v5136 = vunpack.c.h.b16 %v4819
    %v5137 = vunpack.c.l.b16 %v4820
    %v5138 = vunpack.c.h.b16 %v4820
    %v5139 = vunpack.c.l.b16 %v4821
    %v5140 = vunpack.c.h.b16 %v4821
    %v5141 = vunpack.c.l.b16 %v4822
    %v5142 = vunpack.c.h.b16 %v4822
    %v5143 = vunpack.c.l.b16 %v4823
    %v5144 = vunpack.c.h.b16 %v4823
    %v5145 = vunpack.c.l.b16 %v4824
    %v5146 = vunpack.c.h.b16 %v4824
    %v5147 = vunpack.c.l.b16 %v4825
    %v5148 = vunpack.c.h.b16 %v4825
    %v5149 = vunpack.c.l.b16 %v4826
    %v5150 = vunpack.c.h.b16 %v4826
    %v5151 = vunpack.c.l.b16 %v4827
    %v5152 = vunpack.c.h.b16 %v4827
    %v5153 = vunpack.c.l.b16 %v4828
    %v5154 = vunpack.c.h.b16 %v4828
    %v5155 = vunpack.c.l.b16 %v4829
    %v5156 = vunpack.c.h.b16 %v4829
    %v5157 = vunpack.c.l.b16 %v4830
    %v5158 = vunpack.c.h.b16 %v4830
    %v5159 = vunpack.c.l.b16 %v4831
    %v5160 = vunpack.c.h.b16 %v4831
    %v5161 = vunpack.c.l.b16 %v4832
    %v5162 = vunpack.c.h.b16 %v4832
    %v5163 = vunpack.c.l.b16 %v4833
    %v5164 = vunpack.c.h.b16 %v4833
    %v5165 = vunpack.c.l.b16 %v4834
    %v5166 = vunpack.c.h.b16 %v4834
    %v5167 = vunpack.c.l.b16 %v4835
    %v5168 = vunpack.c.h.b16 %v4835
    %v5169 = vunpack.c.l.b16 %v4836
    %v5170 = vunpack.c.h.b16 %v4836
    %v5171 = vunpack.c.l.b16 %v4837
    %v5172 = vunpack.c.h.b16 %v4837
    %v5173 = vunpack.c.l.b16 %v4838
    %v5174 = vunpack.c.h.b16 %v4838
    %v5175 = vunpack.c.l.b16 %v4839
    %v5176 = vunpack.c.h.b16 %v4839
    %v5177 = vunpack.c.l.b16 %v4840
    %v5178 = vunpack.c.h.b16 %v4840
    %v5179 = vunpack.c.l.b16 %v4841
    %v5180 = vunpack.c.h.b16 %v4841
    %v5181 = vunpack.c.l.b16 %v4842
    %v5182 = vunpack.c.h.b16 %v4842
    %v5183 = vunpack.c.l.b16 %v4843
    %v5184 = vunpack.c.h.b16 %v4843
    %v5185 = vunpack.c.l.b16 %v4844
    %v5186 = vunpack.c.h.b16 %v4844
    %v5187 = vunpack.c.l.b16 %v4845
    %v5188 = vunpack.c.h.b16 %v4845
    %v5189 = vunpack.c.l.b16 %v4846
    %v5190 = vunpack.c.h.b16 %v4846
    %v5191 = vunpack.c.l.b16 %v4847
    %v5192 = vunpack.c.h.b16 %v4847
    %v5193 = vunpack.c.l.b16 %v4848
    %v5194 = vunpack.c.h.b16 %v4848
    %v5195 = vunpack.c.l.b16 %v4849
    %v5196 = vunpack.c.h.b16 %v4849
    %v5197 = vunpack.c.l.b16 %v4850
    %v5198 = vunpack.c.h.b16 %v4850
    %v5199 = vunpack.c.l.b16 %v4851
    %v5200 = vunpack.c.h.b16 %v4851
    %v5201 = vunpack.c.l.b16 %v4852
    %v5202 = vunpack.c.h.b16 %v4852
    %v5203 = vunpack.c.l.b16 %v4853
    %v5204 = vunpack.c.h.b16 %v4853
    %v5205 = vunpack.c.l.b16 %v4854
    %v5206 = vunpack.c.h.b16 %v4854
    %v5207 = vunpack.c.l.b16 %v4855
    %v5208 = vunpack.c.h.b16 %v4855
    %v5209 = vunpack.c.l.b16 %v4856
    %v5210 = vunpack.c.h.b16 %v4856
    %v5211 = vunpack.c.l.b16 %v4857
    %v5212 = vunpack.c.h.b16 %v4857
    %v5213 = vunpack.c.l.b16 %v4858
    %v5214 = vunpack.c.h.b16 %v4858
    %v5215 = vunpack.c.l.b16 %v4859
    %v5216 = vunpack.c.h.b16 %v4859
    %v5217 = vunpack.c.l.b16 %v4860
    %v5218 = vunpack.c.h.b16 %v4860
    %v5219 = vunpack.c.l.b16 %v4861
    %v5220 = vunpack.c.h.b16 %v4861
    %v5221 = vunpack.c.l.b16 %v4862
    %v5222 = vunpack.c.h.b16 %v4862
    %v5223 = vunpack.c.l.b16 %v4863
    %v5224 = vunpack.c.h.b16 %v4863
    %v5225 = vunpack.c.l.b16 %v4864
    %v5226 = vunpack.c.h.b16 %v4864
    %v5227 = vunpack.c.l.b16 %v4865
    %v5228 = vunpack.c.h.b16 %v4865
    %v5229 = vunpack.c.l.b16 %v4866
    %v5230 = vunpack.c.h.b16 %v4866
    %v5231 = vunpack.c.l.b16 %v4867
    %v5232 = vunpack.c.h.b16 %v4867
    %v5233 = vunpack.c.l.b16 %v4868
    %v5234 = vunpack.c.h.b16 %v4868
    %v5235 = vunpack.c.l.b16 %v4869
    %v5236 = vunpack.c.h.b16 %v4869
    %v5237 = vunpack.c.l.b16 %v4870
    %v5238 = vunpack.c.h.b16 %v4870
    %v5239 = vunpack.c.l.b16 %v4871
    %v5240 = vunpack.c.h.b16 %v4871
    %v5241 = vunpack.c.l.b16 %v4872
    %v5242 = vunpack.c.h.b16 %v4872
    %v5243 = vunpack.c.l.b16 %v4873
    %v5244 = vunpack.c.h.b16 %v4873
    %v5245 = vunpack.c.l.b16 %v4874
    %v5246 = vunpack.c.h.b16 %v4874
    %v5247 = vunpack.c.l.b16 %v4875
    %v5248 = vunpack.c.h.b16 %v4875
    %v5249 = vunpack.c.l.b16 %v4876
    %v5250 = vunpack.c.h.b16 %v4876
    %v5251 = vunpack.c.l.b16 %v4877
    %v5252 = vunpack.c.h.b16 %v4877
    %v5253 = vunpack.c.l.b16 %v4878
    %v5254 = vunpack.c.h.b16 %v4878
    %v5255 = vunpack.c.l.b16 %v4879
    %v5256 = vunpack.c.h.b16 %v4879
    %v5257 = vunpack.c.l.b16 %v4880
    %v5258 = vunpack.c.h.b16 %v4880
    %v5259 = vunpack.c.l.b16 %v4881
    %v5260 = vunpack.c.h.b16 %v4881
    %v5261 = vunpack.c.l.b16 %v4882
    %v5262 = vunpack.c.h.b16 %v4882
    %v5263 = vunpack.c.l.b16 %v4883
    %v5264 = vunpack.c.h.b16 %v4883
    %v5265 = vunpack.c.l.b16 %v4884
    %v5266 = vunpack.c.h.b16 %v4884
    %v5267 = vunpack.c.l.b16 %v4885
    %v5268 = vunpack.c.h.b16 %v4885
    %v5269 = vunpack.c.l.b16 %v4886
    %v5270 = vunpack.c.h.b16 %v4886
    %v5271 = vunpack.c.l.b16 %v4887
    %v5272 = vunpack.c.h.b16 %v4887
    %v5273 = vunpack.c.l.b16 %v4888
    %v5274 = vunpack.c.h.b16 %v4888
    %v5275 = vunpack.c.l.b16 %v4889
    %v5276 = vunpack.c.h.b16 %v4889
    %v5277 = vunpack.c.l.b16 %v4890
    %v5278 = vunpack.c.h.b16 %v4890
    %v5279 = vunpack.c.l.b16 %v4891
    %v5280 = vunpack.c.h.b16 %v4891
    %v5281 = vunpack.c.l.b16 %v4892
    %v5282 = vunpack.c.h.b16 %v4892
    %v5283 = vunpack.c.l.b16 %v4893
    %v5284 = vunpack.c.h.b16 %v4893
    %v5285 = vunpack.c.l.b16 %v4894
    %v5286 = vunpack.c.h.b16 %v4894
    %v5287 = vunpack.c.l.b16 %v4895
    %v5288 = vunpack.c.h.b16 %v4895
    %v5289 = vunpack.c.l.b16 %v4896
    %v5290 = vunpack.c.h.b16 %v4896
    %v5291 = vunpack.c.l.b16 %v4897
    %v5292 = vunpack.c.h.b16 %v4897
    %v5293 = vunpack.c.l.b16 %v4898
    %v5294 = vunpack.c.h.b16 %v4898
    %v5295 = vunpack.c.l.b16 %v4899
    %v5296 = vunpack.c.h.b16 %v4899
    %v5297 = vunpack.c.l.b16 %v4900
    %v5298 = vunpack.c.h.b16 %v4900
    %v5299 = vunpack.c.l.b16 %v4901
    %v5300 = vunpack.c.h.b16 %v4901
    %v5301 = vpack.c.b16 %v5049, %v5045
    %v5302 = vpack.c.b16 %v5050, %v5046
    %v5303 = vpack.c.b16 %v5051, %v5047
    %v5304 = vpack.c.b16 %v5052, %v5048
    %v5305 = vpack.c.b16 %v5057, %v5053
    %v5306 = vpack.c.b16 %v5058, %v5054
    %v5307 = vpack.c.b16 %v5059, %v5055
    %v5308 = vpack.c.b16 %v5060, %v5056
    %v5309 = vpack.c.b16 %v5065, %v5061
    %v5310 = vpack.c.b16 %v5066, %v5062
    %v5311 = vpack.c.b16 %v5067, %v5063
    %v5312 = vpack.c.b16 %v5068, %v5064
    %v5313 = vpack.c.b16 %v5073, %v5069
    %v5314 = vpack.c.b16 %v5074, %v5070
    %v5315 = vpack.c.b16 %v5075, %v5071
    %v5316 = vpack.c.b16 %v5076, %v5072
    %v5317 = vpack.c.b16 %v5081, %v5077
    %v5318 = vpack.c.b16 %v5082, %v5078
    %v5319 = vpack.c.b16 %v5083, %v5079
    %v5320 = vpack.c.b16 %v5084, %v5080
    %v5321 = vpack.c.b16 %v5089, %v5085
    %v5322 = vpack.c.b16 %v5090, %v5086
    %v5323 = vpack.c.b16 %v5091, %v5087
    %v5324 = vpack.c.b16 %v5092, %v5088
    %v5325 = vpack.c.b16 %v5097, %v5093
    %v5326 = vpack.c.b16 %v5098, %v5094
    %v5327 = vpack.c.b16 %v5099, %v5095
    %v5328 = vpack.c.b16 %v5100, %v5096
    %v5329 = vpack.c.b16 %v5105, %v5101
    %v5330 = vpack.c.b16 %v5106, %v5102
    %v5331 = vpack.c.b16 %v5107, %v5103
    %v5332 = vpack.c.b16 %v5108, %v5104
    %v5333 = vpack.c.b16 %v5113, %v5109
    %v5334 = vpack.c.b16 %v5114, %v5110
    %v5335 = vpack.c.b16 %v5115, %v5111
    %v5336 = vpack.c.b16 %v5116, %v5112
    %v5337 = vpack.c.b16 %v5121, %v5117
    %v5338 = vpack.c.b16 %v5122, %v5118
    %v5339 = vpack.c.b16 %v5123, %v5119
    %v5340 = vpack.c.b16 %v5124, %v5120
    %v5341 = vpack.c.b16 %v5129, %v5125
    %v5342 = vpack.c.b16 %v5130, %v5126
    %v5343 = vpack.c.b16 %v5131, %v5127
    %v5344 = vpack.c.b16 %v5132, %v5128
    %v5345 = vpack.c.b16 %v5137, %v5133
    %v5346 = vpack.c.b16 %v5138, %v5134
    %v5347 = vpack.c.b16 %v5139, %v5135
    %v5348 = vpack.c.b16 %v5140, %v5136
    %v5349 = vpack.c.b16 %v5145, %v5141
    %v5350 = vpack.c.b16 %v5146, %v5142
    %v5351 = vpack.c.b16 %v5147, %v5143
    %v5352 = vpack.c.b16 %v5148, %v5144
    %v5353 = vpack.c.b16 %v5153, %v5149
    %v5354 = vpack.c.b16 %v5154, %v5150
    %v5355 = vpack.c.b16 %v5155, %v5151
    %v5356 = vpack.c.b16 %v5156, %v5152
    %v5357 = vpack.c.b16 %v5161, %v5157
    %v5358 = vpack.c.b16 %v5162, %v5158
    %v5359 = vpack.c.b16 %v5163, %v5159
    %v5360 = vpack.c.b16 %v5164, %v5160
    %v5361 = vpack.c.b16 %v5169, %v5165
    %v5362 = vpack.c.b16 %v5170, %v5166
    %v5363 = vpack.c.b16 %v5171, %v5167
    %v5364 = vpack.c.b16 %v5172, %v5168
    %v5365 = vpack.c.b16 %v5177, %v5173
    %v5366 = vpack.c.b16 %v5178, %v5174
    %v5367 = vpack.c.b16 %v5179, %v5175
    %v5368 = vpack.c.b16 %v5180, %v5176
    %v5369 = vpack.c.b16 %v5185, %v5181
    %v5370 = vpack.c.b16 %v5186, %v5182
    %v5371 = vpack.c.b16 %v5187, %v5183
    %v5372 = vpack.c.b16 %v5188, %v5184
    %v5373 = vpack.c.b16 %v5193, %v5189
    %v5374 = vpack.c.b16 %v5194, %v5190
    %v5375 = vpack.c.b16 %v5195, %v5191
    %v5376 = vpack.c.b16 %v5196, %v5192
    %v5377 = vpack.c.b16 %v5201, %v5197
    %v5378 = vpack.c.b16 %v5202, %v5198
    %v5379 = vpack.c.b16 %v5203, %v5199
    %v5380 = vpack.c.b16 %v5204, %v5200
    %v5381 = vpack.c.b16 %v5209, %v5205
    %v5382 = vpack.c.b16 %v5210, %v5206
    %v5383 = vpack.c.b16 %v5211, %v5207
    %v5384 = vpack.c.b16 %v5212, %v5208
    %v5385 = vpack.c.b16 %v5217, %v5213
    %v5386 = vpack.c.b16 %v5218, %v5214
    %v5387 = vpack.c.b16 %v5219, %v5215
    %v5388 = vpack.c.b16 %v5220, %v5216
    %v5389 = vpack.c.b16 %v5225, %v5221
    %v5390 = vpack.c.b16 %v5226, %v5222
    %v5391 = vpack.c.b16 %v5227, %v5223
    %v5392 = vpack.c.b16 %v5228, %v5224
    %v5393 = vpack.c.b16 %v5233, %v5229
    %v5394 = vpack.c.b16 %v5234, %v5230
    %v5395 = vpack.c.b16 %v5235, %v5231
    %v5396 = vpack.c.b16 %v5236, %v5232
    %v5397 = vpack.c.b16 %v5241, %v5237
    %v5398 = vpack.c.b16 %v5242, %v5238
    %v5399 = vpack.c.b16 %v5243, %v5239
    %v5400 = vpack.c.b16 %v5244, %v5240
    %v5401 = vpack.c.b16 %v5249, %v5245
    %v5402 = vpack.c.b16 %v5250, %v5246
    %v5403 = vpack.c.b16 %v5251, %v5247
    %v5404 = vpack.c.b16 %v5252, %v5248
    %v5405 = vpack.c.b16 %v5257, %v5253
    %v5406 = vpack.c.b16 %v5258, %v5254
    %v5407 = vpack.c.b16 %v5259, %v5255
    %v5408 = vpack.c.b16 %v5260, %v5256
    %v5409 = vpack.c.b16 %v5265, %v5261
    %v5410 = vpack.c.b16 %v5266, %v5262
    %v5411 = vpack.c.b16 %v5267, %v5263
    %v5412 = vpack.c.b16 %v5268, %v5264
    %v5413 = vpack.c.b16 %v5273, %v5269
    %v5414 = vpack.c.b16 %v5274, %v5270
    %v5415 = vpack.c.b16 %v5275, %v5271
    %v5416 = vpack.c.b16 %v5276, %v5272
    %v5417 = vpack.c.b16 %v5281, %v5277
    %v5418 = vpack.c.b16 %v5282, %v5278
    %v5419 = vpack.c.b16 %v5283, %v5279
    %v5420 = vpack.c.b16 %v5284, %v5280
    %v5421 = vpack.c.b16 %v5289, %v5285
    %v5422 = vpack.c.b16 %v5290, %v5286
    %v5423 = vpack.c.b16 %v5291, %v5287
    %v5424 = vpack.c.b16 %v5292, %v5288
    %v5425 = vpack.c.b16 %v5297, %v5293
    %v5426 = vpack.c.b16 %v5298, %v5294
    %v5427 = vpack.c.b16 %v5299, %v5295
    %v5428 = vpack.c.b16 %v5300, %v5296
    %5557 = vmatpush.bf16.msra.mxu0 %v5329
    %5558 = vmatpush.bf16.msra.mxu0 %v5325
    %5559 = vmatpush.bf16.msra.mxu0 %v5321
    %5560 = vmatpush.bf16.msra.mxu0 %v5317
    %5561 = vmatpush.bf16.msra.mxu0 %v5313
    %5562 = vmatpush.bf16.msra.mxu0 %v5309
    %5563 = vmatpush.bf16.msra.mxu0 %v5305
    %5564 = vmatpush.bf16.msra.mxu0 %v5301
    %5565 = vmatmul.bf16.gmra.mxu0 %v4902
    %v5566 = vpop.f32.mrf.mxu0
    %v5567 = vadd.f32 %v4909, %v5566
    %v5568 = vpop.f32.mrf.mxu0
    %v5569 = vadd.f32 %v4909, %v5568
    %5570 = vdwg.mxu0
    %5571 = vmatpush.bf16.msra.mxu0 %v5361
    %5572 = vmatpush.bf16.msra.mxu0 %v5357
    %5573 = vmatpush.bf16.msra.mxu0 %v5353
    %5574 = vmatpush.bf16.msra.mxu0 %v5349
    %5575 = vmatpush.bf16.msra.mxu0 %v5345
    %5576 = vmatpush.bf16.msra.mxu0 %v5341
    %5577 = vmatpush.bf16.msra.mxu0 %v5337
    %5578 = vmatpush.bf16.msra.mxu0 %v5333
    %5579 = vmatmul.bf16.gmra.mxu0 %v4903
    %v5580 = vpop.f32.mrf.mxu0
    %v5581 = vadd.f32 %v5567, %v5580
    %v5582 = vpop.f32.mrf.mxu0
    %v5583 = vadd.f32 %v5569, %v5582
    %5584 = vdwg.mxu0
    %5585 = vmatpush.bf16.msra.mxu0 %v5393
    %5586 = vmatpush.bf16.msra.mxu0 %v5389
    %5587 = vmatpush.bf16.msra.mxu0 %v5385
    %5588 = vmatpush.bf16.msra.mxu0 %v5381
    %5589 = vmatpush.bf16.msra.mxu0 %v5377
    %5590 = vmatpush.bf16.msra.mxu0 %v5373
    %5591 = vmatpush.bf16.msra.mxu0 %v5369
    %5592 = vmatpush.bf16.msra.mxu0 %v5365
    %5593 = vmatmul.bf16.gmra.mxu0 %v4904
    %v5594 = vpop.f32.mrf.mxu0
    %v5595 = vadd.f32 %v5581, %v5594
    %v5596 = vpop.f32.mrf.mxu0
    %v5597 = vadd.f32 %v5583, %v5596
    %5598 = vdwg.mxu0
    %5599 = vmatpush.bf16.msra.mxu0 %v5425
    %5600 = vmatpush.bf16.msra.mxu0 %v5421
    %5601 = vmatpush.bf16.msra.mxu0 %v5417
    %5602 = vmatpush.bf16.msra.mxu0 %v5413
    %5603 = vmatpush.bf16.msra.mxu0 %v5409
    %5604 = vmatpush.bf16.msra.mxu0 %v5405
    %5605 = vmatpush.bf16.msra.mxu0 %v5401
    %5606 = vmatpush.bf16.msra.mxu0 %v5397
    %5607 = vmatmul.bf16.gmra.mxu0 %v4905
    %v5608 = vpop.f32.mrf.mxu0
    %v5609 = vadd.f32 %v5595, %v5608
    %v5610 = vpop.f32.mrf.mxu0
    %v5611 = vadd.f32 %v5597, %v5610
    %5612 = vdwg.mxu0
    %5613 = vmatpush.bf16.msra.mxu0 %v5330
    %5614 = vmatpush.bf16.msra.mxu0 %v5326
    %5615 = vmatpush.bf16.msra.mxu0 %v5322
    %5616 = vmatpush.bf16.msra.mxu0 %v5318
    %5617 = vmatpush.bf16.msra.mxu0 %v5314
    %5618 = vmatpush.bf16.msra.mxu0 %v5310
    %5619 = vmatpush.bf16.msra.mxu0 %v5306
    %5620 = vmatpush.bf16.msra.mxu0 %v5302
    %5621 = vmatmul.bf16.gmra.mxu0 %v4902
    %v5622 = vpop.f32.mrf.mxu0
    %v5623 = vadd.f32 %v4910, %v5622
    %v5624 = vpop.f32.mrf.mxu0
    %v5625 = vadd.f32 %v4910, %v5624
    %5626 = vdwg.mxu0
    %5627 = vmatpush.bf16.msra.mxu0 %v5362
    %5628 = vmatpush.bf16.msra.mxu0 %v5358
    %5629 = vmatpush.bf16.msra.mxu0 %v5354
    %5630 = vmatpush.bf16.msra.mxu0 %v5350
    %5631 = vmatpush.bf16.msra.mxu0 %v5346
    %5632 = vmatpush.bf16.msra.mxu0 %v5342
    %5633 = vmatpush.bf16.msra.mxu0 %v5338
    %5634 = vmatpush.bf16.msra.mxu0 %v5334
    %5635 = vmatmul.bf16.gmra.mxu0 %v4903
    %v5636 = vpop.f32.mrf.mxu0
    %v5637 = vadd.f32 %v5623, %v5636
    %v5638 = vpop.f32.mrf.mxu0
    %v5639 = vadd.f32 %v5625, %v5638
    %5640 = vdwg.mxu0
    %5641 = vmatpush.bf16.msra.mxu0 %v5394
    %5642 = vmatpush.bf16.msra.mxu0 %v5390
    %5643 = vmatpush.bf16.msra.mxu0 %v5386
    %5644 = vmatpush.bf16.msra.mxu0 %v5382
    %5645 = vmatpush.bf16.msra.mxu0 %v5378
    %5646 = vmatpush.bf16.msra.mxu0 %v5374
    %5647 = vmatpush.bf16.msra.mxu0 %v5370
    %5648 = vmatpush.bf16.msra.mxu0 %v5366
    %5649 = vmatmul.bf16.gmra.mxu0 %v4904
    %v5650 = vpop.f32.mrf.mxu0
    %v5651 = vadd.f32 %v5637, %v5650
    %v5652 = vpop.f32.mrf.mxu0
    %v5653 = vadd.f32 %v5639, %v5652
    %5654 = vdwg.mxu0
    %5655 = vmatpush.bf16.msra.mxu0 %v5426
    %5656 = vmatpush.bf16.msra.mxu0 %v5422
    %5657 = vmatpush.bf16.msra.mxu0 %v5418
    %5658 = vmatpush.bf16.msra.mxu0 %v5414
    %5659 = vmatpush.bf16.msra.mxu0 %v5410
    %5660 = vmatpush.bf16.msra.mxu0 %v5406
    %5661 = vmatpush.bf16.msra.mxu0 %v5402
    %5662 = vmatpush.bf16.msra.mxu0 %v5398
    %5663 = vmatmul.bf16.gmra.mxu0 %v4905
    %v5664 = vpop.f32.mrf.mxu0
    %v5665 = vadd.f32 %v5651, %v5664
    %v5666 = vpop.f32.mrf.mxu0
    %v5667 = vadd.f32 %v5653, %v5666
    %5668 = vdwg.mxu0
    %5669 = vmatpush.bf16.msra.mxu0 %v5331
    %5670 = vmatpush.bf16.msra.mxu0 %v5327
    %5671 = vmatpush.bf16.msra.mxu0 %v5323
    %5672 = vmatpush.bf16.msra.mxu0 %v5319
    %5673 = vmatpush.bf16.msra.mxu0 %v5315
    %5674 = vmatpush.bf16.msra.mxu0 %v5311
    %5675 = vmatpush.bf16.msra.mxu0 %v5307
    %5676 = vmatpush.bf16.msra.mxu0 %v5303
    %5677 = vmatmul.bf16.gmra.mxu0 %v4902
    %v5678 = vpop.f32.mrf.mxu0
    %v5679 = vadd.f32 %v4911, %v5678
    %v5680 = vpop.f32.mrf.mxu0
    %v5681 = vadd.f32 %v4911, %v5680
    %5682 = vdwg.mxu0
    %5683 = vmatpush.bf16.msra.mxu0 %v5363
    %5684 = vmatpush.bf16.msra.mxu0 %v5359
    %5685 = vmatpush.bf16.msra.mxu0 %v5355
    %5686 = vmatpush.bf16.msra.mxu0 %v5351
    %5687 = vmatpush.bf16.msra.mxu0 %v5347
    %5688 = vmatpush.bf16.msra.mxu0 %v5343
    %5689 = vmatpush.bf16.msra.mxu0 %v5339
    %5690 = vmatpush.bf16.msra.mxu0 %v5335
    %5691 = vmatmul.bf16.gmra.mxu0 %v4903
    %v5692 = vpop.f32.mrf.mxu0
    %v5693 = vadd.f32 %v5679, %v5692
    %v5694 = vpop.f32.mrf.mxu0
    %v5695 = vadd.f32 %v5681, %v5694
    %5696 = vdwg.mxu0
    %5697 = vmatpush.bf16.msra.mxu0 %v5395
    %5698 = vmatpush.bf16.msra.mxu0 %v5391
    %5699 = vmatpush.bf16.msra.mxu0 %v5387
    %5700 = vmatpush.bf16.msra.mxu0 %v5383
    %5701 = vmatpush.bf16.msra.mxu0 %v5379
    %5702 = vmatpush.bf16.msra.mxu0 %v5375
    %5703 = vmatpush.bf16.msra.mxu0 %v5371
    %5704 = vmatpush.bf16.msra.mxu0 %v5367
    %5705 = vmatmul.bf16.gmra.mxu0 %v4904
    %v5706 = vpop.f32.mrf.mxu0
    %v5707 = vadd.f32 %v5693, %v5706
    %v5708 = vpop.f32.mrf.mxu0
    %v5709 = vadd.f32 %v5695, %v5708
    %5710 = vdwg.mxu0
    %5711 = vmatpush.bf16.msra.mxu0 %v5427
    %5712 = vmatpush.bf16.msra.mxu0 %v5423
    %5713 = vmatpush.bf16.msra.mxu0 %v5419
    %5714 = vmatpush.bf16.msra.mxu0 %v5415
    %5715 = vmatpush.bf16.msra.mxu0 %v5411
    %5716 = vmatpush.bf16.msra.mxu0 %v5407
    %5717 = vmatpush.bf16.msra.mxu0 %v5403
    %5718 = vmatpush.bf16.msra.mxu0 %v5399
    %5719 = vmatmul.bf16.gmra.mxu0 %v4905
    %v5720 = vpop.f32.mrf.mxu0
    %v5721 = vadd.f32 %v5707, %v5720
    %v5722 = vpop.f32.mrf.mxu0
    %v5723 = vadd.f32 %v5709, %v5722
    %5724 = vdwg.mxu0
    %5725 = vmatpush.bf16.msra.mxu0 %v5332
    %5726 = vmatpush.bf16.msra.mxu0 %v5328
    %5727 = vmatpush.bf16.msra.mxu0 %v5324
    %5728 = vmatpush.bf16.msra.mxu0 %v5320
    %5729 = vmatpush.bf16.msra.mxu0 %v5316
    %5730 = vmatpush.bf16.msra.mxu0 %v5312
    %5731 = vmatpush.bf16.msra.mxu0 %v5308
    %5732 = vmatpush.bf16.msra.mxu0 %v5304
    %5733 = vmatmul.bf16.gmra.mxu0 %v4902
    %v5734 = vpop.f32.mrf.mxu0
    %v5735 = vadd.f32 %v4912, %v5734
    %v5736 = vpop.f32.mrf.mxu0
    %v5737 = vadd.f32 %v4912, %v5736
    %5738 = vdwg.mxu0
    %5739 = vmatpush.bf16.msra.mxu0 %v5364
    %5740 = vmatpush.bf16.msra.mxu0 %v5360
    %5741 = vmatpush.bf16.msra.mxu0 %v5356
    %5742 = vmatpush.bf16.msra.mxu0 %v5352
    %5743 = vmatpush.bf16.msra.mxu0 %v5348
    %5744 = vmatpush.bf16.msra.mxu0 %v5344
    %5745 = vmatpush.bf16.msra.mxu0 %v5340
    %5746 = vmatpush.bf16.msra.mxu0 %v5336
    %5747 = vmatmul.bf16.gmra.mxu0 %v4903
    %v5748 = vpop.f32.mrf.mxu0
    %v5749 = vadd.f32 %v5735, %v5748
    %v5750 = vpop.f32.mrf.mxu0
    %v5751 = vadd.f32 %v5737, %v5750
    %5752 = vdwg.mxu0
    %5753 = vmatpush.bf16.msra.mxu0 %v5396
    %5754 = vmatpush.bf16.msra.mxu0 %v5392
    %5755 = vmatpush.bf16.msra.mxu0 %v5388
    %5756 = vmatpush.bf16.msra.mxu0 %v5384
    %5757 = vmatpush.bf16.msra.mxu0 %v5380
    %5758 = vmatpush.bf16.msra.mxu0 %v5376
    %5759 = vmatpush.bf16.msra.mxu0 %v5372
    %5760 = vmatpush.bf16.msra.mxu0 %v5368
    %5761 = vmatmul.bf16.gmra.mxu0 %v4904
    %v5762 = vpop.f32.mrf.mxu0
    %v5763 = vadd.f32 %v5749, %v5762
    %v5764 = vpop.f32.mrf.mxu0
    %v5765 = vadd.f32 %v5751, %v5764
    %5766 = vdwg.mxu0
    %5767 = vmatpush.bf16.msra.mxu0 %v5428
    %5768 = vmatpush.bf16.msra.mxu0 %v5424
    %5769 = vmatpush.bf16.msra.mxu0 %v5420
    %5770 = vmatpush.bf16.msra.mxu0 %v5416
    %5771 = vmatpush.bf16.msra.mxu0 %v5412
    %5772 = vmatpush.bf16.msra.mxu0 %v5408
    %5773 = vmatpush.bf16.msra.mxu0 %v5404
    %5774 = vmatpush.bf16.msra.mxu0 %v5400
    %5775 = vmatmul.bf16.gmra.mxu0 %v4905
    %v5776 = vpop.f32.mrf.mxu0
    %v5777 = vadd.f32 %v5763, %v5776
    %v5778 = vpop.f32.mrf.mxu0
    %v5779 = vadd.f32 %v5765, %v5778
    %5780 = vdwg.mxu0
    %v5781 = vpack.c.bf16 %v126, %v126
    %v5782 = vpack.c.bf16 %v5611, %v5609
    %v5783 = vpack.c.bf16 %v5667, %v5665
    %v5784 = vpack.c.bf16 %v5723, %v5721
    %v5785 = vpack.c.bf16 %v5779, %v5777
    %v5787 = vsel %vm975, %v5781, 0
    %5789 = vmatpush.bf16.msra.mxu0 0
    %5790 = vmatpush.bf16.msra.mxu0 0
    %5791 = vmatpush.bf16.msra.mxu0 0
    %5792 = vmatpush.bf16.msra.mxu0 0
    %5793 = vmatpush.bf16.msra.mxu0 0
    %5794 = vmatpush.bf16.msra.mxu0 0
    %5795 = vmatpush.bf16.msra.mxu0 0
    %5796 = vmatpush.bf16.msra.mxu0 %v5782
    %5797 = vmatmul.bf16.gmra.mxu0 %v5787
    %v5798 = vpop.f32.mrf.mxu0
    %v5799 = vadd.f32 0.0, %v5798
    %v5800 = vpop.f32.mrf.mxu0
    %5801 = vdwg.mxu0
    %5802 = vmatpush.bf16.msra.mxu0 0
    %5803 = vmatpush.bf16.msra.mxu0 0
    %5804 = vmatpush.bf16.msra.mxu0 0
    %5805 = vmatpush.bf16.msra.mxu0 0
    %5806 = vmatpush.bf16.msra.mxu0 0
    %5807 = vmatpush.bf16.msra.mxu0 0
    %5808 = vmatpush.bf16.msra.mxu0 0
    %5809 = vmatpush.bf16.msra.mxu0 %v5783
    %5810 = vmatmul.bf16.gmra.mxu0 %v5787
    %v5811 = vpop.f32.mrf.mxu0
    %v5812 = vadd.f32 0.0, %v5811
    %v5813 = vpop.f32.mrf.mxu0
    %5814 = vdwg.mxu0
    %5815 = vmatpush.bf16.msra.mxu0 0
    %5816 = vmatpush.bf16.msra.mxu0 0
    %5817 = vmatpush.bf16.msra.mxu0 0
    %5818 = vmatpush.bf16.msra.mxu0 0
    %5819 = vmatpush.bf16.msra.mxu0 0
    %5820 = vmatpush.bf16.msra.mxu0 0
    %5821 = vmatpush.bf16.msra.mxu0 0
    %5822 = vmatpush.bf16.msra.mxu0 %v5784
    %5823 = vmatmul.bf16.gmra.mxu0 %v5787
    %v5824 = vpop.f32.mrf.mxu0
    %v5825 = vadd.f32 0.0, %v5824
    %v5826 = vpop.f32.mrf.mxu0
    %5827 = vdwg.mxu0
    %5828 = vmatpush.bf16.msra.mxu0 0
    %5829 = vmatpush.bf16.msra.mxu0 0
    %5830 = vmatpush.bf16.msra.mxu0 0
    %5831 = vmatpush.bf16.msra.mxu0 0
    %5832 = vmatpush.bf16.msra.mxu0 0
    %5833 = vmatpush.bf16.msra.mxu0 0
    %5834 = vmatpush.bf16.msra.mxu0 0
    %5835 = vmatpush.bf16.msra.mxu0 %v5785
    %5836 = vmatmul.bf16.gmra.mxu0 %v5787
    %v5837 = vpop.f32.mrf.mxu0
    %v5838 = vadd.f32 0.0, %v5837
    %v5839 = vpop.f32.mrf.mxu0
    %5840 = vdwg.mxu0
    %5841 = vst [vmem:[#allocation16] sm:$0xff] %v5799
    %5842 = vst [vmem:[#allocation16 + $0x8] sm:$0xff] %v5812
    %5843 = vst [vmem:[#allocation16 + $0x10] sm:$0xff] %v5825
    %5844 = vst [vmem:[#allocation16 + $0x18] sm:$0xff] %v5838
    %v5849 = vrot.slane %v5799, 4
    %v5850 = vrot.slane %v5812, 4
    %v5851 = vrot.slane %v5825, 4
    %v5852 = vrot.slane %v5838, 4
    %v5857 = vmul.f32 %v5799, %v5849
    %v5858 = vmul.f32 %v5812, %v5850
    %v5859 = vmul.f32 %v5825, %v5851
    %v5860 = vmul.f32 %v5838, %v5852
    %v5861 = vld [vmem:[#allocation11 + $0x200] sm:$0xf]
    %v5862 = vld [vmem:[#allocation11 + $0x204] sm:$0xf]
    %v5863 = vld [vmem:[#allocation11 + $0x208] sm:$0xf]
    %v5864 = vld [vmem:[#allocation11 + $0x20c] sm:$0xf]
    %v5865 = vld [vmem:[#allocation11 + $0x210] sm:$0xf]
    %v5866 = vld [vmem:[#allocation11 + $0x214] sm:$0xf]
    %v5867 = vld [vmem:[#allocation11 + $0x218] sm:$0xf]
    %v5868 = vld [vmem:[#allocation11 + $0x21c] sm:$0xf]
    %v5869 = vld [vmem:[#allocation11 + $0x220] sm:$0xf]
    %v5870 = vld [vmem:[#allocation11 + $0x224] sm:$0xf]
    %v5871 = vld [vmem:[#allocation11 + $0x228] sm:$0xf]
    %v5872 = vld [vmem:[#allocation11 + $0x22c] sm:$0xf]
    %v5873 = vld [vmem:[#allocation11 + $0x230] sm:$0xf]
    %v5874 = vld [vmem:[#allocation11 + $0x234] sm:$0xf]
    %v5875 = vld [vmem:[#allocation11 + $0x238] sm:$0xf]
    %v5876 = vld [vmem:[#allocation11 + $0x23c] sm:$0xf]
    %v5877 = vld [vmem:[#allocation11 + $0x240] sm:$0xf]
    %v5878 = vld [vmem:[#allocation11 + $0x244] sm:$0xf]
    %v5879 = vld [vmem:[#allocation11 + $0x248] sm:$0xf]
    %v5880 = vld [vmem:[#allocation11 + $0x24c] sm:$0xf]
    %v5881 = vld [vmem:[#allocation11 + $0x250] sm:$0xf]
    %v5882 = vld [vmem:[#allocation11 + $0x254] sm:$0xf]
    %v5883 = vld [vmem:[#allocation11 + $0x258] sm:$0xf]
    %v5884 = vld [vmem:[#allocation11 + $0x25c] sm:$0xf]
    %v5885 = vld [vmem:[#allocation11 + $0x260] sm:$0xf]
    %v5886 = vld [vmem:[#allocation11 + $0x264] sm:$0xf]
    %v5887 = vld [vmem:[#allocation11 + $0x268] sm:$0xf]
    %v5888 = vld [vmem:[#allocation11 + $0x26c] sm:$0xf]
    %v5889 = vld [vmem:[#allocation11 + $0x270] sm:$0xf]
    %v5890 = vld [vmem:[#allocation11 + $0x274] sm:$0xf]
    %v5891 = vld [vmem:[#allocation11 + $0x278] sm:$0xf]
    %v5892 = vld [vmem:[#allocation11 + $0x27c] sm:$0xf]
    %v5893 = vld [vmem:[#allocation11 + $0x280] sm:$0xf]
    %v5894 = vld [vmem:[#allocation11 + $0x284] sm:$0xf]
    %v5895 = vld [vmem:[#allocation11 + $0x288] sm:$0xf]
    %v5896 = vld [vmem:[#allocation11 + $0x28c] sm:$0xf]
    %v5897 = vld [vmem:[#allocation11 + $0x290] sm:$0xf]
    %v5898 = vld [vmem:[#allocation11 + $0x294] sm:$0xf]
    %v5899 = vld [vmem:[#allocation11 + $0x298] sm:$0xf]
    %v5900 = vld [vmem:[#allocation11 + $0x29c] sm:$0xf]
    %v5901 = vld [vmem:[#allocation11 + $0x2a0] sm:$0xf]
    %v5902 = vld [vmem:[#allocation11 + $0x2a4] sm:$0xf]
    %v5903 = vld [vmem:[#allocation11 + $0x2a8] sm:$0xf]
    %v5904 = vld [vmem:[#allocation11 + $0x2ac] sm:$0xf]
    %v5905 = vld [vmem:[#allocation11 + $0x2b0] sm:$0xf]
    %v5906 = vld [vmem:[#allocation11 + $0x2b4] sm:$0xf]
    %v5907 = vld [vmem:[#allocation11 + $0x2b8] sm:$0xf]
    %v5908 = vld [vmem:[#allocation11 + $0x2bc] sm:$0xf]
    %v5909 = vld [vmem:[#allocation11 + $0x2c0] sm:$0xf]
    %v5910 = vld [vmem:[#allocation11 + $0x2c4] sm:$0xf]
    %v5911 = vld [vmem:[#allocation11 + $0x2c8] sm:$0xf]
    %v5912 = vld [vmem:[#allocation11 + $0x2cc] sm:$0xf]
    %v5913 = vld [vmem:[#allocation11 + $0x2d0] sm:$0xf]
    %v5914 = vld [vmem:[#allocation11 + $0x2d4] sm:$0xf]
    %v5915 = vld [vmem:[#allocation11 + $0x2d8] sm:$0xf]
    %v5916 = vld [vmem:[#allocation11 + $0x2dc] sm:$0xf]
    %v5917 = vld [vmem:[#allocation11 + $0x2e0] sm:$0xf]
    %v5918 = vld [vmem:[#allocation11 + $0x2e4] sm:$0xf]
    %v5919 = vld [vmem:[#allocation11 + $0x2e8] sm:$0xf]
    %v5920 = vld [vmem:[#allocation11 + $0x2ec] sm:$0xf]
    %v5921 = vld [vmem:[#allocation11 + $0x2f0] sm:$0xf]
    %v5922 = vld [vmem:[#allocation11 + $0x2f4] sm:$0xf]
    %v5923 = vld [vmem:[#allocation11 + $0x2f8] sm:$0xf]
    %v5924 = vld [vmem:[#allocation11 + $0x2fc] sm:$0xf]
    %v5925 = vpack.c.bf16 %v5857, %v5857
    %v5926 = vpack.c.bf16 %v5858, %v5858
    %v5927 = vpack.c.bf16 %v5859, %v5859
    %v5928 = vpack.c.bf16 %v5860, %v5860
    %v5929 = vld [vmem:[#allocation12 + $0x66] ss:$0 sm:$0xff]
    %v5994 = vunpack.c.l.b16 %v5861
    %v5995 = vunpack.c.l.b16 %v5862
    %v5996 = vunpack.c.l.b16 %v5863
    %v5997 = vunpack.c.l.b16 %v5864
    %v5998 = vunpack.c.l.b16 %v5865
    %v5999 = vunpack.c.l.b16 %v5866
    %v6000 = vunpack.c.l.b16 %v5867
    %v6001 = vunpack.c.l.b16 %v5868
    %v6002 = vunpack.c.l.b16 %v5869
    %v6003 = vunpack.c.l.b16 %v5870
    %v6004 = vunpack.c.l.b16 %v5871
    %v6005 = vunpack.c.l.b16 %v5872
    %v6006 = vunpack.c.l.b16 %v5873
    %v6007 = vunpack.c.l.b16 %v5874
    %v6008 = vunpack.c.l.b16 %v5875
    %v6009 = vunpack.c.l.b16 %v5876
    %v6010 = vunpack.c.l.b16 %v5877
    %v6011 = vunpack.c.l.b16 %v5878
    %v6012 = vunpack.c.l.b16 %v5879
    %v6013 = vunpack.c.l.b16 %v5880
    %v6014 = vunpack.c.l.b16 %v5881
    %v6015 = vunpack.c.l.b16 %v5882
    %v6016 = vunpack.c.l.b16 %v5883
    %v6017 = vunpack.c.l.b16 %v5884
    %v6018 = vunpack.c.l.b16 %v5885
    %v6019 = vunpack.c.l.b16 %v5886
    %v6020 = vunpack.c.l.b16 %v5887
    %v6021 = vunpack.c.l.b16 %v5888
    %v6022 = vunpack.c.l.b16 %v5889
    %v6023 = vunpack.c.l.b16 %v5890
    %v6024 = vunpack.c.l.b16 %v5891
    %v6025 = vunpack.c.l.b16 %v5892
    %v6026 = vunpack.c.l.b16 %v5893
    %v6027 = vunpack.c.l.b16 %v5894
    %v6028 = vunpack.c.l.b16 %v5895
    %v6029 = vunpack.c.l.b16 %v5896
    %v6030 = vunpack.c.l.b16 %v5897
    %v6031 = vunpack.c.l.b16 %v5898
    %v6032 = vunpack.c.l.b16 %v5899
    %v6033 = vunpack.c.l.b16 %v5900
    %v6034 = vunpack.c.l.b16 %v5901
    %v6035 = vunpack.c.l.b16 %v5902
    %v6036 = vunpack.c.l.b16 %v5903
    %v6037 = vunpack.c.l.b16 %v5904
    %v6038 = vunpack.c.l.b16 %v5905
    %v6039 = vunpack.c.l.b16 %v5906
    %v6040 = vunpack.c.l.b16 %v5907
    %v6041 = vunpack.c.l.b16 %v5908
    %v6042 = vunpack.c.l.b16 %v5909
    %v6043 = vunpack.c.l.b16 %v5910
    %v6044 = vunpack.c.l.b16 %v5911
    %v6045 = vunpack.c.l.b16 %v5912
    %v6046 = vunpack.c.l.b16 %v5913
    %v6047 = vunpack.c.l.b16 %v5914
    %v6048 = vunpack.c.l.b16 %v5915
    %v6049 = vunpack.c.l.b16 %v5916
    %v6050 = vunpack.c.l.b16 %v5917
    %v6051 = vunpack.c.l.b16 %v5918
    %v6052 = vunpack.c.l.b16 %v5919
    %v6053 = vunpack.c.l.b16 %v5920
    %v6054 = vunpack.c.l.b16 %v5921
    %v6055 = vunpack.c.l.b16 %v5922
    %v6056 = vunpack.c.l.b16 %v5923
    %v6057 = vunpack.c.l.b16 %v5924
    %v6058 = vpack.c.b16 %v5995, %v5994
    %v6059 = vpack.c.b16 %v5997, %v5996
    %v6060 = vpack.c.b16 %v5999, %v5998
    %v6061 = vpack.c.b16 %v6001, %v6000
    %v6062 = vpack.c.b16 %v6003, %v6002
    %v6063 = vpack.c.b16 %v6005, %v6004
    %v6064 = vpack.c.b16 %v6007, %v6006
    %v6065 = vpack.c.b16 %v6009, %v6008
    %v6066 = vpack.c.b16 %v6011, %v6010
    %v6067 = vpack.c.b16 %v6013, %v6012
    %v6068 = vpack.c.b16 %v6015, %v6014
    %v6069 = vpack.c.b16 %v6017, %v6016
    %v6070 = vpack.c.b16 %v6019, %v6018
    %v6071 = vpack.c.b16 %v6021, %v6020
    %v6072 = vpack.c.b16 %v6023, %v6022
    %v6073 = vpack.c.b16 %v6025, %v6024
    %v6074 = vpack.c.b16 %v6027, %v6026
    %v6075 = vpack.c.b16 %v6029, %v6028
    %v6076 = vpack.c.b16 %v6031, %v6030
    %v6077 = vpack.c.b16 %v6033, %v6032
    %v6078 = vpack.c.b16 %v6035, %v6034
    %v6079 = vpack.c.b16 %v6037, %v6036
    %v6080 = vpack.c.b16 %v6039, %v6038
    %v6081 = vpack.c.b16 %v6041, %v6040
    %v6082 = vpack.c.b16 %v6043, %v6042
    %v6083 = vpack.c.b16 %v6045, %v6044
    %v6084 = vpack.c.b16 %v6047, %v6046
    %v6085 = vpack.c.b16 %v6049, %v6048
    %v6086 = vpack.c.b16 %v6051, %v6050
    %v6087 = vpack.c.b16 %v6053, %v6052
    %v6088 = vpack.c.b16 %v6055, %v6054
    %v6089 = vpack.c.b16 %v6057, %v6056
    %6122 = vmatpush.bf16.msra.mxu0 %v6065
    %6123 = vmatpush.bf16.msra.mxu0 %v6064
    %6124 = vmatpush.bf16.msra.mxu0 %v6063
    %6125 = vmatpush.bf16.msra.mxu0 %v6062
    %6126 = vmatpush.bf16.msra.mxu0 %v6061
    %6127 = vmatpush.bf16.msra.mxu0 %v6060
    %6128 = vmatpush.bf16.msra.mxu0 %v6059
    %6129 = vmatpush.bf16.msra.mxu0 %v6058
    %6130 = vmatmul.bf16.gmra.mxu0 %v5925
    %v6131 = vpop.f32.mrf.mxu0
    %v6132 = vadd.f32 %v5929, %v6131
    %v6133 = vpop.f32.mrf.mxu0
    %6134 = vdwg.mxu0
    %6135 = vmatpush.bf16.msra.mxu0 %v6073
    %6136 = vmatpush.bf16.msra.mxu0 %v6072
    %6137 = vmatpush.bf16.msra.mxu0 %v6071
    %6138 = vmatpush.bf16.msra.mxu0 %v6070
    %6139 = vmatpush.bf16.msra.mxu0 %v6069
    %6140 = vmatpush.bf16.msra.mxu0 %v6068
    %6141 = vmatpush.bf16.msra.mxu0 %v6067
    %6142 = vmatpush.bf16.msra.mxu0 %v6066
    %6143 = vmatmul.bf16.gmra.mxu0 %v5926
    %v6144 = vpop.f32.mrf.mxu0
    %v6145 = vadd.f32 %v6132, %v6144
    %v6146 = vpop.f32.mrf.mxu0
    %6147 = vdwg.mxu0
    %6148 = vmatpush.bf16.msra.mxu0 %v6081
    %6149 = vmatpush.bf16.msra.mxu0 %v6080
    %6150 = vmatpush.bf16.msra.mxu0 %v6079
    %6151 = vmatpush.bf16.msra.mxu0 %v6078
    %6152 = vmatpush.bf16.msra.mxu0 %v6077
    %6153 = vmatpush.bf16.msra.mxu0 %v6076
    %6154 = vmatpush.bf16.msra.mxu0 %v6075
    %6155 = vmatpush.bf16.msra.mxu0 %v6074
    %6156 = vmatmul.bf16.gmra.mxu0 %v5927
    %v6157 = vpop.f32.mrf.mxu0
    %v6158 = vadd.f32 %v6145, %v6157
    %v6159 = vpop.f32.mrf.mxu0
    %6160 = vdwg.mxu0
    %6161 = vmatpush.bf16.msra.mxu0 %v6089
    %6162 = vmatpush.bf16.msra.mxu0 %v6088
    %6163 = vmatpush.bf16.msra.mxu0 %v6087
    %6164 = vmatpush.bf16.msra.mxu0 %v6086
    %6165 = vmatpush.bf16.msra.mxu0 %v6085
    %6166 = vmatpush.bf16.msra.mxu0 %v6084
    %6167 = vmatpush.bf16.msra.mxu0 %v6083
    %6168 = vmatpush.bf16.msra.mxu0 %v6082
    %6169 = vmatmul.bf16.gmra.mxu0 %v5928
    %v6170 = vpop.f32.mrf.mxu0
    %v6171 = vadd.f32 %v6158, %v6170
    %v6172 = vpop.f32.mrf.mxu0
    %6173 = vdwg.mxu0
    %6174 = vst [vmem:[#allocation15] sm:$0xf] %v6171
    // Predicated region
    $region50: #{tpu_custom_call.1} parent=1 // pred_check
      _
    $region51: #{tpu_custom_call.1} parent=1 // pred_check_branch
      %6176 = sbr.rel (0) target = $region53
    $region52: #{tpu_custom_call.1} parent=1 // pred_region
      %6178 = vsyncadd [#allocation7], 0
      %s6180 = sshll.u32 [#allocation15], 4
      %s6181 = int_to_ptr.vmem [resolvable:$true] %s6180
      %s6182 = sshll.u32 %s7, 4
      %s6183 = int_to_ptr.hbm [resolvable:$true] %s6182
      %6185 = dma.vmem_to_hbm [thread:$0]  %s6181, 64, %s6183, [#allocation7]
    $region53: #{tpu_custom_call.1} parent=1 // pred_fallthru
      _
    // Predicated region
    $region54: #{tpu_custom_call.1} parent=1 // pred_check
      _
    $region55: #{tpu_custom_call.1} parent=1 // pred_check_branch
      %6187 = sbr.rel (0) target = $region57
    $region56: #{tpu_custom_call.1} parent=1 // pred_region
      %6189 = vsyncadd [#allocation17], 0
      %s6191 = sshll.u32 [#allocation16], 4
      %s6192 = int_to_ptr.vmem [resolvable:$true] %s6191
      %s6193 = sshll.u32 %s8, 4
      %s6194 = int_to_ptr.hbm [resolvable:$true] %s6193
      %6196 = dma.vmem_to_hbm [thread:$0]  %s6192, 512, %s6194, [#allocation17]
    $region57: #{tpu_custom_call.1} parent=1 // pred_fallthru
      _
    // Predicated region
    $region58: #{tpu_custom_call.1} parent=1 // pred_check
      _
    $region59: #{tpu_custom_call.1} parent=1 // pred_check_branch
      %6198 = sbr.rel (0) target = $region61
    $region60: #{tpu_custom_call.1} parent=1 // pred_region
      %6200 = dma.done [#allocation7], 64
    $region61: #{tpu_custom_call.1} parent=1 // pred_fallthru
      _
    // Predicated region
    $region62: #{tpu_custom_call.1} parent=1 // pred_check
      _
    $region63: #{tpu_custom_call.1} parent=1 // pred_check_branch
      %6202 = sbr.rel (0) target = $region65
    $region64: #{tpu_custom_call.1} parent=1 // pred_region
      %6204 = dma.done [#allocation17], 512
    $region65: #{tpu_custom_call.1} parent=1 // pred_fallthru
      _
    %6205 = vsyncpa [#allocation6], 1
    %6206 = vsyncpa [#allocation10], 1
    %6207 = vsyncpa [#allocation13], 1
    %6208 = vsyncpa [#allocation7], 1
    %6209 = vsyncpa [#allocation17], 1
    %6210 = vsyncpa [#allocation8], 1
  %6211 = vsyncmov [#allocation3]
  %s6212 = vpop.sfrf %6211
  %p6213 = scmp.eq.s32.totalorder %s6212, 0
  %p6214 = pneg %p6213
  %6216 = shalt.err (%p6214)

</llo_original>
